<compile_context>
chip_gen: v6e
topology: v6e:2x2x1
jax: 0.10.0
libtpu: 0.0.40
codegen_flags: <defaults>
</compile_context>

<pallas_src>
import jax
import jax.numpy as jnp
from jax import lax
from jax.experimental import pallas as pl
from jax.experimental.pallas import tpu as pltpu


def _harmonic_kernel(x_ref, spread_ref, ftile_ref, sel_ref, out_ref):
    # x_ref:      (TMF, D*R)  folded input rows                     VMEM
    # spread_ref: (D*R, W)    constant 0/1 spread matrix, resident  VMEM
    # ftile_ref:  (1, W)      frequency per lane, resident          VMEM
    # sel_ref:    (1, W)      int32, 1 on cos lanes, resident       VMEM
    # out_ref:    (TMF, W)    folded output rows, W = 2*D*H*R       VMEM
    x = x_ref[...]

    # Exact lane spread of x into the (duplicated) output layout on the MXU.
    # 0/1 matrix + HIGHEST precision => bit-exact copy of x per output lane.
    xsp = jnp.dot(x, spread_ref[...],
                  precision=lax.Precision.HIGHEST,
                  preferred_element_type=jnp.float32)          # (TMF, W)

    # Exact f32 phases: identical rounding to the reference x * frequencies.
    phases = xsp * ftile_ref[...]                               # (TMF, W)

    sinv = jnp.sin(phases)
    cosv = jnp.cos(phases)
    # Single full-width (multiple-of-128 lanes) unmasked store.
    out_ref[...] = jnp.where(sel_ref[...] != 0, cosv, sinv)


def harmonic_embedding(x, frequencies, *, fold=32, rows_per_step=8192):
    """x: (..., D), frequencies: (H,) -> (..., 2*D*H) float32 (channels-last)."""
    orig_shape = x.shape
    d = orig_shape[-1]
    h = frequencies.shape[0]
    dh = d * h
    out_feat = 2 * dh

    n = 1
    for s in orig_shape[:-1]:
        n *= s
    x2 = x.reshape(n, d).astype(jnp.float32)

    # --- fold R rows per block row (byte-compatible reshape) -----------------
    r = max(1, int(fold))
    n_pad = ((n + r - 1) // r) * r
    if n_pad != n:
        # Rare / small-N path; the fold needs a multiple of R rows.
        x2 = jnp.pad(x2, ((0, n_pad - n), (0, 0)))
    nf = n_pad // r
    xf = x2.reshape(nf, d * r)

    # --- resident constants for the folded, duplicated-phase layout ----------
    w = out_feat * r                                  # folded output width
    lane = jnp.arange(w, dtype=jnp.int32)
    row_in_fold = lane // out_feat                    # which original row
    within = lane % out_feat                          # 0 .. 2*D*H-1
    feat = within % dh                                # i*H + j
    coord = feat // h                                 # i  (coordinate index)
    harm = feat % h                                   # j  (harmonic index)
    src = row_in_fold * d + coord                     # source lane in xf

    spread = (jnp.arange(d * r, dtype=jnp.int32)[:, None]
              == src[None, :]).astype(jnp.float32)                 # (D*R, W)
    ftile = frequencies.astype(jnp.float32)[harm].reshape(1, w)     # (1, W)
    sel = (within >= dh).astype(jnp.int32).reshape(1, w)            # (1, W)

    # --- folded-row tile: ~rows_per_step original rows per grid step ---------
    tgt = max(8, ((rows_per_step // r) // 8) * 8)
    if nf >= tgt:
        tmf = tgt
    elif nf >= 8:
        tmf = (nf // 8) * 8
    else:
        tmf = nf                                      # block == full row count
    grid = (pl.cdiv(nf, tmf),)

    cost = pl.CostEstimate(
        flops=2 * nf * (d * r) * w + n_pad * out_feat,   # spread matmul + x*f
        transcendentals=2 * n_pad * out_feat,            # sin + cos, full width
        bytes_accessed=n_pad * (d + out_feat) * 4 + (d * r) * w * 4 + 2 * w * 4,
    )

    out = pl.pallas_call(
        _harmonic_kernel,
        out_shape=jax.ShapeDtypeStruct((nf, w), jnp.float32),
        grid_spec=pltpu.PrefetchScalarGridSpec(
            num_scalar_prefetch=0,
            grid=grid,
            in_specs=[
                pl.BlockSpec((tmf, d * r), lambda i: (i, 0)),
                # constant block index -> resident, single DMA
                pl.BlockSpec((d * r, w), lambda i: (0, 0)),
                pl.BlockSpec((1, w), lambda i: (0, 0)),
                pl.BlockSpec((1, w), lambda i: (0, 0)),
            ],
            out_specs=pl.BlockSpec((tmf, w), lambda i: (i, 0)),
        ),
        compiler_params=pltpu.CompilerParams(
            dimension_semantics=("parallel",),
            # Worst-case footprint here is ~10MB; 48MB keeps headroom while
            # staying under v7x's 64MiB physical VMEM (and v5e/v6e 128MiB).
            vmem_limit_bytes=48 * 1024 * 1024,
        ),
        cost_estimate=cost,
    )(xf, spread, ftile, sel)

    out = out.reshape(n_pad, out_feat)
    if n_pad != n:
        out = out[:n]                                 # only on the padded path
    return out.reshape(*orig_shape[:-1], out_feat)


def harmonic_embedding_ref(x, frequencies):
    embed = (x[..., None] * frequencies).reshape(*x.shape[:-1], -1)
    return jnp.concatenate([jnp.sin(embed), jnp.cos(embed)], axis=-1)


if __name__ == "__main__":
    # Module "parameters": buffer frequencies = omega0 * 2**arange(n_harmonic)
    n_harmonic_functions = 10
    omega0 = 1.0
    frequencies = omega0 * (2.0 ** jnp.arange(n_harmonic_functions, dtype=jnp.float32))

    # Small deterministic input: batch=2, points=16, coord dim=3 (typical xyz).
    key = jax.random.PRNGKey(0)
    x = jax.random.normal(key, (2, 16, 3), dtype=jnp.float32)

    out = jax.block_until_ready(harmonic_embedding(x, frequencies))
    ref = harmonic_embedding_ref(x, frequencies)
    assert out.shape == (2, 16, 2 * 3 * n_harmonic_functions), out.shape
    assert jnp.allclose(out, ref, atol=1e-5, rtol=1e-5), "mismatch vs reference"

    # Ragged row count (needs padding to the fold) + multi-step ragged grid.
    x2 = jax.random.normal(jax.random.PRNGKey(1), (7, 300, 3), dtype=jnp.float32)
    out2 = jax.block_until_ready(
        harmonic_embedding(x2, frequencies, fold=32, rows_per_step=1024))
    ref2 = harmonic_embedding_ref(x2, frequencies)
    assert out2.shape == ref2.shape, out2.shape
    assert jnp.allclose(out2, ref2, atol=1e-5, rtol=1e-5), "mismatch (ragged)"

    print("KERNEL_OK")
</pallas_src>

<mosaic_0001>
module attributes {stable_mosaic.version = 11 : i64} {
  func.func @_harmonic_kernel(%arg0: i32, %arg1: memref<1x96xf32, #tpu.memory_space<vmem>>, %arg2: memref<96x1920xf32, #tpu.memory_space<vmem>>, %arg3: memref<1x1920xf32, #tpu.memory_space<vmem>>, %arg4: memref<1x1920xi32, #tpu.memory_space<vmem>>, %arg5: memref<1x1920xf32, #tpu.memory_space<vmem>>) attributes {dimension_semantics = [#tpu.dimension_semantics<parallel>], iteration_bounds = array<i64: 1>, scalar_prefetch = 0 : i64, scratch_operands = 0 : i64, tpu.core_type = #tpu.core_type<tc>, window_params = [{transform_indices = @transform_0, window_bounds = array<i64: 1, 96>}, {pipeline_mode = #tpu.pipeline_mode<synchronous>, transform_indices = @transform_1, window_bounds = array<i64: 96, 1920>}, {pipeline_mode = #tpu.pipeline_mode<synchronous>, transform_indices = @transform_2, window_bounds = array<i64: 1, 1920>}, {pipeline_mode = #tpu.pipeline_mode<synchronous>, transform_indices = @transform_3, window_bounds = array<i64: 1, 1920>}, {transform_indices = @transform_4, window_bounds = array<i64: 1, 1920>}]} {
    %c0 = arith.constant 0 : index
    %c0_0 = arith.constant 0 : index
    %0 = vector.load %arg1[%c0, %c0_0] : memref<1x96xf32, #tpu.memory_space<vmem>>, vector<1x96xf32>
    %c0_1 = arith.constant 0 : index
    %c0_2 = arith.constant 0 : index
    %1 = vector.load %arg2[%c0_1, %c0_2] : memref<96x1920xf32, #tpu.memory_space<vmem>>, vector<96x1920xf32>
    %cst = arith.constant dense<0.000000e+00> : vector<1x1920xf32>
    %2 = tpu.matmul %0, %1, %cst {dimension_numbers = #tpu.dot_dimension_numbers<[1], [0], [0], [1], [0, 0, 1, 1], [], []>, precision = #tpu.contract_precision<fp32>} : vector<1x96xf32>, vector<96x1920xf32>, vector<1x1920xf32> -> vector<1x1920xf32>
    %c0_3 = arith.constant 0 : index
    %c0_4 = arith.constant 0 : index
    %3 = vector.load %arg3[%c0_3, %c0_4] : memref<1x1920xf32, #tpu.memory_space<vmem>>, vector<1x1920xf32>
    %4 = arith.mulf %2, %3 : vector<1x1920xf32>
    %5 = math.sin %4 : vector<1x1920xf32>
    %6 = math.cos %4 : vector<1x1920xf32>
    %c0_5 = arith.constant 0 : index
    %c0_6 = arith.constant 0 : index
    %7 = vector.load %arg4[%c0_5, %c0_6] : memref<1x1920xi32, #tpu.memory_space<vmem>>, vector<1x1920xi32>
    %c0_i32 = arith.constant 0 : i32
    %8 = vector.broadcast %c0_i32 : i32 to vector<1x1920xi32>
    %9 = arith.cmpi ne, %7, %8 : vector<1x1920xi32>
    %10 = arith.select %9, %6, %5 : vector<1x1920xi1>, vector<1x1920xf32>
    %c0_7 = arith.constant 0 : index
    %c0_8 = arith.constant 0 : index
    %11 = vector.load %arg5[%c0_7, %c0_8] : memref<1x1920xf32, #tpu.memory_space<vmem>>, vector<1x1920xf32>
    tpu.vector_store %arg5[%c0_7, %c0_8], %10 {strides = array<i32>} : memref<1x1920xf32, #tpu.memory_space<vmem>>, vector<1x1920xf32>,
    return
  }
  func.func @transform_0(%arg0: i32) -> (i32, i32) {
    %c0_i32 = arith.constant 0 : i32
    %c0_i32_0 = arith.constant 0 : i32
    return %arg0, %c0_i32 : i32, i32
  }
  func.func @transform_1(%arg0: i32) -> (i32, i32) {
    %c0_i32 = arith.constant 0 : i32
    %c0_i32_0 = arith.constant 0 : i32
    %c0_i32_1 = arith.constant 0 : i32
    return %c0_i32, %c0_i32_0 : i32, i32
  }
  func.func @transform_2(%arg0: i32) -> (i32, i32) {
    %c0_i32 = arith.constant 0 : i32
    %c0_i32_0 = arith.constant 0 : i32
    %c0_i32_1 = arith.constant 0 : i32
    return %c0_i32, %c0_i32_0 : i32, i32
  }
  func.func @transform_3(%arg0: i32) -> (i32, i32) {
    %c0_i32 = arith.constant 0 : i32
    %c0_i32_0 = arith.constant 0 : i32
    %c0_i32_1 = arith.constant 0 : i32
    return %c0_i32, %c0_i32_0 : i32, i32
  }
  func.func @transform_4(%arg0: i32) -> (i32, i32) {
    %c0_i32 = arith.constant 0 : i32
    %c0_i32_0 = arith.constant 0 : i32
    return %arg0, %c0_i32 : i32, i32
  }
}

</mosaic_0001>

<llo_original>
// kernel: tpu_custom_call.1
$region0: #{tpu_custom_call.1}
  #allocation0 [shape = 'u32[]', space=smem, size = 0x4, offset = 0x4, fixed_abs, tag = 'smem constant byte address 0x4 - core index']
  #allocation1 [shape = 'u32[144,128]{1,0:T(1,128)}', space=vmem, size = 0x12000, scoped, tag = 'internal scratch']
  %s0 = inlined_call_operand.hbm [shape: f32[1,96], index: 0, kind: input, shape index: {}]
  %s1 = inlined_call_operand.hbm [shape: f32[96,1920], index: 1, kind: input, shape index: {}]
  %s2 = inlined_call_operand.hbm [shape: f32[1,1920], index: 2, kind: input, shape index: {}]
  %s3 = inlined_call_operand.hbm [shape: s32[1,1920], index: 3, kind: input, shape index: {}]
  %s4 = inlined_call_operand.hbm [shape: f32[1,1920], index: 4, kind: output, shape index: {}]
  %s5 = sld [smem:[#allocation0]]
  $region42: #{tpu_custom_call.1} parent=0
    _
  %s7 = ssub.s32 1, %s5
  %s8 = scalar_select 0, %s7, %s5
  $region1: #{tpu_custom_call.1} parent=0
    #allocation2 [shape = 'u8[512]{0}', space=vmem, size = 0x400, scoped, tag = 'input window, operand 0, single buffered']
    #allocation3 [shape = 's32[1]{0}', space=sflag, size = 0x4, scoped, tag = 'scoped memory for tpu_custom_call.1']
    #allocation4 [shape = 's32[1]{0}', space=sflag, size = 0x4, scoped, tag = 'scoped memory for tpu_custom_call.1']
    #allocation5 [shape = 'u8[737280]{0}', space=vmem, size = 0xb4000, scoped, tag = 'input window, operand 1, single buffered']
    #allocation6 [shape = 's32[1]{0}', space=sflag, size = 0x4, scoped, tag = 'scoped memory for tpu_custom_call.1']
    #allocation7 [shape = 'u8[7680]{0}', space=vmem, size = 0x2000, scoped, tag = 'input window, operand 2, single buffered']
    #allocation8 [shape = 'u8[7680]{0}', space=vmem, size = 0x2000, scoped, tag = 'input window, operand 3, single buffered']
    #allocation9 [shape = 's32[1]{0}', space=sflag, size = 0x4, scoped, tag = 'scoped memory for tpu_custom_call.1']
    #allocation10 [shape = 'u8[7680]{0}', space=vmem, size = 0x2000, scoped, tag = 'output window, operand 0, single buffered']
    %9 = vsyncpa [#allocation3], 0
    %10 = vsyncpa [#allocation6], 0
    %11 = vsyncpa [#allocation9], 0
    %12 = vsyncpa [#allocation4], 0
    // Predicated region
    $region2: #{tpu_custom_call.1} parent=1 // pred_check
      _
    $region3: #{tpu_custom_call.1} parent=1 // pred_check_branch
      %14 = sbr.rel (0) target = $region5
    $region4: #{tpu_custom_call.1} parent=1 // pred_region
      %s16 = ssub.s32 16, 16
      %17 = vsyncadd [#allocation3], %s16
      %s19 = sshll.u32 [#allocation2], 4
      %s20 = int_to_ptr.vmem [resolvable:$true] %s19
      %22 = dma.hbm_to_vmem [thread:$0]  %s0, 16, %s20, [#allocation3]
    $region5: #{tpu_custom_call.1} parent=1 // pred_fallthru
      _
    // Predicated region
    $region6: #{tpu_custom_call.1} parent=1 // pred_check
      _
    $region7: #{tpu_custom_call.1} parent=1 // pred_check_branch
      %24 = sbr.rel (0) target = $region9
    $region8: #{tpu_custom_call.1} parent=1 // pred_region
      %s26 = ssub.s32 23040, 23040
      %27 = vsyncadd [#allocation6], %s26
      %s28 = sshll.u32 [#allocation5], 4
      %s29 = int_to_ptr.vmem [resolvable:$true] %s28
      %34 = dma.hbm_to_vmem [thread:$0]  %s1, 23040, %s29, [#allocation6], 1920, 1920, 120
    $region9: #{tpu_custom_call.1} parent=1 // pred_fallthru
      _
    // Predicated region
    $region10: #{tpu_custom_call.1} parent=1 // pred_check
      _
    $region11: #{tpu_custom_call.1} parent=1 // pred_check_branch
      %36 = sbr.rel (0) target = $region13
    $region12: #{tpu_custom_call.1} parent=1 // pred_region
      %s38 = ssub.s32 240, 240
      %39 = vsyncadd [#allocation6], %s38
      %s41 = sshll.u32 [#allocation7], 4
      %s42 = int_to_ptr.vmem [resolvable:$true] %s41
      %44 = dma.hbm_to_vmem [thread:$0]  %s2, 240, %s42, [#allocation6]
    $region13: #{tpu_custom_call.1} parent=1 // pred_fallthru
      _
    // Predicated region
    $region14: #{tpu_custom_call.1} parent=1 // pred_check
      _
    $region15: #{tpu_custom_call.1} parent=1 // pred_check_branch
      %46 = sbr.rel (0) target = $region17
    $region16: #{tpu_custom_call.1} parent=1 // pred_region
      %s48 = ssub.s32 240, 240
      %49 = vsyncadd [#allocation9], %s48
      %s51 = sshll.u32 [#allocation8], 4
      %s52 = int_to_ptr.vmem [resolvable:$true] %s51
      %54 = dma.hbm_to_vmem [thread:$0]  %s3, 240, %s52, [#allocation9]
    $region17: #{tpu_custom_call.1} parent=1 // pred_fallthru
      _
    // Predicated region
    $region18: #{tpu_custom_call.1} parent=1 // pred_check
      _
    $region19: #{tpu_custom_call.1} parent=1 // pred_check_branch
      %56 = sbr.rel (0) target = $region21
    $region20: #{tpu_custom_call.1} parent=1 // pred_region
      %57 = dma.done [#allocation3], 16
    $region21: #{tpu_custom_call.1} parent=1 // pred_fallthru
      _
    // Predicated region
    $region22: #{tpu_custom_call.1} parent=1 // pred_check
      _
    $region23: #{tpu_custom_call.1} parent=1 // pred_check_branch
      %59 = sbr.rel (0) target = $region25
    $region24: #{tpu_custom_call.1} parent=1 // pred_region
      %60 = dma.done [#allocation6], 23040
    $region25: #{tpu_custom_call.1} parent=1 // pred_fallthru
      _
    // Predicated region
    $region26: #{tpu_custom_call.1} parent=1 // pred_check
      _
    $region27: #{tpu_custom_call.1} parent=1 // pred_check_branch
      %62 = sbr.rel (0) target = $region29
    $region28: #{tpu_custom_call.1} parent=1 // pred_region
      %63 = dma.done [#allocation6], 240
    $region29: #{tpu_custom_call.1} parent=1 // pred_fallthru
      _
    // Predicated region
    $region30: #{tpu_custom_call.1} parent=1 // pred_check
      _
    $region31: #{tpu_custom_call.1} parent=1 // pred_check_branch
      %65 = sbr.rel (0) target = $region33
    $region32: #{tpu_custom_call.1} parent=1 // pred_region
      %66 = dma.done [#allocation9], 240
    $region33: #{tpu_custom_call.1} parent=1 // pred_fallthru
      _
    %v67 = vld [vmem:[#allocation2] sm:$0x1]
    %v68 = vld [vmem:[#allocation5] sm:$0xff]
    %v69 = vld [vmem:[#allocation5 + $0x8] sm:$0xff]
    %v70 = vld [vmem:[#allocation5 + $0x10] sm:$0xff]
    %v71 = vld [vmem:[#allocation5 + $0x18] sm:$0xff]
    %v72 = vld [vmem:[#allocation5 + $0x20] sm:$0xff]
    %v73 = vld [vmem:[#allocation5 + $0x28] sm:$0xff]
    %v74 = vld [vmem:[#allocation5 + $0x30] sm:$0xff]
    %v75 = vld [vmem:[#allocation5 + $0x38] sm:$0xff]
    %v76 = vld [vmem:[#allocation5 + $0x40] sm:$0xff]
    %v77 = vld [vmem:[#allocation5 + $0x48] sm:$0xff]
    %v78 = vld [vmem:[#allocation5 + $0x50] sm:$0xff]
    %v79 = vld [vmem:[#allocation5 + $0x58] sm:$0xff]
    %v80 = vld [vmem:[#allocation5 + $0x60] sm:$0xff]
    %v81 = vld [vmem:[#allocation5 + $0x68] sm:$0xff]
    %v82 = vld [vmem:[#allocation5 + $0x70] sm:$0xff]
    %v83 = vld [vmem:[#allocation5 + $0x78] sm:$0xff]
    %v84 = vld [vmem:[#allocation5 + $0x80] sm:$0xff]
    %v85 = vld [vmem:[#allocation5 + $0x88] sm:$0xff]
    %v86 = vld [vmem:[#allocation5 + $0x90] sm:$0xff]
    %v87 = vld [vmem:[#allocation5 + $0x98] sm:$0xff]
    %v88 = vld [vmem:[#allocation5 + $0xa0] sm:$0xff]
    %v89 = vld [vmem:[#allocation5 + $0xa8] sm:$0xff]
    %v90 = vld [vmem:[#allocation5 + $0xb0] sm:$0xff]
    %v91 = vld [vmem:[#allocation5 + $0xb8] sm:$0xff]
    %v92 = vld [vmem:[#allocation5 + $0xc0] sm:$0xff]
    %v93 = vld [vmem:[#allocation5 + $0xc8] sm:$0xff]
    %v94 = vld [vmem:[#allocation5 + $0xd0] sm:$0xff]
    %v95 = vld [vmem:[#allocation5 + $0xd8] sm:$0xff]
    %v96 = vld [vmem:[#allocation5 + $0xe0] sm:$0xff]
    %v97 = vld [vmem:[#allocation5 + $0xe8] sm:$0xff]
    %v98 = vld [vmem:[#allocation5 + $0xf0] sm:$0xff]
    %v99 = vld [vmem:[#allocation5 + $0xf8] sm:$0xff]
    %v100 = vld [vmem:[#allocation5 + $0x100] sm:$0xff]
    %v101 = vld [vmem:[#allocation5 + $0x108] sm:$0xff]
    %v102 = vld [vmem:[#allocation5 + $0x110] sm:$0xff]
    %v103 = vld [vmem:[#allocation5 + $0x118] sm:$0xff]
    %v104 = vld [vmem:[#allocation5 + $0x120] sm:$0xff]
    %v105 = vld [vmem:[#allocation5 + $0x128] sm:$0xff]
    %v106 = vld [vmem:[#allocation5 + $0x130] sm:$0xff]
    %v107 = vld [vmem:[#allocation5 + $0x138] sm:$0xff]
    %v108 = vld [vmem:[#allocation5 + $0x140] sm:$0xff]
    %v109 = vld [vmem:[#allocation5 + $0x148] sm:$0xff]
    %v110 = vld [vmem:[#allocation5 + $0x150] sm:$0xff]
    %v111 = vld [vmem:[#allocation5 + $0x158] sm:$0xff]
    %v112 = vld [vmem:[#allocation5 + $0x160] sm:$0xff]
    %v113 = vld [vmem:[#allocation5 + $0x168] sm:$0xff]
    %v114 = vld [vmem:[#allocation5 + $0x170] sm:$0xff]
    %v115 = vld [vmem:[#allocation5 + $0x178] sm:$0xff]
    %v116 = vld [vmem:[#allocation5 + $0x180] sm:$0xff]
    %v117 = vld [vmem:[#allocation5 + $0x188] sm:$0xff]
    %v118 = vld [vmem:[#allocation5 + $0x190] sm:$0xff]
    %v119 = vld [vmem:[#allocation5 + $0x198] sm:$0xff]
    %v120 = vld [vmem:[#allocation5 + $0x1a0] sm:$0xff]
    %v121 = vld [vmem:[#allocation5 + $0x1a8] sm:$0xff]
    %v122 = vld [vmem:[#allocation5 + $0x1b0] sm:$0xff]
    %v123 = vld [vmem:[#allocation5 + $0x1b8] sm:$0xff]
    %v124 = vld [vmem:[#allocation5 + $0x1c0] sm:$0xff]
    %v125 = vld [vmem:[#allocation5 + $0x1c8] sm:$0xff]
    %v126 = vld [vmem:[#allocation5 + $0x1d0] sm:$0xff]
    %v127 = vld [vmem:[#allocation5 + $0x1d8] sm:$0xff]
    %v128 = vld [vmem:[#allocation5 + $0x1e0] sm:$0xff]
    %v129 = vld [vmem:[#allocation5 + $0x1e8] sm:$0xff]
    %v130 = vld [vmem:[#allocation5 + $0x1f0] sm:$0xff]
    %v131 = vld [vmem:[#allocation5 + $0x1f8] sm:$0xff]
    %v132 = vld [vmem:[#allocation5 + $0x200] sm:$0xff]
    %v133 = vld [vmem:[#allocation5 + $0x208] sm:$0xff]
    %v134 = vld [vmem:[#allocation5 + $0x210] sm:$0xff]
    %v135 = vld [vmem:[#allocation5 + $0x218] sm:$0xff]
    %v136 = vld [vmem:[#allocation5 + $0x220] sm:$0xff]
    %v137 = vld [vmem:[#allocation5 + $0x228] sm:$0xff]
    %v138 = vld [vmem:[#allocation5 + $0x230] sm:$0xff]
    %v139 = vld [vmem:[#allocation5 + $0x238] sm:$0xff]
    %v140 = vld [vmem:[#allocation5 + $0x240] sm:$0xff]
    %v141 = vld [vmem:[#allocation5 + $0x248] sm:$0xff]
    %v142 = vld [vmem:[#allocation5 + $0x250] sm:$0xff]
    %v143 = vld [vmem:[#allocation5 + $0x258] sm:$0xff]
    %v144 = vld [vmem:[#allocation5 + $0x260] sm:$0xff]
    %v145 = vld [vmem:[#allocation5 + $0x268] sm:$0xff]
    %v146 = vld [vmem:[#allocation5 + $0x270] sm:$0xff]
    %v147 = vld [vmem:[#allocation5 + $0x278] sm:$0xff]
    %v148 = vld [vmem:[#allocation5 + $0x280] sm:$0xff]
    %v149 = vld [vmem:[#allocation5 + $0x288] sm:$0xff]
    %v150 = vld [vmem:[#allocation5 + $0x290] sm:$0xff]
    %v151 = vld [vmem:[#allocation5 + $0x298] sm:$0xff]
    %v152 = vld [vmem:[#allocation5 + $0x2a0] sm:$0xff]
    %v153 = vld [vmem:[#allocation5 + $0x2a8] sm:$0xff]
    %v154 = vld [vmem:[#allocation5 + $0x2b0] sm:$0xff]
    %v155 = vld [vmem:[#allocation5 + $0x2b8] sm:$0xff]
    %v156 = vld [vmem:[#allocation5 + $0x2c0] sm:$0xff]
    %v157 = vld [vmem:[#allocation5 + $0x2c8] sm:$0xff]
    %v158 = vld [vmem:[#allocation5 + $0x2d0] sm:$0xff]
    %v159 = vld [vmem:[#allocation5 + $0x2d8] sm:$0xff]
    %v160 = vld [vmem:[#allocation5 + $0x2e0] sm:$0xff]
    %v161 = vld [vmem:[#allocation5 + $0x2e8] sm:$0xff]
    %v162 = vld [vmem:[#allocation5 + $0x2f0] sm:$0xff]
    %v163 = vld [vmem:[#allocation5 + $0x2f8] sm:$0xff]
    %v164 = vld [vmem:[#allocation5 + $0x300] sm:$0xff]
    %v165 = vld [vmem:[#allocation5 + $0x308] sm:$0xff]
    %v166 = vld [vmem:[#allocation5 + $0x310] sm:$0xff]
    %v167 = vld [vmem:[#allocation5 + $0x318] sm:$0xff]
    %v168 = vld [vmem:[#allocation5 + $0x320] sm:$0xff]
    %v169 = vld [vmem:[#allocation5 + $0x328] sm:$0xff]
    %v170 = vld [vmem:[#allocation5 + $0x330] sm:$0xff]
    %v171 = vld [vmem:[#allocation5 + $0x338] sm:$0xff]
    %v172 = vld [vmem:[#allocation5 + $0x340] sm:$0xff]
    %v173 = vld [vmem:[#allocation5 + $0x348] sm:$0xff]
    %v174 = vld [vmem:[#allocation5 + $0x350] sm:$0xff]
    %v175 = vld [vmem:[#allocation5 + $0x358] sm:$0xff]
    %v176 = vld [vmem:[#allocation5 + $0x360] sm:$0xff]
    %v177 = vld [vmem:[#allocation5 + $0x368] sm:$0xff]
    %v178 = vld [vmem:[#allocation5 + $0x370] sm:$0xff]
    %v179 = vld [vmem:[#allocation5 + $0x378] sm:$0xff]
    %v180 = vld [vmem:[#allocation5 + $0x380] sm:$0xff]
    %v181 = vld [vmem:[#allocation5 + $0x388] sm:$0xff]
    %v182 = vld [vmem:[#allocation5 + $0x390] sm:$0xff]
    %v183 = vld [vmem:[#allocation5 + $0x398] sm:$0xff]
    %v184 = vld [vmem:[#allocation5 + $0x3a0] sm:$0xff]
    %v185 = vld [vmem:[#allocation5 + $0x3a8] sm:$0xff]
    %v186 = vld [vmem:[#allocation5 + $0x3b0] sm:$0xff]
    %v187 = vld [vmem:[#allocation5 + $0x3b8] sm:$0xff]
    %v188 = vld [vmem:[#allocation5 + $0x3c0] sm:$0xff]
    %v189 = vld [vmem:[#allocation5 + $0x3c8] sm:$0xff]
    %v190 = vld [vmem:[#allocation5 + $0x3d0] sm:$0xff]
    %v191 = vld [vmem:[#allocation5 + $0x3d8] sm:$0xff]
    %v192 = vld [vmem:[#allocation5 + $0x3e0] sm:$0xff]
    %v193 = vld [vmem:[#allocation5 + $0x3e8] sm:$0xff]
    %v194 = vld [vmem:[#allocation5 + $0x3f0] sm:$0xff]
    %v195 = vld [vmem:[#allocation5 + $0x3f8] sm:$0xff]
    %v196 = vld [vmem:[#allocation5 + $0x400] sm:$0xff]
    %v197 = vld [vmem:[#allocation5 + $0x408] sm:$0xff]
    %v198 = vld [vmem:[#allocation5 + $0x410] sm:$0xff]
    %v199 = vld [vmem:[#allocation5 + $0x418] sm:$0xff]
    %v200 = vld [vmem:[#allocation5 + $0x420] sm:$0xff]
    %v201 = vld [vmem:[#allocation5 + $0x428] sm:$0xff]
    %v202 = vld [vmem:[#allocation5 + $0x430] sm:$0xff]
    %v203 = vld [vmem:[#allocation5 + $0x438] sm:$0xff]
    %v204 = vld [vmem:[#allocation5 + $0x440] sm:$0xff]
    %v205 = vld [vmem:[#allocation5 + $0x448] sm:$0xff]
    %v206 = vld [vmem:[#allocation5 + $0x450] sm:$0xff]
    %v207 = vld [vmem:[#allocation5 + $0x458] sm:$0xff]
    %v208 = vld [vmem:[#allocation5 + $0x460] sm:$0xff]
    %v209 = vld [vmem:[#allocation5 + $0x468] sm:$0xff]
    %v210 = vld [vmem:[#allocation5 + $0x470] sm:$0xff]
    %v211 = vld [vmem:[#allocation5 + $0x478] sm:$0xff]
    %v212 = vld [vmem:[#allocation5 + $0x480] sm:$0xff]
    %v213 = vld [vmem:[#allocation5 + $0x488] sm:$0xff]
    %v214 = vld [vmem:[#allocation5 + $0x490] sm:$0xff]
    %v215 = vld [vmem:[#allocation5 + $0x498] sm:$0xff]
    %v216 = vld [vmem:[#allocation5 + $0x4a0] sm:$0xff]
    %v217 = vld [vmem:[#allocation5 + $0x4a8] sm:$0xff]
    %v218 = vld [vmem:[#allocation5 + $0x4b0] sm:$0xff]
    %v219 = vld [vmem:[#allocation5 + $0x4b8] sm:$0xff]
    %v220 = vld [vmem:[#allocation5 + $0x4c0] sm:$0xff]
    %v221 = vld [vmem:[#allocation5 + $0x4c8] sm:$0xff]
    %v222 = vld [vmem:[#allocation5 + $0x4d0] sm:$0xff]
    %v223 = vld [vmem:[#allocation5 + $0x4d8] sm:$0xff]
    %v224 = vld [vmem:[#allocation5 + $0x4e0] sm:$0xff]
    %v225 = vld [vmem:[#allocation5 + $0x4e8] sm:$0xff]
    %v226 = vld [vmem:[#allocation5 + $0x4f0] sm:$0xff]
    %v227 = vld [vmem:[#allocation5 + $0x4f8] sm:$0xff]
    %v228 = vld [vmem:[#allocation5 + $0x500] sm:$0xff]
    %v229 = vld [vmem:[#allocation5 + $0x508] sm:$0xff]
    %v230 = vld [vmem:[#allocation5 + $0x510] sm:$0xff]
    %v231 = vld [vmem:[#allocation5 + $0x518] sm:$0xff]
    %v232 = vld [vmem:[#allocation5 + $0x520] sm:$0xff]
    %v233 = vld [vmem:[#allocation5 + $0x528] sm:$0xff]
    %v234 = vld [vmem:[#allocation5 + $0x530] sm:$0xff]
    %v235 = vld [vmem:[#allocation5 + $0x538] sm:$0xff]
    %v236 = vld [vmem:[#allocation5 + $0x540] sm:$0xff]
    %v237 = vld [vmem:[#allocation5 + $0x548] sm:$0xff]
    %v238 = vld [vmem:[#allocation5 + $0x550] sm:$0xff]
    %v239 = vld [vmem:[#allocation5 + $0x558] sm:$0xff]
    %v240 = vld [vmem:[#allocation5 + $0x560] sm:$0xff]
    %v241 = vld [vmem:[#allocation5 + $0x568] sm:$0xff]
    %v242 = vld [vmem:[#allocation5 + $0x570] sm:$0xff]
    %v243 = vld [vmem:[#allocation5 + $0x578] sm:$0xff]
    %v244 = vld [vmem:[#allocation5 + $0x580] sm:$0xff]
    %v245 = vld [vmem:[#allocation5 + $0x588] sm:$0xff]
    %v246 = vld [vmem:[#allocation5 + $0x590] sm:$0xff]
    %v247 = vld [vmem:[#allocation5 + $0x598] sm:$0xff]
    %vm248 = vcmask 785408
    %v250 = vsel %vm248, %v67, 0
    %252 = vmatprep.subr.mxu0 0.0
    %253 = vmatpush1.msra.mxu0 0.0
    %254 = vmatprep.subr.mxu0 0.0
    %255 = vmatpush1.msra.mxu0 0.0
    %256 = vmatprep.subr.mxu0 0.0
    %257 = vmatpush1.msra.mxu0 0.0
    %258 = vmatprep.subr.mxu0 0.0
    %259 = vmatpush1.msra.mxu0 0.0
    %v260 = vand.u32 %v234, 4294901760
    %261 = vmatprep.subr.mxu0 %v260
    %v262 = vand.u32 %v233, 4294901760
    %263 = vmatpush1.msra.mxu0 %v262
    %v264 = vand.u32 %v219, 4294901760
    %265 = vmatprep.subr.mxu0 %v264
    %v266 = vand.u32 %v218, 4294901760
    %267 = vmatpush1.msra.mxu0 %v266
    %v268 = vand.u32 %v204, 4294901760
    %269 = vmatprep.subr.mxu0 %v268
    %v270 = vand.u32 %v203, 4294901760
    %271 = vmatpush1.msra.mxu0 %v270
    %v272 = vand.u32 %v189, 4294901760
    %273 = vmatprep.subr.mxu0 %v272
    %v274 = vand.u32 %v188, 4294901760
    %275 = vmatpush1.msra.mxu0 %v274
    %v276 = vand.u32 %v174, 4294901760
    %277 = vmatprep.subr.mxu0 %v276
    %v278 = vand.u32 %v173, 4294901760
    %279 = vmatpush1.msra.mxu0 %v278
    %v280 = vand.u32 %v159, 4294901760
    %281 = vmatprep.subr.mxu0 %v280
    %v282 = vand.u32 %v158, 4294901760
    %283 = vmatpush1.msra.mxu0 %v282
    %v284 = vand.u32 %v144, 4294901760
    %285 = vmatprep.subr.mxu0 %v284
    %v286 = vand.u32 %v143, 4294901760
    %287 = vmatpush1.msra.mxu0 %v286
    %v288 = vand.u32 %v129, 4294901760
    %289 = vmatprep.subr.mxu0 %v288
    %v290 = vand.u32 %v128, 4294901760
    %291 = vmatpush1.msra.mxu0 %v290
    %v292 = vand.u32 %v114, 4294901760
    %293 = vmatprep.subr.mxu0 %v292
    %v294 = vand.u32 %v113, 4294901760
    %295 = vmatpush1.msra.mxu0 %v294
    %v296 = vand.u32 %v99, 4294901760
    %297 = vmatprep.subr.mxu0 %v296
    %v298 = vand.u32 %v98, 4294901760
    %299 = vmatpush1.msra.mxu0 %v298
    %v300 = vand.u32 %v84, 4294901760
    %301 = vmatprep.subr.mxu0 %v300
    %v302 = vand.u32 %v83, 4294901760
    %303 = vmatpush1.msra.mxu0 %v302
    %v304 = vand.u32 %v69, 4294901760
    %305 = vmatprep.subr.mxu0 %v304
    %v306 = vand.u32 %v68, 4294901760
    %307 = vmatpush1.msra.mxu0 %v306
    %308 = vmatprep.subr.mxu0 0.0
    %309 = vmatpush2.msra.mxu0 0.0
    %310 = vmatprep.subr.mxu0 0.0
    %311 = vmatpush2.msra.mxu0 0.0
    %312 = vmatprep.subr.mxu0 0.0
    %313 = vmatpush2.msra.mxu0 0.0
    %314 = vmatprep.subr.mxu0 0.0
    %315 = vmatpush2.msra.mxu0 0.0
    %316 = vmatprep.subr.mxu0 0.0
    %317 = vmatpush2.msra.mxu0 0.0
    %318 = vmatprep.subr.mxu0 0.0
    %319 = vmatpush2.msra.mxu0 0.0
    %320 = vmatprep.subr.mxu0 0.0
    %321 = vmatpush2.msra.mxu0 0.0
    %322 = vmatprep.subr.mxu0 0.0
    %323 = vmatpush2.msra.mxu0 0.0
    %324 = vmatprep.subr.mxu0 0.0
    %325 = vmatpush2.msra.mxu0 0.0
    %326 = vmatprep.subr.mxu0 0.0
    %327 = vmatpush2.msra.mxu0 0.0
    %328 = vmatprep.subr.mxu0 0.0
    %329 = vmatpush2.msra.mxu0 0.0
    %330 = vmatprep.subr.mxu0 0.0
    %331 = vmatpush2.msra.mxu0 0.0
    %332 = vmatprep.subr.mxu0 0.0
    %333 = vmatpush2.msra.mxu0 0.0
    %334 = vmatprep.subr.mxu0 0.0
    %335 = vmatpush2.msra.mxu0 0.0
    %336 = vmatprep.subr.mxu0 0.0
    %337 = vmatpush2.msra.mxu0 0.0
    %338 = vmatprep.subr.mxu0 0.0
    %339 = vmatpush2.msra.mxu0 0.0
    %340 = vmatprep.mubr.f32.mxu0 0.0
    %v341 = vand.u32 %v250, 4294901760
    %v342 = vsub.f32 %v250, %v341
    %v343 = vand.u32 %v342, 4294901760
    %v344 = vsub.f32 %v342, %v343
    %v345 = vand.u32 %v344, 4294901760
    %346 = vmatmul.mubr.f32.gmra.mxu0 %v345
    %v347 = vpop.f32.mrf.mxu0
    %v348 = vadd.f32 0.0, %v347
    %v349 = vpop.f32.mrf.mxu0
    %v350 = vadd.f32 0.0, %v349
    %351 = vdwg.mxu0
    %352 = vmatprep.subr.mxu0 0.0
    %353 = vmatpush1.msra.mxu0 0.0
    %354 = vmatprep.subr.mxu0 0.0
    %355 = vmatpush1.msra.mxu0 0.0
    %356 = vmatprep.subr.mxu0 0.0
    %357 = vmatpush1.msra.mxu0 0.0
    %358 = vmatprep.subr.mxu0 0.0
    %359 = vmatpush1.msra.mxu0 0.0
    %v360 = vand.u32 %v234, 4294901760
    %v361 = vsub.f32 %v234, %v360
    %v362 = vand.u32 %v361, 4294901760
    %v363 = vsub.f32 %v361, %v362
    %v364 = vand.u32 %v363, 4294901760
    %365 = vmatprep.subr.mxu0 %v364
    %v366 = vand.u32 %v233, 4294901760
    %v367 = vsub.f32 %v233, %v366
    %v368 = vand.u32 %v367, 4294901760
    %v369 = vsub.f32 %v367, %v368
    %v370 = vand.u32 %v369, 4294901760
    %371 = vmatpush1.msra.mxu0 %v370
    %v372 = vand.u32 %v219, 4294901760
    %v373 = vsub.f32 %v219, %v372
    %v374 = vand.u32 %v373, 4294901760
    %v375 = vsub.f32 %v373, %v374
    %v376 = vand.u32 %v375, 4294901760
    %377 = vmatprep.subr.mxu0 %v376
    %v378 = vand.u32 %v218, 4294901760
    %v379 = vsub.f32 %v218, %v378
    %v380 = vand.u32 %v379, 4294901760
    %v381 = vsub.f32 %v379, %v380
    %v382 = vand.u32 %v381, 4294901760
    %383 = vmatpush1.msra.mxu0 %v382
    %v384 = vand.u32 %v204, 4294901760
    %v385 = vsub.f32 %v204, %v384
    %v386 = vand.u32 %v385, 4294901760
    %v387 = vsub.f32 %v385, %v386
    %v388 = vand.u32 %v387, 4294901760
    %389 = vmatprep.subr.mxu0 %v388
    %v390 = vand.u32 %v203, 4294901760
    %v391 = vsub.f32 %v203, %v390
    %v392 = vand.u32 %v391, 4294901760
    %v393 = vsub.f32 %v391, %v392
    %v394 = vand.u32 %v393, 4294901760
    %395 = vmatpush1.msra.mxu0 %v394
    %v396 = vand.u32 %v189, 4294901760
    %v397 = vsub.f32 %v189, %v396
    %v398 = vand.u32 %v397, 4294901760
    %v399 = vsub.f32 %v397, %v398
    %v400 = vand.u32 %v399, 4294901760
    %401 = vmatprep.subr.mxu0 %v400
    %v402 = vand.u32 %v188, 4294901760
    %v403 = vsub.f32 %v188, %v402
    %v404 = vand.u32 %v403, 4294901760
    %v405 = vsub.f32 %v403, %v404
    %v406 = vand.u32 %v405, 4294901760
    %407 = vmatpush1.msra.mxu0 %v406
    %v408 = vand.u32 %v174, 4294901760
    %v409 = vsub.f32 %v174, %v408
    %v410 = vand.u32 %v409, 4294901760
    %v411 = vsub.f32 %v409, %v410
    %v412 = vand.u32 %v411, 4294901760
    %413 = vmatprep.subr.mxu0 %v412
    %v414 = vand.u32 %v173, 4294901760
    %v415 = vsub.f32 %v173, %v414
    %v416 = vand.u32 %v415, 4294901760
    %v417 = vsub.f32 %v415, %v416
    %v418 = vand.u32 %v417, 4294901760
    %419 = vmatpush1.msra.mxu0 %v418
    %v420 = vand.u32 %v159, 4294901760
    %v421 = vsub.f32 %v159, %v420
    %v422 = vand.u32 %v421, 4294901760
    %v423 = vsub.f32 %v421, %v422
    %v424 = vand.u32 %v423, 4294901760
    %425 = vmatprep.subr.mxu0 %v424
    %v426 = vand.u32 %v158, 4294901760
    %v427 = vsub.f32 %v158, %v426
    %v428 = vand.u32 %v427, 4294901760
    %v429 = vsub.f32 %v427, %v428
    %v430 = vand.u32 %v429, 4294901760
    %431 = vmatpush1.msra.mxu0 %v430
    %v432 = vand.u32 %v144, 4294901760
    %v433 = vsub.f32 %v144, %v432
    %v434 = vand.u32 %v433, 4294901760
    %v435 = vsub.f32 %v433, %v434
    %v436 = vand.u32 %v435, 4294901760
    %437 = vmatprep.subr.mxu0 %v436
    %v438 = vand.u32 %v143, 4294901760
    %v439 = vsub.f32 %v143, %v438
    %v440 = vand.u32 %v439, 4294901760
    %v441 = vsub.f32 %v439, %v440
    %v442 = vand.u32 %v441, 4294901760
    %443 = vmatpush1.msra.mxu0 %v442
    %v444 = vand.u32 %v129, 4294901760
    %v445 = vsub.f32 %v129, %v444
    %v446 = vand.u32 %v445, 4294901760
    %v447 = vsub.f32 %v445, %v446
    %v448 = vand.u32 %v447, 4294901760
    %449 = vmatprep.subr.mxu0 %v448
    %v450 = vand.u32 %v128, 4294901760
    %v451 = vsub.f32 %v128, %v450
    %v452 = vand.u32 %v451, 4294901760
    %v453 = vsub.f32 %v451, %v452
    %v454 = vand.u32 %v453, 4294901760
    %455 = vmatpush1.msra.mxu0 %v454
    %v456 = vand.u32 %v114, 4294901760
    %v457 = vsub.f32 %v114, %v456
    %v458 = vand.u32 %v457, 4294901760
    %v459 = vsub.f32 %v457, %v458
    %v460 = vand.u32 %v459, 4294901760
    %461 = vmatprep.subr.mxu0 %v460
    %v462 = vand.u32 %v113, 4294901760
    %v463 = vsub.f32 %v113, %v462
    %v464 = vand.u32 %v463, 4294901760
    %v465 = vsub.f32 %v463, %v464
    %v466 = vand.u32 %v465, 4294901760
    %467 = vmatpush1.msra.mxu0 %v466
    %v468 = vand.u32 %v99, 4294901760
    %v469 = vsub.f32 %v99, %v468
    %v470 = vand.u32 %v469, 4294901760
    %v471 = vsub.f32 %v469, %v470
    %v472 = vand.u32 %v471, 4294901760
    %473 = vmatprep.subr.mxu0 %v472
    %v474 = vand.u32 %v98, 4294901760
    %v475 = vsub.f32 %v98, %v474
    %v476 = vand.u32 %v475, 4294901760
    %v477 = vsub.f32 %v475, %v476
    %v478 = vand.u32 %v477, 4294901760
    %479 = vmatpush1.msra.mxu0 %v478
    %v480 = vand.u32 %v84, 4294901760
    %v481 = vsub.f32 %v84, %v480
    %v482 = vand.u32 %v481, 4294901760
    %v483 = vsub.f32 %v481, %v482
    %v484 = vand.u32 %v483, 4294901760
    %485 = vmatprep.subr.mxu0 %v484
    %v486 = vand.u32 %v83, 4294901760
    %v487 = vsub.f32 %v83, %v486
    %v488 = vand.u32 %v487, 4294901760
    %v489 = vsub.f32 %v487, %v488
    %v490 = vand.u32 %v489, 4294901760
    %491 = vmatpush1.msra.mxu0 %v490
    %v492 = vand.u32 %v69, 4294901760
    %v493 = vsub.f32 %v69, %v492
    %v494 = vand.u32 %v493, 4294901760
    %v495 = vsub.f32 %v493, %v494
    %v496 = vand.u32 %v495, 4294901760
    %497 = vmatprep.subr.mxu0 %v496
    %v498 = vand.u32 %v68, 4294901760
    %v499 = vsub.f32 %v68, %v498
    %v500 = vand.u32 %v499, 4294901760
    %v501 = vsub.f32 %v499, %v500
    %v502 = vand.u32 %v501, 4294901760
    %503 = vmatpush1.msra.mxu0 %v502
    %504 = vmatprep.subr.mxu0 0.0
    %505 = vmatpush2.msra.mxu0 0.0
    %506 = vmatprep.subr.mxu0 0.0
    %507 = vmatpush2.msra.mxu0 0.0
    %508 = vmatprep.subr.mxu0 0.0
    %509 = vmatpush2.msra.mxu0 0.0
    %510 = vmatprep.subr.mxu0 0.0
    %511 = vmatpush2.msra.mxu0 0.0
    %512 = vmatprep.subr.mxu0 0.0
    %513 = vmatpush2.msra.mxu0 0.0
    %514 = vmatprep.subr.mxu0 0.0
    %515 = vmatpush2.msra.mxu0 0.0
    %516 = vmatprep.subr.mxu0 0.0
    %517 = vmatpush2.msra.mxu0 0.0
    %518 = vmatprep.subr.mxu0 0.0
    %519 = vmatpush2.msra.mxu0 0.0
    %520 = vmatprep.subr.mxu0 0.0
    %521 = vmatpush2.msra.mxu0 0.0
    %522 = vmatprep.subr.mxu0 0.0
    %523 = vmatpush2.msra.mxu0 0.0
    %524 = vmatprep.subr.mxu0 0.0
    %525 = vmatpush2.msra.mxu0 0.0
    %526 = vmatprep.subr.mxu0 0.0
    %527 = vmatpush2.msra.mxu0 0.0
    %528 = vmatprep.subr.mxu0 0.0
    %529 = vmatpush2.msra.mxu0 0.0
    %530 = vmatprep.subr.mxu0 0.0
    %531 = vmatpush2.msra.mxu0 0.0
    %532 = vmatprep.subr.mxu0 0.0
    %533 = vmatpush2.msra.mxu0 0.0
    %534 = vmatprep.subr.mxu0 0.0
    %535 = vmatpush2.msra.mxu0 0.0
    %536 = vmatprep.mubr.f32.mxu0 0.0
    %v537 = vand.u32 %v250, 4294901760
    %538 = vmatmul.mubr.f32.gmra.mxu0 %v537
    %v539 = vpop.f32.mrf.mxu0
    %v540 = vadd.f32 %v348, %v539
    %v541 = vpop.f32.mrf.mxu0
    %v542 = vadd.f32 %v350, %v541
    %543 = vdwg.mxu0
    %544 = vmatprep.subr.mxu0 0.0
    %545 = vmatpush1.msra.mxu0 0.0
    %546 = vmatprep.subr.mxu0 0.0
    %547 = vmatpush1.msra.mxu0 0.0
    %548 = vmatprep.subr.mxu0 0.0
    %549 = vmatpush1.msra.mxu0 0.0
    %550 = vmatprep.subr.mxu0 0.0
    %551 = vmatpush1.msra.mxu0 0.0
    %v552 = vand.u32 %v234, 4294901760
    %v553 = vsub.f32 %v234, %v552
    %554 = vmatprep.subr.mxu0 %v553
    %v555 = vand.u32 %v233, 4294901760
    %v556 = vsub.f32 %v233, %v555
    %557 = vmatpush1.msra.mxu0 %v556
    %v558 = vand.u32 %v219, 4294901760
    %v559 = vsub.f32 %v219, %v558
    %560 = vmatprep.subr.mxu0 %v559
    %v561 = vand.u32 %v218, 4294901760
    %v562 = vsub.f32 %v218, %v561
    %563 = vmatpush1.msra.mxu0 %v562
    %v564 = vand.u32 %v204, 4294901760
    %v565 = vsub.f32 %v204, %v564
    %566 = vmatprep.subr.mxu0 %v565
    %v567 = vand.u32 %v203, 4294901760
    %v568 = vsub.f32 %v203, %v567
    %569 = vmatpush1.msra.mxu0 %v568
    %v570 = vand.u32 %v189, 4294901760
    %v571 = vsub.f32 %v189, %v570
    %572 = vmatprep.subr.mxu0 %v571
    %v573 = vand.u32 %v188, 4294901760
    %v574 = vsub.f32 %v188, %v573
    %575 = vmatpush1.msra.mxu0 %v574
    %v576 = vand.u32 %v174, 4294901760
    %v577 = vsub.f32 %v174, %v576
    %578 = vmatprep.subr.mxu0 %v577
    %v579 = vand.u32 %v173, 4294901760
    %v580 = vsub.f32 %v173, %v579
    %581 = vmatpush1.msra.mxu0 %v580
    %v582 = vand.u32 %v159, 4294901760
    %v583 = vsub.f32 %v159, %v582
    %584 = vmatprep.subr.mxu0 %v583
    %v585 = vand.u32 %v158, 4294901760
    %v586 = vsub.f32 %v158, %v585
    %587 = vmatpush1.msra.mxu0 %v586
    %v588 = vand.u32 %v144, 4294901760
    %v589 = vsub.f32 %v144, %v588
    %590 = vmatprep.subr.mxu0 %v589
    %v591 = vand.u32 %v143, 4294901760
    %v592 = vsub.f32 %v143, %v591
    %593 = vmatpush1.msra.mxu0 %v592
    %v594 = vand.u32 %v129, 4294901760
    %v595 = vsub.f32 %v129, %v594
    %596 = vmatprep.subr.mxu0 %v595
    %v597 = vand.u32 %v128, 4294901760
    %v598 = vsub.f32 %v128, %v597
    %599 = vmatpush1.msra.mxu0 %v598
    %v600 = vand.u32 %v114, 4294901760
    %v601 = vsub.f32 %v114, %v600
    %602 = vmatprep.subr.mxu0 %v601
    %v603 = vand.u32 %v113, 4294901760
    %v604 = vsub.f32 %v113, %v603
    %605 = vmatpush1.msra.mxu0 %v604
    %v606 = vand.u32 %v99, 4294901760
    %v607 = vsub.f32 %v99, %v606
    %608 = vmatprep.subr.mxu0 %v607
    %v609 = vand.u32 %v98, 4294901760
    %v610 = vsub.f32 %v98, %v609
    %611 = vmatpush1.msra.mxu0 %v610
    %v612 = vand.u32 %v84, 4294901760
    %v613 = vsub.f32 %v84, %v612
    %614 = vmatprep.subr.mxu0 %v613
    %v615 = vand.u32 %v83, 4294901760
    %v616 = vsub.f32 %v83, %v615
    %617 = vmatpush1.msra.mxu0 %v616
    %v618 = vand.u32 %v69, 4294901760
    %v619 = vsub.f32 %v69, %v618
    %620 = vmatprep.subr.mxu0 %v619
    %v621 = vand.u32 %v68, 4294901760
    %v622 = vsub.f32 %v68, %v621
    %623 = vmatpush1.msra.mxu0 %v622
    %624 = vmatprep.subr.mxu0 0.0
    %625 = vmatpush2.msra.mxu0 0.0
    %626 = vmatprep.subr.mxu0 0.0
    %627 = vmatpush2.msra.mxu0 0.0
    %628 = vmatprep.subr.mxu0 0.0
    %629 = vmatpush2.msra.mxu0 0.0
    %630 = vmatprep.subr.mxu0 0.0
    %631 = vmatpush2.msra.mxu0 0.0
    %632 = vmatprep.subr.mxu0 0.0
    %633 = vmatpush2.msra.mxu0 0.0
    %634 = vmatprep.subr.mxu0 0.0
    %635 = vmatpush2.msra.mxu0 0.0
    %636 = vmatprep.subr.mxu0 0.0
    %637 = vmatpush2.msra.mxu0 0.0
    %638 = vmatprep.subr.mxu0 0.0
    %639 = vmatpush2.msra.mxu0 0.0
    %640 = vmatprep.subr.mxu0 0.0
    %641 = vmatpush2.msra.mxu0 0.0
    %642 = vmatprep.subr.mxu0 0.0
    %643 = vmatpush2.msra.mxu0 0.0
    %644 = vmatprep.subr.mxu0 0.0
    %645 = vmatpush2.msra.mxu0 0.0
    %646 = vmatprep.subr.mxu0 0.0
    %647 = vmatpush2.msra.mxu0 0.0
    %648 = vmatprep.subr.mxu0 0.0
    %649 = vmatpush2.msra.mxu0 0.0
    %650 = vmatprep.subr.mxu0 0.0
    %651 = vmatpush2.msra.mxu0 0.0
    %652 = vmatprep.subr.mxu0 0.0
    %653 = vmatpush2.msra.mxu0 0.0
    %654 = vmatprep.subr.mxu0 0.0
    %655 = vmatpush2.msra.mxu0 0.0
    %656 = vmatprep.mubr.f32.mxu0 0.0
    %v657 = vand.u32 %v250, 4294901760
    %v658 = vsub.f32 %v250, %v657
    %659 = vmatmul.mubr.f32.gmra.mxu0 %v658
    %v660 = vpop.f32.mrf.mxu0
    %v661 = vadd.f32 %v540, %v660
    %v662 = vpop.f32.mrf.mxu0
    %v663 = vadd.f32 %v542, %v662
    %664 = vdwg.mxu0
    %665 = vmatprep.subr.mxu0 0.0
    %666 = vmatpush1.msra.mxu0 0.0
    %667 = vmatprep.subr.mxu0 0.0
    %668 = vmatpush1.msra.mxu0 0.0
    %669 = vmatprep.subr.mxu0 0.0
    %670 = vmatpush1.msra.mxu0 0.0
    %671 = vmatprep.subr.mxu0 0.0
    %672 = vmatpush1.msra.mxu0 0.0
    %v673 = vand.u32 %v234, 4294901760
    %674 = vmatprep.subr.mxu0 %v673
    %v675 = vand.u32 %v233, 4294901760
    %676 = vmatpush1.msra.mxu0 %v675
    %v677 = vand.u32 %v219, 4294901760
    %678 = vmatprep.subr.mxu0 %v677
    %v679 = vand.u32 %v218, 4294901760
    %680 = vmatpush1.msra.mxu0 %v679
    %v681 = vand.u32 %v204, 4294901760
    %682 = vmatprep.subr.mxu0 %v681
    %v683 = vand.u32 %v203, 4294901760
    %684 = vmatpush1.msra.mxu0 %v683
    %v685 = vand.u32 %v189, 4294901760
    %686 = vmatprep.subr.mxu0 %v685
    %v687 = vand.u32 %v188, 4294901760
    %688 = vmatpush1.msra.mxu0 %v687
    %v689 = vand.u32 %v174, 4294901760
    %690 = vmatprep.subr.mxu0 %v689
    %v691 = vand.u32 %v173, 4294901760
    %692 = vmatpush1.msra.mxu0 %v691
    %v693 = vand.u32 %v159, 4294901760
    %694 = vmatprep.subr.mxu0 %v693
    %v695 = vand.u32 %v158, 4294901760
    %696 = vmatpush1.msra.mxu0 %v695
    %v697 = vand.u32 %v144, 4294901760
    %698 = vmatprep.subr.mxu0 %v697
    %v699 = vand.u32 %v143, 4294901760
    %700 = vmatpush1.msra.mxu0 %v699
    %v701 = vand.u32 %v129, 4294901760
    %702 = vmatprep.subr.mxu0 %v701
    %v703 = vand.u32 %v128, 4294901760
    %704 = vmatpush1.msra.mxu0 %v703
    %v705 = vand.u32 %v114, 4294901760
    %706 = vmatprep.subr.mxu0 %v705
    %v707 = vand.u32 %v113, 4294901760
    %708 = vmatpush1.msra.mxu0 %v707
    %v709 = vand.u32 %v99, 4294901760
    %710 = vmatprep.subr.mxu0 %v709
    %v711 = vand.u32 %v98, 4294901760
    %712 = vmatpush1.msra.mxu0 %v711
    %v713 = vand.u32 %v84, 4294901760
    %714 = vmatprep.subr.mxu0 %v713
    %v715 = vand.u32 %v83, 4294901760
    %716 = vmatpush1.msra.mxu0 %v715
    %v717 = vand.u32 %v69, 4294901760
    %718 = vmatprep.subr.mxu0 %v717
    %v719 = vand.u32 %v68, 4294901760
    %720 = vmatpush1.msra.mxu0 %v719
    %721 = vmatprep.subr.mxu0 0.0
    %722 = vmatpush2.msra.mxu0 0.0
    %723 = vmatprep.subr.mxu0 0.0
    %724 = vmatpush2.msra.mxu0 0.0
    %725 = vmatprep.subr.mxu0 0.0
    %726 = vmatpush2.msra.mxu0 0.0
    %727 = vmatprep.subr.mxu0 0.0
    %728 = vmatpush2.msra.mxu0 0.0
    %729 = vmatprep.subr.mxu0 0.0
    %730 = vmatpush2.msra.mxu0 0.0
    %731 = vmatprep.subr.mxu0 0.0
    %732 = vmatpush2.msra.mxu0 0.0
    %733 = vmatprep.subr.mxu0 0.0
    %734 = vmatpush2.msra.mxu0 0.0
    %735 = vmatprep.subr.mxu0 0.0
    %736 = vmatpush2.msra.mxu0 0.0
    %737 = vmatprep.subr.mxu0 0.0
    %738 = vmatpush2.msra.mxu0 0.0
    %739 = vmatprep.subr.mxu0 0.0
    %740 = vmatpush2.msra.mxu0 0.0
    %741 = vmatprep.subr.mxu0 0.0
    %742 = vmatpush2.msra.mxu0 0.0
    %743 = vmatprep.subr.mxu0 0.0
    %744 = vmatpush2.msra.mxu0 0.0
    %745 = vmatprep.subr.mxu0 0.0
    %746 = vmatpush2.msra.mxu0 0.0
    %747 = vmatprep.subr.mxu0 0.0
    %748 = vmatpush2.msra.mxu0 0.0
    %749 = vmatprep.subr.mxu0 0.0
    %750 = vmatpush2.msra.mxu0 0.0
    %751 = vmatprep.subr.mxu0 0.0
    %752 = vmatpush2.msra.mxu0 0.0
    %753 = vmatprep.mubr.f32.mxu0 0.0
    %v754 = vand.u32 %v250, 4294901760
    %v755 = vsub.f32 %v250, %v754
    %v756 = vand.u32 %v755, 4294901760
    %757 = vmatmul.mubr.f32.gmra.mxu0 %v756
    %v758 = vpop.f32.mrf.mxu0
    %v759 = vadd.f32 %v661, %v758
    %v760 = vpop.f32.mrf.mxu0
    %v761 = vadd.f32 %v663, %v760
    %762 = vdwg.mxu0
    %763 = vmatprep.subr.mxu0 0.0
    %764 = vmatpush1.msra.mxu0 0.0
    %765 = vmatprep.subr.mxu0 0.0
    %766 = vmatpush1.msra.mxu0 0.0
    %767 = vmatprep.subr.mxu0 0.0
    %768 = vmatpush1.msra.mxu0 0.0
    %769 = vmatprep.subr.mxu0 0.0
    %770 = vmatpush1.msra.mxu0 0.0
    %v771 = vand.u32 %v234, 4294901760
    %v772 = vsub.f32 %v234, %v771
    %v773 = vand.u32 %v772, 4294901760
    %774 = vmatprep.subr.mxu0 %v773
    %v775 = vand.u32 %v233, 4294901760
    %v776 = vsub.f32 %v233, %v775
    %v777 = vand.u32 %v776, 4294901760
    %778 = vmatpush1.msra.mxu0 %v777
    %v779 = vand.u32 %v219, 4294901760
    %v780 = vsub.f32 %v219, %v779
    %v781 = vand.u32 %v780, 4294901760
    %782 = vmatprep.subr.mxu0 %v781
    %v783 = vand.u32 %v218, 4294901760
    %v784 = vsub.f32 %v218, %v783
    %v785 = vand.u32 %v784, 4294901760
    %786 = vmatpush1.msra.mxu0 %v785
    %v787 = vand.u32 %v204, 4294901760
    %v788 = vsub.f32 %v204, %v787
    %v789 = vand.u32 %v788, 4294901760
    %790 = vmatprep.subr.mxu0 %v789
    %v791 = vand.u32 %v203, 4294901760
    %v792 = vsub.f32 %v203, %v791
    %v793 = vand.u32 %v792, 4294901760
    %794 = vmatpush1.msra.mxu0 %v793
    %v795 = vand.u32 %v189, 4294901760
    %v796 = vsub.f32 %v189, %v795
    %v797 = vand.u32 %v796, 4294901760
    %798 = vmatprep.subr.mxu0 %v797
    %v799 = vand.u32 %v188, 4294901760
    %v800 = vsub.f32 %v188, %v799
    %v801 = vand.u32 %v800, 4294901760
    %802 = vmatpush1.msra.mxu0 %v801
    %v803 = vand.u32 %v174, 4294901760
    %v804 = vsub.f32 %v174, %v803
    %v805 = vand.u32 %v804, 4294901760
    %806 = vmatprep.subr.mxu0 %v805
    %v807 = vand.u32 %v173, 4294901760
    %v808 = vsub.f32 %v173, %v807
    %v809 = vand.u32 %v808, 4294901760
    %810 = vmatpush1.msra.mxu0 %v809
    %v811 = vand.u32 %v159, 4294901760
    %v812 = vsub.f32 %v159, %v811
    %v813 = vand.u32 %v812, 4294901760
    %814 = vmatprep.subr.mxu0 %v813
    %v815 = vand.u32 %v158, 4294901760
    %v816 = vsub.f32 %v158, %v815
    %v817 = vand.u32 %v816, 4294901760
    %818 = vmatpush1.msra.mxu0 %v817
    %v819 = vand.u32 %v144, 4294901760
    %v820 = vsub.f32 %v144, %v819
    %v821 = vand.u32 %v820, 4294901760
    %822 = vmatprep.subr.mxu0 %v821
    %v823 = vand.u32 %v143, 4294901760
    %v824 = vsub.f32 %v143, %v823
    %v825 = vand.u32 %v824, 4294901760
    %826 = vmatpush1.msra.mxu0 %v825
    %v827 = vand.u32 %v129, 4294901760
    %v828 = vsub.f32 %v129, %v827
    %v829 = vand.u32 %v828, 4294901760
    %830 = vmatprep.subr.mxu0 %v829
    %v831 = vand.u32 %v128, 4294901760
    %v832 = vsub.f32 %v128, %v831
    %v833 = vand.u32 %v832, 4294901760
    %834 = vmatpush1.msra.mxu0 %v833
    %v835 = vand.u32 %v114, 4294901760
    %v836 = vsub.f32 %v114, %v835
    %v837 = vand.u32 %v836, 4294901760
    %838 = vmatprep.subr.mxu0 %v837
    %v839 = vand.u32 %v113, 4294901760
    %v840 = vsub.f32 %v113, %v839
    %v841 = vand.u32 %v840, 4294901760
    %842 = vmatpush1.msra.mxu0 %v841
    %v843 = vand.u32 %v99, 4294901760
    %v844 = vsub.f32 %v99, %v843
    %v845 = vand.u32 %v844, 4294901760
    %846 = vmatprep.subr.mxu0 %v845
    %v847 = vand.u32 %v98, 4294901760
    %v848 = vsub.f32 %v98, %v847
    %v849 = vand.u32 %v848, 4294901760
    %850 = vmatpush1.msra.mxu0 %v849
    %v851 = vand.u32 %v84, 4294901760
    %v852 = vsub.f32 %v84, %v851
    %v853 = vand.u32 %v852, 4294901760
    %854 = vmatprep.subr.mxu0 %v853
    %v855 = vand.u32 %v83, 4294901760
    %v856 = vsub.f32 %v83, %v855
    %v857 = vand.u32 %v856, 4294901760
    %858 = vmatpush1.msra.mxu0 %v857
    %v859 = vand.u32 %v69, 4294901760
    %v860 = vsub.f32 %v69, %v859
    %v861 = vand.u32 %v860, 4294901760
    %862 = vmatprep.subr.mxu0 %v861
    %v863 = vand.u32 %v68, 4294901760
    %v864 = vsub.f32 %v68, %v863
    %v865 = vand.u32 %v864, 4294901760
    %866 = vmatpush1.msra.mxu0 %v865
    %867 = vmatprep.subr.mxu0 0.0
    %868 = vmatpush2.msra.mxu0 0.0
    %869 = vmatprep.subr.mxu0 0.0
    %870 = vmatpush2.msra.mxu0 0.0
    %871 = vmatprep.subr.mxu0 0.0
    %872 = vmatpush2.msra.mxu0 0.0
    %873 = vmatprep.subr.mxu0 0.0
    %874 = vmatpush2.msra.mxu0 0.0
    %875 = vmatprep.subr.mxu0 0.0
    %876 = vmatpush2.msra.mxu0 0.0
    %877 = vmatprep.subr.mxu0 0.0
    %878 = vmatpush2.msra.mxu0 0.0
    %879 = vmatprep.subr.mxu0 0.0
    %880 = vmatpush2.msra.mxu0 0.0
    %881 = vmatprep.subr.mxu0 0.0
    %882 = vmatpush2.msra.mxu0 0.0
    %883 = vmatprep.subr.mxu0 0.0
    %884 = vmatpush2.msra.mxu0 0.0
    %885 = vmatprep.subr.mxu0 0.0
    %886 = vmatpush2.msra.mxu0 0.0
    %887 = vmatprep.subr.mxu0 0.0
    %888 = vmatpush2.msra.mxu0 0.0
    %889 = vmatprep.subr.mxu0 0.0
    %890 = vmatpush2.msra.mxu0 0.0
    %891 = vmatprep.subr.mxu0 0.0
    %892 = vmatpush2.msra.mxu0 0.0
    %893 = vmatprep.subr.mxu0 0.0
    %894 = vmatpush2.msra.mxu0 0.0
    %895 = vmatprep.subr.mxu0 0.0
    %896 = vmatpush2.msra.mxu0 0.0
    %897 = vmatprep.subr.mxu0 0.0
    %898 = vmatpush2.msra.mxu0 0.0
    %899 = vmatprep.mubr.f32.mxu0 0.0
    %v900 = vand.u32 %v250, 4294901760
    %901 = vmatmul.mubr.f32.gmra.mxu0 %v900
    %v902 = vpop.f32.mrf.mxu0
    %v903 = vadd.f32 %v759, %v902
    %v904 = vpop.f32.mrf.mxu0
    %v905 = vadd.f32 %v761, %v904
    %906 = vdwg.mxu0
    %907 = vmatprep.subr.mxu0 0.0
    %908 = vmatpush1.msra.mxu0 0.0
    %909 = vmatprep.subr.mxu0 0.0
    %910 = vmatpush1.msra.mxu0 0.0
    %911 = vmatprep.subr.mxu0 0.0
    %912 = vmatpush1.msra.mxu0 0.0
    %913 = vmatprep.subr.mxu0 0.0
    %914 = vmatpush1.msra.mxu0 0.0
    %v915 = vand.u32 %v234, 4294901760
    %916 = vmatprep.subr.mxu0 %v915
    %v917 = vand.u32 %v233, 4294901760
    %918 = vmatpush1.msra.mxu0 %v917
    %v919 = vand.u32 %v219, 4294901760
    %920 = vmatprep.subr.mxu0 %v919
    %v921 = vand.u32 %v218, 4294901760
    %922 = vmatpush1.msra.mxu0 %v921
    %v923 = vand.u32 %v204, 4294901760
    %924 = vmatprep.subr.mxu0 %v923
    %v925 = vand.u32 %v203, 4294901760
    %926 = vmatpush1.msra.mxu0 %v925
    %v927 = vand.u32 %v189, 4294901760
    %928 = vmatprep.subr.mxu0 %v927
    %v929 = vand.u32 %v188, 4294901760
    %930 = vmatpush1.msra.mxu0 %v929
    %v931 = vand.u32 %v174, 4294901760
    %932 = vmatprep.subr.mxu0 %v931
    %v933 = vand.u32 %v173, 4294901760
    %934 = vmatpush1.msra.mxu0 %v933
    %v935 = vand.u32 %v159, 4294901760
    %936 = vmatprep.subr.mxu0 %v935
    %v937 = vand.u32 %v158, 4294901760
    %938 = vmatpush1.msra.mxu0 %v937
    %v939 = vand.u32 %v144, 4294901760
    %940 = vmatprep.subr.mxu0 %v939
    %v941 = vand.u32 %v143, 4294901760
    %942 = vmatpush1.msra.mxu0 %v941
    %v943 = vand.u32 %v129, 4294901760
    %944 = vmatprep.subr.mxu0 %v943
    %v945 = vand.u32 %v128, 4294901760
    %946 = vmatpush1.msra.mxu0 %v945
    %v947 = vand.u32 %v114, 4294901760
    %948 = vmatprep.subr.mxu0 %v947
    %v949 = vand.u32 %v113, 4294901760
    %950 = vmatpush1.msra.mxu0 %v949
    %v951 = vand.u32 %v99, 4294901760
    %952 = vmatprep.subr.mxu0 %v951
    %v953 = vand.u32 %v98, 4294901760
    %954 = vmatpush1.msra.mxu0 %v953
    %v955 = vand.u32 %v84, 4294901760
    %956 = vmatprep.subr.mxu0 %v955
    %v957 = vand.u32 %v83, 4294901760
    %958 = vmatpush1.msra.mxu0 %v957
    %v959 = vand.u32 %v69, 4294901760
    %960 = vmatprep.subr.mxu0 %v959
    %v961 = vand.u32 %v68, 4294901760
    %962 = vmatpush1.msra.mxu0 %v961
    %963 = vmatprep.subr.mxu0 0.0
    %964 = vmatpush2.msra.mxu0 0.0
    %965 = vmatprep.subr.mxu0 0.0
    %966 = vmatpush2.msra.mxu0 0.0
    %967 = vmatprep.subr.mxu0 0.0
    %968 = vmatpush2.msra.mxu0 0.0
    %969 = vmatprep.subr.mxu0 0.0
    %970 = vmatpush2.msra.mxu0 0.0
    %971 = vmatprep.subr.mxu0 0.0
    %972 = vmatpush2.msra.mxu0 0.0
    %973 = vmatprep.subr.mxu0 0.0
    %974 = vmatpush2.msra.mxu0 0.0
    %975 = vmatprep.subr.mxu0 0.0
    %976 = vmatpush2.msra.mxu0 0.0
    %977 = vmatprep.subr.mxu0 0.0
    %978 = vmatpush2.msra.mxu0 0.0
    %979 = vmatprep.subr.mxu0 0.0
    %980 = vmatpush2.msra.mxu0 0.0
    %981 = vmatprep.subr.mxu0 0.0
    %982 = vmatpush2.msra.mxu0 0.0
    %983 = vmatprep.subr.mxu0 0.0
    %984 = vmatpush2.msra.mxu0 0.0
    %985 = vmatprep.subr.mxu0 0.0
    %986 = vmatpush2.msra.mxu0 0.0
    %987 = vmatprep.subr.mxu0 0.0
    %988 = vmatpush2.msra.mxu0 0.0
    %989 = vmatprep.subr.mxu0 0.0
    %990 = vmatpush2.msra.mxu0 0.0
    %991 = vmatprep.subr.mxu0 0.0
    %992 = vmatpush2.msra.mxu0 0.0
    %993 = vmatprep.subr.mxu0 0.0
    %994 = vmatpush2.msra.mxu0 0.0
    %995 = vmatprep.mubr.f32.mxu0 0.0
    %v996 = vand.u32 %v250, 4294901760
    %997 = vmatmul.mubr.f32.gmra.mxu0 %v996
    %v998 = vpop.f32.mrf.mxu0
    %v999 = vadd.f32 %v903, %v998
    %v1000 = vpop.f32.mrf.mxu0
    %v1001 = vadd.f32 %v905, %v1000
    %1002 = vdwg.mxu0
    %1003 = vmatprep.subr.mxu0 0.0
    %1004 = vmatpush1.msra.mxu0 0.0
    %1005 = vmatprep.subr.mxu0 0.0
    %1006 = vmatpush1.msra.mxu0 0.0
    %1007 = vmatprep.subr.mxu0 0.0
    %1008 = vmatpush1.msra.mxu0 0.0
    %1009 = vmatprep.subr.mxu0 0.0
    %1010 = vmatpush1.msra.mxu0 0.0
    %v1011 = vand.u32 %v236, 4294901760
    %1012 = vmatprep.subr.mxu0 %v1011
    %v1013 = vand.u32 %v235, 4294901760
    %1014 = vmatpush1.msra.mxu0 %v1013
    %v1015 = vand.u32 %v221, 4294901760
    %1016 = vmatprep.subr.mxu0 %v1015
    %v1017 = vand.u32 %v220, 4294901760
    %1018 = vmatpush1.msra.mxu0 %v1017
    %v1019 = vand.u32 %v206, 4294901760
    %1020 = vmatprep.subr.mxu0 %v1019
    %v1021 = vand.u32 %v205, 4294901760
    %1022 = vmatpush1.msra.mxu0 %v1021
    %v1023 = vand.u32 %v191, 4294901760
    %1024 = vmatprep.subr.mxu0 %v1023
    %v1025 = vand.u32 %v190, 4294901760
    %1026 = vmatpush1.msra.mxu0 %v1025
    %v1027 = vand.u32 %v176, 4294901760
    %1028 = vmatprep.subr.mxu0 %v1027
    %v1029 = vand.u32 %v175, 4294901760
    %1030 = vmatpush1.msra.mxu0 %v1029
    %v1031 = vand.u32 %v161, 4294901760
    %1032 = vmatprep.subr.mxu0 %v1031
    %v1033 = vand.u32 %v160, 4294901760
    %1034 = vmatpush1.msra.mxu0 %v1033
    %v1035 = vand.u32 %v146, 4294901760
    %1036 = vmatprep.subr.mxu0 %v1035
    %v1037 = vand.u32 %v145, 4294901760
    %1038 = vmatpush1.msra.mxu0 %v1037
    %v1039 = vand.u32 %v131, 4294901760
    %1040 = vmatprep.subr.mxu0 %v1039
    %v1041 = vand.u32 %v130, 4294901760
    %1042 = vmatpush1.msra.mxu0 %v1041
    %v1043 = vand.u32 %v116, 4294901760
    %1044 = vmatprep.subr.mxu0 %v1043
    %v1045 = vand.u32 %v115, 4294901760
    %1046 = vmatpush1.msra.mxu0 %v1045
    %v1047 = vand.u32 %v101, 4294901760
    %1048 = vmatprep.subr.mxu0 %v1047
    %v1049 = vand.u32 %v100, 4294901760
    %1050 = vmatpush1.msra.mxu0 %v1049
    %v1051 = vand.u32 %v86, 4294901760
    %1052 = vmatprep.subr.mxu0 %v1051
    %v1053 = vand.u32 %v85, 4294901760
    %1054 = vmatpush1.msra.mxu0 %v1053
    %v1055 = vand.u32 %v71, 4294901760
    %1056 = vmatprep.subr.mxu0 %v1055
    %v1057 = vand.u32 %v70, 4294901760
    %1058 = vmatpush1.msra.mxu0 %v1057
    %1059 = vmatprep.subr.mxu0 0.0
    %1060 = vmatpush2.msra.mxu0 0.0
    %1061 = vmatprep.subr.mxu0 0.0
    %1062 = vmatpush2.msra.mxu0 0.0
    %1063 = vmatprep.subr.mxu0 0.0
    %1064 = vmatpush2.msra.mxu0 0.0
    %1065 = vmatprep.subr.mxu0 0.0
    %1066 = vmatpush2.msra.mxu0 0.0
    %1067 = vmatprep.subr.mxu0 0.0
    %1068 = vmatpush2.msra.mxu0 0.0
    %1069 = vmatprep.subr.mxu0 0.0
    %1070 = vmatpush2.msra.mxu0 0.0
    %1071 = vmatprep.subr.mxu0 0.0
    %1072 = vmatpush2.msra.mxu0 0.0
    %1073 = vmatprep.subr.mxu0 0.0
    %1074 = vmatpush2.msra.mxu0 0.0
    %1075 = vmatprep.subr.mxu0 0.0
    %1076 = vmatpush2.msra.mxu0 0.0
    %1077 = vmatprep.subr.mxu0 0.0
    %1078 = vmatpush2.msra.mxu0 0.0
    %1079 = vmatprep.subr.mxu0 0.0
    %1080 = vmatpush2.msra.mxu0 0.0
    %1081 = vmatprep.subr.mxu0 0.0
    %1082 = vmatpush2.msra.mxu0 0.0
    %1083 = vmatprep.subr.mxu0 0.0
    %1084 = vmatpush2.msra.mxu0 0.0
    %1085 = vmatprep.subr.mxu0 0.0
    %1086 = vmatpush2.msra.mxu0 0.0
    %1087 = vmatprep.subr.mxu0 0.0
    %1088 = vmatpush2.msra.mxu0 0.0
    %1089 = vmatprep.subr.mxu0 0.0
    %1090 = vmatpush2.msra.mxu0 0.0
    %1091 = vmatprep.mubr.f32.mxu0 0.0
    %v1092 = vand.u32 %v250, 4294901760
    %v1093 = vsub.f32 %v250, %v1092
    %v1094 = vand.u32 %v1093, 4294901760
    %v1095 = vsub.f32 %v1093, %v1094
    %v1096 = vand.u32 %v1095, 4294901760
    %1097 = vmatmul.mubr.f32.gmra.mxu0 %v1096
    %v1098 = vpop.f32.mrf.mxu0
    %v1099 = vadd.f32 0.0, %v1098
    %v1100 = vpop.f32.mrf.mxu0
    %v1101 = vadd.f32 0.0, %v1100
    %1102 = vdwg.mxu0
    %1103 = vmatprep.subr.mxu0 0.0
    %1104 = vmatpush1.msra.mxu0 0.0
    %1105 = vmatprep.subr.mxu0 0.0
    %1106 = vmatpush1.msra.mxu0 0.0
    %1107 = vmatprep.subr.mxu0 0.0
    %1108 = vmatpush1.msra.mxu0 0.0
    %1109 = vmatprep.subr.mxu0 0.0
    %1110 = vmatpush1.msra.mxu0 0.0
    %v1111 = vand.u32 %v236, 4294901760
    %v1112 = vsub.f32 %v236, %v1111
    %v1113 = vand.u32 %v1112, 4294901760
    %v1114 = vsub.f32 %v1112, %v1113
    %v1115 = vand.u32 %v1114, 4294901760
    %1116 = vmatprep.subr.mxu0 %v1115
    %v1117 = vand.u32 %v235, 4294901760
    %v1118 = vsub.f32 %v235, %v1117
    %v1119 = vand.u32 %v1118, 4294901760
    %v1120 = vsub.f32 %v1118, %v1119
    %v1121 = vand.u32 %v1120, 4294901760
    %1122 = vmatpush1.msra.mxu0 %v1121
    %v1123 = vand.u32 %v221, 4294901760
    %v1124 = vsub.f32 %v221, %v1123
    %v1125 = vand.u32 %v1124, 4294901760
    %v1126 = vsub.f32 %v1124, %v1125
    %v1127 = vand.u32 %v1126, 4294901760
    %1128 = vmatprep.subr.mxu0 %v1127
    %v1129 = vand.u32 %v220, 4294901760
    %v1130 = vsub.f32 %v220, %v1129
    %v1131 = vand.u32 %v1130, 4294901760
    %v1132 = vsub.f32 %v1130, %v1131
    %v1133 = vand.u32 %v1132, 4294901760
    %1134 = vmatpush1.msra.mxu0 %v1133
    %v1135 = vand.u32 %v206, 4294901760
    %v1136 = vsub.f32 %v206, %v1135
    %v1137 = vand.u32 %v1136, 4294901760
    %v1138 = vsub.f32 %v1136, %v1137
    %v1139 = vand.u32 %v1138, 4294901760
    %1140 = vmatprep.subr.mxu0 %v1139
    %v1141 = vand.u32 %v205, 4294901760
    %v1142 = vsub.f32 %v205, %v1141
    %v1143 = vand.u32 %v1142, 4294901760
    %v1144 = vsub.f32 %v1142, %v1143
    %v1145 = vand.u32 %v1144, 4294901760
    %1146 = vmatpush1.msra.mxu0 %v1145
    %v1147 = vand.u32 %v191, 4294901760
    %v1148 = vsub.f32 %v191, %v1147
    %v1149 = vand.u32 %v1148, 4294901760
    %v1150 = vsub.f32 %v1148, %v1149
    %v1151 = vand.u32 %v1150, 4294901760
    %1152 = vmatprep.subr.mxu0 %v1151
    %v1153 = vand.u32 %v190, 4294901760
    %v1154 = vsub.f32 %v190, %v1153
    %v1155 = vand.u32 %v1154, 4294901760
    %v1156 = vsub.f32 %v1154, %v1155
    %v1157 = vand.u32 %v1156, 4294901760
    %1158 = vmatpush1.msra.mxu0 %v1157
    %v1159 = vand.u32 %v176, 4294901760
    %v1160 = vsub.f32 %v176, %v1159
    %v1161 = vand.u32 %v1160, 4294901760
    %v1162 = vsub.f32 %v1160, %v1161
    %v1163 = vand.u32 %v1162, 4294901760
    %1164 = vmatprep.subr.mxu0 %v1163
    %v1165 = vand.u32 %v175, 4294901760
    %v1166 = vsub.f32 %v175, %v1165
    %v1167 = vand.u32 %v1166, 4294901760
    %v1168 = vsub.f32 %v1166, %v1167
    %v1169 = vand.u32 %v1168, 4294901760
    %1170 = vmatpush1.msra.mxu0 %v1169
    %v1171 = vand.u32 %v161, 4294901760
    %v1172 = vsub.f32 %v161, %v1171
    %v1173 = vand.u32 %v1172, 4294901760
    %v1174 = vsub.f32 %v1172, %v1173
    %v1175 = vand.u32 %v1174, 4294901760
    %1176 = vmatprep.subr.mxu0 %v1175
    %v1177 = vand.u32 %v160, 4294901760
    %v1178 = vsub.f32 %v160, %v1177
    %v1179 = vand.u32 %v1178, 4294901760
    %v1180 = vsub.f32 %v1178, %v1179
    %v1181 = vand.u32 %v1180, 4294901760
    %1182 = vmatpush1.msra.mxu0 %v1181
    %v1183 = vand.u32 %v146, 4294901760
    %v1184 = vsub.f32 %v146, %v1183
    %v1185 = vand.u32 %v1184, 4294901760
    %v1186 = vsub.f32 %v1184, %v1185
    %v1187 = vand.u32 %v1186, 4294901760
    %1188 = vmatprep.subr.mxu0 %v1187
    %v1189 = vand.u32 %v145, 4294901760
    %v1190 = vsub.f32 %v145, %v1189
    %v1191 = vand.u32 %v1190, 4294901760
    %v1192 = vsub.f32 %v1190, %v1191
    %v1193 = vand.u32 %v1192, 4294901760
    %1194 = vmatpush1.msra.mxu0 %v1193
    %v1195 = vand.u32 %v131, 4294901760
    %v1196 = vsub.f32 %v131, %v1195
    %v1197 = vand.u32 %v1196, 4294901760
    %v1198 = vsub.f32 %v1196, %v1197
    %v1199 = vand.u32 %v1198, 4294901760
    %1200 = vmatprep.subr.mxu0 %v1199
    %v1201 = vand.u32 %v130, 4294901760
    %v1202 = vsub.f32 %v130, %v1201
    %v1203 = vand.u32 %v1202, 4294901760
    %v1204 = vsub.f32 %v1202, %v1203
    %v1205 = vand.u32 %v1204, 4294901760
    %1206 = vmatpush1.msra.mxu0 %v1205
    %v1207 = vand.u32 %v116, 4294901760
    %v1208 = vsub.f32 %v116, %v1207
    %v1209 = vand.u32 %v1208, 4294901760
    %v1210 = vsub.f32 %v1208, %v1209
    %v1211 = vand.u32 %v1210, 4294901760
    %1212 = vmatprep.subr.mxu0 %v1211
    %v1213 = vand.u32 %v115, 4294901760
    %v1214 = vsub.f32 %v115, %v1213
    %v1215 = vand.u32 %v1214, 4294901760
    %v1216 = vsub.f32 %v1214, %v1215
    %v1217 = vand.u32 %v1216, 4294901760
    %1218 = vmatpush1.msra.mxu0 %v1217
    %v1219 = vand.u32 %v101, 4294901760
    %v1220 = vsub.f32 %v101, %v1219
    %v1221 = vand.u32 %v1220, 4294901760
    %v1222 = vsub.f32 %v1220, %v1221
    %v1223 = vand.u32 %v1222, 4294901760
    %1224 = vmatprep.subr.mxu0 %v1223
    %v1225 = vand.u32 %v100, 4294901760
    %v1226 = vsub.f32 %v100, %v1225
    %v1227 = vand.u32 %v1226, 4294901760
    %v1228 = vsub.f32 %v1226, %v1227
    %v1229 = vand.u32 %v1228, 4294901760
    %1230 = vmatpush1.msra.mxu0 %v1229
    %v1231 = vand.u32 %v86, 4294901760
    %v1232 = vsub.f32 %v86, %v1231
    %v1233 = vand.u32 %v1232, 4294901760
    %v1234 = vsub.f32 %v1232, %v1233
    %v1235 = vand.u32 %v1234, 4294901760
    %1236 = vmatprep.subr.mxu0 %v1235
    %v1237 = vand.u32 %v85, 4294901760
    %v1238 = vsub.f32 %v85, %v1237
    %v1239 = vand.u32 %v1238, 4294901760
    %v1240 = vsub.f32 %v1238, %v1239
    %v1241 = vand.u32 %v1240, 4294901760
    %1242 = vmatpush1.msra.mxu0 %v1241
    %v1243 = vand.u32 %v71, 4294901760
    %v1244 = vsub.f32 %v71, %v1243
    %v1245 = vand.u32 %v1244, 4294901760
    %v1246 = vsub.f32 %v1244, %v1245
    %v1247 = vand.u32 %v1246, 4294901760
    %1248 = vmatprep.subr.mxu0 %v1247
    %v1249 = vand.u32 %v70, 4294901760
    %v1250 = vsub.f32 %v70, %v1249
    %v1251 = vand.u32 %v1250, 4294901760
    %v1252 = vsub.f32 %v1250, %v1251
    %v1253 = vand.u32 %v1252, 4294901760
    %1254 = vmatpush1.msra.mxu0 %v1253
    %1255 = vmatprep.subr.mxu0 0.0
    %1256 = vmatpush2.msra.mxu0 0.0
    %1257 = vmatprep.subr.mxu0 0.0
    %1258 = vmatpush2.msra.mxu0 0.0
    %1259 = vmatprep.subr.mxu0 0.0
    %1260 = vmatpush2.msra.mxu0 0.0
    %1261 = vmatprep.subr.mxu0 0.0
    %1262 = vmatpush2.msra.mxu0 0.0
    %1263 = vmatprep.subr.mxu0 0.0
    %1264 = vmatpush2.msra.mxu0 0.0
    %1265 = vmatprep.subr.mxu0 0.0
    %1266 = vmatpush2.msra.mxu0 0.0
    %1267 = vmatprep.subr.mxu0 0.0
    %1268 = vmatpush2.msra.mxu0 0.0
    %1269 = vmatprep.subr.mxu0 0.0
    %1270 = vmatpush2.msra.mxu0 0.0
    %1271 = vmatprep.subr.mxu0 0.0
    %1272 = vmatpush2.msra.mxu0 0.0
    %1273 = vmatprep.subr.mxu0 0.0
    %1274 = vmatpush2.msra.mxu0 0.0
    %1275 = vmatprep.subr.mxu0 0.0
    %1276 = vmatpush2.msra.mxu0 0.0
    %1277 = vmatprep.subr.mxu0 0.0
    %1278 = vmatpush2.msra.mxu0 0.0
    %1279 = vmatprep.subr.mxu0 0.0
    %1280 = vmatpush2.msra.mxu0 0.0
    %1281 = vmatprep.subr.mxu0 0.0
    %1282 = vmatpush2.msra.mxu0 0.0
    %1283 = vmatprep.subr.mxu0 0.0
    %1284 = vmatpush2.msra.mxu0 0.0
    %1285 = vmatprep.subr.mxu0 0.0
    %1286 = vmatpush2.msra.mxu0 0.0
    %1287 = vmatprep.mubr.f32.mxu0 0.0
    %v1288 = vand.u32 %v250, 4294901760
    %1289 = vmatmul.mubr.f32.gmra.mxu0 %v1288
    %v1290 = vpop.f32.mrf.mxu0
    %v1291 = vadd.f32 %v1099, %v1290
    %v1292 = vpop.f32.mrf.mxu0
    %v1293 = vadd.f32 %v1101, %v1292
    %1294 = vdwg.mxu0
    %1295 = vmatprep.subr.mxu0 0.0
    %1296 = vmatpush1.msra.mxu0 0.0
    %1297 = vmatprep.subr.mxu0 0.0
    %1298 = vmatpush1.msra.mxu0 0.0
    %1299 = vmatprep.subr.mxu0 0.0
    %1300 = vmatpush1.msra.mxu0 0.0
    %1301 = vmatprep.subr.mxu0 0.0
    %1302 = vmatpush1.msra.mxu0 0.0
    %v1303 = vand.u32 %v236, 4294901760
    %v1304 = vsub.f32 %v236, %v1303
    %1305 = vmatprep.subr.mxu0 %v1304
    %v1306 = vand.u32 %v235, 4294901760
    %v1307 = vsub.f32 %v235, %v1306
    %1308 = vmatpush1.msra.mxu0 %v1307
    %v1309 = vand.u32 %v221, 4294901760
    %v1310 = vsub.f32 %v221, %v1309
    %1311 = vmatprep.subr.mxu0 %v1310
    %v1312 = vand.u32 %v220, 4294901760
    %v1313 = vsub.f32 %v220, %v1312
    %1314 = vmatpush1.msra.mxu0 %v1313
    %v1315 = vand.u32 %v206, 4294901760
    %v1316 = vsub.f32 %v206, %v1315
    %1317 = vmatprep.subr.mxu0 %v1316
    %v1318 = vand.u32 %v205, 4294901760
    %v1319 = vsub.f32 %v205, %v1318
    %1320 = vmatpush1.msra.mxu0 %v1319
    %v1321 = vand.u32 %v191, 4294901760
    %v1322 = vsub.f32 %v191, %v1321
    %1323 = vmatprep.subr.mxu0 %v1322
    %v1324 = vand.u32 %v190, 4294901760
    %v1325 = vsub.f32 %v190, %v1324
    %1326 = vmatpush1.msra.mxu0 %v1325
    %v1327 = vand.u32 %v176, 4294901760
    %v1328 = vsub.f32 %v176, %v1327
    %1329 = vmatprep.subr.mxu0 %v1328
    %v1330 = vand.u32 %v175, 4294901760
    %v1331 = vsub.f32 %v175, %v1330
    %1332 = vmatpush1.msra.mxu0 %v1331
    %v1333 = vand.u32 %v161, 4294901760
    %v1334 = vsub.f32 %v161, %v1333
    %1335 = vmatprep.subr.mxu0 %v1334
    %v1336 = vand.u32 %v160, 4294901760
    %v1337 = vsub.f32 %v160, %v1336
    %1338 = vmatpush1.msra.mxu0 %v1337
    %v1339 = vand.u32 %v146, 4294901760
    %v1340 = vsub.f32 %v146, %v1339
    %1341 = vmatprep.subr.mxu0 %v1340
    %v1342 = vand.u32 %v145, 4294901760
    %v1343 = vsub.f32 %v145, %v1342
    %1344 = vmatpush1.msra.mxu0 %v1343
    %v1345 = vand.u32 %v131, 4294901760
    %v1346 = vsub.f32 %v131, %v1345
    %1347 = vmatprep.subr.mxu0 %v1346
    %v1348 = vand.u32 %v130, 4294901760
    %v1349 = vsub.f32 %v130, %v1348
    %1350 = vmatpush1.msra.mxu0 %v1349
    %v1351 = vand.u32 %v116, 4294901760
    %v1352 = vsub.f32 %v116, %v1351
    %1353 = vmatprep.subr.mxu0 %v1352
    %v1354 = vand.u32 %v115, 4294901760
    %v1355 = vsub.f32 %v115, %v1354
    %1356 = vmatpush1.msra.mxu0 %v1355
    %v1357 = vand.u32 %v101, 4294901760
    %v1358 = vsub.f32 %v101, %v1357
    %1359 = vmatprep.subr.mxu0 %v1358
    %v1360 = vand.u32 %v100, 4294901760
    %v1361 = vsub.f32 %v100, %v1360
    %1362 = vmatpush1.msra.mxu0 %v1361
    %v1363 = vand.u32 %v86, 4294901760
    %v1364 = vsub.f32 %v86, %v1363
    %1365 = vmatprep.subr.mxu0 %v1364
    %v1366 = vand.u32 %v85, 4294901760
    %v1367 = vsub.f32 %v85, %v1366
    %1368 = vmatpush1.msra.mxu0 %v1367
    %v1369 = vand.u32 %v71, 4294901760
    %v1370 = vsub.f32 %v71, %v1369
    %1371 = vmatprep.subr.mxu0 %v1370
    %v1372 = vand.u32 %v70, 4294901760
    %v1373 = vsub.f32 %v70, %v1372
    %1374 = vmatpush1.msra.mxu0 %v1373
    %1375 = vmatprep.subr.mxu0 0.0
    %1376 = vmatpush2.msra.mxu0 0.0
    %1377 = vmatprep.subr.mxu0 0.0
    %1378 = vmatpush2.msra.mxu0 0.0
    %1379 = vmatprep.subr.mxu0 0.0
    %1380 = vmatpush2.msra.mxu0 0.0
    %1381 = vmatprep.subr.mxu0 0.0
    %1382 = vmatpush2.msra.mxu0 0.0
    %1383 = vmatprep.subr.mxu0 0.0
    %1384 = vmatpush2.msra.mxu0 0.0
    %1385 = vmatprep.subr.mxu0 0.0
    %1386 = vmatpush2.msra.mxu0 0.0
    %1387 = vmatprep.subr.mxu0 0.0
    %1388 = vmatpush2.msra.mxu0 0.0
    %1389 = vmatprep.subr.mxu0 0.0
    %1390 = vmatpush2.msra.mxu0 0.0
    %1391 = vmatprep.subr.mxu0 0.0
    %1392 = vmatpush2.msra.mxu0 0.0
    %1393 = vmatprep.subr.mxu0 0.0
    %1394 = vmatpush2.msra.mxu0 0.0
    %1395 = vmatprep.subr.mxu0 0.0
    %1396 = vmatpush2.msra.mxu0 0.0
    %1397 = vmatprep.subr.mxu0 0.0
    %1398 = vmatpush2.msra.mxu0 0.0
    %1399 = vmatprep.subr.mxu0 0.0
    %1400 = vmatpush2.msra.mxu0 0.0
    %1401 = vmatprep.subr.mxu0 0.0
    %1402 = vmatpush2.msra.mxu0 0.0
    %1403 = vmatprep.subr.mxu0 0.0
    %1404 = vmatpush2.msra.mxu0 0.0
    %1405 = vmatprep.subr.mxu0 0.0
    %1406 = vmatpush2.msra.mxu0 0.0
    %1407 = vmatprep.mubr.f32.mxu0 0.0
    %v1408 = vand.u32 %v250, 4294901760
    %v1409 = vsub.f32 %v250, %v1408
    %1410 = vmatmul.mubr.f32.gmra.mxu0 %v1409
    %v1411 = vpop.f32.mrf.mxu0
    %v1412 = vadd.f32 %v1291, %v1411
    %v1413 = vpop.f32.mrf.mxu0
    %v1414 = vadd.f32 %v1293, %v1413
    %1415 = vdwg.mxu0
    %1416 = vmatprep.subr.mxu0 0.0
    %1417 = vmatpush1.msra.mxu0 0.0
    %1418 = vmatprep.subr.mxu0 0.0
    %1419 = vmatpush1.msra.mxu0 0.0
    %1420 = vmatprep.subr.mxu0 0.0
    %1421 = vmatpush1.msra.mxu0 0.0
    %1422 = vmatprep.subr.mxu0 0.0
    %1423 = vmatpush1.msra.mxu0 0.0
    %v1424 = vand.u32 %v236, 4294901760
    %1425 = vmatprep.subr.mxu0 %v1424
    %v1426 = vand.u32 %v235, 4294901760
    %1427 = vmatpush1.msra.mxu0 %v1426
    %v1428 = vand.u32 %v221, 4294901760
    %1429 = vmatprep.subr.mxu0 %v1428
    %v1430 = vand.u32 %v220, 4294901760
    %1431 = vmatpush1.msra.mxu0 %v1430
    %v1432 = vand.u32 %v206, 4294901760
    %1433 = vmatprep.subr.mxu0 %v1432
    %v1434 = vand.u32 %v205, 4294901760
    %1435 = vmatpush1.msra.mxu0 %v1434
    %v1436 = vand.u32 %v191, 4294901760
    %1437 = vmatprep.subr.mxu0 %v1436
    %v1438 = vand.u32 %v190, 4294901760
    %1439 = vmatpush1.msra.mxu0 %v1438
    %v1440 = vand.u32 %v176, 4294901760
    %1441 = vmatprep.subr.mxu0 %v1440
    %v1442 = vand.u32 %v175, 4294901760
    %1443 = vmatpush1.msra.mxu0 %v1442
    %v1444 = vand.u32 %v161, 4294901760
    %1445 = vmatprep.subr.mxu0 %v1444
    %v1446 = vand.u32 %v160, 4294901760
    %1447 = vmatpush1.msra.mxu0 %v1446
    %v1448 = vand.u32 %v146, 4294901760
    %1449 = vmatprep.subr.mxu0 %v1448
    %v1450 = vand.u32 %v145, 4294901760
    %1451 = vmatpush1.msra.mxu0 %v1450
    %v1452 = vand.u32 %v131, 4294901760
    %1453 = vmatprep.subr.mxu0 %v1452
    %v1454 = vand.u32 %v130, 4294901760
    %1455 = vmatpush1.msra.mxu0 %v1454
    %v1456 = vand.u32 %v116, 4294901760
    %1457 = vmatprep.subr.mxu0 %v1456
    %v1458 = vand.u32 %v115, 4294901760
    %1459 = vmatpush1.msra.mxu0 %v1458
    %v1460 = vand.u32 %v101, 4294901760
    %1461 = vmatprep.subr.mxu0 %v1460
    %v1462 = vand.u32 %v100, 4294901760
    %1463 = vmatpush1.msra.mxu0 %v1462
    %v1464 = vand.u32 %v86, 4294901760
    %1465 = vmatprep.subr.mxu0 %v1464
    %v1466 = vand.u32 %v85, 4294901760
    %1467 = vmatpush1.msra.mxu0 %v1466
    %v1468 = vand.u32 %v71, 4294901760
    %1469 = vmatprep.subr.mxu0 %v1468
    %v1470 = vand.u32 %v70, 4294901760
    %1471 = vmatpush1.msra.mxu0 %v1470
    %1472 = vmatprep.subr.mxu0 0.0
    %1473 = vmatpush2.msra.mxu0 0.0
    %1474 = vmatprep.subr.mxu0 0.0
    %1475 = vmatpush2.msra.mxu0 0.0
    %1476 = vmatprep.subr.mxu0 0.0
    %1477 = vmatpush2.msra.mxu0 0.0
    %1478 = vmatprep.subr.mxu0 0.0
    %1479 = vmatpush2.msra.mxu0 0.0
    %1480 = vmatprep.subr.mxu0 0.0
    %1481 = vmatpush2.msra.mxu0 0.0
    %1482 = vmatprep.subr.mxu0 0.0
    %1483 = vmatpush2.msra.mxu0 0.0
    %1484 = vmatprep.subr.mxu0 0.0
    %1485 = vmatpush2.msra.mxu0 0.0
    %1486 = vmatprep.subr.mxu0 0.0
    %1487 = vmatpush2.msra.mxu0 0.0
    %1488 = vmatprep.subr.mxu0 0.0
    %1489 = vmatpush2.msra.mxu0 0.0
    %1490 = vmatprep.subr.mxu0 0.0
    %1491 = vmatpush2.msra.mxu0 0.0
    %1492 = vmatprep.subr.mxu0 0.0
    %1493 = vmatpush2.msra.mxu0 0.0
    %1494 = vmatprep.subr.mxu0 0.0
    %1495 = vmatpush2.msra.mxu0 0.0
    %1496 = vmatprep.subr.mxu0 0.0
    %1497 = vmatpush2.msra.mxu0 0.0
    %1498 = vmatprep.subr.mxu0 0.0
    %1499 = vmatpush2.msra.mxu0 0.0
    %1500 = vmatprep.subr.mxu0 0.0
    %1501 = vmatpush2.msra.mxu0 0.0
    %1502 = vmatprep.subr.mxu0 0.0
    %1503 = vmatpush2.msra.mxu0 0.0
    %1504 = vmatprep.mubr.f32.mxu0 0.0
    %v1505 = vand.u32 %v250, 4294901760
    %v1506 = vsub.f32 %v250, %v1505
    %v1507 = vand.u32 %v1506, 4294901760
    %1508 = vmatmul.mubr.f32.gmra.mxu0 %v1507
    %v1509 = vpop.f32.mrf.mxu0
    %v1510 = vadd.f32 %v1412, %v1509
    %v1511 = vpop.f32.mrf.mxu0
    %v1512 = vadd.f32 %v1414, %v1511
    %1513 = vdwg.mxu0
    %1514 = vmatprep.subr.mxu0 0.0
    %1515 = vmatpush1.msra.mxu0 0.0
    %1516 = vmatprep.subr.mxu0 0.0
    %1517 = vmatpush1.msra.mxu0 0.0
    %1518 = vmatprep.subr.mxu0 0.0
    %1519 = vmatpush1.msra.mxu0 0.0
    %1520 = vmatprep.subr.mxu0 0.0
    %1521 = vmatpush1.msra.mxu0 0.0
    %v1522 = vand.u32 %v236, 4294901760
    %v1523 = vsub.f32 %v236, %v1522
    %v1524 = vand.u32 %v1523, 4294901760
    %1525 = vmatprep.subr.mxu0 %v1524
    %v1526 = vand.u32 %v235, 4294901760
    %v1527 = vsub.f32 %v235, %v1526
    %v1528 = vand.u32 %v1527, 4294901760
    %1529 = vmatpush1.msra.mxu0 %v1528
    %v1530 = vand.u32 %v221, 4294901760
    %v1531 = vsub.f32 %v221, %v1530
    %v1532 = vand.u32 %v1531, 4294901760
    %1533 = vmatprep.subr.mxu0 %v1532
    %v1534 = vand.u32 %v220, 4294901760
    %v1535 = vsub.f32 %v220, %v1534
    %v1536 = vand.u32 %v1535, 4294901760
    %1537 = vmatpush1.msra.mxu0 %v1536
    %v1538 = vand.u32 %v206, 4294901760
    %v1539 = vsub.f32 %v206, %v1538
    %v1540 = vand.u32 %v1539, 4294901760
    %1541 = vmatprep.subr.mxu0 %v1540
    %v1542 = vand.u32 %v205, 4294901760
    %v1543 = vsub.f32 %v205, %v1542
    %v1544 = vand.u32 %v1543, 4294901760
    %1545 = vmatpush1.msra.mxu0 %v1544
    %v1546 = vand.u32 %v191, 4294901760
    %v1547 = vsub.f32 %v191, %v1546
    %v1548 = vand.u32 %v1547, 4294901760
    %1549 = vmatprep.subr.mxu0 %v1548
    %v1550 = vand.u32 %v190, 4294901760
    %v1551 = vsub.f32 %v190, %v1550
    %v1552 = vand.u32 %v1551, 4294901760
    %1553 = vmatpush1.msra.mxu0 %v1552
    %v1554 = vand.u32 %v176, 4294901760
    %v1555 = vsub.f32 %v176, %v1554
    %v1556 = vand.u32 %v1555, 4294901760
    %1557 = vmatprep.subr.mxu0 %v1556
    %v1558 = vand.u32 %v175, 4294901760
    %v1559 = vsub.f32 %v175, %v1558
    %v1560 = vand.u32 %v1559, 4294901760
    %1561 = vmatpush1.msra.mxu0 %v1560
    %v1562 = vand.u32 %v161, 4294901760
    %v1563 = vsub.f32 %v161, %v1562
    %v1564 = vand.u32 %v1563, 4294901760
    %1565 = vmatprep.subr.mxu0 %v1564
    %v1566 = vand.u32 %v160, 4294901760
    %v1567 = vsub.f32 %v160, %v1566
    %v1568 = vand.u32 %v1567, 4294901760
    %1569 = vmatpush1.msra.mxu0 %v1568
    %v1570 = vand.u32 %v146, 4294901760
    %v1571 = vsub.f32 %v146, %v1570
    %v1572 = vand.u32 %v1571, 4294901760
    %1573 = vmatprep.subr.mxu0 %v1572
    %v1574 = vand.u32 %v145, 4294901760
    %v1575 = vsub.f32 %v145, %v1574
    %v1576 = vand.u32 %v1575, 4294901760
    %1577 = vmatpush1.msra.mxu0 %v1576
    %v1578 = vand.u32 %v131, 4294901760
    %v1579 = vsub.f32 %v131, %v1578
    %v1580 = vand.u32 %v1579, 4294901760
    %1581 = vmatprep.subr.mxu0 %v1580
    %v1582 = vand.u32 %v130, 4294901760
    %v1583 = vsub.f32 %v130, %v1582
    %v1584 = vand.u32 %v1583, 4294901760
    %1585 = vmatpush1.msra.mxu0 %v1584
    %v1586 = vand.u32 %v116, 4294901760
    %v1587 = vsub.f32 %v116, %v1586
    %v1588 = vand.u32 %v1587, 4294901760
    %1589 = vmatprep.subr.mxu0 %v1588
    %v1590 = vand.u32 %v115, 4294901760
    %v1591 = vsub.f32 %v115, %v1590
    %v1592 = vand.u32 %v1591, 4294901760
    %1593 = vmatpush1.msra.mxu0 %v1592
    %v1594 = vand.u32 %v101, 4294901760
    %v1595 = vsub.f32 %v101, %v1594
    %v1596 = vand.u32 %v1595, 4294901760
    %1597 = vmatprep.subr.mxu0 %v1596
    %v1598 = vand.u32 %v100, 4294901760
    %v1599 = vsub.f32 %v100, %v1598
    %v1600 = vand.u32 %v1599, 4294901760
    %1601 = vmatpush1.msra.mxu0 %v1600
    %v1602 = vand.u32 %v86, 4294901760
    %v1603 = vsub.f32 %v86, %v1602
    %v1604 = vand.u32 %v1603, 4294901760
    %1605 = vmatprep.subr.mxu0 %v1604
    %v1606 = vand.u32 %v85, 4294901760
    %v1607 = vsub.f32 %v85, %v1606
    %v1608 = vand.u32 %v1607, 4294901760
    %1609 = vmatpush1.msra.mxu0 %v1608
    %v1610 = vand.u32 %v71, 4294901760
    %v1611 = vsub.f32 %v71, %v1610
    %v1612 = vand.u32 %v1611, 4294901760
    %1613 = vmatprep.subr.mxu0 %v1612
    %v1614 = vand.u32 %v70, 4294901760
    %v1615 = vsub.f32 %v70, %v1614
    %v1616 = vand.u32 %v1615, 4294901760
    %1617 = vmatpush1.msra.mxu0 %v1616
    %1618 = vmatprep.subr.mxu0 0.0
    %1619 = vmatpush2.msra.mxu0 0.0
    %1620 = vmatprep.subr.mxu0 0.0
    %1621 = vmatpush2.msra.mxu0 0.0
    %1622 = vmatprep.subr.mxu0 0.0
    %1623 = vmatpush2.msra.mxu0 0.0
    %1624 = vmatprep.subr.mxu0 0.0
    %1625 = vmatpush2.msra.mxu0 0.0
    %1626 = vmatprep.subr.mxu0 0.0
    %1627 = vmatpush2.msra.mxu0 0.0
    %1628 = vmatprep.subr.mxu0 0.0
    %1629 = vmatpush2.msra.mxu0 0.0
    %1630 = vmatprep.subr.mxu0 0.0
    %1631 = vmatpush2.msra.mxu0 0.0
    %1632 = vmatprep.subr.mxu0 0.0
    %1633 = vmatpush2.msra.mxu0 0.0
    %1634 = vmatprep.subr.mxu0 0.0
    %1635 = vmatpush2.msra.mxu0 0.0
    %1636 = vmatprep.subr.mxu0 0.0
    %1637 = vmatpush2.msra.mxu0 0.0
    %1638 = vmatprep.subr.mxu0 0.0
    %1639 = vmatpush2.msra.mxu0 0.0
    %1640 = vmatprep.subr.mxu0 0.0
    %1641 = vmatpush2.msra.mxu0 0.0
    %1642 = vmatprep.subr.mxu0 0.0
    %1643 = vmatpush2.msra.mxu0 0.0
    %1644 = vmatprep.subr.mxu0 0.0
    %1645 = vmatpush2.msra.mxu0 0.0
    %1646 = vmatprep.subr.mxu0 0.0
    %1647 = vmatpush2.msra.mxu0 0.0
    %1648 = vmatprep.subr.mxu0 0.0
    %1649 = vmatpush2.msra.mxu0 0.0
    %1650 = vmatprep.mubr.f32.mxu0 0.0
    %v1651 = vand.u32 %v250, 4294901760
    %1652 = vmatmul.mubr.f32.gmra.mxu0 %v1651
    %v1653 = vpop.f32.mrf.mxu0
    %v1654 = vadd.f32 %v1510, %v1653
    %v1655 = vpop.f32.mrf.mxu0
    %v1656 = vadd.f32 %v1512, %v1655
    %1657 = vdwg.mxu0
    %1658 = vmatprep.subr.mxu0 0.0
    %1659 = vmatpush1.msra.mxu0 0.0
    %1660 = vmatprep.subr.mxu0 0.0
    %1661 = vmatpush1.msra.mxu0 0.0
    %1662 = vmatprep.subr.mxu0 0.0
    %1663 = vmatpush1.msra.mxu0 0.0
    %1664 = vmatprep.subr.mxu0 0.0
    %1665 = vmatpush1.msra.mxu0 0.0
    %v1666 = vand.u32 %v236, 4294901760
    %1667 = vmatprep.subr.mxu0 %v1666
    %v1668 = vand.u32 %v235, 4294901760
    %1669 = vmatpush1.msra.mxu0 %v1668
    %v1670 = vand.u32 %v221, 4294901760
    %1671 = vmatprep.subr.mxu0 %v1670
    %v1672 = vand.u32 %v220, 4294901760
    %1673 = vmatpush1.msra.mxu0 %v1672
    %v1674 = vand.u32 %v206, 4294901760
    %1675 = vmatprep.subr.mxu0 %v1674
    %v1676 = vand.u32 %v205, 4294901760
    %1677 = vmatpush1.msra.mxu0 %v1676
    %v1678 = vand.u32 %v191, 4294901760
    %1679 = vmatprep.subr.mxu0 %v1678
    %v1680 = vand.u32 %v190, 4294901760
    %1681 = vmatpush1.msra.mxu0 %v1680
    %v1682 = vand.u32 %v176, 4294901760
    %1683 = vmatprep.subr.mxu0 %v1682
    %v1684 = vand.u32 %v175, 4294901760
    %1685 = vmatpush1.msra.mxu0 %v1684
    %v1686 = vand.u32 %v161, 4294901760
    %1687 = vmatprep.subr.mxu0 %v1686
    %v1688 = vand.u32 %v160, 4294901760
    %1689 = vmatpush1.msra.mxu0 %v1688
    %v1690 = vand.u32 %v146, 4294901760
    %1691 = vmatprep.subr.mxu0 %v1690
    %v1692 = vand.u32 %v145, 4294901760
    %1693 = vmatpush1.msra.mxu0 %v1692
    %v1694 = vand.u32 %v131, 4294901760
    %1695 = vmatprep.subr.mxu0 %v1694
    %v1696 = vand.u32 %v130, 4294901760
    %1697 = vmatpush1.msra.mxu0 %v1696
    %v1698 = vand.u32 %v116, 4294901760
    %1699 = vmatprep.subr.mxu0 %v1698
    %v1700 = vand.u32 %v115, 4294901760
    %1701 = vmatpush1.msra.mxu0 %v1700
    %v1702 = vand.u32 %v101, 4294901760
    %1703 = vmatprep.subr.mxu0 %v1702
    %v1704 = vand.u32 %v100, 4294901760
    %1705 = vmatpush1.msra.mxu0 %v1704
    %v1706 = vand.u32 %v86, 4294901760
    %1707 = vmatprep.subr.mxu0 %v1706
    %v1708 = vand.u32 %v85, 4294901760
    %1709 = vmatpush1.msra.mxu0 %v1708
    %v1710 = vand.u32 %v71, 4294901760
    %1711 = vmatprep.subr.mxu0 %v1710
    %v1712 = vand.u32 %v70, 4294901760
    %1713 = vmatpush1.msra.mxu0 %v1712
    %1714 = vmatprep.subr.mxu0 0.0
    %1715 = vmatpush2.msra.mxu0 0.0
    %1716 = vmatprep.subr.mxu0 0.0
    %1717 = vmatpush2.msra.mxu0 0.0
    %1718 = vmatprep.subr.mxu0 0.0
    %1719 = vmatpush2.msra.mxu0 0.0
    %1720 = vmatprep.subr.mxu0 0.0
    %1721 = vmatpush2.msra.mxu0 0.0
    %1722 = vmatprep.subr.mxu0 0.0
    %1723 = vmatpush2.msra.mxu0 0.0
    %1724 = vmatprep.subr.mxu0 0.0
    %1725 = vmatpush2.msra.mxu0 0.0
    %1726 = vmatprep.subr.mxu0 0.0
    %1727 = vmatpush2.msra.mxu0 0.0
    %1728 = vmatprep.subr.mxu0 0.0
    %1729 = vmatpush2.msra.mxu0 0.0
    %1730 = vmatprep.subr.mxu0 0.0
    %1731 = vmatpush2.msra.mxu0 0.0
    %1732 = vmatprep.subr.mxu0 0.0
    %1733 = vmatpush2.msra.mxu0 0.0
    %1734 = vmatprep.subr.mxu0 0.0
    %1735 = vmatpush2.msra.mxu0 0.0
    %1736 = vmatprep.subr.mxu0 0.0
    %1737 = vmatpush2.msra.mxu0 0.0
    %1738 = vmatprep.subr.mxu0 0.0
    %1739 = vmatpush2.msra.mxu0 0.0
    %1740 = vmatprep.subr.mxu0 0.0
    %1741 = vmatpush2.msra.mxu0 0.0
    %1742 = vmatprep.subr.mxu0 0.0
    %1743 = vmatpush2.msra.mxu0 0.0
    %1744 = vmatprep.subr.mxu0 0.0
    %1745 = vmatpush2.msra.mxu0 0.0
    %1746 = vmatprep.mubr.f32.mxu0 0.0
    %v1747 = vand.u32 %v250, 4294901760
    %1748 = vmatmul.mubr.f32.gmra.mxu0 %v1747
    %v1749 = vpop.f32.mrf.mxu0
    %v1750 = vadd.f32 %v1654, %v1749
    %v1751 = vpop.f32.mrf.mxu0
    %v1752 = vadd.f32 %v1656, %v1751
    %1753 = vdwg.mxu0
    %1754 = vmatprep.subr.mxu0 0.0
    %1755 = vmatpush1.msra.mxu0 0.0
    %1756 = vmatprep.subr.mxu0 0.0
    %1757 = vmatpush1.msra.mxu0 0.0
    %1758 = vmatprep.subr.mxu0 0.0
    %1759 = vmatpush1.msra.mxu0 0.0
    %1760 = vmatprep.subr.mxu0 0.0
    %1761 = vmatpush1.msra.mxu0 0.0
    %v1762 = vand.u32 %v238, 4294901760
    %1763 = vmatprep.subr.mxu0 %v1762
    %v1764 = vand.u32 %v237, 4294901760
    %1765 = vmatpush1.msra.mxu0 %v1764
    %v1766 = vand.u32 %v223, 4294901760
    %1767 = vmatprep.subr.mxu0 %v1766
    %v1768 = vand.u32 %v222, 4294901760
    %1769 = vmatpush1.msra.mxu0 %v1768
    %v1770 = vand.u32 %v208, 4294901760
    %1771 = vmatprep.subr.mxu0 %v1770
    %v1772 = vand.u32 %v207, 4294901760
    %1773 = vmatpush1.msra.mxu0 %v1772
    %v1774 = vand.u32 %v193, 4294901760
    %1775 = vmatprep.subr.mxu0 %v1774
    %v1776 = vand.u32 %v192, 4294901760
    %1777 = vmatpush1.msra.mxu0 %v1776
    %v1778 = vand.u32 %v178, 4294901760
    %1779 = vmatprep.subr.mxu0 %v1778
    %v1780 = vand.u32 %v177, 4294901760
    %1781 = vmatpush1.msra.mxu0 %v1780
    %v1782 = vand.u32 %v163, 4294901760
    %1783 = vmatprep.subr.mxu0 %v1782
    %v1784 = vand.u32 %v162, 4294901760
    %1785 = vmatpush1.msra.mxu0 %v1784
    %v1786 = vand.u32 %v148, 4294901760
    %1787 = vmatprep.subr.mxu0 %v1786
    %v1788 = vand.u32 %v147, 4294901760
    %1789 = vmatpush1.msra.mxu0 %v1788
    %v1790 = vand.u32 %v133, 4294901760
    %1791 = vmatprep.subr.mxu0 %v1790
    %v1792 = vand.u32 %v132, 4294901760
    %1793 = vmatpush1.msra.mxu0 %v1792
    %v1794 = vand.u32 %v118, 4294901760
    %1795 = vmatprep.subr.mxu0 %v1794
    %v1796 = vand.u32 %v117, 4294901760
    %1797 = vmatpush1.msra.mxu0 %v1796
    %v1798 = vand.u32 %v103, 4294901760
    %1799 = vmatprep.subr.mxu0 %v1798
    %v1800 = vand.u32 %v102, 4294901760
    %1801 = vmatpush1.msra.mxu0 %v1800
    %v1802 = vand.u32 %v88, 4294901760
    %1803 = vmatprep.subr.mxu0 %v1802
    %v1804 = vand.u32 %v87, 4294901760
    %1805 = vmatpush1.msra.mxu0 %v1804
    %v1806 = vand.u32 %v73, 4294901760
    %1807 = vmatprep.subr.mxu0 %v1806
    %v1808 = vand.u32 %v72, 4294901760
    %1809 = vmatpush1.msra.mxu0 %v1808
    %1810 = vmatprep.subr.mxu0 0.0
    %1811 = vmatpush2.msra.mxu0 0.0
    %1812 = vmatprep.subr.mxu0 0.0
    %1813 = vmatpush2.msra.mxu0 0.0
    %1814 = vmatprep.subr.mxu0 0.0
    %1815 = vmatpush2.msra.mxu0 0.0
    %1816 = vmatprep.subr.mxu0 0.0
    %1817 = vmatpush2.msra.mxu0 0.0
    %1818 = vmatprep.subr.mxu0 0.0
    %1819 = vmatpush2.msra.mxu0 0.0
    %1820 = vmatprep.subr.mxu0 0.0
    %1821 = vmatpush2.msra.mxu0 0.0
    %1822 = vmatprep.subr.mxu0 0.0
    %1823 = vmatpush2.msra.mxu0 0.0
    %1824 = vmatprep.subr.mxu0 0.0
    %1825 = vmatpush2.msra.mxu0 0.0
    %1826 = vmatprep.subr.mxu0 0.0
    %1827 = vmatpush2.msra.mxu0 0.0
    %1828 = vmatprep.subr.mxu0 0.0
    %1829 = vmatpush2.msra.mxu0 0.0
    %1830 = vmatprep.subr.mxu0 0.0
    %1831 = vmatpush2.msra.mxu0 0.0
    %1832 = vmatprep.subr.mxu0 0.0
    %1833 = vmatpush2.msra.mxu0 0.0
    %1834 = vmatprep.subr.mxu0 0.0
    %1835 = vmatpush2.msra.mxu0 0.0
    %1836 = vmatprep.subr.mxu0 0.0
    %1837 = vmatpush2.msra.mxu0 0.0
    %1838 = vmatprep.subr.mxu0 0.0
    %1839 = vmatpush2.msra.mxu0 0.0
    %1840 = vmatprep.subr.mxu0 0.0
    %1841 = vmatpush2.msra.mxu0 0.0
    %1842 = vmatprep.mubr.f32.mxu0 0.0
    %v1843 = vand.u32 %v250, 4294901760
    %v1844 = vsub.f32 %v250, %v1843
    %v1845 = vand.u32 %v1844, 4294901760
    %v1846 = vsub.f32 %v1844, %v1845
    %v1847 = vand.u32 %v1846, 4294901760
    %1848 = vmatmul.mubr.f32.gmra.mxu0 %v1847
    %v1849 = vpop.f32.mrf.mxu0
    %v1850 = vadd.f32 0.0, %v1849
    %v1851 = vpop.f32.mrf.mxu0
    %v1852 = vadd.f32 0.0, %v1851
    %1853 = vdwg.mxu0
    %1854 = vmatprep.subr.mxu0 0.0
    %1855 = vmatpush1.msra.mxu0 0.0
    %1856 = vmatprep.subr.mxu0 0.0
    %1857 = vmatpush1.msra.mxu0 0.0
    %1858 = vmatprep.subr.mxu0 0.0
    %1859 = vmatpush1.msra.mxu0 0.0
    %1860 = vmatprep.subr.mxu0 0.0
    %1861 = vmatpush1.msra.mxu0 0.0
    %v1862 = vand.u32 %v238, 4294901760
    %v1863 = vsub.f32 %v238, %v1862
    %v1864 = vand.u32 %v1863, 4294901760
    %v1865 = vsub.f32 %v1863, %v1864
    %v1866 = vand.u32 %v1865, 4294901760
    %1867 = vmatprep.subr.mxu0 %v1866
    %v1868 = vand.u32 %v237, 4294901760
    %v1869 = vsub.f32 %v237, %v1868
    %v1870 = vand.u32 %v1869, 4294901760
    %v1871 = vsub.f32 %v1869, %v1870
    %v1872 = vand.u32 %v1871, 4294901760
    %1873 = vmatpush1.msra.mxu0 %v1872
    %v1874 = vand.u32 %v223, 4294901760
    %v1875 = vsub.f32 %v223, %v1874
    %v1876 = vand.u32 %v1875, 4294901760
    %v1877 = vsub.f32 %v1875, %v1876
    %v1878 = vand.u32 %v1877, 4294901760
    %1879 = vmatprep.subr.mxu0 %v1878
    %v1880 = vand.u32 %v222, 4294901760
    %v1881 = vsub.f32 %v222, %v1880
    %v1882 = vand.u32 %v1881, 4294901760
    %v1883 = vsub.f32 %v1881, %v1882
    %v1884 = vand.u32 %v1883, 4294901760
    %1885 = vmatpush1.msra.mxu0 %v1884
    %v1886 = vand.u32 %v208, 4294901760
    %v1887 = vsub.f32 %v208, %v1886
    %v1888 = vand.u32 %v1887, 4294901760
    %v1889 = vsub.f32 %v1887, %v1888
    %v1890 = vand.u32 %v1889, 4294901760
    %1891 = vmatprep.subr.mxu0 %v1890
    %v1892 = vand.u32 %v207, 4294901760
    %v1893 = vsub.f32 %v207, %v1892
    %v1894 = vand.u32 %v1893, 4294901760
    %v1895 = vsub.f32 %v1893, %v1894
    %v1896 = vand.u32 %v1895, 4294901760
    %1897 = vmatpush1.msra.mxu0 %v1896
    %v1898 = vand.u32 %v193, 4294901760
    %v1899 = vsub.f32 %v193, %v1898
    %v1900 = vand.u32 %v1899, 4294901760
    %v1901 = vsub.f32 %v1899, %v1900
    %v1902 = vand.u32 %v1901, 4294901760
    %1903 = vmatprep.subr.mxu0 %v1902
    %v1904 = vand.u32 %v192, 4294901760
    %v1905 = vsub.f32 %v192, %v1904
    %v1906 = vand.u32 %v1905, 4294901760
    %v1907 = vsub.f32 %v1905, %v1906
    %v1908 = vand.u32 %v1907, 4294901760
    %1909 = vmatpush1.msra.mxu0 %v1908
    %v1910 = vand.u32 %v178, 4294901760
    %v1911 = vsub.f32 %v178, %v1910
    %v1912 = vand.u32 %v1911, 4294901760
    %v1913 = vsub.f32 %v1911, %v1912
    %v1914 = vand.u32 %v1913, 4294901760
    %1915 = vmatprep.subr.mxu0 %v1914
    %v1916 = vand.u32 %v177, 4294901760
    %v1917 = vsub.f32 %v177, %v1916
    %v1918 = vand.u32 %v1917, 4294901760
    %v1919 = vsub.f32 %v1917, %v1918
    %v1920 = vand.u32 %v1919, 4294901760
    %1921 = vmatpush1.msra.mxu0 %v1920
    %v1922 = vand.u32 %v163, 4294901760
    %v1923 = vsub.f32 %v163, %v1922
    %v1924 = vand.u32 %v1923, 4294901760
    %v1925 = vsub.f32 %v1923, %v1924
    %v1926 = vand.u32 %v1925, 4294901760
    %1927 = vmatprep.subr.mxu0 %v1926
    %v1928 = vand.u32 %v162, 4294901760
    %v1929 = vsub.f32 %v162, %v1928
    %v1930 = vand.u32 %v1929, 4294901760
    %v1931 = vsub.f32 %v1929, %v1930
    %v1932 = vand.u32 %v1931, 4294901760
    %1933 = vmatpush1.msra.mxu0 %v1932
    %v1934 = vand.u32 %v148, 4294901760
    %v1935 = vsub.f32 %v148, %v1934
    %v1936 = vand.u32 %v1935, 4294901760
    %v1937 = vsub.f32 %v1935, %v1936
    %v1938 = vand.u32 %v1937, 4294901760
    %1939 = vmatprep.subr.mxu0 %v1938
    %v1940 = vand.u32 %v147, 4294901760
    %v1941 = vsub.f32 %v147, %v1940
    %v1942 = vand.u32 %v1941, 4294901760
    %v1943 = vsub.f32 %v1941, %v1942
    %v1944 = vand.u32 %v1943, 4294901760
    %1945 = vmatpush1.msra.mxu0 %v1944
    %v1946 = vand.u32 %v133, 4294901760
    %v1947 = vsub.f32 %v133, %v1946
    %v1948 = vand.u32 %v1947, 4294901760
    %v1949 = vsub.f32 %v1947, %v1948
    %v1950 = vand.u32 %v1949, 4294901760
    %1951 = vmatprep.subr.mxu0 %v1950
    %v1952 = vand.u32 %v132, 4294901760
    %v1953 = vsub.f32 %v132, %v1952
    %v1954 = vand.u32 %v1953, 4294901760
    %v1955 = vsub.f32 %v1953, %v1954
    %v1956 = vand.u32 %v1955, 4294901760
    %1957 = vmatpush1.msra.mxu0 %v1956
    %v1958 = vand.u32 %v118, 4294901760
    %v1959 = vsub.f32 %v118, %v1958
    %v1960 = vand.u32 %v1959, 4294901760
    %v1961 = vsub.f32 %v1959, %v1960
    %v1962 = vand.u32 %v1961, 4294901760
    %1963 = vmatprep.subr.mxu0 %v1962
    %v1964 = vand.u32 %v117, 4294901760
    %v1965 = vsub.f32 %v117, %v1964
    %v1966 = vand.u32 %v1965, 4294901760
    %v1967 = vsub.f32 %v1965, %v1966
    %v1968 = vand.u32 %v1967, 4294901760
    %1969 = vmatpush1.msra.mxu0 %v1968
    %v1970 = vand.u32 %v103, 4294901760
    %v1971 = vsub.f32 %v103, %v1970
    %v1972 = vand.u32 %v1971, 4294901760
    %v1973 = vsub.f32 %v1971, %v1972
    %v1974 = vand.u32 %v1973, 4294901760
    %1975 = vmatprep.subr.mxu0 %v1974
    %v1976 = vand.u32 %v102, 4294901760
    %v1977 = vsub.f32 %v102, %v1976
    %v1978 = vand.u32 %v1977, 4294901760
    %v1979 = vsub.f32 %v1977, %v1978
    %v1980 = vand.u32 %v1979, 4294901760
    %1981 = vmatpush1.msra.mxu0 %v1980
    %v1982 = vand.u32 %v88, 4294901760
    %v1983 = vsub.f32 %v88, %v1982
    %v1984 = vand.u32 %v1983, 4294901760
    %v1985 = vsub.f32 %v1983, %v1984
    %v1986 = vand.u32 %v1985, 4294901760
    %1987 = vmatprep.subr.mxu0 %v1986
    %v1988 = vand.u32 %v87, 4294901760
    %v1989 = vsub.f32 %v87, %v1988
    %v1990 = vand.u32 %v1989, 4294901760
    %v1991 = vsub.f32 %v1989, %v1990
    %v1992 = vand.u32 %v1991, 4294901760
    %1993 = vmatpush1.msra.mxu0 %v1992
    %v1994 = vand.u32 %v73, 4294901760
    %v1995 = vsub.f32 %v73, %v1994
    %v1996 = vand.u32 %v1995, 4294901760
    %v1997 = vsub.f32 %v1995, %v1996
    %v1998 = vand.u32 %v1997, 4294901760
    %1999 = vmatprep.subr.mxu0 %v1998
    %v2000 = vand.u32 %v72, 4294901760
    %v2001 = vsub.f32 %v72, %v2000
    %v2002 = vand.u32 %v2001, 4294901760
    %v2003 = vsub.f32 %v2001, %v2002
    %v2004 = vand.u32 %v2003, 4294901760
    %2005 = vmatpush1.msra.mxu0 %v2004
    %2006 = vmatprep.subr.mxu0 0.0
    %2007 = vmatpush2.msra.mxu0 0.0
    %2008 = vmatprep.subr.mxu0 0.0
    %2009 = vmatpush2.msra.mxu0 0.0
    %2010 = vmatprep.subr.mxu0 0.0
    %2011 = vmatpush2.msra.mxu0 0.0
    %2012 = vmatprep.subr.mxu0 0.0
    %2013 = vmatpush2.msra.mxu0 0.0
    %2014 = vmatprep.subr.mxu0 0.0
    %2015 = vmatpush2.msra.mxu0 0.0
    %2016 = vmatprep.subr.mxu0 0.0
    %2017 = vmatpush2.msra.mxu0 0.0
    %2018 = vmatprep.subr.mxu0 0.0
    %2019 = vmatpush2.msra.mxu0 0.0
    %2020 = vmatprep.subr.mxu0 0.0
    %2021 = vmatpush2.msra.mxu0 0.0
    %2022 = vmatprep.subr.mxu0 0.0
    %2023 = vmatpush2.msra.mxu0 0.0
    %2024 = vmatprep.subr.mxu0 0.0
    %2025 = vmatpush2.msra.mxu0 0.0
    %2026 = vmatprep.subr.mxu0 0.0
    %2027 = vmatpush2.msra.mxu0 0.0
    %2028 = vmatprep.subr.mxu0 0.0
    %2029 = vmatpush2.msra.mxu0 0.0
    %2030 = vmatprep.subr.mxu0 0.0
    %2031 = vmatpush2.msra.mxu0 0.0
    %2032 = vmatprep.subr.mxu0 0.0
    %2033 = vmatpush2.msra.mxu0 0.0
    %2034 = vmatprep.subr.mxu0 0.0
    %2035 = vmatpush2.msra.mxu0 0.0
    %2036 = vmatprep.subr.mxu0 0.0
    %2037 = vmatpush2.msra.mxu0 0.0
    %2038 = vmatprep.mubr.f32.mxu0 0.0
    %v2039 = vand.u32 %v250, 4294901760
    %2040 = vmatmul.mubr.f32.gmra.mxu0 %v2039
    %v2041 = vpop.f32.mrf.mxu0
    %v2042 = vadd.f32 %v1850, %v2041
    %v2043 = vpop.f32.mrf.mxu0
    %v2044 = vadd.f32 %v1852, %v2043
    %2045 = vdwg.mxu0
    %2046 = vmatprep.subr.mxu0 0.0
    %2047 = vmatpush1.msra.mxu0 0.0
    %2048 = vmatprep.subr.mxu0 0.0
    %2049 = vmatpush1.msra.mxu0 0.0
    %2050 = vmatprep.subr.mxu0 0.0
    %2051 = vmatpush1.msra.mxu0 0.0
    %2052 = vmatprep.subr.mxu0 0.0
    %2053 = vmatpush1.msra.mxu0 0.0
    %v2054 = vand.u32 %v238, 4294901760
    %v2055 = vsub.f32 %v238, %v2054
    %2056 = vmatprep.subr.mxu0 %v2055
    %v2057 = vand.u32 %v237, 4294901760
    %v2058 = vsub.f32 %v237, %v2057
    %2059 = vmatpush1.msra.mxu0 %v2058
    %v2060 = vand.u32 %v223, 4294901760
    %v2061 = vsub.f32 %v223, %v2060
    %2062 = vmatprep.subr.mxu0 %v2061
    %v2063 = vand.u32 %v222, 4294901760
    %v2064 = vsub.f32 %v222, %v2063
    %2065 = vmatpush1.msra.mxu0 %v2064
    %v2066 = vand.u32 %v208, 4294901760
    %v2067 = vsub.f32 %v208, %v2066
    %2068 = vmatprep.subr.mxu0 %v2067
    %v2069 = vand.u32 %v207, 4294901760
    %v2070 = vsub.f32 %v207, %v2069
    %2071 = vmatpush1.msra.mxu0 %v2070
    %v2072 = vand.u32 %v193, 4294901760
    %v2073 = vsub.f32 %v193, %v2072
    %2074 = vmatprep.subr.mxu0 %v2073
    %v2075 = vand.u32 %v192, 4294901760
    %v2076 = vsub.f32 %v192, %v2075
    %2077 = vmatpush1.msra.mxu0 %v2076
    %v2078 = vand.u32 %v178, 4294901760
    %v2079 = vsub.f32 %v178, %v2078
    %2080 = vmatprep.subr.mxu0 %v2079
    %v2081 = vand.u32 %v177, 4294901760
    %v2082 = vsub.f32 %v177, %v2081
    %2083 = vmatpush1.msra.mxu0 %v2082
    %v2084 = vand.u32 %v163, 4294901760
    %v2085 = vsub.f32 %v163, %v2084
    %2086 = vmatprep.subr.mxu0 %v2085
    %v2087 = vand.u32 %v162, 4294901760
    %v2088 = vsub.f32 %v162, %v2087
    %2089 = vmatpush1.msra.mxu0 %v2088
    %v2090 = vand.u32 %v148, 4294901760
    %v2091 = vsub.f32 %v148, %v2090
    %2092 = vmatprep.subr.mxu0 %v2091
    %v2093 = vand.u32 %v147, 4294901760
    %v2094 = vsub.f32 %v147, %v2093
    %2095 = vmatpush1.msra.mxu0 %v2094
    %v2096 = vand.u32 %v133, 4294901760
    %v2097 = vsub.f32 %v133, %v2096
    %2098 = vmatprep.subr.mxu0 %v2097
    %v2099 = vand.u32 %v132, 4294901760
    %v2100 = vsub.f32 %v132, %v2099
    %2101 = vmatpush1.msra.mxu0 %v2100
    %v2102 = vand.u32 %v118, 4294901760
    %v2103 = vsub.f32 %v118, %v2102
    %2104 = vmatprep.subr.mxu0 %v2103
    %v2105 = vand.u32 %v117, 4294901760
    %v2106 = vsub.f32 %v117, %v2105
    %2107 = vmatpush1.msra.mxu0 %v2106
    %v2108 = vand.u32 %v103, 4294901760
    %v2109 = vsub.f32 %v103, %v2108
    %2110 = vmatprep.subr.mxu0 %v2109
    %v2111 = vand.u32 %v102, 4294901760
    %v2112 = vsub.f32 %v102, %v2111
    %2113 = vmatpush1.msra.mxu0 %v2112
    %v2114 = vand.u32 %v88, 4294901760
    %v2115 = vsub.f32 %v88, %v2114
    %2116 = vmatprep.subr.mxu0 %v2115
    %v2117 = vand.u32 %v87, 4294901760
    %v2118 = vsub.f32 %v87, %v2117
    %2119 = vmatpush1.msra.mxu0 %v2118
    %v2120 = vand.u32 %v73, 4294901760
    %v2121 = vsub.f32 %v73, %v2120
    %2122 = vmatprep.subr.mxu0 %v2121
    %v2123 = vand.u32 %v72, 4294901760
    %v2124 = vsub.f32 %v72, %v2123
    %2125 = vmatpush1.msra.mxu0 %v2124
    %2126 = vmatprep.subr.mxu0 0.0
    %2127 = vmatpush2.msra.mxu0 0.0
    %2128 = vmatprep.subr.mxu0 0.0
    %2129 = vmatpush2.msra.mxu0 0.0
    %2130 = vmatprep.subr.mxu0 0.0
    %2131 = vmatpush2.msra.mxu0 0.0
    %2132 = vmatprep.subr.mxu0 0.0
    %2133 = vmatpush2.msra.mxu0 0.0
    %2134 = vmatprep.subr.mxu0 0.0
    %2135 = vmatpush2.msra.mxu0 0.0
    %2136 = vmatprep.subr.mxu0 0.0
    %2137 = vmatpush2.msra.mxu0 0.0
    %2138 = vmatprep.subr.mxu0 0.0
    %2139 = vmatpush2.msra.mxu0 0.0
    %2140 = vmatprep.subr.mxu0 0.0
    %2141 = vmatpush2.msra.mxu0 0.0
    %2142 = vmatprep.subr.mxu0 0.0
    %2143 = vmatpush2.msra.mxu0 0.0
    %2144 = vmatprep.subr.mxu0 0.0
    %2145 = vmatpush2.msra.mxu0 0.0
    %2146 = vmatprep.subr.mxu0 0.0
    %2147 = vmatpush2.msra.mxu0 0.0
    %2148 = vmatprep.subr.mxu0 0.0
    %2149 = vmatpush2.msra.mxu0 0.0
    %2150 = vmatprep.subr.mxu0 0.0
    %2151 = vmatpush2.msra.mxu0 0.0
    %2152 = vmatprep.subr.mxu0 0.0
    %2153 = vmatpush2.msra.mxu0 0.0
    %2154 = vmatprep.subr.mxu0 0.0
    %2155 = vmatpush2.msra.mxu0 0.0
    %2156 = vmatprep.subr.mxu0 0.0
    %2157 = vmatpush2.msra.mxu0 0.0
    %2158 = vmatprep.mubr.f32.mxu0 0.0
    %v2159 = vand.u32 %v250, 4294901760
    %v2160 = vsub.f32 %v250, %v2159
    %2161 = vmatmul.mubr.f32.gmra.mxu0 %v2160
    %v2162 = vpop.f32.mrf.mxu0
    %v2163 = vadd.f32 %v2042, %v2162
    %v2164 = vpop.f32.mrf.mxu0
    %v2165 = vadd.f32 %v2044, %v2164
    %2166 = vdwg.mxu0
    %2167 = vmatprep.subr.mxu0 0.0
    %2168 = vmatpush1.msra.mxu0 0.0
    %2169 = vmatprep.subr.mxu0 0.0
    %2170 = vmatpush1.msra.mxu0 0.0
    %2171 = vmatprep.subr.mxu0 0.0
    %2172 = vmatpush1.msra.mxu0 0.0
    %2173 = vmatprep.subr.mxu0 0.0
    %2174 = vmatpush1.msra.mxu0 0.0
    %v2175 = vand.u32 %v238, 4294901760
    %2176 = vmatprep.subr.mxu0 %v2175
    %v2177 = vand.u32 %v237, 4294901760
    %2178 = vmatpush1.msra.mxu0 %v2177
    %v2179 = vand.u32 %v223, 4294901760
    %2180 = vmatprep.subr.mxu0 %v2179
    %v2181 = vand.u32 %v222, 4294901760
    %2182 = vmatpush1.msra.mxu0 %v2181
    %v2183 = vand.u32 %v208, 4294901760
    %2184 = vmatprep.subr.mxu0 %v2183
    %v2185 = vand.u32 %v207, 4294901760
    %2186 = vmatpush1.msra.mxu0 %v2185
    %v2187 = vand.u32 %v193, 4294901760
    %2188 = vmatprep.subr.mxu0 %v2187
    %v2189 = vand.u32 %v192, 4294901760
    %2190 = vmatpush1.msra.mxu0 %v2189
    %v2191 = vand.u32 %v178, 4294901760
    %2192 = vmatprep.subr.mxu0 %v2191
    %v2193 = vand.u32 %v177, 4294901760
    %2194 = vmatpush1.msra.mxu0 %v2193
    %v2195 = vand.u32 %v163, 4294901760
    %2196 = vmatprep.subr.mxu0 %v2195
    %v2197 = vand.u32 %v162, 4294901760
    %2198 = vmatpush1.msra.mxu0 %v2197
    %v2199 = vand.u32 %v148, 4294901760
    %2200 = vmatprep.subr.mxu0 %v2199
    %v2201 = vand.u32 %v147, 4294901760
    %2202 = vmatpush1.msra.mxu0 %v2201
    %v2203 = vand.u32 %v133, 4294901760
    %2204 = vmatprep.subr.mxu0 %v2203
    %v2205 = vand.u32 %v132, 4294901760
    %2206 = vmatpush1.msra.mxu0 %v2205
    %v2207 = vand.u32 %v118, 4294901760
    %2208 = vmatprep.subr.mxu0 %v2207
    %v2209 = vand.u32 %v117, 4294901760
    %2210 = vmatpush1.msra.mxu0 %v2209
    %v2211 = vand.u32 %v103, 4294901760
    %2212 = vmatprep.subr.mxu0 %v2211
    %v2213 = vand.u32 %v102, 4294901760
    %2214 = vmatpush1.msra.mxu0 %v2213
    %v2215 = vand.u32 %v88, 4294901760
    %2216 = vmatprep.subr.mxu0 %v2215
    %v2217 = vand.u32 %v87, 4294901760
    %2218 = vmatpush1.msra.mxu0 %v2217
    %v2219 = vand.u32 %v73, 4294901760
    %2220 = vmatprep.subr.mxu0 %v2219
    %v2221 = vand.u32 %v72, 4294901760
    %2222 = vmatpush1.msra.mxu0 %v2221
    %2223 = vmatprep.subr.mxu0 0.0
    %2224 = vmatpush2.msra.mxu0 0.0
    %2225 = vmatprep.subr.mxu0 0.0
    %2226 = vmatpush2.msra.mxu0 0.0
    %2227 = vmatprep.subr.mxu0 0.0
    %2228 = vmatpush2.msra.mxu0 0.0
    %2229 = vmatprep.subr.mxu0 0.0
    %2230 = vmatpush2.msra.mxu0 0.0
    %2231 = vmatprep.subr.mxu0 0.0
    %2232 = vmatpush2.msra.mxu0 0.0
    %2233 = vmatprep.subr.mxu0 0.0
    %2234 = vmatpush2.msra.mxu0 0.0
    %2235 = vmatprep.subr.mxu0 0.0
    %2236 = vmatpush2.msra.mxu0 0.0
    %2237 = vmatprep.subr.mxu0 0.0
    %2238 = vmatpush2.msra.mxu0 0.0
    %2239 = vmatprep.subr.mxu0 0.0
    %2240 = vmatpush2.msra.mxu0 0.0
    %2241 = vmatprep.subr.mxu0 0.0
    %2242 = vmatpush2.msra.mxu0 0.0
    %2243 = vmatprep.subr.mxu0 0.0
    %2244 = vmatpush2.msra.mxu0 0.0
    %2245 = vmatprep.subr.mxu0 0.0
    %2246 = vmatpush2.msra.mxu0 0.0
    %2247 = vmatprep.subr.mxu0 0.0
    %2248 = vmatpush2.msra.mxu0 0.0
    %2249 = vmatprep.subr.mxu0 0.0
    %2250 = vmatpush2.msra.mxu0 0.0
    %2251 = vmatprep.subr.mxu0 0.0
    %2252 = vmatpush2.msra.mxu0 0.0
    %2253 = vmatprep.subr.mxu0 0.0
    %2254 = vmatpush2.msra.mxu0 0.0
    %2255 = vmatprep.mubr.f32.mxu0 0.0
    %v2256 = vand.u32 %v250, 4294901760
    %v2257 = vsub.f32 %v250, %v2256
    %v2258 = vand.u32 %v2257, 4294901760
    %2259 = vmatmul.mubr.f32.gmra.mxu0 %v2258
    %v2260 = vpop.f32.mrf.mxu0
    %v2261 = vadd.f32 %v2163, %v2260
    %v2262 = vpop.f32.mrf.mxu0
    %v2263 = vadd.f32 %v2165, %v2262
    %2264 = vdwg.mxu0
    %2265 = vmatprep.subr.mxu0 0.0
    %2266 = vmatpush1.msra.mxu0 0.0
    %2267 = vmatprep.subr.mxu0 0.0
    %2268 = vmatpush1.msra.mxu0 0.0
    %2269 = vmatprep.subr.mxu0 0.0
    %2270 = vmatpush1.msra.mxu0 0.0
    %2271 = vmatprep.subr.mxu0 0.0
    %2272 = vmatpush1.msra.mxu0 0.0
    %v2273 = vand.u32 %v238, 4294901760
    %v2274 = vsub.f32 %v238, %v2273
    %v2275 = vand.u32 %v2274, 4294901760
    %2276 = vmatprep.subr.mxu0 %v2275
    %v2277 = vand.u32 %v237, 4294901760
    %v2278 = vsub.f32 %v237, %v2277
    %v2279 = vand.u32 %v2278, 4294901760
    %2280 = vmatpush1.msra.mxu0 %v2279
    %v2281 = vand.u32 %v223, 4294901760
    %v2282 = vsub.f32 %v223, %v2281
    %v2283 = vand.u32 %v2282, 4294901760
    %2284 = vmatprep.subr.mxu0 %v2283
    %v2285 = vand.u32 %v222, 4294901760
    %v2286 = vsub.f32 %v222, %v2285
    %v2287 = vand.u32 %v2286, 4294901760
    %2288 = vmatpush1.msra.mxu0 %v2287
    %v2289 = vand.u32 %v208, 4294901760
    %v2290 = vsub.f32 %v208, %v2289
    %v2291 = vand.u32 %v2290, 4294901760
    %2292 = vmatprep.subr.mxu0 %v2291
    %v2293 = vand.u32 %v207, 4294901760
    %v2294 = vsub.f32 %v207, %v2293
    %v2295 = vand.u32 %v2294, 4294901760
    %2296 = vmatpush1.msra.mxu0 %v2295
    %v2297 = vand.u32 %v193, 4294901760
    %v2298 = vsub.f32 %v193, %v2297
    %v2299 = vand.u32 %v2298, 4294901760
    %2300 = vmatprep.subr.mxu0 %v2299
    %v2301 = vand.u32 %v192, 4294901760
    %v2302 = vsub.f32 %v192, %v2301
    %v2303 = vand.u32 %v2302, 4294901760
    %2304 = vmatpush1.msra.mxu0 %v2303
    %v2305 = vand.u32 %v178, 4294901760
    %v2306 = vsub.f32 %v178, %v2305
    %v2307 = vand.u32 %v2306, 4294901760
    %2308 = vmatprep.subr.mxu0 %v2307
    %v2309 = vand.u32 %v177, 4294901760
    %v2310 = vsub.f32 %v177, %v2309
    %v2311 = vand.u32 %v2310, 4294901760
    %2312 = vmatpush1.msra.mxu0 %v2311
    %v2313 = vand.u32 %v163, 4294901760
    %v2314 = vsub.f32 %v163, %v2313
    %v2315 = vand.u32 %v2314, 4294901760
    %2316 = vmatprep.subr.mxu0 %v2315
    %v2317 = vand.u32 %v162, 4294901760
    %v2318 = vsub.f32 %v162, %v2317
    %v2319 = vand.u32 %v2318, 4294901760
    %2320 = vmatpush1.msra.mxu0 %v2319
    %v2321 = vand.u32 %v148, 4294901760
    %v2322 = vsub.f32 %v148, %v2321
    %v2323 = vand.u32 %v2322, 4294901760
    %2324 = vmatprep.subr.mxu0 %v2323
    %v2325 = vand.u32 %v147, 4294901760
    %v2326 = vsub.f32 %v147, %v2325
    %v2327 = vand.u32 %v2326, 4294901760
    %2328 = vmatpush1.msra.mxu0 %v2327
    %v2329 = vand.u32 %v133, 4294901760
    %v2330 = vsub.f32 %v133, %v2329
    %v2331 = vand.u32 %v2330, 4294901760
    %2332 = vmatprep.subr.mxu0 %v2331
    %v2333 = vand.u32 %v132, 4294901760
    %v2334 = vsub.f32 %v132, %v2333
    %v2335 = vand.u32 %v2334, 4294901760
    %2336 = vmatpush1.msra.mxu0 %v2335
    %v2337 = vand.u32 %v118, 4294901760
    %v2338 = vsub.f32 %v118, %v2337
    %v2339 = vand.u32 %v2338, 4294901760
    %2340 = vmatprep.subr.mxu0 %v2339
    %v2341 = vand.u32 %v117, 4294901760
    %v2342 = vsub.f32 %v117, %v2341
    %v2343 = vand.u32 %v2342, 4294901760
    %2344 = vmatpush1.msra.mxu0 %v2343
    %v2345 = vand.u32 %v103, 4294901760
    %v2346 = vsub.f32 %v103, %v2345
    %v2347 = vand.u32 %v2346, 4294901760
    %2348 = vmatprep.subr.mxu0 %v2347
    %v2349 = vand.u32 %v102, 4294901760
    %v2350 = vsub.f32 %v102, %v2349
    %v2351 = vand.u32 %v2350, 4294901760
    %2352 = vmatpush1.msra.mxu0 %v2351
    %v2353 = vand.u32 %v88, 4294901760
    %v2354 = vsub.f32 %v88, %v2353
    %v2355 = vand.u32 %v2354, 4294901760
    %2356 = vmatprep.subr.mxu0 %v2355
    %v2357 = vand.u32 %v87, 4294901760
    %v2358 = vsub.f32 %v87, %v2357
    %v2359 = vand.u32 %v2358, 4294901760
    %2360 = vmatpush1.msra.mxu0 %v2359
    %v2361 = vand.u32 %v73, 4294901760
    %v2362 = vsub.f32 %v73, %v2361
    %v2363 = vand.u32 %v2362, 4294901760
    %2364 = vmatprep.subr.mxu0 %v2363
    %v2365 = vand.u32 %v72, 4294901760
    %v2366 = vsub.f32 %v72, %v2365
    %v2367 = vand.u32 %v2366, 4294901760
    %2368 = vmatpush1.msra.mxu0 %v2367
    %2369 = vmatprep.subr.mxu0 0.0
    %2370 = vmatpush2.msra.mxu0 0.0
    %2371 = vmatprep.subr.mxu0 0.0
    %2372 = vmatpush2.msra.mxu0 0.0
    %2373 = vmatprep.subr.mxu0 0.0
    %2374 = vmatpush2.msra.mxu0 0.0
    %2375 = vmatprep.subr.mxu0 0.0
    %2376 = vmatpush2.msra.mxu0 0.0
    %2377 = vmatprep.subr.mxu0 0.0
    %2378 = vmatpush2.msra.mxu0 0.0
    %2379 = vmatprep.subr.mxu0 0.0
    %2380 = vmatpush2.msra.mxu0 0.0
    %2381 = vmatprep.subr.mxu0 0.0
    %2382 = vmatpush2.msra.mxu0 0.0
    %2383 = vmatprep.subr.mxu0 0.0
    %2384 = vmatpush2.msra.mxu0 0.0
    %2385 = vmatprep.subr.mxu0 0.0
    %2386 = vmatpush2.msra.mxu0 0.0
    %2387 = vmatprep.subr.mxu0 0.0
    %2388 = vmatpush2.msra.mxu0 0.0
    %2389 = vmatprep.subr.mxu0 0.0
    %2390 = vmatpush2.msra.mxu0 0.0
    %2391 = vmatprep.subr.mxu0 0.0
    %2392 = vmatpush2.msra.mxu0 0.0
    %2393 = vmatprep.subr.mxu0 0.0
    %2394 = vmatpush2.msra.mxu0 0.0
    %2395 = vmatprep.subr.mxu0 0.0
    %2396 = vmatpush2.msra.mxu0 0.0
    %2397 = vmatprep.subr.mxu0 0.0
    %2398 = vmatpush2.msra.mxu0 0.0
    %2399 = vmatprep.subr.mxu0 0.0
    %2400 = vmatpush2.msra.mxu0 0.0
    %2401 = vmatprep.mubr.f32.mxu0 0.0
    %v2402 = vand.u32 %v250, 4294901760
    %2403 = vmatmul.mubr.f32.gmra.mxu0 %v2402
    %v2404 = vpop.f32.mrf.mxu0
    %v2405 = vadd.f32 %v2261, %v2404
    %v2406 = vpop.f32.mrf.mxu0
    %v2407 = vadd.f32 %v2263, %v2406
    %2408 = vdwg.mxu0
    %2409 = vmatprep.subr.mxu0 0.0
    %2410 = vmatpush1.msra.mxu0 0.0
    %2411 = vmatprep.subr.mxu0 0.0
    %2412 = vmatpush1.msra.mxu0 0.0
    %2413 = vmatprep.subr.mxu0 0.0
    %2414 = vmatpush1.msra.mxu0 0.0
    %2415 = vmatprep.subr.mxu0 0.0
    %2416 = vmatpush1.msra.mxu0 0.0
    %v2417 = vand.u32 %v238, 4294901760
    %2418 = vmatprep.subr.mxu0 %v2417
    %v2419 = vand.u32 %v237, 4294901760
    %2420 = vmatpush1.msra.mxu0 %v2419
    %v2421 = vand.u32 %v223, 4294901760
    %2422 = vmatprep.subr.mxu0 %v2421
    %v2423 = vand.u32 %v222, 4294901760
    %2424 = vmatpush1.msra.mxu0 %v2423
    %v2425 = vand.u32 %v208, 4294901760
    %2426 = vmatprep.subr.mxu0 %v2425
    %v2427 = vand.u32 %v207, 4294901760
    %2428 = vmatpush1.msra.mxu0 %v2427
    %v2429 = vand.u32 %v193, 4294901760
    %2430 = vmatprep.subr.mxu0 %v2429
    %v2431 = vand.u32 %v192, 4294901760
    %2432 = vmatpush1.msra.mxu0 %v2431
    %v2433 = vand.u32 %v178, 4294901760
    %2434 = vmatprep.subr.mxu0 %v2433
    %v2435 = vand.u32 %v177, 4294901760
    %2436 = vmatpush1.msra.mxu0 %v2435
    %v2437 = vand.u32 %v163, 4294901760
    %2438 = vmatprep.subr.mxu0 %v2437
    %v2439 = vand.u32 %v162, 4294901760
    %2440 = vmatpush1.msra.mxu0 %v2439
    %v2441 = vand.u32 %v148, 4294901760
    %2442 = vmatprep.subr.mxu0 %v2441
    %v2443 = vand.u32 %v147, 4294901760
    %2444 = vmatpush1.msra.mxu0 %v2443
    %v2445 = vand.u32 %v133, 4294901760
    %2446 = vmatprep.subr.mxu0 %v2445
    %v2447 = vand.u32 %v132, 4294901760
    %2448 = vmatpush1.msra.mxu0 %v2447
    %v2449 = vand.u32 %v118, 4294901760
    %2450 = vmatprep.subr.mxu0 %v2449
    %v2451 = vand.u32 %v117, 4294901760
    %2452 = vmatpush1.msra.mxu0 %v2451
    %v2453 = vand.u32 %v103, 4294901760
    %2454 = vmatprep.subr.mxu0 %v2453
    %v2455 = vand.u32 %v102, 4294901760
    %2456 = vmatpush1.msra.mxu0 %v2455
    %v2457 = vand.u32 %v88, 4294901760
    %2458 = vmatprep.subr.mxu0 %v2457
    %v2459 = vand.u32 %v87, 4294901760
    %2460 = vmatpush1.msra.mxu0 %v2459
    %v2461 = vand.u32 %v73, 4294901760
    %2462 = vmatprep.subr.mxu0 %v2461
    %v2463 = vand.u32 %v72, 4294901760
    %2464 = vmatpush1.msra.mxu0 %v2463
    %2465 = vmatprep.subr.mxu0 0.0
    %2466 = vmatpush2.msra.mxu0 0.0
    %2467 = vmatprep.subr.mxu0 0.0
    %2468 = vmatpush2.msra.mxu0 0.0
    %2469 = vmatprep.subr.mxu0 0.0
    %2470 = vmatpush2.msra.mxu0 0.0
    %2471 = vmatprep.subr.mxu0 0.0
    %2472 = vmatpush2.msra.mxu0 0.0
    %2473 = vmatprep.subr.mxu0 0.0
    %2474 = vmatpush2.msra.mxu0 0.0
    %2475 = vmatprep.subr.mxu0 0.0
    %2476 = vmatpush2.msra.mxu0 0.0
    %2477 = vmatprep.subr.mxu0 0.0
    %2478 = vmatpush2.msra.mxu0 0.0
    %2479 = vmatprep.subr.mxu0 0.0
    %2480 = vmatpush2.msra.mxu0 0.0
    %2481 = vmatprep.subr.mxu0 0.0
    %2482 = vmatpush2.msra.mxu0 0.0
    %2483 = vmatprep.subr.mxu0 0.0
    %2484 = vmatpush2.msra.mxu0 0.0
    %2485 = vmatprep.subr.mxu0 0.0
    %2486 = vmatpush2.msra.mxu0 0.0
    %2487 = vmatprep.subr.mxu0 0.0
    %2488 = vmatpush2.msra.mxu0 0.0
    %2489 = vmatprep.subr.mxu0 0.0
    %2490 = vmatpush2.msra.mxu0 0.0
    %2491 = vmatprep.subr.mxu0 0.0
    %2492 = vmatpush2.msra.mxu0 0.0
    %2493 = vmatprep.subr.mxu0 0.0
    %2494 = vmatpush2.msra.mxu0 0.0
    %2495 = vmatprep.subr.mxu0 0.0
    %2496 = vmatpush2.msra.mxu0 0.0
    %2497 = vmatprep.mubr.f32.mxu0 0.0
    %v2498 = vand.u32 %v250, 4294901760
    %2499 = vmatmul.mubr.f32.gmra.mxu0 %v2498
    %v2500 = vpop.f32.mrf.mxu0
    %v2501 = vadd.f32 %v2405, %v2500
    %v2502 = vpop.f32.mrf.mxu0
    %v2503 = vadd.f32 %v2407, %v2502
    %2504 = vdwg.mxu0
    %2505 = vmatprep.subr.mxu0 0.0
    %2506 = vmatpush1.msra.mxu0 0.0
    %2507 = vmatprep.subr.mxu0 0.0
    %2508 = vmatpush1.msra.mxu0 0.0
    %2509 = vmatprep.subr.mxu0 0.0
    %2510 = vmatpush1.msra.mxu0 0.0
    %2511 = vmatprep.subr.mxu0 0.0
    %2512 = vmatpush1.msra.mxu0 0.0
    %v2513 = vand.u32 %v240, 4294901760
    %2514 = vmatprep.subr.mxu0 %v2513
    %v2515 = vand.u32 %v239, 4294901760
    %2516 = vmatpush1.msra.mxu0 %v2515
    %v2517 = vand.u32 %v225, 4294901760
    %2518 = vmatprep.subr.mxu0 %v2517
    %v2519 = vand.u32 %v224, 4294901760
    %2520 = vmatpush1.msra.mxu0 %v2519
    %v2521 = vand.u32 %v210, 4294901760
    %2522 = vmatprep.subr.mxu0 %v2521
    %v2523 = vand.u32 %v209, 4294901760
    %2524 = vmatpush1.msra.mxu0 %v2523
    %v2525 = vand.u32 %v195, 4294901760
    %2526 = vmatprep.subr.mxu0 %v2525
    %v2527 = vand.u32 %v194, 4294901760
    %2528 = vmatpush1.msra.mxu0 %v2527
    %v2529 = vand.u32 %v180, 4294901760
    %2530 = vmatprep.subr.mxu0 %v2529
    %v2531 = vand.u32 %v179, 4294901760
    %2532 = vmatpush1.msra.mxu0 %v2531
    %v2533 = vand.u32 %v165, 4294901760
    %2534 = vmatprep.subr.mxu0 %v2533
    %v2535 = vand.u32 %v164, 4294901760
    %2536 = vmatpush1.msra.mxu0 %v2535
    %v2537 = vand.u32 %v150, 4294901760
    %2538 = vmatprep.subr.mxu0 %v2537
    %v2539 = vand.u32 %v149, 4294901760
    %2540 = vmatpush1.msra.mxu0 %v2539
    %v2541 = vand.u32 %v135, 4294901760
    %2542 = vmatprep.subr.mxu0 %v2541
    %v2543 = vand.u32 %v134, 4294901760
    %2544 = vmatpush1.msra.mxu0 %v2543
    %v2545 = vand.u32 %v120, 4294901760
    %2546 = vmatprep.subr.mxu0 %v2545
    %v2547 = vand.u32 %v119, 4294901760
    %2548 = vmatpush1.msra.mxu0 %v2547
    %v2549 = vand.u32 %v105, 4294901760
    %2550 = vmatprep.subr.mxu0 %v2549
    %v2551 = vand.u32 %v104, 4294901760
    %2552 = vmatpush1.msra.mxu0 %v2551
    %v2553 = vand.u32 %v90, 4294901760
    %2554 = vmatprep.subr.mxu0 %v2553
    %v2555 = vand.u32 %v89, 4294901760
    %2556 = vmatpush1.msra.mxu0 %v2555
    %v2557 = vand.u32 %v75, 4294901760
    %2558 = vmatprep.subr.mxu0 %v2557
    %v2559 = vand.u32 %v74, 4294901760
    %2560 = vmatpush1.msra.mxu0 %v2559
    %2561 = vmatprep.subr.mxu0 0.0
    %2562 = vmatpush2.msra.mxu0 0.0
    %2563 = vmatprep.subr.mxu0 0.0
    %2564 = vmatpush2.msra.mxu0 0.0
    %2565 = vmatprep.subr.mxu0 0.0
    %2566 = vmatpush2.msra.mxu0 0.0
    %2567 = vmatprep.subr.mxu0 0.0
    %2568 = vmatpush2.msra.mxu0 0.0
    %2569 = vmatprep.subr.mxu0 0.0
    %2570 = vmatpush2.msra.mxu0 0.0
    %2571 = vmatprep.subr.mxu0 0.0
    %2572 = vmatpush2.msra.mxu0 0.0
    %2573 = vmatprep.subr.mxu0 0.0
    %2574 = vmatpush2.msra.mxu0 0.0
    %2575 = vmatprep.subr.mxu0 0.0
    %2576 = vmatpush2.msra.mxu0 0.0
    %2577 = vmatprep.subr.mxu0 0.0
    %2578 = vmatpush2.msra.mxu0 0.0
    %2579 = vmatprep.subr.mxu0 0.0
    %2580 = vmatpush2.msra.mxu0 0.0
    %2581 = vmatprep.subr.mxu0 0.0
    %2582 = vmatpush2.msra.mxu0 0.0
    %2583 = vmatprep.subr.mxu0 0.0
    %2584 = vmatpush2.msra.mxu0 0.0
    %2585 = vmatprep.subr.mxu0 0.0
    %2586 = vmatpush2.msra.mxu0 0.0
    %2587 = vmatprep.subr.mxu0 0.0
    %2588 = vmatpush2.msra.mxu0 0.0
    %2589 = vmatprep.subr.mxu0 0.0
    %2590 = vmatpush2.msra.mxu0 0.0
    %2591 = vmatprep.subr.mxu0 0.0
    %2592 = vmatpush2.msra.mxu0 0.0
    %2593 = vmatprep.mubr.f32.mxu0 0.0
    %v2594 = vand.u32 %v250, 4294901760
    %v2595 = vsub.f32 %v250, %v2594
    %v2596 = vand.u32 %v2595, 4294901760
    %v2597 = vsub.f32 %v2595, %v2596
    %v2598 = vand.u32 %v2597, 4294901760
    %2599 = vmatmul.mubr.f32.gmra.mxu0 %v2598
    %v2600 = vpop.f32.mrf.mxu0
    %v2601 = vadd.f32 0.0, %v2600
    %v2602 = vpop.f32.mrf.mxu0
    %v2603 = vadd.f32 0.0, %v2602
    %2604 = vdwg.mxu0
    %2605 = vmatprep.subr.mxu0 0.0
    %2606 = vmatpush1.msra.mxu0 0.0
    %2607 = vmatprep.subr.mxu0 0.0
    %2608 = vmatpush1.msra.mxu0 0.0
    %2609 = vmatprep.subr.mxu0 0.0
    %2610 = vmatpush1.msra.mxu0 0.0
    %2611 = vmatprep.subr.mxu0 0.0
    %2612 = vmatpush1.msra.mxu0 0.0
    %v2613 = vand.u32 %v240, 4294901760
    %v2614 = vsub.f32 %v240, %v2613
    %v2615 = vand.u32 %v2614, 4294901760
    %v2616 = vsub.f32 %v2614, %v2615
    %v2617 = vand.u32 %v2616, 4294901760
    %2618 = vmatprep.subr.mxu0 %v2617
    %v2619 = vand.u32 %v239, 4294901760
    %v2620 = vsub.f32 %v239, %v2619
    %v2621 = vand.u32 %v2620, 4294901760
    %v2622 = vsub.f32 %v2620, %v2621
    %v2623 = vand.u32 %v2622, 4294901760
    %2624 = vmatpush1.msra.mxu0 %v2623
    %v2625 = vand.u32 %v225, 4294901760
    %v2626 = vsub.f32 %v225, %v2625
    %v2627 = vand.u32 %v2626, 4294901760
    %v2628 = vsub.f32 %v2626, %v2627
    %v2629 = vand.u32 %v2628, 4294901760
    %2630 = vmatprep.subr.mxu0 %v2629
    %v2631 = vand.u32 %v224, 4294901760
    %v2632 = vsub.f32 %v224, %v2631
    %v2633 = vand.u32 %v2632, 4294901760
    %v2634 = vsub.f32 %v2632, %v2633
    %v2635 = vand.u32 %v2634, 4294901760
    %2636 = vmatpush1.msra.mxu0 %v2635
    %v2637 = vand.u32 %v210, 4294901760
    %v2638 = vsub.f32 %v210, %v2637
    %v2639 = vand.u32 %v2638, 4294901760
    %v2640 = vsub.f32 %v2638, %v2639
    %v2641 = vand.u32 %v2640, 4294901760
    %2642 = vmatprep.subr.mxu0 %v2641
    %v2643 = vand.u32 %v209, 4294901760
    %v2644 = vsub.f32 %v209, %v2643
    %v2645 = vand.u32 %v2644, 4294901760
    %v2646 = vsub.f32 %v2644, %v2645
    %v2647 = vand.u32 %v2646, 4294901760
    %2648 = vmatpush1.msra.mxu0 %v2647
    %v2649 = vand.u32 %v195, 4294901760
    %v2650 = vsub.f32 %v195, %v2649
    %v2651 = vand.u32 %v2650, 4294901760
    %v2652 = vsub.f32 %v2650, %v2651
    %v2653 = vand.u32 %v2652, 4294901760
    %2654 = vmatprep.subr.mxu0 %v2653
    %v2655 = vand.u32 %v194, 4294901760
    %v2656 = vsub.f32 %v194, %v2655
    %v2657 = vand.u32 %v2656, 4294901760
    %v2658 = vsub.f32 %v2656, %v2657
    %v2659 = vand.u32 %v2658, 4294901760
    %2660 = vmatpush1.msra.mxu0 %v2659
    %v2661 = vand.u32 %v180, 4294901760
    %v2662 = vsub.f32 %v180, %v2661
    %v2663 = vand.u32 %v2662, 4294901760
    %v2664 = vsub.f32 %v2662, %v2663
    %v2665 = vand.u32 %v2664, 4294901760
    %2666 = vmatprep.subr.mxu0 %v2665
    %v2667 = vand.u32 %v179, 4294901760
    %v2668 = vsub.f32 %v179, %v2667
    %v2669 = vand.u32 %v2668, 4294901760
    %v2670 = vsub.f32 %v2668, %v2669
    %v2671 = vand.u32 %v2670, 4294901760
    %2672 = vmatpush1.msra.mxu0 %v2671
    %v2673 = vand.u32 %v165, 4294901760
    %v2674 = vsub.f32 %v165, %v2673
    %v2675 = vand.u32 %v2674, 4294901760
    %v2676 = vsub.f32 %v2674, %v2675
    %v2677 = vand.u32 %v2676, 4294901760
    %2678 = vmatprep.subr.mxu0 %v2677
    %v2679 = vand.u32 %v164, 4294901760
    %v2680 = vsub.f32 %v164, %v2679
    %v2681 = vand.u32 %v2680, 4294901760
    %v2682 = vsub.f32 %v2680, %v2681
    %v2683 = vand.u32 %v2682, 4294901760
    %2684 = vmatpush1.msra.mxu0 %v2683
    %v2685 = vand.u32 %v150, 4294901760
    %v2686 = vsub.f32 %v150, %v2685
    %v2687 = vand.u32 %v2686, 4294901760
    %v2688 = vsub.f32 %v2686, %v2687
    %v2689 = vand.u32 %v2688, 4294901760
    %2690 = vmatprep.subr.mxu0 %v2689
    %v2691 = vand.u32 %v149, 4294901760
    %v2692 = vsub.f32 %v149, %v2691
    %v2693 = vand.u32 %v2692, 4294901760
    %v2694 = vsub.f32 %v2692, %v2693
    %v2695 = vand.u32 %v2694, 4294901760
    %2696 = vmatpush1.msra.mxu0 %v2695
    %v2697 = vand.u32 %v135, 4294901760
    %v2698 = vsub.f32 %v135, %v2697
    %v2699 = vand.u32 %v2698, 4294901760
    %v2700 = vsub.f32 %v2698, %v2699
    %v2701 = vand.u32 %v2700, 4294901760
    %2702 = vmatprep.subr.mxu0 %v2701
    %v2703 = vand.u32 %v134, 4294901760
    %v2704 = vsub.f32 %v134, %v2703
    %v2705 = vand.u32 %v2704, 4294901760
    %v2706 = vsub.f32 %v2704, %v2705
    %v2707 = vand.u32 %v2706, 4294901760
    %2708 = vmatpush1.msra.mxu0 %v2707
    %v2709 = vand.u32 %v120, 4294901760
    %v2710 = vsub.f32 %v120, %v2709
    %v2711 = vand.u32 %v2710, 4294901760
    %v2712 = vsub.f32 %v2710, %v2711
    %v2713 = vand.u32 %v2712, 4294901760
    %2714 = vmatprep.subr.mxu0 %v2713
    %v2715 = vand.u32 %v119, 4294901760
    %v2716 = vsub.f32 %v119, %v2715
    %v2717 = vand.u32 %v2716, 4294901760
    %v2718 = vsub.f32 %v2716, %v2717
    %v2719 = vand.u32 %v2718, 4294901760
    %2720 = vmatpush1.msra.mxu0 %v2719
    %v2721 = vand.u32 %v105, 4294901760
    %v2722 = vsub.f32 %v105, %v2721
    %v2723 = vand.u32 %v2722, 4294901760
    %v2724 = vsub.f32 %v2722, %v2723
    %v2725 = vand.u32 %v2724, 4294901760
    %2726 = vmatprep.subr.mxu0 %v2725
    %v2727 = vand.u32 %v104, 4294901760
    %v2728 = vsub.f32 %v104, %v2727
    %v2729 = vand.u32 %v2728, 4294901760
    %v2730 = vsub.f32 %v2728, %v2729
    %v2731 = vand.u32 %v2730, 4294901760
    %2732 = vmatpush1.msra.mxu0 %v2731
    %v2733 = vand.u32 %v90, 4294901760
    %v2734 = vsub.f32 %v90, %v2733
    %v2735 = vand.u32 %v2734, 4294901760
    %v2736 = vsub.f32 %v2734, %v2735
    %v2737 = vand.u32 %v2736, 4294901760
    %2738 = vmatprep.subr.mxu0 %v2737
    %v2739 = vand.u32 %v89, 4294901760
    %v2740 = vsub.f32 %v89, %v2739
    %v2741 = vand.u32 %v2740, 4294901760
    %v2742 = vsub.f32 %v2740, %v2741
    %v2743 = vand.u32 %v2742, 4294901760
    %2744 = vmatpush1.msra.mxu0 %v2743
    %v2745 = vand.u32 %v75, 4294901760
    %v2746 = vsub.f32 %v75, %v2745
    %v2747 = vand.u32 %v2746, 4294901760
    %v2748 = vsub.f32 %v2746, %v2747
    %v2749 = vand.u32 %v2748, 4294901760
    %2750 = vmatprep.subr.mxu0 %v2749
    %v2751 = vand.u32 %v74, 4294901760
    %v2752 = vsub.f32 %v74, %v2751
    %v2753 = vand.u32 %v2752, 4294901760
    %v2754 = vsub.f32 %v2752, %v2753
    %v2755 = vand.u32 %v2754, 4294901760
    %2756 = vmatpush1.msra.mxu0 %v2755
    %2757 = vmatprep.subr.mxu0 0.0
    %2758 = vmatpush2.msra.mxu0 0.0
    %2759 = vmatprep.subr.mxu0 0.0
    %2760 = vmatpush2.msra.mxu0 0.0
    %2761 = vmatprep.subr.mxu0 0.0
    %2762 = vmatpush2.msra.mxu0 0.0
    %2763 = vmatprep.subr.mxu0 0.0
    %2764 = vmatpush2.msra.mxu0 0.0
    %2765 = vmatprep.subr.mxu0 0.0
    %2766 = vmatpush2.msra.mxu0 0.0
    %2767 = vmatprep.subr.mxu0 0.0
    %2768 = vmatpush2.msra.mxu0 0.0
    %2769 = vmatprep.subr.mxu0 0.0
    %2770 = vmatpush2.msra.mxu0 0.0
    %2771 = vmatprep.subr.mxu0 0.0
    %2772 = vmatpush2.msra.mxu0 0.0
    %2773 = vmatprep.subr.mxu0 0.0
    %2774 = vmatpush2.msra.mxu0 0.0
    %2775 = vmatprep.subr.mxu0 0.0
    %2776 = vmatpush2.msra.mxu0 0.0
    %2777 = vmatprep.subr.mxu0 0.0
    %2778 = vmatpush2.msra.mxu0 0.0
    %2779 = vmatprep.subr.mxu0 0.0
    %2780 = vmatpush2.msra.mxu0 0.0
    %2781 = vmatprep.subr.mxu0 0.0
    %2782 = vmatpush2.msra.mxu0 0.0
    %2783 = vmatprep.subr.mxu0 0.0
    %2784 = vmatpush2.msra.mxu0 0.0
    %2785 = vmatprep.subr.mxu0 0.0
    %2786 = vmatpush2.msra.mxu0 0.0
    %2787 = vmatprep.subr.mxu0 0.0
    %2788 = vmatpush2.msra.mxu0 0.0
    %2789 = vmatprep.mubr.f32.mxu0 0.0
    %v2790 = vand.u32 %v250, 4294901760
    %2791 = vmatmul.mubr.f32.gmra.mxu0 %v2790
    %v2792 = vpop.f32.mrf.mxu0
    %v2793 = vadd.f32 %v2601, %v2792
    %v2794 = vpop.f32.mrf.mxu0
    %v2795 = vadd.f32 %v2603, %v2794
    %2796 = vdwg.mxu0
    %2797 = vmatprep.subr.mxu0 0.0
    %2798 = vmatpush1.msra.mxu0 0.0
    %2799 = vmatprep.subr.mxu0 0.0
    %2800 = vmatpush1.msra.mxu0 0.0
    %2801 = vmatprep.subr.mxu0 0.0
    %2802 = vmatpush1.msra.mxu0 0.0
    %2803 = vmatprep.subr.mxu0 0.0
    %2804 = vmatpush1.msra.mxu0 0.0
    %v2805 = vand.u32 %v240, 4294901760
    %v2806 = vsub.f32 %v240, %v2805
    %2807 = vmatprep.subr.mxu0 %v2806
    %v2808 = vand.u32 %v239, 4294901760
    %v2809 = vsub.f32 %v239, %v2808
    %2810 = vmatpush1.msra.mxu0 %v2809
    %v2811 = vand.u32 %v225, 4294901760
    %v2812 = vsub.f32 %v225, %v2811
    %2813 = vmatprep.subr.mxu0 %v2812
    %v2814 = vand.u32 %v224, 4294901760
    %v2815 = vsub.f32 %v224, %v2814
    %2816 = vmatpush1.msra.mxu0 %v2815
    %v2817 = vand.u32 %v210, 4294901760
    %v2818 = vsub.f32 %v210, %v2817
    %2819 = vmatprep.subr.mxu0 %v2818
    %v2820 = vand.u32 %v209, 4294901760
    %v2821 = vsub.f32 %v209, %v2820
    %2822 = vmatpush1.msra.mxu0 %v2821
    %v2823 = vand.u32 %v195, 4294901760
    %v2824 = vsub.f32 %v195, %v2823
    %2825 = vmatprep.subr.mxu0 %v2824
    %v2826 = vand.u32 %v194, 4294901760
    %v2827 = vsub.f32 %v194, %v2826
    %2828 = vmatpush1.msra.mxu0 %v2827
    %v2829 = vand.u32 %v180, 4294901760
    %v2830 = vsub.f32 %v180, %v2829
    %2831 = vmatprep.subr.mxu0 %v2830
    %v2832 = vand.u32 %v179, 4294901760
    %v2833 = vsub.f32 %v179, %v2832
    %2834 = vmatpush1.msra.mxu0 %v2833
    %v2835 = vand.u32 %v165, 4294901760
    %v2836 = vsub.f32 %v165, %v2835
    %2837 = vmatprep.subr.mxu0 %v2836
    %v2838 = vand.u32 %v164, 4294901760
    %v2839 = vsub.f32 %v164, %v2838
    %2840 = vmatpush1.msra.mxu0 %v2839
    %v2841 = vand.u32 %v150, 4294901760
    %v2842 = vsub.f32 %v150, %v2841
    %2843 = vmatprep.subr.mxu0 %v2842
    %v2844 = vand.u32 %v149, 4294901760
    %v2845 = vsub.f32 %v149, %v2844
    %2846 = vmatpush1.msra.mxu0 %v2845
    %v2847 = vand.u32 %v135, 4294901760
    %v2848 = vsub.f32 %v135, %v2847
    %2849 = vmatprep.subr.mxu0 %v2848
    %v2850 = vand.u32 %v134, 4294901760
    %v2851 = vsub.f32 %v134, %v2850
    %2852 = vmatpush1.msra.mxu0 %v2851
    %v2853 = vand.u32 %v120, 4294901760
    %v2854 = vsub.f32 %v120, %v2853
    %2855 = vmatprep.subr.mxu0 %v2854
    %v2856 = vand.u32 %v119, 4294901760
    %v2857 = vsub.f32 %v119, %v2856
    %2858 = vmatpush1.msra.mxu0 %v2857
    %v2859 = vand.u32 %v105, 4294901760
    %v2860 = vsub.f32 %v105, %v2859
    %2861 = vmatprep.subr.mxu0 %v2860
    %v2862 = vand.u32 %v104, 4294901760
    %v2863 = vsub.f32 %v104, %v2862
    %2864 = vmatpush1.msra.mxu0 %v2863
    %v2865 = vand.u32 %v90, 4294901760
    %v2866 = vsub.f32 %v90, %v2865
    %2867 = vmatprep.subr.mxu0 %v2866
    %v2868 = vand.u32 %v89, 4294901760
    %v2869 = vsub.f32 %v89, %v2868
    %2870 = vmatpush1.msra.mxu0 %v2869
    %v2871 = vand.u32 %v75, 4294901760
    %v2872 = vsub.f32 %v75, %v2871
    %2873 = vmatprep.subr.mxu0 %v2872
    %v2874 = vand.u32 %v74, 4294901760
    %v2875 = vsub.f32 %v74, %v2874
    %2876 = vmatpush1.msra.mxu0 %v2875
    %2877 = vmatprep.subr.mxu0 0.0
    %2878 = vmatpush2.msra.mxu0 0.0
    %2879 = vmatprep.subr.mxu0 0.0
    %2880 = vmatpush2.msra.mxu0 0.0
    %2881 = vmatprep.subr.mxu0 0.0
    %2882 = vmatpush2.msra.mxu0 0.0
    %2883 = vmatprep.subr.mxu0 0.0
    %2884 = vmatpush2.msra.mxu0 0.0
    %2885 = vmatprep.subr.mxu0 0.0
    %2886 = vmatpush2.msra.mxu0 0.0
    %2887 = vmatprep.subr.mxu0 0.0
    %2888 = vmatpush2.msra.mxu0 0.0
    %2889 = vmatprep.subr.mxu0 0.0
    %2890 = vmatpush2.msra.mxu0 0.0
    %2891 = vmatprep.subr.mxu0 0.0
    %2892 = vmatpush2.msra.mxu0 0.0
    %2893 = vmatprep.subr.mxu0 0.0
    %2894 = vmatpush2.msra.mxu0 0.0
    %2895 = vmatprep.subr.mxu0 0.0
    %2896 = vmatpush2.msra.mxu0 0.0
    %2897 = vmatprep.subr.mxu0 0.0
    %2898 = vmatpush2.msra.mxu0 0.0
    %2899 = vmatprep.subr.mxu0 0.0
    %2900 = vmatpush2.msra.mxu0 0.0
    %2901 = vmatprep.subr.mxu0 0.0
    %2902 = vmatpush2.msra.mxu0 0.0
    %2903 = vmatprep.subr.mxu0 0.0
    %2904 = vmatpush2.msra.mxu0 0.0
    %2905 = vmatprep.subr.mxu0 0.0
    %2906 = vmatpush2.msra.mxu0 0.0
    %2907 = vmatprep.subr.mxu0 0.0
    %2908 = vmatpush2.msra.mxu0 0.0
    %2909 = vmatprep.mubr.f32.mxu0 0.0
    %v2910 = vand.u32 %v250, 4294901760
    %v2911 = vsub.f32 %v250, %v2910
    %2912 = vmatmul.mubr.f32.gmra.mxu0 %v2911
    %v2913 = vpop.f32.mrf.mxu0
    %v2914 = vadd.f32 %v2793, %v2913
    %v2915 = vpop.f32.mrf.mxu0
    %v2916 = vadd.f32 %v2795, %v2915
    %2917 = vdwg.mxu0
    %2918 = vmatprep.subr.mxu0 0.0
    %2919 = vmatpush1.msra.mxu0 0.0
    %2920 = vmatprep.subr.mxu0 0.0
    %2921 = vmatpush1.msra.mxu0 0.0
    %2922 = vmatprep.subr.mxu0 0.0
    %2923 = vmatpush1.msra.mxu0 0.0
    %2924 = vmatprep.subr.mxu0 0.0
    %2925 = vmatpush1.msra.mxu0 0.0
    %v2926 = vand.u32 %v240, 4294901760
    %2927 = vmatprep.subr.mxu0 %v2926
    %v2928 = vand.u32 %v239, 4294901760
    %2929 = vmatpush1.msra.mxu0 %v2928
    %v2930 = vand.u32 %v225, 4294901760
    %2931 = vmatprep.subr.mxu0 %v2930
    %v2932 = vand.u32 %v224, 4294901760
    %2933 = vmatpush1.msra.mxu0 %v2932
    %v2934 = vand.u32 %v210, 4294901760
    %2935 = vmatprep.subr.mxu0 %v2934
    %v2936 = vand.u32 %v209, 4294901760
    %2937 = vmatpush1.msra.mxu0 %v2936
    %v2938 = vand.u32 %v195, 4294901760
    %2939 = vmatprep.subr.mxu0 %v2938
    %v2940 = vand.u32 %v194, 4294901760
    %2941 = vmatpush1.msra.mxu0 %v2940
    %v2942 = vand.u32 %v180, 4294901760
    %2943 = vmatprep.subr.mxu0 %v2942
    %v2944 = vand.u32 %v179, 4294901760
    %2945 = vmatpush1.msra.mxu0 %v2944
    %v2946 = vand.u32 %v165, 4294901760
    %2947 = vmatprep.subr.mxu0 %v2946
    %v2948 = vand.u32 %v164, 4294901760
    %2949 = vmatpush1.msra.mxu0 %v2948
    %v2950 = vand.u32 %v150, 4294901760
    %2951 = vmatprep.subr.mxu0 %v2950
    %v2952 = vand.u32 %v149, 4294901760
    %2953 = vmatpush1.msra.mxu0 %v2952
    %v2954 = vand.u32 %v135, 4294901760
    %2955 = vmatprep.subr.mxu0 %v2954
    %v2956 = vand.u32 %v134, 4294901760
    %2957 = vmatpush1.msra.mxu0 %v2956
    %v2958 = vand.u32 %v120, 4294901760
    %2959 = vmatprep.subr.mxu0 %v2958
    %v2960 = vand.u32 %v119, 4294901760
    %2961 = vmatpush1.msra.mxu0 %v2960
    %v2962 = vand.u32 %v105, 4294901760
    %2963 = vmatprep.subr.mxu0 %v2962
    %v2964 = vand.u32 %v104, 4294901760
    %2965 = vmatpush1.msra.mxu0 %v2964
    %v2966 = vand.u32 %v90, 4294901760
    %2967 = vmatprep.subr.mxu0 %v2966
    %v2968 = vand.u32 %v89, 4294901760
    %2969 = vmatpush1.msra.mxu0 %v2968
    %v2970 = vand.u32 %v75, 4294901760
    %2971 = vmatprep.subr.mxu0 %v2970
    %v2972 = vand.u32 %v74, 4294901760
    %2973 = vmatpush1.msra.mxu0 %v2972
    %2974 = vmatprep.subr.mxu0 0.0
    %2975 = vmatpush2.msra.mxu0 0.0
    %2976 = vmatprep.subr.mxu0 0.0
    %2977 = vmatpush2.msra.mxu0 0.0
    %2978 = vmatprep.subr.mxu0 0.0
    %2979 = vmatpush2.msra.mxu0 0.0
    %2980 = vmatprep.subr.mxu0 0.0
    %2981 = vmatpush2.msra.mxu0 0.0
    %2982 = vmatprep.subr.mxu0 0.0
    %2983 = vmatpush2.msra.mxu0 0.0
    %2984 = vmatprep.subr.mxu0 0.0
    %2985 = vmatpush2.msra.mxu0 0.0
    %2986 = vmatprep.subr.mxu0 0.0
    %2987 = vmatpush2.msra.mxu0 0.0
    %2988 = vmatprep.subr.mxu0 0.0
    %2989 = vmatpush2.msra.mxu0 0.0
    %2990 = vmatprep.subr.mxu0 0.0
    %2991 = vmatpush2.msra.mxu0 0.0
    %2992 = vmatprep.subr.mxu0 0.0
    %2993 = vmatpush2.msra.mxu0 0.0
    %2994 = vmatprep.subr.mxu0 0.0
    %2995 = vmatpush2.msra.mxu0 0.0
    %2996 = vmatprep.subr.mxu0 0.0
    %2997 = vmatpush2.msra.mxu0 0.0
    %2998 = vmatprep.subr.mxu0 0.0
    %2999 = vmatpush2.msra.mxu0 0.0
    %3000 = vmatprep.subr.mxu0 0.0
    %3001 = vmatpush2.msra.mxu0 0.0
    %3002 = vmatprep.subr.mxu0 0.0
    %3003 = vmatpush2.msra.mxu0 0.0
    %3004 = vmatprep.subr.mxu0 0.0
    %3005 = vmatpush2.msra.mxu0 0.0
    %3006 = vmatprep.mubr.f32.mxu0 0.0
    %v3007 = vand.u32 %v250, 4294901760
    %v3008 = vsub.f32 %v250, %v3007
    %v3009 = vand.u32 %v3008, 4294901760
    %3010 = vmatmul.mubr.f32.gmra.mxu0 %v3009
    %v3011 = vpop.f32.mrf.mxu0
    %v3012 = vadd.f32 %v2914, %v3011
    %v3013 = vpop.f32.mrf.mxu0
    %v3014 = vadd.f32 %v2916, %v3013
    %3015 = vdwg.mxu0
    %3016 = vmatprep.subr.mxu0 0.0
    %3017 = vmatpush1.msra.mxu0 0.0
    %3018 = vmatprep.subr.mxu0 0.0
    %3019 = vmatpush1.msra.mxu0 0.0
    %3020 = vmatprep.subr.mxu0 0.0
    %3021 = vmatpush1.msra.mxu0 0.0
    %3022 = vmatprep.subr.mxu0 0.0
    %3023 = vmatpush1.msra.mxu0 0.0
    %v3024 = vand.u32 %v240, 4294901760
    %v3025 = vsub.f32 %v240, %v3024
    %v3026 = vand.u32 %v3025, 4294901760
    %3027 = vmatprep.subr.mxu0 %v3026
    %v3028 = vand.u32 %v239, 4294901760
    %v3029 = vsub.f32 %v239, %v3028
    %v3030 = vand.u32 %v3029, 4294901760
    %3031 = vmatpush1.msra.mxu0 %v3030
    %v3032 = vand.u32 %v225, 4294901760
    %v3033 = vsub.f32 %v225, %v3032
    %v3034 = vand.u32 %v3033, 4294901760
    %3035 = vmatprep.subr.mxu0 %v3034
    %v3036 = vand.u32 %v224, 4294901760
    %v3037 = vsub.f32 %v224, %v3036
    %v3038 = vand.u32 %v3037, 4294901760
    %3039 = vmatpush1.msra.mxu0 %v3038
    %v3040 = vand.u32 %v210, 4294901760
    %v3041 = vsub.f32 %v210, %v3040
    %v3042 = vand.u32 %v3041, 4294901760
    %3043 = vmatprep.subr.mxu0 %v3042
    %v3044 = vand.u32 %v209, 4294901760
    %v3045 = vsub.f32 %v209, %v3044
    %v3046 = vand.u32 %v3045, 4294901760
    %3047 = vmatpush1.msra.mxu0 %v3046
    %v3048 = vand.u32 %v195, 4294901760
    %v3049 = vsub.f32 %v195, %v3048
    %v3050 = vand.u32 %v3049, 4294901760
    %3051 = vmatprep.subr.mxu0 %v3050
    %v3052 = vand.u32 %v194, 4294901760
    %v3053 = vsub.f32 %v194, %v3052
    %v3054 = vand.u32 %v3053, 4294901760
    %3055 = vmatpush1.msra.mxu0 %v3054
    %v3056 = vand.u32 %v180, 4294901760
    %v3057 = vsub.f32 %v180, %v3056
    %v3058 = vand.u32 %v3057, 4294901760
    %3059 = vmatprep.subr.mxu0 %v3058
    %v3060 = vand.u32 %v179, 4294901760
    %v3061 = vsub.f32 %v179, %v3060
    %v3062 = vand.u32 %v3061, 4294901760
    %3063 = vmatpush1.msra.mxu0 %v3062
    %v3064 = vand.u32 %v165, 4294901760
    %v3065 = vsub.f32 %v165, %v3064
    %v3066 = vand.u32 %v3065, 4294901760
    %3067 = vmatprep.subr.mxu0 %v3066
    %v3068 = vand.u32 %v164, 4294901760
    %v3069 = vsub.f32 %v164, %v3068
    %v3070 = vand.u32 %v3069, 4294901760
    %3071 = vmatpush1.msra.mxu0 %v3070
    %v3072 = vand.u32 %v150, 4294901760
    %v3073 = vsub.f32 %v150, %v3072
    %v3074 = vand.u32 %v3073, 4294901760
    %3075 = vmatprep.subr.mxu0 %v3074
    %v3076 = vand.u32 %v149, 4294901760
    %v3077 = vsub.f32 %v149, %v3076
    %v3078 = vand.u32 %v3077, 4294901760
    %3079 = vmatpush1.msra.mxu0 %v3078
    %v3080 = vand.u32 %v135, 4294901760
    %v3081 = vsub.f32 %v135, %v3080
    %v3082 = vand.u32 %v3081, 4294901760
    %3083 = vmatprep.subr.mxu0 %v3082
    %v3084 = vand.u32 %v134, 4294901760
    %v3085 = vsub.f32 %v134, %v3084
    %v3086 = vand.u32 %v3085, 4294901760
    %3087 = vmatpush1.msra.mxu0 %v3086
    %v3088 = vand.u32 %v120, 4294901760
    %v3089 = vsub.f32 %v120, %v3088
    %v3090 = vand.u32 %v3089, 4294901760
    %3091 = vmatprep.subr.mxu0 %v3090
    %v3092 = vand.u32 %v119, 4294901760
    %v3093 = vsub.f32 %v119, %v3092
    %v3094 = vand.u32 %v3093, 4294901760
    %3095 = vmatpush1.msra.mxu0 %v3094
    %v3096 = vand.u32 %v105, 4294901760
    %v3097 = vsub.f32 %v105, %v3096
    %v3098 = vand.u32 %v3097, 4294901760
    %3099 = vmatprep.subr.mxu0 %v3098
    %v3100 = vand.u32 %v104, 4294901760
    %v3101 = vsub.f32 %v104, %v3100
    %v3102 = vand.u32 %v3101, 4294901760
    %3103 = vmatpush1.msra.mxu0 %v3102
    %v3104 = vand.u32 %v90, 4294901760
    %v3105 = vsub.f32 %v90, %v3104
    %v3106 = vand.u32 %v3105, 4294901760
    %3107 = vmatprep.subr.mxu0 %v3106
    %v3108 = vand.u32 %v89, 4294901760
    %v3109 = vsub.f32 %v89, %v3108
    %v3110 = vand.u32 %v3109, 4294901760
    %3111 = vmatpush1.msra.mxu0 %v3110
    %v3112 = vand.u32 %v75, 4294901760
    %v3113 = vsub.f32 %v75, %v3112
    %v3114 = vand.u32 %v3113, 4294901760
    %3115 = vmatprep.subr.mxu0 %v3114
    %v3116 = vand.u32 %v74, 4294901760
    %v3117 = vsub.f32 %v74, %v3116
    %v3118 = vand.u32 %v3117, 4294901760
    %3119 = vmatpush1.msra.mxu0 %v3118
    %3120 = vmatprep.subr.mxu0 0.0
    %3121 = vmatpush2.msra.mxu0 0.0
    %3122 = vmatprep.subr.mxu0 0.0
    %3123 = vmatpush2.msra.mxu0 0.0
    %3124 = vmatprep.subr.mxu0 0.0
    %3125 = vmatpush2.msra.mxu0 0.0
    %3126 = vmatprep.subr.mxu0 0.0
    %3127 = vmatpush2.msra.mxu0 0.0
    %3128 = vmatprep.subr.mxu0 0.0
    %3129 = vmatpush2.msra.mxu0 0.0
    %3130 = vmatprep.subr.mxu0 0.0
    %3131 = vmatpush2.msra.mxu0 0.0
    %3132 = vmatprep.subr.mxu0 0.0
    %3133 = vmatpush2.msra.mxu0 0.0
    %3134 = vmatprep.subr.mxu0 0.0
    %3135 = vmatpush2.msra.mxu0 0.0
    %3136 = vmatprep.subr.mxu0 0.0
    %3137 = vmatpush2.msra.mxu0 0.0
    %3138 = vmatprep.subr.mxu0 0.0
    %3139 = vmatpush2.msra.mxu0 0.0
    %3140 = vmatprep.subr.mxu0 0.0
    %3141 = vmatpush2.msra.mxu0 0.0
    %3142 = vmatprep.subr.mxu0 0.0
    %3143 = vmatpush2.msra.mxu0 0.0
    %3144 = vmatprep.subr.mxu0 0.0
    %3145 = vmatpush2.msra.mxu0 0.0
    %3146 = vmatprep.subr.mxu0 0.0
    %3147 = vmatpush2.msra.mxu0 0.0
    %3148 = vmatprep.subr.mxu0 0.0
    %3149 = vmatpush2.msra.mxu0 0.0
    %3150 = vmatprep.subr.mxu0 0.0
    %3151 = vmatpush2.msra.mxu0 0.0
    %3152 = vmatprep.mubr.f32.mxu0 0.0
    %v3153 = vand.u32 %v250, 4294901760
    %3154 = vmatmul.mubr.f32.gmra.mxu0 %v3153
    %v3155 = vpop.f32.mrf.mxu0
    %v3156 = vadd.f32 %v3012, %v3155
    %v3157 = vpop.f32.mrf.mxu0
    %v3158 = vadd.f32 %v3014, %v3157
    %3159 = vdwg.mxu0
    %3160 = vmatprep.subr.mxu0 0.0
    %3161 = vmatpush1.msra.mxu0 0.0
    %3162 = vmatprep.subr.mxu0 0.0
    %3163 = vmatpush1.msra.mxu0 0.0
    %3164 = vmatprep.subr.mxu0 0.0
    %3165 = vmatpush1.msra.mxu0 0.0
    %3166 = vmatprep.subr.mxu0 0.0
    %3167 = vmatpush1.msra.mxu0 0.0
    %v3168 = vand.u32 %v240, 4294901760
    %3169 = vmatprep.subr.mxu0 %v3168
    %v3170 = vand.u32 %v239, 4294901760
    %3171 = vmatpush1.msra.mxu0 %v3170
    %v3172 = vand.u32 %v225, 4294901760
    %3173 = vmatprep.subr.mxu0 %v3172
    %v3174 = vand.u32 %v224, 4294901760
    %3175 = vmatpush1.msra.mxu0 %v3174
    %v3176 = vand.u32 %v210, 4294901760
    %3177 = vmatprep.subr.mxu0 %v3176
    %v3178 = vand.u32 %v209, 4294901760
    %3179 = vmatpush1.msra.mxu0 %v3178
    %v3180 = vand.u32 %v195, 4294901760
    %3181 = vmatprep.subr.mxu0 %v3180
    %v3182 = vand.u32 %v194, 4294901760
    %3183 = vmatpush1.msra.mxu0 %v3182
    %v3184 = vand.u32 %v180, 4294901760
    %3185 = vmatprep.subr.mxu0 %v3184
    %v3186 = vand.u32 %v179, 4294901760
    %3187 = vmatpush1.msra.mxu0 %v3186
    %v3188 = vand.u32 %v165, 4294901760
    %3189 = vmatprep.subr.mxu0 %v3188
    %v3190 = vand.u32 %v164, 4294901760
    %3191 = vmatpush1.msra.mxu0 %v3190
    %v3192 = vand.u32 %v150, 4294901760
    %3193 = vmatprep.subr.mxu0 %v3192
    %v3194 = vand.u32 %v149, 4294901760
    %3195 = vmatpush1.msra.mxu0 %v3194
    %v3196 = vand.u32 %v135, 4294901760
    %3197 = vmatprep.subr.mxu0 %v3196
    %v3198 = vand.u32 %v134, 4294901760
    %3199 = vmatpush1.msra.mxu0 %v3198
    %v3200 = vand.u32 %v120, 4294901760
    %3201 = vmatprep.subr.mxu0 %v3200
    %v3202 = vand.u32 %v119, 4294901760
    %3203 = vmatpush1.msra.mxu0 %v3202
    %v3204 = vand.u32 %v105, 4294901760
    %3205 = vmatprep.subr.mxu0 %v3204
    %v3206 = vand.u32 %v104, 4294901760
    %3207 = vmatpush1.msra.mxu0 %v3206
    %v3208 = vand.u32 %v90, 4294901760
    %3209 = vmatprep.subr.mxu0 %v3208
    %v3210 = vand.u32 %v89, 4294901760
    %3211 = vmatpush1.msra.mxu0 %v3210
    %v3212 = vand.u32 %v75, 4294901760
    %3213 = vmatprep.subr.mxu0 %v3212
    %v3214 = vand.u32 %v74, 4294901760
    %3215 = vmatpush1.msra.mxu0 %v3214
    %3216 = vmatprep.subr.mxu0 0.0
    %3217 = vmatpush2.msra.mxu0 0.0
    %3218 = vmatprep.subr.mxu0 0.0
    %3219 = vmatpush2.msra.mxu0 0.0
    %3220 = vmatprep.subr.mxu0 0.0
    %3221 = vmatpush2.msra.mxu0 0.0
    %3222 = vmatprep.subr.mxu0 0.0
    %3223 = vmatpush2.msra.mxu0 0.0
    %3224 = vmatprep.subr.mxu0 0.0
    %3225 = vmatpush2.msra.mxu0 0.0
    %3226 = vmatprep.subr.mxu0 0.0
    %3227 = vmatpush2.msra.mxu0 0.0
    %3228 = vmatprep.subr.mxu0 0.0
    %3229 = vmatpush2.msra.mxu0 0.0
    %3230 = vmatprep.subr.mxu0 0.0
    %3231 = vmatpush2.msra.mxu0 0.0
    %3232 = vmatprep.subr.mxu0 0.0
    %3233 = vmatpush2.msra.mxu0 0.0
    %3234 = vmatprep.subr.mxu0 0.0
    %3235 = vmatpush2.msra.mxu0 0.0
    %3236 = vmatprep.subr.mxu0 0.0
    %3237 = vmatpush2.msra.mxu0 0.0
    %3238 = vmatprep.subr.mxu0 0.0
    %3239 = vmatpush2.msra.mxu0 0.0
    %3240 = vmatprep.subr.mxu0 0.0
    %3241 = vmatpush2.msra.mxu0 0.0
    %3242 = vmatprep.subr.mxu0 0.0
    %3243 = vmatpush2.msra.mxu0 0.0
    %3244 = vmatprep.subr.mxu0 0.0
    %3245 = vmatpush2.msra.mxu0 0.0
    %3246 = vmatprep.subr.mxu0 0.0
    %3247 = vmatpush2.msra.mxu0 0.0
    %3248 = vmatprep.mubr.f32.mxu0 0.0
    %v3249 = vand.u32 %v250, 4294901760
    %3250 = vmatmul.mubr.f32.gmra.mxu0 %v3249
    %v3251 = vpop.f32.mrf.mxu0
    %v3252 = vadd.f32 %v3156, %v3251
    %v3253 = vpop.f32.mrf.mxu0
    %v3254 = vadd.f32 %v3158, %v3253
    %3255 = vdwg.mxu0
    %3256 = vmatprep.subr.mxu0 0.0
    %3257 = vmatpush1.msra.mxu0 0.0
    %3258 = vmatprep.subr.mxu0 0.0
    %3259 = vmatpush1.msra.mxu0 0.0
    %3260 = vmatprep.subr.mxu0 0.0
    %3261 = vmatpush1.msra.mxu0 0.0
    %3262 = vmatprep.subr.mxu0 0.0
    %3263 = vmatpush1.msra.mxu0 0.0
    %v3264 = vand.u32 %v242, 4294901760
    %3265 = vmatprep.subr.mxu0 %v3264
    %v3266 = vand.u32 %v241, 4294901760
    %3267 = vmatpush1.msra.mxu0 %v3266
    %v3268 = vand.u32 %v227, 4294901760
    %3269 = vmatprep.subr.mxu0 %v3268
    %v3270 = vand.u32 %v226, 4294901760
    %3271 = vmatpush1.msra.mxu0 %v3270
    %v3272 = vand.u32 %v212, 4294901760
    %3273 = vmatprep.subr.mxu0 %v3272
    %v3274 = vand.u32 %v211, 4294901760
    %3275 = vmatpush1.msra.mxu0 %v3274
    %v3276 = vand.u32 %v197, 4294901760
    %3277 = vmatprep.subr.mxu0 %v3276
    %v3278 = vand.u32 %v196, 4294901760
    %3279 = vmatpush1.msra.mxu0 %v3278
    %v3280 = vand.u32 %v182, 4294901760
    %3281 = vmatprep.subr.mxu0 %v3280
    %v3282 = vand.u32 %v181, 4294901760
    %3283 = vmatpush1.msra.mxu0 %v3282
    %v3284 = vand.u32 %v167, 4294901760
    %3285 = vmatprep.subr.mxu0 %v3284
    %v3286 = vand.u32 %v166, 4294901760
    %3287 = vmatpush1.msra.mxu0 %v3286
    %v3288 = vand.u32 %v152, 4294901760
    %3289 = vmatprep.subr.mxu0 %v3288
    %v3290 = vand.u32 %v151, 4294901760
    %3291 = vmatpush1.msra.mxu0 %v3290
    %v3292 = vand.u32 %v137, 4294901760
    %3293 = vmatprep.subr.mxu0 %v3292
    %v3294 = vand.u32 %v136, 4294901760
    %3295 = vmatpush1.msra.mxu0 %v3294
    %v3296 = vand.u32 %v122, 4294901760
    %3297 = vmatprep.subr.mxu0 %v3296
    %v3298 = vand.u32 %v121, 4294901760
    %3299 = vmatpush1.msra.mxu0 %v3298
    %v3300 = vand.u32 %v107, 4294901760
    %3301 = vmatprep.subr.mxu0 %v3300
    %v3302 = vand.u32 %v106, 4294901760
    %3303 = vmatpush1.msra.mxu0 %v3302
    %v3304 = vand.u32 %v92, 4294901760
    %3305 = vmatprep.subr.mxu0 %v3304
    %v3306 = vand.u32 %v91, 4294901760
    %3307 = vmatpush1.msra.mxu0 %v3306
    %v3308 = vand.u32 %v77, 4294901760
    %3309 = vmatprep.subr.mxu0 %v3308
    %v3310 = vand.u32 %v76, 4294901760
    %3311 = vmatpush1.msra.mxu0 %v3310
    %3312 = vmatprep.subr.mxu0 0.0
    %3313 = vmatpush2.msra.mxu0 0.0
    %3314 = vmatprep.subr.mxu0 0.0
    %3315 = vmatpush2.msra.mxu0 0.0
    %3316 = vmatprep.subr.mxu0 0.0
    %3317 = vmatpush2.msra.mxu0 0.0
    %3318 = vmatprep.subr.mxu0 0.0
    %3319 = vmatpush2.msra.mxu0 0.0
    %3320 = vmatprep.subr.mxu0 0.0
    %3321 = vmatpush2.msra.mxu0 0.0
    %3322 = vmatprep.subr.mxu0 0.0
    %3323 = vmatpush2.msra.mxu0 0.0
    %3324 = vmatprep.subr.mxu0 0.0
    %3325 = vmatpush2.msra.mxu0 0.0
    %3326 = vmatprep.subr.mxu0 0.0
    %3327 = vmatpush2.msra.mxu0 0.0
    %3328 = vmatprep.subr.mxu0 0.0
    %3329 = vmatpush2.msra.mxu0 0.0
    %3330 = vmatprep.subr.mxu0 0.0
    %3331 = vmatpush2.msra.mxu0 0.0
    %3332 = vmatprep.subr.mxu0 0.0
    %3333 = vmatpush2.msra.mxu0 0.0
    %3334 = vmatprep.subr.mxu0 0.0
    %3335 = vmatpush2.msra.mxu0 0.0
    %3336 = vmatprep.subr.mxu0 0.0
    %3337 = vmatpush2.msra.mxu0 0.0
    %3338 = vmatprep.subr.mxu0 0.0
    %3339 = vmatpush2.msra.mxu0 0.0
    %3340 = vmatprep.subr.mxu0 0.0
    %3341 = vmatpush2.msra.mxu0 0.0
    %3342 = vmatprep.subr.mxu0 0.0
    %3343 = vmatpush2.msra.mxu0 0.0
    %3344 = vmatprep.mubr.f32.mxu0 0.0
    %v3345 = vand.u32 %v250, 4294901760
    %v3346 = vsub.f32 %v250, %v3345
    %v3347 = vand.u32 %v3346, 4294901760
    %v3348 = vsub.f32 %v3346, %v3347
    %v3349 = vand.u32 %v3348, 4294901760
    %3350 = vmatmul.mubr.f32.gmra.mxu0 %v3349
    %v3351 = vpop.f32.mrf.mxu0
    %v3352 = vadd.f32 0.0, %v3351
    %v3353 = vpop.f32.mrf.mxu0
    %v3354 = vadd.f32 0.0, %v3353
    %3355 = vdwg.mxu0
    %3356 = vmatprep.subr.mxu0 0.0
    %3357 = vmatpush1.msra.mxu0 0.0
    %3358 = vmatprep.subr.mxu0 0.0
    %3359 = vmatpush1.msra.mxu0 0.0
    %3360 = vmatprep.subr.mxu0 0.0
    %3361 = vmatpush1.msra.mxu0 0.0
    %3362 = vmatprep.subr.mxu0 0.0
    %3363 = vmatpush1.msra.mxu0 0.0
    %v3364 = vand.u32 %v242, 4294901760
    %v3365 = vsub.f32 %v242, %v3364
    %v3366 = vand.u32 %v3365, 4294901760
    %v3367 = vsub.f32 %v3365, %v3366
    %v3368 = vand.u32 %v3367, 4294901760
    %3369 = vmatprep.subr.mxu0 %v3368
    %v3370 = vand.u32 %v241, 4294901760
    %v3371 = vsub.f32 %v241, %v3370
    %v3372 = vand.u32 %v3371, 4294901760
    %v3373 = vsub.f32 %v3371, %v3372
    %v3374 = vand.u32 %v3373, 4294901760
    %3375 = vmatpush1.msra.mxu0 %v3374
    %v3376 = vand.u32 %v227, 4294901760
    %v3377 = vsub.f32 %v227, %v3376
    %v3378 = vand.u32 %v3377, 4294901760
    %v3379 = vsub.f32 %v3377, %v3378
    %v3380 = vand.u32 %v3379, 4294901760
    %3381 = vmatprep.subr.mxu0 %v3380
    %v3382 = vand.u32 %v226, 4294901760
    %v3383 = vsub.f32 %v226, %v3382
    %v3384 = vand.u32 %v3383, 4294901760
    %v3385 = vsub.f32 %v3383, %v3384
    %v3386 = vand.u32 %v3385, 4294901760
    %3387 = vmatpush1.msra.mxu0 %v3386
    %v3388 = vand.u32 %v212, 4294901760
    %v3389 = vsub.f32 %v212, %v3388
    %v3390 = vand.u32 %v3389, 4294901760
    %v3391 = vsub.f32 %v3389, %v3390
    %v3392 = vand.u32 %v3391, 4294901760
    %3393 = vmatprep.subr.mxu0 %v3392
    %v3394 = vand.u32 %v211, 4294901760
    %v3395 = vsub.f32 %v211, %v3394
    %v3396 = vand.u32 %v3395, 4294901760
    %v3397 = vsub.f32 %v3395, %v3396
    %v3398 = vand.u32 %v3397, 4294901760
    %3399 = vmatpush1.msra.mxu0 %v3398
    %v3400 = vand.u32 %v197, 4294901760
    %v3401 = vsub.f32 %v197, %v3400
    %v3402 = vand.u32 %v3401, 4294901760
    %v3403 = vsub.f32 %v3401, %v3402
    %v3404 = vand.u32 %v3403, 4294901760
    %3405 = vmatprep.subr.mxu0 %v3404
    %v3406 = vand.u32 %v196, 4294901760
    %v3407 = vsub.f32 %v196, %v3406
    %v3408 = vand.u32 %v3407, 4294901760
    %v3409 = vsub.f32 %v3407, %v3408
    %v3410 = vand.u32 %v3409, 4294901760
    %3411 = vmatpush1.msra.mxu0 %v3410
    %v3412 = vand.u32 %v182, 4294901760
    %v3413 = vsub.f32 %v182, %v3412
    %v3414 = vand.u32 %v3413, 4294901760
    %v3415 = vsub.f32 %v3413, %v3414
    %v3416 = vand.u32 %v3415, 4294901760
    %3417 = vmatprep.subr.mxu0 %v3416
    %v3418 = vand.u32 %v181, 4294901760
    %v3419 = vsub.f32 %v181, %v3418
    %v3420 = vand.u32 %v3419, 4294901760
    %v3421 = vsub.f32 %v3419, %v3420
    %v3422 = vand.u32 %v3421, 4294901760
    %3423 = vmatpush1.msra.mxu0 %v3422
    %v3424 = vand.u32 %v167, 4294901760
    %v3425 = vsub.f32 %v167, %v3424
    %v3426 = vand.u32 %v3425, 4294901760
    %v3427 = vsub.f32 %v3425, %v3426
    %v3428 = vand.u32 %v3427, 4294901760
    %3429 = vmatprep.subr.mxu0 %v3428
    %v3430 = vand.u32 %v166, 4294901760
    %v3431 = vsub.f32 %v166, %v3430
    %v3432 = vand.u32 %v3431, 4294901760
    %v3433 = vsub.f32 %v3431, %v3432
    %v3434 = vand.u32 %v3433, 4294901760
    %3435 = vmatpush1.msra.mxu0 %v3434
    %v3436 = vand.u32 %v152, 4294901760
    %v3437 = vsub.f32 %v152, %v3436
    %v3438 = vand.u32 %v3437, 4294901760
    %v3439 = vsub.f32 %v3437, %v3438
    %v3440 = vand.u32 %v3439, 4294901760
    %3441 = vmatprep.subr.mxu0 %v3440
    %v3442 = vand.u32 %v151, 4294901760
    %v3443 = vsub.f32 %v151, %v3442
    %v3444 = vand.u32 %v3443, 4294901760
    %v3445 = vsub.f32 %v3443, %v3444
    %v3446 = vand.u32 %v3445, 4294901760
    %3447 = vmatpush1.msra.mxu0 %v3446
    %v3448 = vand.u32 %v137, 4294901760
    %v3449 = vsub.f32 %v137, %v3448
    %v3450 = vand.u32 %v3449, 4294901760
    %v3451 = vsub.f32 %v3449, %v3450
    %v3452 = vand.u32 %v3451, 4294901760
    %3453 = vmatprep.subr.mxu0 %v3452
    %v3454 = vand.u32 %v136, 4294901760
    %v3455 = vsub.f32 %v136, %v3454
    %v3456 = vand.u32 %v3455, 4294901760
    %v3457 = vsub.f32 %v3455, %v3456
    %v3458 = vand.u32 %v3457, 4294901760
    %3459 = vmatpush1.msra.mxu0 %v3458
    %v3460 = vand.u32 %v122, 4294901760
    %v3461 = vsub.f32 %v122, %v3460
    %v3462 = vand.u32 %v3461, 4294901760
    %v3463 = vsub.f32 %v3461, %v3462
    %v3464 = vand.u32 %v3463, 4294901760
    %3465 = vmatprep.subr.mxu0 %v3464
    %v3466 = vand.u32 %v121, 4294901760
    %v3467 = vsub.f32 %v121, %v3466
    %v3468 = vand.u32 %v3467, 4294901760
    %v3469 = vsub.f32 %v3467, %v3468
    %v3470 = vand.u32 %v3469, 4294901760
    %3471 = vmatpush1.msra.mxu0 %v3470
    %v3472 = vand.u32 %v107, 4294901760
    %v3473 = vsub.f32 %v107, %v3472
    %v3474 = vand.u32 %v3473, 4294901760
    %v3475 = vsub.f32 %v3473, %v3474
    %v3476 = vand.u32 %v3475, 4294901760
    %3477 = vmatprep.subr.mxu0 %v3476
    %v3478 = vand.u32 %v106, 4294901760
    %v3479 = vsub.f32 %v106, %v3478
    %v3480 = vand.u32 %v3479, 4294901760
    %v3481 = vsub.f32 %v3479, %v3480
    %v3482 = vand.u32 %v3481, 4294901760
    %3483 = vmatpush1.msra.mxu0 %v3482
    %v3484 = vand.u32 %v92, 4294901760
    %v3485 = vsub.f32 %v92, %v3484
    %v3486 = vand.u32 %v3485, 4294901760
    %v3487 = vsub.f32 %v3485, %v3486
    %v3488 = vand.u32 %v3487, 4294901760
    %3489 = vmatprep.subr.mxu0 %v3488
    %v3490 = vand.u32 %v91, 4294901760
    %v3491 = vsub.f32 %v91, %v3490
    %v3492 = vand.u32 %v3491, 4294901760
    %v3493 = vsub.f32 %v3491, %v3492
    %v3494 = vand.u32 %v3493, 4294901760
    %3495 = vmatpush1.msra.mxu0 %v3494
    %v3496 = vand.u32 %v77, 4294901760
    %v3497 = vsub.f32 %v77, %v3496
    %v3498 = vand.u32 %v3497, 4294901760
    %v3499 = vsub.f32 %v3497, %v3498
    %v3500 = vand.u32 %v3499, 4294901760
    %3501 = vmatprep.subr.mxu0 %v3500
    %v3502 = vand.u32 %v76, 4294901760
    %v3503 = vsub.f32 %v76, %v3502
    %v3504 = vand.u32 %v3503, 4294901760
    %v3505 = vsub.f32 %v3503, %v3504
    %v3506 = vand.u32 %v3505, 4294901760
    %3507 = vmatpush1.msra.mxu0 %v3506
    %3508 = vmatprep.subr.mxu0 0.0
    %3509 = vmatpush2.msra.mxu0 0.0
    %3510 = vmatprep.subr.mxu0 0.0
    %3511 = vmatpush2.msra.mxu0 0.0
    %3512 = vmatprep.subr.mxu0 0.0
    %3513 = vmatpush2.msra.mxu0 0.0
    %3514 = vmatprep.subr.mxu0 0.0
    %3515 = vmatpush2.msra.mxu0 0.0
    %3516 = vmatprep.subr.mxu0 0.0
    %3517 = vmatpush2.msra.mxu0 0.0
    %3518 = vmatprep.subr.mxu0 0.0
    %3519 = vmatpush2.msra.mxu0 0.0
    %3520 = vmatprep.subr.mxu0 0.0
    %3521 = vmatpush2.msra.mxu0 0.0
    %3522 = vmatprep.subr.mxu0 0.0
    %3523 = vmatpush2.msra.mxu0 0.0
    %3524 = vmatprep.subr.mxu0 0.0
    %3525 = vmatpush2.msra.mxu0 0.0
    %3526 = vmatprep.subr.mxu0 0.0
    %3527 = vmatpush2.msra.mxu0 0.0
    %3528 = vmatprep.subr.mxu0 0.0
    %3529 = vmatpush2.msra.mxu0 0.0
    %3530 = vmatprep.subr.mxu0 0.0
    %3531 = vmatpush2.msra.mxu0 0.0
    %3532 = vmatprep.subr.mxu0 0.0
    %3533 = vmatpush2.msra.mxu0 0.0
    %3534 = vmatprep.subr.mxu0 0.0
    %3535 = vmatpush2.msra.mxu0 0.0
    %3536 = vmatprep.subr.mxu0 0.0
    %3537 = vmatpush2.msra.mxu0 0.0
    %3538 = vmatprep.subr.mxu0 0.0
    %3539 = vmatpush2.msra.mxu0 0.0
    %3540 = vmatprep.mubr.f32.mxu0 0.0
    %v3541 = vand.u32 %v250, 4294901760
    %3542 = vmatmul.mubr.f32.gmra.mxu0 %v3541
    %v3543 = vpop.f32.mrf.mxu0
    %v3544 = vadd.f32 %v3352, %v3543
    %v3545 = vpop.f32.mrf.mxu0
    %v3546 = vadd.f32 %v3354, %v3545
    %3547 = vdwg.mxu0
    %3548 = vmatprep.subr.mxu0 0.0
    %3549 = vmatpush1.msra.mxu0 0.0
    %3550 = vmatprep.subr.mxu0 0.0
    %3551 = vmatpush1.msra.mxu0 0.0
    %3552 = vmatprep.subr.mxu0 0.0
    %3553 = vmatpush1.msra.mxu0 0.0
    %3554 = vmatprep.subr.mxu0 0.0
    %3555 = vmatpush1.msra.mxu0 0.0
    %v3556 = vand.u32 %v242, 4294901760
    %v3557 = vsub.f32 %v242, %v3556
    %3558 = vmatprep.subr.mxu0 %v3557
    %v3559 = vand.u32 %v241, 4294901760
    %v3560 = vsub.f32 %v241, %v3559
    %3561 = vmatpush1.msra.mxu0 %v3560
    %v3562 = vand.u32 %v227, 4294901760
    %v3563 = vsub.f32 %v227, %v3562
    %3564 = vmatprep.subr.mxu0 %v3563
    %v3565 = vand.u32 %v226, 4294901760
    %v3566 = vsub.f32 %v226, %v3565
    %3567 = vmatpush1.msra.mxu0 %v3566
    %v3568 = vand.u32 %v212, 4294901760
    %v3569 = vsub.f32 %v212, %v3568
    %3570 = vmatprep.subr.mxu0 %v3569
    %v3571 = vand.u32 %v211, 4294901760
    %v3572 = vsub.f32 %v211, %v3571
    %3573 = vmatpush1.msra.mxu0 %v3572
    %v3574 = vand.u32 %v197, 4294901760
    %v3575 = vsub.f32 %v197, %v3574
    %3576 = vmatprep.subr.mxu0 %v3575
    %v3577 = vand.u32 %v196, 4294901760
    %v3578 = vsub.f32 %v196, %v3577
    %3579 = vmatpush1.msra.mxu0 %v3578
    %v3580 = vand.u32 %v182, 4294901760
    %v3581 = vsub.f32 %v182, %v3580
    %3582 = vmatprep.subr.mxu0 %v3581
    %v3583 = vand.u32 %v181, 4294901760
    %v3584 = vsub.f32 %v181, %v3583
    %3585 = vmatpush1.msra.mxu0 %v3584
    %v3586 = vand.u32 %v167, 4294901760
    %v3587 = vsub.f32 %v167, %v3586
    %3588 = vmatprep.subr.mxu0 %v3587
    %v3589 = vand.u32 %v166, 4294901760
    %v3590 = vsub.f32 %v166, %v3589
    %3591 = vmatpush1.msra.mxu0 %v3590
    %v3592 = vand.u32 %v152, 4294901760
    %v3593 = vsub.f32 %v152, %v3592
    %3594 = vmatprep.subr.mxu0 %v3593
    %v3595 = vand.u32 %v151, 4294901760
    %v3596 = vsub.f32 %v151, %v3595
    %3597 = vmatpush1.msra.mxu0 %v3596
    %v3598 = vand.u32 %v137, 4294901760
    %v3599 = vsub.f32 %v137, %v3598
    %3600 = vmatprep.subr.mxu0 %v3599
    %v3601 = vand.u32 %v136, 4294901760
    %v3602 = vsub.f32 %v136, %v3601
    %3603 = vmatpush1.msra.mxu0 %v3602
    %v3604 = vand.u32 %v122, 4294901760
    %v3605 = vsub.f32 %v122, %v3604
    %3606 = vmatprep.subr.mxu0 %v3605
    %v3607 = vand.u32 %v121, 4294901760
    %v3608 = vsub.f32 %v121, %v3607
    %3609 = vmatpush1.msra.mxu0 %v3608
    %v3610 = vand.u32 %v107, 4294901760
    %v3611 = vsub.f32 %v107, %v3610
    %3612 = vmatprep.subr.mxu0 %v3611
    %v3613 = vand.u32 %v106, 4294901760
    %v3614 = vsub.f32 %v106, %v3613
    %3615 = vmatpush1.msra.mxu0 %v3614
    %v3616 = vand.u32 %v92, 4294901760
    %v3617 = vsub.f32 %v92, %v3616
    %3618 = vmatprep.subr.mxu0 %v3617
    %v3619 = vand.u32 %v91, 4294901760
    %v3620 = vsub.f32 %v91, %v3619
    %3621 = vmatpush1.msra.mxu0 %v3620
    %v3622 = vand.u32 %v77, 4294901760
    %v3623 = vsub.f32 %v77, %v3622
    %3624 = vmatprep.subr.mxu0 %v3623
    %v3625 = vand.u32 %v76, 4294901760
    %v3626 = vsub.f32 %v76, %v3625
    %3627 = vmatpush1.msra.mxu0 %v3626
    %3628 = vmatprep.subr.mxu0 0.0
    %3629 = vmatpush2.msra.mxu0 0.0
    %3630 = vmatprep.subr.mxu0 0.0
    %3631 = vmatpush2.msra.mxu0 0.0
    %3632 = vmatprep.subr.mxu0 0.0
    %3633 = vmatpush2.msra.mxu0 0.0
    %3634 = vmatprep.subr.mxu0 0.0
    %3635 = vmatpush2.msra.mxu0 0.0
    %3636 = vmatprep.subr.mxu0 0.0
    %3637 = vmatpush2.msra.mxu0 0.0
    %3638 = vmatprep.subr.mxu0 0.0
    %3639 = vmatpush2.msra.mxu0 0.0
    %3640 = vmatprep.subr.mxu0 0.0
    %3641 = vmatpush2.msra.mxu0 0.0
    %3642 = vmatprep.subr.mxu0 0.0
    %3643 = vmatpush2.msra.mxu0 0.0
    %3644 = vmatprep.subr.mxu0 0.0
    %3645 = vmatpush2.msra.mxu0 0.0
    %3646 = vmatprep.subr.mxu0 0.0
    %3647 = vmatpush2.msra.mxu0 0.0
    %3648 = vmatprep.subr.mxu0 0.0
    %3649 = vmatpush2.msra.mxu0 0.0
    %3650 = vmatprep.subr.mxu0 0.0
    %3651 = vmatpush2.msra.mxu0 0.0
    %3652 = vmatprep.subr.mxu0 0.0
    %3653 = vmatpush2.msra.mxu0 0.0
    %3654 = vmatprep.subr.mxu0 0.0
    %3655 = vmatpush2.msra.mxu0 0.0
    %3656 = vmatprep.subr.mxu0 0.0
    %3657 = vmatpush2.msra.mxu0 0.0
    %3658 = vmatprep.subr.mxu0 0.0
    %3659 = vmatpush2.msra.mxu0 0.0
    %3660 = vmatprep.mubr.f32.mxu0 0.0
    %v3661 = vand.u32 %v250, 4294901760
    %v3662 = vsub.f32 %v250, %v3661
    %3663 = vmatmul.mubr.f32.gmra.mxu0 %v3662
    %v3664 = vpop.f32.mrf.mxu0
    %v3665 = vadd.f32 %v3544, %v3664
    %v3666 = vpop.f32.mrf.mxu0
    %v3667 = vadd.f32 %v3546, %v3666
    %3668 = vdwg.mxu0
    %3669 = vmatprep.subr.mxu0 0.0
    %3670 = vmatpush1.msra.mxu0 0.0
    %3671 = vmatprep.subr.mxu0 0.0
    %3672 = vmatpush1.msra.mxu0 0.0
    %3673 = vmatprep.subr.mxu0 0.0
    %3674 = vmatpush1.msra.mxu0 0.0
    %3675 = vmatprep.subr.mxu0 0.0
    %3676 = vmatpush1.msra.mxu0 0.0
    %v3677 = vand.u32 %v242, 4294901760
    %3678 = vmatprep.subr.mxu0 %v3677
    %v3679 = vand.u32 %v241, 4294901760
    %3680 = vmatpush1.msra.mxu0 %v3679
    %v3681 = vand.u32 %v227, 4294901760
    %3682 = vmatprep.subr.mxu0 %v3681
    %v3683 = vand.u32 %v226, 4294901760
    %3684 = vmatpush1.msra.mxu0 %v3683
    %v3685 = vand.u32 %v212, 4294901760
    %3686 = vmatprep.subr.mxu0 %v3685
    %v3687 = vand.u32 %v211, 4294901760
    %3688 = vmatpush1.msra.mxu0 %v3687
    %v3689 = vand.u32 %v197, 4294901760
    %3690 = vmatprep.subr.mxu0 %v3689
    %v3691 = vand.u32 %v196, 4294901760
    %3692 = vmatpush1.msra.mxu0 %v3691
    %v3693 = vand.u32 %v182, 4294901760
    %3694 = vmatprep.subr.mxu0 %v3693
    %v3695 = vand.u32 %v181, 4294901760
    %3696 = vmatpush1.msra.mxu0 %v3695
    %v3697 = vand.u32 %v167, 4294901760
    %3698 = vmatprep.subr.mxu0 %v3697
    %v3699 = vand.u32 %v166, 4294901760
    %3700 = vmatpush1.msra.mxu0 %v3699
    %v3701 = vand.u32 %v152, 4294901760
    %3702 = vmatprep.subr.mxu0 %v3701
    %v3703 = vand.u32 %v151, 4294901760
    %3704 = vmatpush1.msra.mxu0 %v3703
    %v3705 = vand.u32 %v137, 4294901760
    %3706 = vmatprep.subr.mxu0 %v3705
    %v3707 = vand.u32 %v136, 4294901760
    %3708 = vmatpush1.msra.mxu0 %v3707
    %v3709 = vand.u32 %v122, 4294901760
    %3710 = vmatprep.subr.mxu0 %v3709
    %v3711 = vand.u32 %v121, 4294901760
    %3712 = vmatpush1.msra.mxu0 %v3711
    %v3713 = vand.u32 %v107, 4294901760
    %3714 = vmatprep.subr.mxu0 %v3713
    %v3715 = vand.u32 %v106, 4294901760
    %3716 = vmatpush1.msra.mxu0 %v3715
    %v3717 = vand.u32 %v92, 4294901760
    %3718 = vmatprep.subr.mxu0 %v3717
    %v3719 = vand.u32 %v91, 4294901760
    %3720 = vmatpush1.msra.mxu0 %v3719
    %v3721 = vand.u32 %v77, 4294901760
    %3722 = vmatprep.subr.mxu0 %v3721
    %v3723 = vand.u32 %v76, 4294901760
    %3724 = vmatpush1.msra.mxu0 %v3723
    %3725 = vmatprep.subr.mxu0 0.0
    %3726 = vmatpush2.msra.mxu0 0.0
    %3727 = vmatprep.subr.mxu0 0.0
    %3728 = vmatpush2.msra.mxu0 0.0
    %3729 = vmatprep.subr.mxu0 0.0
    %3730 = vmatpush2.msra.mxu0 0.0
    %3731 = vmatprep.subr.mxu0 0.0
    %3732 = vmatpush2.msra.mxu0 0.0
    %3733 = vmatprep.subr.mxu0 0.0
    %3734 = vmatpush2.msra.mxu0 0.0
    %3735 = vmatprep.subr.mxu0 0.0
    %3736 = vmatpush2.msra.mxu0 0.0
    %3737 = vmatprep.subr.mxu0 0.0
    %3738 = vmatpush2.msra.mxu0 0.0
    %3739 = vmatprep.subr.mxu0 0.0
    %3740 = vmatpush2.msra.mxu0 0.0
    %3741 = vmatprep.subr.mxu0 0.0
    %3742 = vmatpush2.msra.mxu0 0.0
    %3743 = vmatprep.subr.mxu0 0.0
    %3744 = vmatpush2.msra.mxu0 0.0
    %3745 = vmatprep.subr.mxu0 0.0
    %3746 = vmatpush2.msra.mxu0 0.0
    %3747 = vmatprep.subr.mxu0 0.0
    %3748 = vmatpush2.msra.mxu0 0.0
    %3749 = vmatprep.subr.mxu0 0.0
    %3750 = vmatpush2.msra.mxu0 0.0
    %3751 = vmatprep.subr.mxu0 0.0
    %3752 = vmatpush2.msra.mxu0 0.0
    %3753 = vmatprep.subr.mxu0 0.0
    %3754 = vmatpush2.msra.mxu0 0.0
    %3755 = vmatprep.subr.mxu0 0.0
    %3756 = vmatpush2.msra.mxu0 0.0
    %3757 = vmatprep.mubr.f32.mxu0 0.0
    %v3758 = vand.u32 %v250, 4294901760
    %v3759 = vsub.f32 %v250, %v3758
    %v3760 = vand.u32 %v3759, 4294901760
    %3761 = vmatmul.mubr.f32.gmra.mxu0 %v3760
    %v3762 = vpop.f32.mrf.mxu0
    %v3763 = vadd.f32 %v3665, %v3762
    %v3764 = vpop.f32.mrf.mxu0
    %v3765 = vadd.f32 %v3667, %v3764
    %3766 = vdwg.mxu0
    %3767 = vmatprep.subr.mxu0 0.0
    %3768 = vmatpush1.msra.mxu0 0.0
    %3769 = vmatprep.subr.mxu0 0.0
    %3770 = vmatpush1.msra.mxu0 0.0
    %3771 = vmatprep.subr.mxu0 0.0
    %3772 = vmatpush1.msra.mxu0 0.0
    %3773 = vmatprep.subr.mxu0 0.0
    %3774 = vmatpush1.msra.mxu0 0.0
    %v3775 = vand.u32 %v242, 4294901760
    %v3776 = vsub.f32 %v242, %v3775
    %v3777 = vand.u32 %v3776, 4294901760
    %3778 = vmatprep.subr.mxu0 %v3777
    %v3779 = vand.u32 %v241, 4294901760
    %v3780 = vsub.f32 %v241, %v3779
    %v3781 = vand.u32 %v3780, 4294901760
    %3782 = vmatpush1.msra.mxu0 %v3781
    %v3783 = vand.u32 %v227, 4294901760
    %v3784 = vsub.f32 %v227, %v3783
    %v3785 = vand.u32 %v3784, 4294901760
    %3786 = vmatprep.subr.mxu0 %v3785
    %v3787 = vand.u32 %v226, 4294901760
    %v3788 = vsub.f32 %v226, %v3787
    %v3789 = vand.u32 %v3788, 4294901760
    %3790 = vmatpush1.msra.mxu0 %v3789
    %v3791 = vand.u32 %v212, 4294901760
    %v3792 = vsub.f32 %v212, %v3791
    %v3793 = vand.u32 %v3792, 4294901760
    %3794 = vmatprep.subr.mxu0 %v3793
    %v3795 = vand.u32 %v211, 4294901760
    %v3796 = vsub.f32 %v211, %v3795
    %v3797 = vand.u32 %v3796, 4294901760
    %3798 = vmatpush1.msra.mxu0 %v3797
    %v3799 = vand.u32 %v197, 4294901760
    %v3800 = vsub.f32 %v197, %v3799
    %v3801 = vand.u32 %v3800, 4294901760
    %3802 = vmatprep.subr.mxu0 %v3801
    %v3803 = vand.u32 %v196, 4294901760
    %v3804 = vsub.f32 %v196, %v3803
    %v3805 = vand.u32 %v3804, 4294901760
    %3806 = vmatpush1.msra.mxu0 %v3805
    %v3807 = vand.u32 %v182, 4294901760
    %v3808 = vsub.f32 %v182, %v3807
    %v3809 = vand.u32 %v3808, 4294901760
    %3810 = vmatprep.subr.mxu0 %v3809
    %v3811 = vand.u32 %v181, 4294901760
    %v3812 = vsub.f32 %v181, %v3811
    %v3813 = vand.u32 %v3812, 4294901760
    %3814 = vmatpush1.msra.mxu0 %v3813
    %v3815 = vand.u32 %v167, 4294901760
    %v3816 = vsub.f32 %v167, %v3815
    %v3817 = vand.u32 %v3816, 4294901760
    %3818 = vmatprep.subr.mxu0 %v3817
    %v3819 = vand.u32 %v166, 4294901760
    %v3820 = vsub.f32 %v166, %v3819
    %v3821 = vand.u32 %v3820, 4294901760
    %3822 = vmatpush1.msra.mxu0 %v3821
    %v3823 = vand.u32 %v152, 4294901760
    %v3824 = vsub.f32 %v152, %v3823
    %v3825 = vand.u32 %v3824, 4294901760
    %3826 = vmatprep.subr.mxu0 %v3825
    %v3827 = vand.u32 %v151, 4294901760
    %v3828 = vsub.f32 %v151, %v3827
    %v3829 = vand.u32 %v3828, 4294901760
    %3830 = vmatpush1.msra.mxu0 %v3829
    %v3831 = vand.u32 %v137, 4294901760
    %v3832 = vsub.f32 %v137, %v3831
    %v3833 = vand.u32 %v3832, 4294901760
    %3834 = vmatprep.subr.mxu0 %v3833
    %v3835 = vand.u32 %v136, 4294901760
    %v3836 = vsub.f32 %v136, %v3835
    %v3837 = vand.u32 %v3836, 4294901760
    %3838 = vmatpush1.msra.mxu0 %v3837
    %v3839 = vand.u32 %v122, 4294901760
    %v3840 = vsub.f32 %v122, %v3839
    %v3841 = vand.u32 %v3840, 4294901760
    %3842 = vmatprep.subr.mxu0 %v3841
    %v3843 = vand.u32 %v121, 4294901760
    %v3844 = vsub.f32 %v121, %v3843
    %v3845 = vand.u32 %v3844, 4294901760
    %3846 = vmatpush1.msra.mxu0 %v3845
    %v3847 = vand.u32 %v107, 4294901760
    %v3848 = vsub.f32 %v107, %v3847
    %v3849 = vand.u32 %v3848, 4294901760
    %3850 = vmatprep.subr.mxu0 %v3849
    %v3851 = vand.u32 %v106, 4294901760
    %v3852 = vsub.f32 %v106, %v3851
    %v3853 = vand.u32 %v3852, 4294901760
    %3854 = vmatpush1.msra.mxu0 %v3853
    %v3855 = vand.u32 %v92, 4294901760
    %v3856 = vsub.f32 %v92, %v3855
    %v3857 = vand.u32 %v3856, 4294901760
    %3858 = vmatprep.subr.mxu0 %v3857
    %v3859 = vand.u32 %v91, 4294901760
    %v3860 = vsub.f32 %v91, %v3859
    %v3861 = vand.u32 %v3860, 4294901760
    %3862 = vmatpush1.msra.mxu0 %v3861
    %v3863 = vand.u32 %v77, 4294901760
    %v3864 = vsub.f32 %v77, %v3863
    %v3865 = vand.u32 %v3864, 4294901760
    %3866 = vmatprep.subr.mxu0 %v3865
    %v3867 = vand.u32 %v76, 4294901760
    %v3868 = vsub.f32 %v76, %v3867
    %v3869 = vand.u32 %v3868, 4294901760
    %3870 = vmatpush1.msra.mxu0 %v3869
    %3871 = vmatprep.subr.mxu0 0.0
    %3872 = vmatpush2.msra.mxu0 0.0
    %3873 = vmatprep.subr.mxu0 0.0
    %3874 = vmatpush2.msra.mxu0 0.0
    %3875 = vmatprep.subr.mxu0 0.0
    %3876 = vmatpush2.msra.mxu0 0.0
    %3877 = vmatprep.subr.mxu0 0.0
    %3878 = vmatpush2.msra.mxu0 0.0
    %3879 = vmatprep.subr.mxu0 0.0
    %3880 = vmatpush2.msra.mxu0 0.0
    %3881 = vmatprep.subr.mxu0 0.0
    %3882 = vmatpush2.msra.mxu0 0.0
    %3883 = vmatprep.subr.mxu0 0.0
    %3884 = vmatpush2.msra.mxu0 0.0
    %3885 = vmatprep.subr.mxu0 0.0
    %3886 = vmatpush2.msra.mxu0 0.0
    %3887 = vmatprep.subr.mxu0 0.0
    %3888 = vmatpush2.msra.mxu0 0.0
    %3889 = vmatprep.subr.mxu0 0.0
    %3890 = vmatpush2.msra.mxu0 0.0
    %3891 = vmatprep.subr.mxu0 0.0
    %3892 = vmatpush2.msra.mxu0 0.0
    %3893 = vmatprep.subr.mxu0 0.0
    %3894 = vmatpush2.msra.mxu0 0.0
    %3895 = vmatprep.subr.mxu0 0.0
    %3896 = vmatpush2.msra.mxu0 0.0
    %3897 = vmatprep.subr.mxu0 0.0
    %3898 = vmatpush2.msra.mxu0 0.0
    %3899 = vmatprep.subr.mxu0 0.0
    %3900 = vmatpush2.msra.mxu0 0.0
    %3901 = vmatprep.subr.mxu0 0.0
    %3902 = vmatpush2.msra.mxu0 0.0
    %3903 = vmatprep.mubr.f32.mxu0 0.0
    %v3904 = vand.u32 %v250, 4294901760
    %3905 = vmatmul.mubr.f32.gmra.mxu0 %v3904
    %v3906 = vpop.f32.mrf.mxu0
    %v3907 = vadd.f32 %v3763, %v3906
    %v3908 = vpop.f32.mrf.mxu0
    %v3909 = vadd.f32 %v3765, %v3908
    %3910 = vdwg.mxu0
    %3911 = vmatprep.subr.mxu0 0.0
    %3912 = vmatpush1.msra.mxu0 0.0
    %3913 = vmatprep.subr.mxu0 0.0
    %3914 = vmatpush1.msra.mxu0 0.0
    %3915 = vmatprep.subr.mxu0 0.0
    %3916 = vmatpush1.msra.mxu0 0.0
    %3917 = vmatprep.subr.mxu0 0.0
    %3918 = vmatpush1.msra.mxu0 0.0
    %v3919 = vand.u32 %v242, 4294901760
    %3920 = vmatprep.subr.mxu0 %v3919
    %v3921 = vand.u32 %v241, 4294901760
    %3922 = vmatpush1.msra.mxu0 %v3921
    %v3923 = vand.u32 %v227, 4294901760
    %3924 = vmatprep.subr.mxu0 %v3923
    %v3925 = vand.u32 %v226, 4294901760
    %3926 = vmatpush1.msra.mxu0 %v3925
    %v3927 = vand.u32 %v212, 4294901760
    %3928 = vmatprep.subr.mxu0 %v3927
    %v3929 = vand.u32 %v211, 4294901760
    %3930 = vmatpush1.msra.mxu0 %v3929
    %v3931 = vand.u32 %v197, 4294901760
    %3932 = vmatprep.subr.mxu0 %v3931
    %v3933 = vand.u32 %v196, 4294901760
    %3934 = vmatpush1.msra.mxu0 %v3933
    %v3935 = vand.u32 %v182, 4294901760
    %3936 = vmatprep.subr.mxu0 %v3935
    %v3937 = vand.u32 %v181, 4294901760
    %3938 = vmatpush1.msra.mxu0 %v3937
    %v3939 = vand.u32 %v167, 4294901760
    %3940 = vmatprep.subr.mxu0 %v3939
    %v3941 = vand.u32 %v166, 4294901760
    %3942 = vmatpush1.msra.mxu0 %v3941
    %v3943 = vand.u32 %v152, 4294901760
    %3944 = vmatprep.subr.mxu0 %v3943
    %v3945 = vand.u32 %v151, 4294901760
    %3946 = vmatpush1.msra.mxu0 %v3945
    %v3947 = vand.u32 %v137, 4294901760
    %3948 = vmatprep.subr.mxu0 %v3947
    %v3949 = vand.u32 %v136, 4294901760
    %3950 = vmatpush1.msra.mxu0 %v3949
    %v3951 = vand.u32 %v122, 4294901760
    %3952 = vmatprep.subr.mxu0 %v3951
    %v3953 = vand.u32 %v121, 4294901760
    %3954 = vmatpush1.msra.mxu0 %v3953
    %v3955 = vand.u32 %v107, 4294901760
    %3956 = vmatprep.subr.mxu0 %v3955
    %v3957 = vand.u32 %v106, 4294901760
    %3958 = vmatpush1.msra.mxu0 %v3957
    %v3959 = vand.u32 %v92, 4294901760
    %3960 = vmatprep.subr.mxu0 %v3959
    %v3961 = vand.u32 %v91, 4294901760
    %3962 = vmatpush1.msra.mxu0 %v3961
    %v3963 = vand.u32 %v77, 4294901760
    %3964 = vmatprep.subr.mxu0 %v3963
    %v3965 = vand.u32 %v76, 4294901760
    %3966 = vmatpush1.msra.mxu0 %v3965
    %3967 = vmatprep.subr.mxu0 0.0
    %3968 = vmatpush2.msra.mxu0 0.0
    %3969 = vmatprep.subr.mxu0 0.0
    %3970 = vmatpush2.msra.mxu0 0.0
    %3971 = vmatprep.subr.mxu0 0.0
    %3972 = vmatpush2.msra.mxu0 0.0
    %3973 = vmatprep.subr.mxu0 0.0
    %3974 = vmatpush2.msra.mxu0 0.0
    %3975 = vmatprep.subr.mxu0 0.0
    %3976 = vmatpush2.msra.mxu0 0.0
    %3977 = vmatprep.subr.mxu0 0.0
    %3978 = vmatpush2.msra.mxu0 0.0
    %3979 = vmatprep.subr.mxu0 0.0
    %3980 = vmatpush2.msra.mxu0 0.0
    %3981 = vmatprep.subr.mxu0 0.0
    %3982 = vmatpush2.msra.mxu0 0.0
    %3983 = vmatprep.subr.mxu0 0.0
    %3984 = vmatpush2.msra.mxu0 0.0
    %3985 = vmatprep.subr.mxu0 0.0
    %3986 = vmatpush2.msra.mxu0 0.0
    %3987 = vmatprep.subr.mxu0 0.0
    %3988 = vmatpush2.msra.mxu0 0.0
    %3989 = vmatprep.subr.mxu0 0.0
    %3990 = vmatpush2.msra.mxu0 0.0
    %3991 = vmatprep.subr.mxu0 0.0
    %3992 = vmatpush2.msra.mxu0 0.0
    %3993 = vmatprep.subr.mxu0 0.0
    %3994 = vmatpush2.msra.mxu0 0.0
    %3995 = vmatprep.subr.mxu0 0.0
    %3996 = vmatpush2.msra.mxu0 0.0
    %3997 = vmatprep.subr.mxu0 0.0
    %3998 = vmatpush2.msra.mxu0 0.0
    %3999 = vmatprep.mubr.f32.mxu0 0.0
    %v4000 = vand.u32 %v250, 4294901760
    %4001 = vmatmul.mubr.f32.gmra.mxu0 %v4000
    %v4002 = vpop.f32.mrf.mxu0
    %v4003 = vadd.f32 %v3907, %v4002
    %v4004 = vpop.f32.mrf.mxu0
    %v4005 = vadd.f32 %v3909, %v4004
    %4006 = vdwg.mxu0
    %4007 = vmatprep.subr.mxu0 0.0
    %4008 = vmatpush1.msra.mxu0 0.0
    %4009 = vmatprep.subr.mxu0 0.0
    %4010 = vmatpush1.msra.mxu0 0.0
    %4011 = vmatprep.subr.mxu0 0.0
    %4012 = vmatpush1.msra.mxu0 0.0
    %4013 = vmatprep.subr.mxu0 0.0
    %4014 = vmatpush1.msra.mxu0 0.0
    %v4015 = vand.u32 %v244, 4294901760
    %4016 = vmatprep.subr.mxu0 %v4015
    %v4017 = vand.u32 %v243, 4294901760
    %4018 = vmatpush1.msra.mxu0 %v4017
    %v4019 = vand.u32 %v229, 4294901760
    %4020 = vmatprep.subr.mxu0 %v4019
    %v4021 = vand.u32 %v228, 4294901760
    %4022 = vmatpush1.msra.mxu0 %v4021
    %v4023 = vand.u32 %v214, 4294901760
    %4024 = vmatprep.subr.mxu0 %v4023
    %v4025 = vand.u32 %v213, 4294901760
    %4026 = vmatpush1.msra.mxu0 %v4025
    %v4027 = vand.u32 %v199, 4294901760
    %4028 = vmatprep.subr.mxu0 %v4027
    %v4029 = vand.u32 %v198, 4294901760
    %4030 = vmatpush1.msra.mxu0 %v4029
    %v4031 = vand.u32 %v184, 4294901760
    %4032 = vmatprep.subr.mxu0 %v4031
    %v4033 = vand.u32 %v183, 4294901760
    %4034 = vmatpush1.msra.mxu0 %v4033
    %v4035 = vand.u32 %v169, 4294901760
    %4036 = vmatprep.subr.mxu0 %v4035
    %v4037 = vand.u32 %v168, 4294901760
    %4038 = vmatpush1.msra.mxu0 %v4037
    %v4039 = vand.u32 %v154, 4294901760
    %4040 = vmatprep.subr.mxu0 %v4039
    %v4041 = vand.u32 %v153, 4294901760
    %4042 = vmatpush1.msra.mxu0 %v4041
    %v4043 = vand.u32 %v139, 4294901760
    %4044 = vmatprep.subr.mxu0 %v4043
    %v4045 = vand.u32 %v138, 4294901760
    %4046 = vmatpush1.msra.mxu0 %v4045
    %v4047 = vand.u32 %v124, 4294901760
    %4048 = vmatprep.subr.mxu0 %v4047
    %v4049 = vand.u32 %v123, 4294901760
    %4050 = vmatpush1.msra.mxu0 %v4049
    %v4051 = vand.u32 %v109, 4294901760
    %4052 = vmatprep.subr.mxu0 %v4051
    %v4053 = vand.u32 %v108, 4294901760
    %4054 = vmatpush1.msra.mxu0 %v4053
    %v4055 = vand.u32 %v94, 4294901760
    %4056 = vmatprep.subr.mxu0 %v4055
    %v4057 = vand.u32 %v93, 4294901760
    %4058 = vmatpush1.msra.mxu0 %v4057
    %v4059 = vand.u32 %v79, 4294901760
    %4060 = vmatprep.subr.mxu0 %v4059
    %v4061 = vand.u32 %v78, 4294901760
    %4062 = vmatpush1.msra.mxu0 %v4061
    %4063 = vmatprep.subr.mxu0 0.0
    %4064 = vmatpush2.msra.mxu0 0.0
    %4065 = vmatprep.subr.mxu0 0.0
    %4066 = vmatpush2.msra.mxu0 0.0
    %4067 = vmatprep.subr.mxu0 0.0
    %4068 = vmatpush2.msra.mxu0 0.0
    %4069 = vmatprep.subr.mxu0 0.0
    %4070 = vmatpush2.msra.mxu0 0.0
    %4071 = vmatprep.subr.mxu0 0.0
    %4072 = vmatpush2.msra.mxu0 0.0
    %4073 = vmatprep.subr.mxu0 0.0
    %4074 = vmatpush2.msra.mxu0 0.0
    %4075 = vmatprep.subr.mxu0 0.0
    %4076 = vmatpush2.msra.mxu0 0.0
    %4077 = vmatprep.subr.mxu0 0.0
    %4078 = vmatpush2.msra.mxu0 0.0
    %4079 = vmatprep.subr.mxu0 0.0
    %4080 = vmatpush2.msra.mxu0 0.0
    %4081 = vmatprep.subr.mxu0 0.0
    %4082 = vmatpush2.msra.mxu0 0.0
    %4083 = vmatprep.subr.mxu0 0.0
    %4084 = vmatpush2.msra.mxu0 0.0
    %4085 = vmatprep.subr.mxu0 0.0
    %4086 = vmatpush2.msra.mxu0 0.0
    %4087 = vmatprep.subr.mxu0 0.0
    %4088 = vmatpush2.msra.mxu0 0.0
    %4089 = vmatprep.subr.mxu0 0.0
    %4090 = vmatpush2.msra.mxu0 0.0
    %4091 = vmatprep.subr.mxu0 0.0
    %4092 = vmatpush2.msra.mxu0 0.0
    %4093 = vmatprep.subr.mxu0 0.0
    %4094 = vmatpush2.msra.mxu0 0.0
    %4095 = vmatprep.mubr.f32.mxu0 0.0
    %v4096 = vand.u32 %v250, 4294901760
    %v4097 = vsub.f32 %v250, %v4096
    %v4098 = vand.u32 %v4097, 4294901760
    %v4099 = vsub.f32 %v4097, %v4098
    %v4100 = vand.u32 %v4099, 4294901760
    %4101 = vmatmul.mubr.f32.gmra.mxu0 %v4100
    %v4102 = vpop.f32.mrf.mxu0
    %v4103 = vadd.f32 0.0, %v4102
    %v4104 = vpop.f32.mrf.mxu0
    %v4105 = vadd.f32 0.0, %v4104
    %4106 = vdwg.mxu0
    %4107 = vmatprep.subr.mxu0 0.0
    %4108 = vmatpush1.msra.mxu0 0.0
    %4109 = vmatprep.subr.mxu0 0.0
    %4110 = vmatpush1.msra.mxu0 0.0
    %4111 = vmatprep.subr.mxu0 0.0
    %4112 = vmatpush1.msra.mxu0 0.0
    %4113 = vmatprep.subr.mxu0 0.0
    %4114 = vmatpush1.msra.mxu0 0.0
    %v4115 = vand.u32 %v244, 4294901760
    %v4116 = vsub.f32 %v244, %v4115
    %v4117 = vand.u32 %v4116, 4294901760
    %v4118 = vsub.f32 %v4116, %v4117
    %v4119 = vand.u32 %v4118, 4294901760
    %4120 = vmatprep.subr.mxu0 %v4119
    %v4121 = vand.u32 %v243, 4294901760
    %v4122 = vsub.f32 %v243, %v4121
    %v4123 = vand.u32 %v4122, 4294901760
    %v4124 = vsub.f32 %v4122, %v4123
    %v4125 = vand.u32 %v4124, 4294901760
    %4126 = vmatpush1.msra.mxu0 %v4125
    %v4127 = vand.u32 %v229, 4294901760
    %v4128 = vsub.f32 %v229, %v4127
    %v4129 = vand.u32 %v4128, 4294901760
    %v4130 = vsub.f32 %v4128, %v4129
    %v4131 = vand.u32 %v4130, 4294901760
    %4132 = vmatprep.subr.mxu0 %v4131
    %v4133 = vand.u32 %v228, 4294901760
    %v4134 = vsub.f32 %v228, %v4133
    %v4135 = vand.u32 %v4134, 4294901760
    %v4136 = vsub.f32 %v4134, %v4135
    %v4137 = vand.u32 %v4136, 4294901760
    %4138 = vmatpush1.msra.mxu0 %v4137
    %v4139 = vand.u32 %v214, 4294901760
    %v4140 = vsub.f32 %v214, %v4139
    %v4141 = vand.u32 %v4140, 4294901760
    %v4142 = vsub.f32 %v4140, %v4141
    %v4143 = vand.u32 %v4142, 4294901760
    %4144 = vmatprep.subr.mxu0 %v4143
    %v4145 = vand.u32 %v213, 4294901760
    %v4146 = vsub.f32 %v213, %v4145
    %v4147 = vand.u32 %v4146, 4294901760
    %v4148 = vsub.f32 %v4146, %v4147
    %v4149 = vand.u32 %v4148, 4294901760
    %4150 = vmatpush1.msra.mxu0 %v4149
    %v4151 = vand.u32 %v199, 4294901760
    %v4152 = vsub.f32 %v199, %v4151
    %v4153 = vand.u32 %v4152, 4294901760
    %v4154 = vsub.f32 %v4152, %v4153
    %v4155 = vand.u32 %v4154, 4294901760
    %4156 = vmatprep.subr.mxu0 %v4155
    %v4157 = vand.u32 %v198, 4294901760
    %v4158 = vsub.f32 %v198, %v4157
    %v4159 = vand.u32 %v4158, 4294901760
    %v4160 = vsub.f32 %v4158, %v4159
    %v4161 = vand.u32 %v4160, 4294901760
    %4162 = vmatpush1.msra.mxu0 %v4161
    %v4163 = vand.u32 %v184, 4294901760
    %v4164 = vsub.f32 %v184, %v4163
    %v4165 = vand.u32 %v4164, 4294901760
    %v4166 = vsub.f32 %v4164, %v4165
    %v4167 = vand.u32 %v4166, 4294901760
    %4168 = vmatprep.subr.mxu0 %v4167
    %v4169 = vand.u32 %v183, 4294901760
    %v4170 = vsub.f32 %v183, %v4169
    %v4171 = vand.u32 %v4170, 4294901760
    %v4172 = vsub.f32 %v4170, %v4171
    %v4173 = vand.u32 %v4172, 4294901760
    %4174 = vmatpush1.msra.mxu0 %v4173
    %v4175 = vand.u32 %v169, 4294901760
    %v4176 = vsub.f32 %v169, %v4175
    %v4177 = vand.u32 %v4176, 4294901760
    %v4178 = vsub.f32 %v4176, %v4177
    %v4179 = vand.u32 %v4178, 4294901760
    %4180 = vmatprep.subr.mxu0 %v4179
    %v4181 = vand.u32 %v168, 4294901760
    %v4182 = vsub.f32 %v168, %v4181
    %v4183 = vand.u32 %v4182, 4294901760
    %v4184 = vsub.f32 %v4182, %v4183
    %v4185 = vand.u32 %v4184, 4294901760
    %4186 = vmatpush1.msra.mxu0 %v4185
    %v4187 = vand.u32 %v154, 4294901760
    %v4188 = vsub.f32 %v154, %v4187
    %v4189 = vand.u32 %v4188, 4294901760
    %v4190 = vsub.f32 %v4188, %v4189
    %v4191 = vand.u32 %v4190, 4294901760
    %4192 = vmatprep.subr.mxu0 %v4191
    %v4193 = vand.u32 %v153, 4294901760
    %v4194 = vsub.f32 %v153, %v4193
    %v4195 = vand.u32 %v4194, 4294901760
    %v4196 = vsub.f32 %v4194, %v4195
    %v4197 = vand.u32 %v4196, 4294901760
    %4198 = vmatpush1.msra.mxu0 %v4197
    %v4199 = vand.u32 %v139, 4294901760
    %v4200 = vsub.f32 %v139, %v4199
    %v4201 = vand.u32 %v4200, 4294901760
    %v4202 = vsub.f32 %v4200, %v4201
    %v4203 = vand.u32 %v4202, 4294901760
    %4204 = vmatprep.subr.mxu0 %v4203
    %v4205 = vand.u32 %v138, 4294901760
    %v4206 = vsub.f32 %v138, %v4205
    %v4207 = vand.u32 %v4206, 4294901760
    %v4208 = vsub.f32 %v4206, %v4207
    %v4209 = vand.u32 %v4208, 4294901760
    %4210 = vmatpush1.msra.mxu0 %v4209
    %v4211 = vand.u32 %v124, 4294901760
    %v4212 = vsub.f32 %v124, %v4211
    %v4213 = vand.u32 %v4212, 4294901760
    %v4214 = vsub.f32 %v4212, %v4213
    %v4215 = vand.u32 %v4214, 4294901760
    %4216 = vmatprep.subr.mxu0 %v4215
    %v4217 = vand.u32 %v123, 4294901760
    %v4218 = vsub.f32 %v123, %v4217
    %v4219 = vand.u32 %v4218, 4294901760
    %v4220 = vsub.f32 %v4218, %v4219
    %v4221 = vand.u32 %v4220, 4294901760
    %4222 = vmatpush1.msra.mxu0 %v4221
    %v4223 = vand.u32 %v109, 4294901760
    %v4224 = vsub.f32 %v109, %v4223
    %v4225 = vand.u32 %v4224, 4294901760
    %v4226 = vsub.f32 %v4224, %v4225
    %v4227 = vand.u32 %v4226, 4294901760
    %4228 = vmatprep.subr.mxu0 %v4227
    %v4229 = vand.u32 %v108, 4294901760
    %v4230 = vsub.f32 %v108, %v4229
    %v4231 = vand.u32 %v4230, 4294901760
    %v4232 = vsub.f32 %v4230, %v4231
    %v4233 = vand.u32 %v4232, 4294901760
    %4234 = vmatpush1.msra.mxu0 %v4233
    %v4235 = vand.u32 %v94, 4294901760
    %v4236 = vsub.f32 %v94, %v4235
    %v4237 = vand.u32 %v4236, 4294901760
    %v4238 = vsub.f32 %v4236, %v4237
    %v4239 = vand.u32 %v4238, 4294901760
    %4240 = vmatprep.subr.mxu0 %v4239
    %v4241 = vand.u32 %v93, 4294901760
    %v4242 = vsub.f32 %v93, %v4241
    %v4243 = vand.u32 %v4242, 4294901760
    %v4244 = vsub.f32 %v4242, %v4243
    %v4245 = vand.u32 %v4244, 4294901760
    %4246 = vmatpush1.msra.mxu0 %v4245
    %v4247 = vand.u32 %v79, 4294901760
    %v4248 = vsub.f32 %v79, %v4247
    %v4249 = vand.u32 %v4248, 4294901760
    %v4250 = vsub.f32 %v4248, %v4249
    %v4251 = vand.u32 %v4250, 4294901760
    %4252 = vmatprep.subr.mxu0 %v4251
    %v4253 = vand.u32 %v78, 4294901760
    %v4254 = vsub.f32 %v78, %v4253
    %v4255 = vand.u32 %v4254, 4294901760
    %v4256 = vsub.f32 %v4254, %v4255
    %v4257 = vand.u32 %v4256, 4294901760
    %4258 = vmatpush1.msra.mxu0 %v4257
    %4259 = vmatprep.subr.mxu0 0.0
    %4260 = vmatpush2.msra.mxu0 0.0
    %4261 = vmatprep.subr.mxu0 0.0
    %4262 = vmatpush2.msra.mxu0 0.0
    %4263 = vmatprep.subr.mxu0 0.0
    %4264 = vmatpush2.msra.mxu0 0.0
    %4265 = vmatprep.subr.mxu0 0.0
    %4266 = vmatpush2.msra.mxu0 0.0
    %4267 = vmatprep.subr.mxu0 0.0
    %4268 = vmatpush2.msra.mxu0 0.0
    %4269 = vmatprep.subr.mxu0 0.0
    %4270 = vmatpush2.msra.mxu0 0.0
    %4271 = vmatprep.subr.mxu0 0.0
    %4272 = vmatpush2.msra.mxu0 0.0
    %4273 = vmatprep.subr.mxu0 0.0
    %4274 = vmatpush2.msra.mxu0 0.0
    %4275 = vmatprep.subr.mxu0 0.0
    %4276 = vmatpush2.msra.mxu0 0.0
    %4277 = vmatprep.subr.mxu0 0.0
    %4278 = vmatpush2.msra.mxu0 0.0
    %4279 = vmatprep.subr.mxu0 0.0
    %4280 = vmatpush2.msra.mxu0 0.0
    %4281 = vmatprep.subr.mxu0 0.0
    %4282 = vmatpush2.msra.mxu0 0.0
    %4283 = vmatprep.subr.mxu0 0.0
    %4284 = vmatpush2.msra.mxu0 0.0
    %4285 = vmatprep.subr.mxu0 0.0
    %4286 = vmatpush2.msra.mxu0 0.0
    %4287 = vmatprep.subr.mxu0 0.0
    %4288 = vmatpush2.msra.mxu0 0.0
    %4289 = vmatprep.subr.mxu0 0.0
    %4290 = vmatpush2.msra.mxu0 0.0
    %4291 = vmatprep.mubr.f32.mxu0 0.0
    %v4292 = vand.u32 %v250, 4294901760
    %4293 = vmatmul.mubr.f32.gmra.mxu0 %v4292
    %v4294 = vpop.f32.mrf.mxu0
    %v4295 = vadd.f32 %v4103, %v4294
    %v4296 = vpop.f32.mrf.mxu0
    %v4297 = vadd.f32 %v4105, %v4296
    %4298 = vdwg.mxu0
    %4299 = vmatprep.subr.mxu0 0.0
    %4300 = vmatpush1.msra.mxu0 0.0
    %4301 = vmatprep.subr.mxu0 0.0
    %4302 = vmatpush1.msra.mxu0 0.0
    %4303 = vmatprep.subr.mxu0 0.0
    %4304 = vmatpush1.msra.mxu0 0.0
    %4305 = vmatprep.subr.mxu0 0.0
    %4306 = vmatpush1.msra.mxu0 0.0
    %v4307 = vand.u32 %v244, 4294901760
    %v4308 = vsub.f32 %v244, %v4307
    %4309 = vmatprep.subr.mxu0 %v4308
    %v4310 = vand.u32 %v243, 4294901760
    %v4311 = vsub.f32 %v243, %v4310
    %4312 = vmatpush1.msra.mxu0 %v4311
    %v4313 = vand.u32 %v229, 4294901760
    %v4314 = vsub.f32 %v229, %v4313
    %4315 = vmatprep.subr.mxu0 %v4314
    %v4316 = vand.u32 %v228, 4294901760
    %v4317 = vsub.f32 %v228, %v4316
    %4318 = vmatpush1.msra.mxu0 %v4317
    %v4319 = vand.u32 %v214, 4294901760
    %v4320 = vsub.f32 %v214, %v4319
    %4321 = vmatprep.subr.mxu0 %v4320
    %v4322 = vand.u32 %v213, 4294901760
    %v4323 = vsub.f32 %v213, %v4322
    %4324 = vmatpush1.msra.mxu0 %v4323
    %v4325 = vand.u32 %v199, 4294901760
    %v4326 = vsub.f32 %v199, %v4325
    %4327 = vmatprep.subr.mxu0 %v4326
    %v4328 = vand.u32 %v198, 4294901760
    %v4329 = vsub.f32 %v198, %v4328
    %4330 = vmatpush1.msra.mxu0 %v4329
    %v4331 = vand.u32 %v184, 4294901760
    %v4332 = vsub.f32 %v184, %v4331
    %4333 = vmatprep.subr.mxu0 %v4332
    %v4334 = vand.u32 %v183, 4294901760
    %v4335 = vsub.f32 %v183, %v4334
    %4336 = vmatpush1.msra.mxu0 %v4335
    %v4337 = vand.u32 %v169, 4294901760
    %v4338 = vsub.f32 %v169, %v4337
    %4339 = vmatprep.subr.mxu0 %v4338
    %v4340 = vand.u32 %v168, 4294901760
    %v4341 = vsub.f32 %v168, %v4340
    %4342 = vmatpush1.msra.mxu0 %v4341
    %v4343 = vand.u32 %v154, 4294901760
    %v4344 = vsub.f32 %v154, %v4343
    %4345 = vmatprep.subr.mxu0 %v4344
    %v4346 = vand.u32 %v153, 4294901760
    %v4347 = vsub.f32 %v153, %v4346
    %4348 = vmatpush1.msra.mxu0 %v4347
    %v4349 = vand.u32 %v139, 4294901760
    %v4350 = vsub.f32 %v139, %v4349
    %4351 = vmatprep.subr.mxu0 %v4350
    %v4352 = vand.u32 %v138, 4294901760
    %v4353 = vsub.f32 %v138, %v4352
    %4354 = vmatpush1.msra.mxu0 %v4353
    %v4355 = vand.u32 %v124, 4294901760
    %v4356 = vsub.f32 %v124, %v4355
    %4357 = vmatprep.subr.mxu0 %v4356
    %v4358 = vand.u32 %v123, 4294901760
    %v4359 = vsub.f32 %v123, %v4358
    %4360 = vmatpush1.msra.mxu0 %v4359
    %v4361 = vand.u32 %v109, 4294901760
    %v4362 = vsub.f32 %v109, %v4361
    %4363 = vmatprep.subr.mxu0 %v4362
    %v4364 = vand.u32 %v108, 4294901760
    %v4365 = vsub.f32 %v108, %v4364
    %4366 = vmatpush1.msra.mxu0 %v4365
    %v4367 = vand.u32 %v94, 4294901760
    %v4368 = vsub.f32 %v94, %v4367
    %4369 = vmatprep.subr.mxu0 %v4368
    %v4370 = vand.u32 %v93, 4294901760
    %v4371 = vsub.f32 %v93, %v4370
    %4372 = vmatpush1.msra.mxu0 %v4371
    %v4373 = vand.u32 %v79, 4294901760
    %v4374 = vsub.f32 %v79, %v4373
    %4375 = vmatprep.subr.mxu0 %v4374
    %v4376 = vand.u32 %v78, 4294901760
    %v4377 = vsub.f32 %v78, %v4376
    %4378 = vmatpush1.msra.mxu0 %v4377
    %4379 = vmatprep.subr.mxu0 0.0
    %4380 = vmatpush2.msra.mxu0 0.0
    %4381 = vmatprep.subr.mxu0 0.0
    %4382 = vmatpush2.msra.mxu0 0.0
    %4383 = vmatprep.subr.mxu0 0.0
    %4384 = vmatpush2.msra.mxu0 0.0
    %4385 = vmatprep.subr.mxu0 0.0
    %4386 = vmatpush2.msra.mxu0 0.0
    %4387 = vmatprep.subr.mxu0 0.0
    %4388 = vmatpush2.msra.mxu0 0.0
    %4389 = vmatprep.subr.mxu0 0.0
    %4390 = vmatpush2.msra.mxu0 0.0
    %4391 = vmatprep.subr.mxu0 0.0
    %4392 = vmatpush2.msra.mxu0 0.0
    %4393 = vmatprep.subr.mxu0 0.0
    %4394 = vmatpush2.msra.mxu0 0.0
    %4395 = vmatprep.subr.mxu0 0.0
    %4396 = vmatpush2.msra.mxu0 0.0
    %4397 = vmatprep.subr.mxu0 0.0
    %4398 = vmatpush2.msra.mxu0 0.0
    %4399 = vmatprep.subr.mxu0 0.0
    %4400 = vmatpush2.msra.mxu0 0.0
    %4401 = vmatprep.subr.mxu0 0.0
    %4402 = vmatpush2.msra.mxu0 0.0
    %4403 = vmatprep.subr.mxu0 0.0
    %4404 = vmatpush2.msra.mxu0 0.0
    %4405 = vmatprep.subr.mxu0 0.0
    %4406 = vmatpush2.msra.mxu0 0.0
    %4407 = vmatprep.subr.mxu0 0.0
    %4408 = vmatpush2.msra.mxu0 0.0
    %4409 = vmatprep.subr.mxu0 0.0
    %4410 = vmatpush2.msra.mxu0 0.0
    %4411 = vmatprep.mubr.f32.mxu0 0.0
    %v4412 = vand.u32 %v250, 4294901760
    %v4413 = vsub.f32 %v250, %v4412
    %4414 = vmatmul.mubr.f32.gmra.mxu0 %v4413
    %v4415 = vpop.f32.mrf.mxu0
    %v4416 = vadd.f32 %v4295, %v4415
    %v4417 = vpop.f32.mrf.mxu0
    %v4418 = vadd.f32 %v4297, %v4417
    %4419 = vdwg.mxu0
    %4420 = vmatprep.subr.mxu0 0.0
    %4421 = vmatpush1.msra.mxu0 0.0
    %4422 = vmatprep.subr.mxu0 0.0
    %4423 = vmatpush1.msra.mxu0 0.0
    %4424 = vmatprep.subr.mxu0 0.0
    %4425 = vmatpush1.msra.mxu0 0.0
    %4426 = vmatprep.subr.mxu0 0.0
    %4427 = vmatpush1.msra.mxu0 0.0
    %v4428 = vand.u32 %v244, 4294901760
    %4429 = vmatprep.subr.mxu0 %v4428
    %v4430 = vand.u32 %v243, 4294901760
    %4431 = vmatpush1.msra.mxu0 %v4430
    %v4432 = vand.u32 %v229, 4294901760
    %4433 = vmatprep.subr.mxu0 %v4432
    %v4434 = vand.u32 %v228, 4294901760
    %4435 = vmatpush1.msra.mxu0 %v4434
    %v4436 = vand.u32 %v214, 4294901760
    %4437 = vmatprep.subr.mxu0 %v4436
    %v4438 = vand.u32 %v213, 4294901760
    %4439 = vmatpush1.msra.mxu0 %v4438
    %v4440 = vand.u32 %v199, 4294901760
    %4441 = vmatprep.subr.mxu0 %v4440
    %v4442 = vand.u32 %v198, 4294901760
    %4443 = vmatpush1.msra.mxu0 %v4442
    %v4444 = vand.u32 %v184, 4294901760
    %4445 = vmatprep.subr.mxu0 %v4444
    %v4446 = vand.u32 %v183, 4294901760
    %4447 = vmatpush1.msra.mxu0 %v4446
    %v4448 = vand.u32 %v169, 4294901760
    %4449 = vmatprep.subr.mxu0 %v4448
    %v4450 = vand.u32 %v168, 4294901760
    %4451 = vmatpush1.msra.mxu0 %v4450
    %v4452 = vand.u32 %v154, 4294901760
    %4453 = vmatprep.subr.mxu0 %v4452
    %v4454 = vand.u32 %v153, 4294901760
    %4455 = vmatpush1.msra.mxu0 %v4454
    %v4456 = vand.u32 %v139, 4294901760
    %4457 = vmatprep.subr.mxu0 %v4456
    %v4458 = vand.u32 %v138, 4294901760
    %4459 = vmatpush1.msra.mxu0 %v4458
    %v4460 = vand.u32 %v124, 4294901760
    %4461 = vmatprep.subr.mxu0 %v4460
    %v4462 = vand.u32 %v123, 4294901760
    %4463 = vmatpush1.msra.mxu0 %v4462
    %v4464 = vand.u32 %v109, 4294901760
    %4465 = vmatprep.subr.mxu0 %v4464
    %v4466 = vand.u32 %v108, 4294901760
    %4467 = vmatpush1.msra.mxu0 %v4466
    %v4468 = vand.u32 %v94, 4294901760
    %4469 = vmatprep.subr.mxu0 %v4468
    %v4470 = vand.u32 %v93, 4294901760
    %4471 = vmatpush1.msra.mxu0 %v4470
    %v4472 = vand.u32 %v79, 4294901760
    %4473 = vmatprep.subr.mxu0 %v4472
    %v4474 = vand.u32 %v78, 4294901760
    %4475 = vmatpush1.msra.mxu0 %v4474
    %4476 = vmatprep.subr.mxu0 0.0
    %4477 = vmatpush2.msra.mxu0 0.0
    %4478 = vmatprep.subr.mxu0 0.0
    %4479 = vmatpush2.msra.mxu0 0.0
    %4480 = vmatprep.subr.mxu0 0.0
    %4481 = vmatpush2.msra.mxu0 0.0
    %4482 = vmatprep.subr.mxu0 0.0
    %4483 = vmatpush2.msra.mxu0 0.0
    %4484 = vmatprep.subr.mxu0 0.0
    %4485 = vmatpush2.msra.mxu0 0.0
    %4486 = vmatprep.subr.mxu0 0.0
    %4487 = vmatpush2.msra.mxu0 0.0
    %4488 = vmatprep.subr.mxu0 0.0
    %4489 = vmatpush2.msra.mxu0 0.0
    %4490 = vmatprep.subr.mxu0 0.0
    %4491 = vmatpush2.msra.mxu0 0.0
    %4492 = vmatprep.subr.mxu0 0.0
    %4493 = vmatpush2.msra.mxu0 0.0
    %4494 = vmatprep.subr.mxu0 0.0
    %4495 = vmatpush2.msra.mxu0 0.0
    %4496 = vmatprep.subr.mxu0 0.0
    %4497 = vmatpush2.msra.mxu0 0.0
    %4498 = vmatprep.subr.mxu0 0.0
    %4499 = vmatpush2.msra.mxu0 0.0
    %4500 = vmatprep.subr.mxu0 0.0
    %4501 = vmatpush2.msra.mxu0 0.0
    %4502 = vmatprep.subr.mxu0 0.0
    %4503 = vmatpush2.msra.mxu0 0.0
    %4504 = vmatprep.subr.mxu0 0.0
    %4505 = vmatpush2.msra.mxu0 0.0
    %4506 = vmatprep.subr.mxu0 0.0
    %4507 = vmatpush2.msra.mxu0 0.0
    %4508 = vmatprep.mubr.f32.mxu0 0.0
    %v4509 = vand.u32 %v250, 4294901760
    %v4510 = vsub.f32 %v250, %v4509
    %v4511 = vand.u32 %v4510, 4294901760
    %4512 = vmatmul.mubr.f32.gmra.mxu0 %v4511
    %v4513 = vpop.f32.mrf.mxu0
    %v4514 = vadd.f32 %v4416, %v4513
    %v4515 = vpop.f32.mrf.mxu0
    %v4516 = vadd.f32 %v4418, %v4515
    %4517 = vdwg.mxu0
    %4518 = vmatprep.subr.mxu0 0.0
    %4519 = vmatpush1.msra.mxu0 0.0
    %4520 = vmatprep.subr.mxu0 0.0
    %4521 = vmatpush1.msra.mxu0 0.0
    %4522 = vmatprep.subr.mxu0 0.0
    %4523 = vmatpush1.msra.mxu0 0.0
    %4524 = vmatprep.subr.mxu0 0.0
    %4525 = vmatpush1.msra.mxu0 0.0
    %v4526 = vand.u32 %v244, 4294901760
    %v4527 = vsub.f32 %v244, %v4526
    %v4528 = vand.u32 %v4527, 4294901760
    %4529 = vmatprep.subr.mxu0 %v4528
    %v4530 = vand.u32 %v243, 4294901760
    %v4531 = vsub.f32 %v243, %v4530
    %v4532 = vand.u32 %v4531, 4294901760
    %4533 = vmatpush1.msra.mxu0 %v4532
    %v4534 = vand.u32 %v229, 4294901760
    %v4535 = vsub.f32 %v229, %v4534
    %v4536 = vand.u32 %v4535, 4294901760
    %4537 = vmatprep.subr.mxu0 %v4536
    %v4538 = vand.u32 %v228, 4294901760
    %v4539 = vsub.f32 %v228, %v4538
    %v4540 = vand.u32 %v4539, 4294901760
    %4541 = vmatpush1.msra.mxu0 %v4540
    %v4542 = vand.u32 %v214, 4294901760
    %v4543 = vsub.f32 %v214, %v4542
    %v4544 = vand.u32 %v4543, 4294901760
    %4545 = vmatprep.subr.mxu0 %v4544
    %v4546 = vand.u32 %v213, 4294901760
    %v4547 = vsub.f32 %v213, %v4546
    %v4548 = vand.u32 %v4547, 4294901760
    %4549 = vmatpush1.msra.mxu0 %v4548
    %v4550 = vand.u32 %v199, 4294901760
    %v4551 = vsub.f32 %v199, %v4550
    %v4552 = vand.u32 %v4551, 4294901760
    %4553 = vmatprep.subr.mxu0 %v4552
    %v4554 = vand.u32 %v198, 4294901760
    %v4555 = vsub.f32 %v198, %v4554
    %v4556 = vand.u32 %v4555, 4294901760
    %4557 = vmatpush1.msra.mxu0 %v4556
    %v4558 = vand.u32 %v184, 4294901760
    %v4559 = vsub.f32 %v184, %v4558
    %v4560 = vand.u32 %v4559, 4294901760
    %4561 = vmatprep.subr.mxu0 %v4560
    %v4562 = vand.u32 %v183, 4294901760
    %v4563 = vsub.f32 %v183, %v4562
    %v4564 = vand.u32 %v4563, 4294901760
    %4565 = vmatpush1.msra.mxu0 %v4564
    %v4566 = vand.u32 %v169, 4294901760
    %v4567 = vsub.f32 %v169, %v4566
    %v4568 = vand.u32 %v4567, 4294901760
    %4569 = vmatprep.subr.mxu0 %v4568
    %v4570 = vand.u32 %v168, 4294901760
    %v4571 = vsub.f32 %v168, %v4570
    %v4572 = vand.u32 %v4571, 4294901760
    %4573 = vmatpush1.msra.mxu0 %v4572
    %v4574 = vand.u32 %v154, 4294901760
    %v4575 = vsub.f32 %v154, %v4574
    %v4576 = vand.u32 %v4575, 4294901760
    %4577 = vmatprep.subr.mxu0 %v4576
    %v4578 = vand.u32 %v153, 4294901760
    %v4579 = vsub.f32 %v153, %v4578
    %v4580 = vand.u32 %v4579, 4294901760
    %4581 = vmatpush1.msra.mxu0 %v4580
    %v4582 = vand.u32 %v139, 4294901760
    %v4583 = vsub.f32 %v139, %v4582
    %v4584 = vand.u32 %v4583, 4294901760
    %4585 = vmatprep.subr.mxu0 %v4584
    %v4586 = vand.u32 %v138, 4294901760
    %v4587 = vsub.f32 %v138, %v4586
    %v4588 = vand.u32 %v4587, 4294901760
    %4589 = vmatpush1.msra.mxu0 %v4588
    %v4590 = vand.u32 %v124, 4294901760
    %v4591 = vsub.f32 %v124, %v4590
    %v4592 = vand.u32 %v4591, 4294901760
    %4593 = vmatprep.subr.mxu0 %v4592
    %v4594 = vand.u32 %v123, 4294901760
    %v4595 = vsub.f32 %v123, %v4594
    %v4596 = vand.u32 %v4595, 4294901760
    %4597 = vmatpush1.msra.mxu0 %v4596
    %v4598 = vand.u32 %v109, 4294901760
    %v4599 = vsub.f32 %v109, %v4598
    %v4600 = vand.u32 %v4599, 4294901760
    %4601 = vmatprep.subr.mxu0 %v4600
    %v4602 = vand.u32 %v108, 4294901760
    %v4603 = vsub.f32 %v108, %v4602
    %v4604 = vand.u32 %v4603, 4294901760
    %4605 = vmatpush1.msra.mxu0 %v4604
    %v4606 = vand.u32 %v94, 4294901760
    %v4607 = vsub.f32 %v94, %v4606
    %v4608 = vand.u32 %v4607, 4294901760
    %4609 = vmatprep.subr.mxu0 %v4608
    %v4610 = vand.u32 %v93, 4294901760
    %v4611 = vsub.f32 %v93, %v4610
    %v4612 = vand.u32 %v4611, 4294901760
    %4613 = vmatpush1.msra.mxu0 %v4612
    %v4614 = vand.u32 %v79, 4294901760
    %v4615 = vsub.f32 %v79, %v4614
    %v4616 = vand.u32 %v4615, 4294901760
    %4617 = vmatprep.subr.mxu0 %v4616
    %v4618 = vand.u32 %v78, 4294901760
    %v4619 = vsub.f32 %v78, %v4618
    %v4620 = vand.u32 %v4619, 4294901760
    %4621 = vmatpush1.msra.mxu0 %v4620
    %4622 = vmatprep.subr.mxu0 0.0
    %4623 = vmatpush2.msra.mxu0 0.0
    %4624 = vmatprep.subr.mxu0 0.0
    %4625 = vmatpush2.msra.mxu0 0.0
    %4626 = vmatprep.subr.mxu0 0.0
    %4627 = vmatpush2.msra.mxu0 0.0
    %4628 = vmatprep.subr.mxu0 0.0
    %4629 = vmatpush2.msra.mxu0 0.0
    %4630 = vmatprep.subr.mxu0 0.0
    %4631 = vmatpush2.msra.mxu0 0.0
    %4632 = vmatprep.subr.mxu0 0.0
    %4633 = vmatpush2.msra.mxu0 0.0
    %4634 = vmatprep.subr.mxu0 0.0
    %4635 = vmatpush2.msra.mxu0 0.0
    %4636 = vmatprep.subr.mxu0 0.0
    %4637 = vmatpush2.msra.mxu0 0.0
    %4638 = vmatprep.subr.mxu0 0.0
    %4639 = vmatpush2.msra.mxu0 0.0
    %4640 = vmatprep.subr.mxu0 0.0
    %4641 = vmatpush2.msra.mxu0 0.0
    %4642 = vmatprep.subr.mxu0 0.0
    %4643 = vmatpush2.msra.mxu0 0.0
    %4644 = vmatprep.subr.mxu0 0.0
    %4645 = vmatpush2.msra.mxu0 0.0
    %4646 = vmatprep.subr.mxu0 0.0
    %4647 = vmatpush2.msra.mxu0 0.0
    %4648 = vmatprep.subr.mxu0 0.0
    %4649 = vmatpush2.msra.mxu0 0.0
    %4650 = vmatprep.subr.mxu0 0.0
    %4651 = vmatpush2.msra.mxu0 0.0
    %4652 = vmatprep.subr.mxu0 0.0
    %4653 = vmatpush2.msra.mxu0 0.0
    %4654 = vmatprep.mubr.f32.mxu0 0.0
    %v4655 = vand.u32 %v250, 4294901760
    %4656 = vmatmul.mubr.f32.gmra.mxu0 %v4655
    %v4657 = vpop.f32.mrf.mxu0
    %v4658 = vadd.f32 %v4514, %v4657
    %v4659 = vpop.f32.mrf.mxu0
    %v4660 = vadd.f32 %v4516, %v4659
    %4661 = vdwg.mxu0
    %4662 = vmatprep.subr.mxu0 0.0
    %4663 = vmatpush1.msra.mxu0 0.0
    %4664 = vmatprep.subr.mxu0 0.0
    %4665 = vmatpush1.msra.mxu0 0.0
    %4666 = vmatprep.subr.mxu0 0.0
    %4667 = vmatpush1.msra.mxu0 0.0
    %4668 = vmatprep.subr.mxu0 0.0
    %4669 = vmatpush1.msra.mxu0 0.0
    %v4670 = vand.u32 %v244, 4294901760
    %4671 = vmatprep.subr.mxu0 %v4670
    %v4672 = vand.u32 %v243, 4294901760
    %4673 = vmatpush1.msra.mxu0 %v4672
    %v4674 = vand.u32 %v229, 4294901760
    %4675 = vmatprep.subr.mxu0 %v4674
    %v4676 = vand.u32 %v228, 4294901760
    %4677 = vmatpush1.msra.mxu0 %v4676
    %v4678 = vand.u32 %v214, 4294901760
    %4679 = vmatprep.subr.mxu0 %v4678
    %v4680 = vand.u32 %v213, 4294901760
    %4681 = vmatpush1.msra.mxu0 %v4680
    %v4682 = vand.u32 %v199, 4294901760
    %4683 = vmatprep.subr.mxu0 %v4682
    %v4684 = vand.u32 %v198, 4294901760
    %4685 = vmatpush1.msra.mxu0 %v4684
    %v4686 = vand.u32 %v184, 4294901760
    %4687 = vmatprep.subr.mxu0 %v4686
    %v4688 = vand.u32 %v183, 4294901760
    %4689 = vmatpush1.msra.mxu0 %v4688
    %v4690 = vand.u32 %v169, 4294901760
    %4691 = vmatprep.subr.mxu0 %v4690
    %v4692 = vand.u32 %v168, 4294901760
    %4693 = vmatpush1.msra.mxu0 %v4692
    %v4694 = vand.u32 %v154, 4294901760
    %4695 = vmatprep.subr.mxu0 %v4694
    %v4696 = vand.u32 %v153, 4294901760
    %4697 = vmatpush1.msra.mxu0 %v4696
    %v4698 = vand.u32 %v139, 4294901760
    %4699 = vmatprep.subr.mxu0 %v4698
    %v4700 = vand.u32 %v138, 4294901760
    %4701 = vmatpush1.msra.mxu0 %v4700
    %v4702 = vand.u32 %v124, 4294901760
    %4703 = vmatprep.subr.mxu0 %v4702
    %v4704 = vand.u32 %v123, 4294901760
    %4705 = vmatpush1.msra.mxu0 %v4704
    %v4706 = vand.u32 %v109, 4294901760
    %4707 = vmatprep.subr.mxu0 %v4706
    %v4708 = vand.u32 %v108, 4294901760
    %4709 = vmatpush1.msra.mxu0 %v4708
    %v4710 = vand.u32 %v94, 4294901760
    %4711 = vmatprep.subr.mxu0 %v4710
    %v4712 = vand.u32 %v93, 4294901760
    %4713 = vmatpush1.msra.mxu0 %v4712
    %v4714 = vand.u32 %v79, 4294901760
    %4715 = vmatprep.subr.mxu0 %v4714
    %v4716 = vand.u32 %v78, 4294901760
    %4717 = vmatpush1.msra.mxu0 %v4716
    %4718 = vmatprep.subr.mxu0 0.0
    %4719 = vmatpush2.msra.mxu0 0.0
    %4720 = vmatprep.subr.mxu0 0.0
    %4721 = vmatpush2.msra.mxu0 0.0
    %4722 = vmatprep.subr.mxu0 0.0
    %4723 = vmatpush2.msra.mxu0 0.0
    %4724 = vmatprep.subr.mxu0 0.0
    %4725 = vmatpush2.msra.mxu0 0.0
    %4726 = vmatprep.subr.mxu0 0.0
    %4727 = vmatpush2.msra.mxu0 0.0
    %4728 = vmatprep.subr.mxu0 0.0
    %4729 = vmatpush2.msra.mxu0 0.0
    %4730 = vmatprep.subr.mxu0 0.0
    %4731 = vmatpush2.msra.mxu0 0.0
    %4732 = vmatprep.subr.mxu0 0.0
    %4733 = vmatpush2.msra.mxu0 0.0
    %4734 = vmatprep.subr.mxu0 0.0
    %4735 = vmatpush2.msra.mxu0 0.0
    %4736 = vmatprep.subr.mxu0 0.0
    %4737 = vmatpush2.msra.mxu0 0.0
    %4738 = vmatprep.subr.mxu0 0.0
    %4739 = vmatpush2.msra.mxu0 0.0
    %4740 = vmatprep.subr.mxu0 0.0
    %4741 = vmatpush2.msra.mxu0 0.0
    %4742 = vmatprep.subr.mxu0 0.0
    %4743 = vmatpush2.msra.mxu0 0.0
    %4744 = vmatprep.subr.mxu0 0.0
    %4745 = vmatpush2.msra.mxu0 0.0
    %4746 = vmatprep.subr.mxu0 0.0
    %4747 = vmatpush2.msra.mxu0 0.0
    %4748 = vmatprep.subr.mxu0 0.0
    %4749 = vmatpush2.msra.mxu0 0.0
    %4750 = vmatprep.mubr.f32.mxu0 0.0
    %v4751 = vand.u32 %v250, 4294901760
    %4752 = vmatmul.mubr.f32.gmra.mxu0 %v4751
    %v4753 = vpop.f32.mrf.mxu0
    %v4754 = vadd.f32 %v4658, %v4753
    %v4755 = vpop.f32.mrf.mxu0
    %v4756 = vadd.f32 %v4660, %v4755
    %4757 = vdwg.mxu0
    %4758 = vmatprep.subr.mxu0 0.0
    %4759 = vmatpush1.msra.mxu0 0.0
    %4760 = vmatprep.subr.mxu0 0.0
    %4761 = vmatpush1.msra.mxu0 0.0
    %4762 = vmatprep.subr.mxu0 0.0
    %4763 = vmatpush1.msra.mxu0 0.0
    %4764 = vmatprep.subr.mxu0 0.0
    %4765 = vmatpush1.msra.mxu0 0.0
    %v4766 = vand.u32 %v246, 4294901760
    %4767 = vmatprep.subr.mxu0 %v4766
    %v4768 = vand.u32 %v245, 4294901760
    %4769 = vmatpush1.msra.mxu0 %v4768
    %v4770 = vand.u32 %v231, 4294901760
    %4771 = vmatprep.subr.mxu0 %v4770
    %v4772 = vand.u32 %v230, 4294901760
    %4773 = vmatpush1.msra.mxu0 %v4772
    %v4774 = vand.u32 %v216, 4294901760
    %4775 = vmatprep.subr.mxu0 %v4774
    %v4776 = vand.u32 %v215, 4294901760
    %4777 = vmatpush1.msra.mxu0 %v4776
    %v4778 = vand.u32 %v201, 4294901760
    %4779 = vmatprep.subr.mxu0 %v4778
    %v4780 = vand.u32 %v200, 4294901760
    %4781 = vmatpush1.msra.mxu0 %v4780
    %v4782 = vand.u32 %v186, 4294901760
    %4783 = vmatprep.subr.mxu0 %v4782
    %v4784 = vand.u32 %v185, 4294901760
    %4785 = vmatpush1.msra.mxu0 %v4784
    %v4786 = vand.u32 %v171, 4294901760
    %4787 = vmatprep.subr.mxu0 %v4786
    %v4788 = vand.u32 %v170, 4294901760
    %4789 = vmatpush1.msra.mxu0 %v4788
    %v4790 = vand.u32 %v156, 4294901760
    %4791 = vmatprep.subr.mxu0 %v4790
    %v4792 = vand.u32 %v155, 4294901760
    %4793 = vmatpush1.msra.mxu0 %v4792
    %v4794 = vand.u32 %v141, 4294901760
    %4795 = vmatprep.subr.mxu0 %v4794
    %v4796 = vand.u32 %v140, 4294901760
    %4797 = vmatpush1.msra.mxu0 %v4796
    %v4798 = vand.u32 %v126, 4294901760
    %4799 = vmatprep.subr.mxu0 %v4798
    %v4800 = vand.u32 %v125, 4294901760
    %4801 = vmatpush1.msra.mxu0 %v4800
    %v4802 = vand.u32 %v111, 4294901760
    %4803 = vmatprep.subr.mxu0 %v4802
    %v4804 = vand.u32 %v110, 4294901760
    %4805 = vmatpush1.msra.mxu0 %v4804
    %v4806 = vand.u32 %v96, 4294901760
    %4807 = vmatprep.subr.mxu0 %v4806
    %v4808 = vand.u32 %v95, 4294901760
    %4809 = vmatpush1.msra.mxu0 %v4808
    %v4810 = vand.u32 %v81, 4294901760
    %4811 = vmatprep.subr.mxu0 %v4810
    %v4812 = vand.u32 %v80, 4294901760
    %4813 = vmatpush1.msra.mxu0 %v4812
    %4814 = vmatprep.subr.mxu0 0.0
    %4815 = vmatpush2.msra.mxu0 0.0
    %4816 = vmatprep.subr.mxu0 0.0
    %4817 = vmatpush2.msra.mxu0 0.0
    %4818 = vmatprep.subr.mxu0 0.0
    %4819 = vmatpush2.msra.mxu0 0.0
    %4820 = vmatprep.subr.mxu0 0.0
    %4821 = vmatpush2.msra.mxu0 0.0
    %4822 = vmatprep.subr.mxu0 0.0
    %4823 = vmatpush2.msra.mxu0 0.0
    %4824 = vmatprep.subr.mxu0 0.0
    %4825 = vmatpush2.msra.mxu0 0.0
    %4826 = vmatprep.subr.mxu0 0.0
    %4827 = vmatpush2.msra.mxu0 0.0
    %4828 = vmatprep.subr.mxu0 0.0
    %4829 = vmatpush2.msra.mxu0 0.0
    %4830 = vmatprep.subr.mxu0 0.0
    %4831 = vmatpush2.msra.mxu0 0.0
    %4832 = vmatprep.subr.mxu0 0.0
    %4833 = vmatpush2.msra.mxu0 0.0
    %4834 = vmatprep.subr.mxu0 0.0
    %4835 = vmatpush2.msra.mxu0 0.0
    %4836 = vmatprep.subr.mxu0 0.0
    %4837 = vmatpush2.msra.mxu0 0.0
    %4838 = vmatprep.subr.mxu0 0.0
    %4839 = vmatpush2.msra.mxu0 0.0
    %4840 = vmatprep.subr.mxu0 0.0
    %4841 = vmatpush2.msra.mxu0 0.0
    %4842 = vmatprep.subr.mxu0 0.0
    %4843 = vmatpush2.msra.mxu0 0.0
    %4844 = vmatprep.subr.mxu0 0.0
    %4845 = vmatpush2.msra.mxu0 0.0
    %4846 = vmatprep.mubr.f32.mxu0 0.0
    %v4847 = vand.u32 %v250, 4294901760
    %v4848 = vsub.f32 %v250, %v4847
    %v4849 = vand.u32 %v4848, 4294901760
    %v4850 = vsub.f32 %v4848, %v4849
    %v4851 = vand.u32 %v4850, 4294901760
    %4852 = vmatmul.mubr.f32.gmra.mxu0 %v4851
    %v4853 = vpop.f32.mrf.mxu0
    %v4854 = vadd.f32 0.0, %v4853
    %v4855 = vpop.f32.mrf.mxu0
    %v4856 = vadd.f32 0.0, %v4855
    %4857 = vdwg.mxu0
    %4858 = vmatprep.subr.mxu0 0.0
    %4859 = vmatpush1.msra.mxu0 0.0
    %4860 = vmatprep.subr.mxu0 0.0
    %4861 = vmatpush1.msra.mxu0 0.0
    %4862 = vmatprep.subr.mxu0 0.0
    %4863 = vmatpush1.msra.mxu0 0.0
    %4864 = vmatprep.subr.mxu0 0.0
    %4865 = vmatpush1.msra.mxu0 0.0
    %v4866 = vand.u32 %v246, 4294901760
    %v4867 = vsub.f32 %v246, %v4866
    %v4868 = vand.u32 %v4867, 4294901760
    %v4869 = vsub.f32 %v4867, %v4868
    %v4870 = vand.u32 %v4869, 4294901760
    %4871 = vmatprep.subr.mxu0 %v4870
    %v4872 = vand.u32 %v245, 4294901760
    %v4873 = vsub.f32 %v245, %v4872
    %v4874 = vand.u32 %v4873, 4294901760
    %v4875 = vsub.f32 %v4873, %v4874
    %v4876 = vand.u32 %v4875, 4294901760
    %4877 = vmatpush1.msra.mxu0 %v4876
    %v4878 = vand.u32 %v231, 4294901760
    %v4879 = vsub.f32 %v231, %v4878
    %v4880 = vand.u32 %v4879, 4294901760
    %v4881 = vsub.f32 %v4879, %v4880
    %v4882 = vand.u32 %v4881, 4294901760
    %4883 = vmatprep.subr.mxu0 %v4882
    %v4884 = vand.u32 %v230, 4294901760
    %v4885 = vsub.f32 %v230, %v4884
    %v4886 = vand.u32 %v4885, 4294901760
    %v4887 = vsub.f32 %v4885, %v4886
    %v4888 = vand.u32 %v4887, 4294901760
    %4889 = vmatpush1.msra.mxu0 %v4888
    %v4890 = vand.u32 %v216, 4294901760
    %v4891 = vsub.f32 %v216, %v4890
    %v4892 = vand.u32 %v4891, 4294901760
    %v4893 = vsub.f32 %v4891, %v4892
    %v4894 = vand.u32 %v4893, 4294901760
    %4895 = vmatprep.subr.mxu0 %v4894
    %v4896 = vand.u32 %v215, 4294901760
    %v4897 = vsub.f32 %v215, %v4896
    %v4898 = vand.u32 %v4897, 4294901760
    %v4899 = vsub.f32 %v4897, %v4898
    %v4900 = vand.u32 %v4899, 4294901760
    %4901 = vmatpush1.msra.mxu0 %v4900
    %v4902 = vand.u32 %v201, 4294901760
    %v4903 = vsub.f32 %v201, %v4902
    %v4904 = vand.u32 %v4903, 4294901760
    %v4905 = vsub.f32 %v4903, %v4904
    %v4906 = vand.u32 %v4905, 4294901760
    %4907 = vmatprep.subr.mxu0 %v4906
    %v4908 = vand.u32 %v200, 4294901760
    %v4909 = vsub.f32 %v200, %v4908
    %v4910 = vand.u32 %v4909, 4294901760
    %v4911 = vsub.f32 %v4909, %v4910
    %v4912 = vand.u32 %v4911, 4294901760
    %4913 = vmatpush1.msra.mxu0 %v4912
    %v4914 = vand.u32 %v186, 4294901760
    %v4915 = vsub.f32 %v186, %v4914
    %v4916 = vand.u32 %v4915, 4294901760
    %v4917 = vsub.f32 %v4915, %v4916
    %v4918 = vand.u32 %v4917, 4294901760
    %4919 = vmatprep.subr.mxu0 %v4918
    %v4920 = vand.u32 %v185, 4294901760
    %v4921 = vsub.f32 %v185, %v4920
    %v4922 = vand.u32 %v4921, 4294901760
    %v4923 = vsub.f32 %v4921, %v4922
    %v4924 = vand.u32 %v4923, 4294901760
    %4925 = vmatpush1.msra.mxu0 %v4924
    %v4926 = vand.u32 %v171, 4294901760
    %v4927 = vsub.f32 %v171, %v4926
    %v4928 = vand.u32 %v4927, 4294901760
    %v4929 = vsub.f32 %v4927, %v4928
    %v4930 = vand.u32 %v4929, 4294901760
    %4931 = vmatprep.subr.mxu0 %v4930
    %v4932 = vand.u32 %v170, 4294901760
    %v4933 = vsub.f32 %v170, %v4932
    %v4934 = vand.u32 %v4933, 4294901760
    %v4935 = vsub.f32 %v4933, %v4934
    %v4936 = vand.u32 %v4935, 4294901760
    %4937 = vmatpush1.msra.mxu0 %v4936
    %v4938 = vand.u32 %v156, 4294901760
    %v4939 = vsub.f32 %v156, %v4938
    %v4940 = vand.u32 %v4939, 4294901760
    %v4941 = vsub.f32 %v4939, %v4940
    %v4942 = vand.u32 %v4941, 4294901760
    %4943 = vmatprep.subr.mxu0 %v4942
    %v4944 = vand.u32 %v155, 4294901760
    %v4945 = vsub.f32 %v155, %v4944
    %v4946 = vand.u32 %v4945, 4294901760
    %v4947 = vsub.f32 %v4945, %v4946
    %v4948 = vand.u32 %v4947, 4294901760
    %4949 = vmatpush1.msra.mxu0 %v4948
    %v4950 = vand.u32 %v141, 4294901760
    %v4951 = vsub.f32 %v141, %v4950
    %v4952 = vand.u32 %v4951, 4294901760
    %v4953 = vsub.f32 %v4951, %v4952
    %v4954 = vand.u32 %v4953, 4294901760
    %4955 = vmatprep.subr.mxu0 %v4954
    %v4956 = vand.u32 %v140, 4294901760
    %v4957 = vsub.f32 %v140, %v4956
    %v4958 = vand.u32 %v4957, 4294901760
    %v4959 = vsub.f32 %v4957, %v4958
    %v4960 = vand.u32 %v4959, 4294901760
    %4961 = vmatpush1.msra.mxu0 %v4960
    %v4962 = vand.u32 %v126, 4294901760
    %v4963 = vsub.f32 %v126, %v4962
    %v4964 = vand.u32 %v4963, 4294901760
    %v4965 = vsub.f32 %v4963, %v4964
    %v4966 = vand.u32 %v4965, 4294901760
    %4967 = vmatprep.subr.mxu0 %v4966
    %v4968 = vand.u32 %v125, 4294901760
    %v4969 = vsub.f32 %v125, %v4968
    %v4970 = vand.u32 %v4969, 4294901760
    %v4971 = vsub.f32 %v4969, %v4970
    %v4972 = vand.u32 %v4971, 4294901760
    %4973 = vmatpush1.msra.mxu0 %v4972
    %v4974 = vand.u32 %v111, 4294901760
    %v4975 = vsub.f32 %v111, %v4974
    %v4976 = vand.u32 %v4975, 4294901760
    %v4977 = vsub.f32 %v4975, %v4976
    %v4978 = vand.u32 %v4977, 4294901760
    %4979 = vmatprep.subr.mxu0 %v4978
    %v4980 = vand.u32 %v110, 4294901760
    %v4981 = vsub.f32 %v110, %v4980
    %v4982 = vand.u32 %v4981, 4294901760
    %v4983 = vsub.f32 %v4981, %v4982
    %v4984 = vand.u32 %v4983, 4294901760
    %4985 = vmatpush1.msra.mxu0 %v4984
    %v4986 = vand.u32 %v96, 4294901760
    %v4987 = vsub.f32 %v96, %v4986
    %v4988 = vand.u32 %v4987, 4294901760
    %v4989 = vsub.f32 %v4987, %v4988
    %v4990 = vand.u32 %v4989, 4294901760
    %4991 = vmatprep.subr.mxu0 %v4990
    %v4992 = vand.u32 %v95, 4294901760
    %v4993 = vsub.f32 %v95, %v4992
    %v4994 = vand.u32 %v4993, 4294901760
    %v4995 = vsub.f32 %v4993, %v4994
    %v4996 = vand.u32 %v4995, 4294901760
    %4997 = vmatpush1.msra.mxu0 %v4996
    %v4998 = vand.u32 %v81, 4294901760
    %v4999 = vsub.f32 %v81, %v4998
    %v5000 = vand.u32 %v4999, 4294901760
    %v5001 = vsub.f32 %v4999, %v5000
    %v5002 = vand.u32 %v5001, 4294901760
    %5003 = vmatprep.subr.mxu0 %v5002
    %v5004 = vand.u32 %v80, 4294901760
    %v5005 = vsub.f32 %v80, %v5004
    %v5006 = vand.u32 %v5005, 4294901760
    %v5007 = vsub.f32 %v5005, %v5006
    %v5008 = vand.u32 %v5007, 4294901760
    %5009 = vmatpush1.msra.mxu0 %v5008
    %5010 = vmatprep.subr.mxu0 0.0
    %5011 = vmatpush2.msra.mxu0 0.0
    %5012 = vmatprep.subr.mxu0 0.0
    %5013 = vmatpush2.msra.mxu0 0.0
    %5014 = vmatprep.subr.mxu0 0.0
    %5015 = vmatpush2.msra.mxu0 0.0
    %5016 = vmatprep.subr.mxu0 0.0
    %5017 = vmatpush2.msra.mxu0 0.0
    %5018 = vmatprep.subr.mxu0 0.0
    %5019 = vmatpush2.msra.mxu0 0.0
    %5020 = vmatprep.subr.mxu0 0.0
    %5021 = vmatpush2.msra.mxu0 0.0
    %5022 = vmatprep.subr.mxu0 0.0
    %5023 = vmatpush2.msra.mxu0 0.0
    %5024 = vmatprep.subr.mxu0 0.0
    %5025 = vmatpush2.msra.mxu0 0.0
    %5026 = vmatprep.subr.mxu0 0.0
    %5027 = vmatpush2.msra.mxu0 0.0
    %5028 = vmatprep.subr.mxu0 0.0
    %5029 = vmatpush2.msra.mxu0 0.0
    %5030 = vmatprep.subr.mxu0 0.0
    %5031 = vmatpush2.msra.mxu0 0.0
    %5032 = vmatprep.subr.mxu0 0.0
    %5033 = vmatpush2.msra.mxu0 0.0
    %5034 = vmatprep.subr.mxu0 0.0
    %5035 = vmatpush2.msra.mxu0 0.0
    %5036 = vmatprep.subr.mxu0 0.0
    %5037 = vmatpush2.msra.mxu0 0.0
    %5038 = vmatprep.subr.mxu0 0.0
    %5039 = vmatpush2.msra.mxu0 0.0
    %5040 = vmatprep.subr.mxu0 0.0
    %5041 = vmatpush2.msra.mxu0 0.0
    %5042 = vmatprep.mubr.f32.mxu0 0.0
    %v5043 = vand.u32 %v250, 4294901760
    %5044 = vmatmul.mubr.f32.gmra.mxu0 %v5043
    %v5045 = vpop.f32.mrf.mxu0
    %v5046 = vadd.f32 %v4854, %v5045
    %v5047 = vpop.f32.mrf.mxu0
    %v5048 = vadd.f32 %v4856, %v5047
    %5049 = vdwg.mxu0
    %5050 = vmatprep.subr.mxu0 0.0
    %5051 = vmatpush1.msra.mxu0 0.0
    %5052 = vmatprep.subr.mxu0 0.0
    %5053 = vmatpush1.msra.mxu0 0.0
    %5054 = vmatprep.subr.mxu0 0.0
    %5055 = vmatpush1.msra.mxu0 0.0
    %5056 = vmatprep.subr.mxu0 0.0
    %5057 = vmatpush1.msra.mxu0 0.0
    %v5058 = vand.u32 %v246, 4294901760
    %v5059 = vsub.f32 %v246, %v5058
    %5060 = vmatprep.subr.mxu0 %v5059
    %v5061 = vand.u32 %v245, 4294901760
    %v5062 = vsub.f32 %v245, %v5061
    %5063 = vmatpush1.msra.mxu0 %v5062
    %v5064 = vand.u32 %v231, 4294901760
    %v5065 = vsub.f32 %v231, %v5064
    %5066 = vmatprep.subr.mxu0 %v5065
    %v5067 = vand.u32 %v230, 4294901760
    %v5068 = vsub.f32 %v230, %v5067
    %5069 = vmatpush1.msra.mxu0 %v5068
    %v5070 = vand.u32 %v216, 4294901760
    %v5071 = vsub.f32 %v216, %v5070
    %5072 = vmatprep.subr.mxu0 %v5071
    %v5073 = vand.u32 %v215, 4294901760
    %v5074 = vsub.f32 %v215, %v5073
    %5075 = vmatpush1.msra.mxu0 %v5074
    %v5076 = vand.u32 %v201, 4294901760
    %v5077 = vsub.f32 %v201, %v5076
    %5078 = vmatprep.subr.mxu0 %v5077
    %v5079 = vand.u32 %v200, 4294901760
    %v5080 = vsub.f32 %v200, %v5079
    %5081 = vmatpush1.msra.mxu0 %v5080
    %v5082 = vand.u32 %v186, 4294901760
    %v5083 = vsub.f32 %v186, %v5082
    %5084 = vmatprep.subr.mxu0 %v5083
    %v5085 = vand.u32 %v185, 4294901760
    %v5086 = vsub.f32 %v185, %v5085
    %5087 = vmatpush1.msra.mxu0 %v5086
    %v5088 = vand.u32 %v171, 4294901760
    %v5089 = vsub.f32 %v171, %v5088
    %5090 = vmatprep.subr.mxu0 %v5089
    %v5091 = vand.u32 %v170, 4294901760
    %v5092 = vsub.f32 %v170, %v5091
    %5093 = vmatpush1.msra.mxu0 %v5092
    %v5094 = vand.u32 %v156, 4294901760
    %v5095 = vsub.f32 %v156, %v5094
    %5096 = vmatprep.subr.mxu0 %v5095
    %v5097 = vand.u32 %v155, 4294901760
    %v5098 = vsub.f32 %v155, %v5097
    %5099 = vmatpush1.msra.mxu0 %v5098
    %v5100 = vand.u32 %v141, 4294901760
    %v5101 = vsub.f32 %v141, %v5100
    %5102 = vmatprep.subr.mxu0 %v5101
    %v5103 = vand.u32 %v140, 4294901760
    %v5104 = vsub.f32 %v140, %v5103
    %5105 = vmatpush1.msra.mxu0 %v5104
    %v5106 = vand.u32 %v126, 4294901760
    %v5107 = vsub.f32 %v126, %v5106
    %5108 = vmatprep.subr.mxu0 %v5107
    %v5109 = vand.u32 %v125, 4294901760
    %v5110 = vsub.f32 %v125, %v5109
    %5111 = vmatpush1.msra.mxu0 %v5110
    %v5112 = vand.u32 %v111, 4294901760
    %v5113 = vsub.f32 %v111, %v5112
    %5114 = vmatprep.subr.mxu0 %v5113
    %v5115 = vand.u32 %v110, 4294901760
    %v5116 = vsub.f32 %v110, %v5115
    %5117 = vmatpush1.msra.mxu0 %v5116
    %v5118 = vand.u32 %v96, 4294901760
    %v5119 = vsub.f32 %v96, %v5118
    %5120 = vmatprep.subr.mxu0 %v5119
    %v5121 = vand.u32 %v95, 4294901760
    %v5122 = vsub.f32 %v95, %v5121
    %5123 = vmatpush1.msra.mxu0 %v5122
    %v5124 = vand.u32 %v81, 4294901760
    %v5125 = vsub.f32 %v81, %v5124
    %5126 = vmatprep.subr.mxu0 %v5125
    %v5127 = vand.u32 %v80, 4294901760
    %v5128 = vsub.f32 %v80, %v5127
    %5129 = vmatpush1.msra.mxu0 %v5128
    %5130 = vmatprep.subr.mxu0 0.0
    %5131 = vmatpush2.msra.mxu0 0.0
    %5132 = vmatprep.subr.mxu0 0.0
    %5133 = vmatpush2.msra.mxu0 0.0
    %5134 = vmatprep.subr.mxu0 0.0
    %5135 = vmatpush2.msra.mxu0 0.0
    %5136 = vmatprep.subr.mxu0 0.0
    %5137 = vmatpush2.msra.mxu0 0.0
    %5138 = vmatprep.subr.mxu0 0.0
    %5139 = vmatpush2.msra.mxu0 0.0
    %5140 = vmatprep.subr.mxu0 0.0
    %5141 = vmatpush2.msra.mxu0 0.0
    %5142 = vmatprep.subr.mxu0 0.0
    %5143 = vmatpush2.msra.mxu0 0.0
    %5144 = vmatprep.subr.mxu0 0.0
    %5145 = vmatpush2.msra.mxu0 0.0
    %5146 = vmatprep.subr.mxu0 0.0
    %5147 = vmatpush2.msra.mxu0 0.0
    %5148 = vmatprep.subr.mxu0 0.0
    %5149 = vmatpush2.msra.mxu0 0.0
    %5150 = vmatprep.subr.mxu0 0.0
    %5151 = vmatpush2.msra.mxu0 0.0
    %5152 = vmatprep.subr.mxu0 0.0
    %5153 = vmatpush2.msra.mxu0 0.0
    %5154 = vmatprep.subr.mxu0 0.0
    %5155 = vmatpush2.msra.mxu0 0.0
    %5156 = vmatprep.subr.mxu0 0.0
    %5157 = vmatpush2.msra.mxu0 0.0
    %5158 = vmatprep.subr.mxu0 0.0
    %5159 = vmatpush2.msra.mxu0 0.0
    %5160 = vmatprep.subr.mxu0 0.0
    %5161 = vmatpush2.msra.mxu0 0.0
    %5162 = vmatprep.mubr.f32.mxu0 0.0
    %v5163 = vand.u32 %v250, 4294901760
    %v5164 = vsub.f32 %v250, %v5163
    %5165 = vmatmul.mubr.f32.gmra.mxu0 %v5164
    %v5166 = vpop.f32.mrf.mxu0
    %v5167 = vadd.f32 %v5046, %v5166
    %v5168 = vpop.f32.mrf.mxu0
    %v5169 = vadd.f32 %v5048, %v5168
    %5170 = vdwg.mxu0
    %5171 = vmatprep.subr.mxu0 0.0
    %5172 = vmatpush1.msra.mxu0 0.0
    %5173 = vmatprep.subr.mxu0 0.0
    %5174 = vmatpush1.msra.mxu0 0.0
    %5175 = vmatprep.subr.mxu0 0.0
    %5176 = vmatpush1.msra.mxu0 0.0
    %5177 = vmatprep.subr.mxu0 0.0
    %5178 = vmatpush1.msra.mxu0 0.0
    %v5179 = vand.u32 %v246, 4294901760
    %5180 = vmatprep.subr.mxu0 %v5179
    %v5181 = vand.u32 %v245, 4294901760
    %5182 = vmatpush1.msra.mxu0 %v5181
    %v5183 = vand.u32 %v231, 4294901760
    %5184 = vmatprep.subr.mxu0 %v5183
    %v5185 = vand.u32 %v230, 4294901760
    %5186 = vmatpush1.msra.mxu0 %v5185
    %v5187 = vand.u32 %v216, 4294901760
    %5188 = vmatprep.subr.mxu0 %v5187
    %v5189 = vand.u32 %v215, 4294901760
    %5190 = vmatpush1.msra.mxu0 %v5189
    %v5191 = vand.u32 %v201, 4294901760
    %5192 = vmatprep.subr.mxu0 %v5191
    %v5193 = vand.u32 %v200, 4294901760
    %5194 = vmatpush1.msra.mxu0 %v5193
    %v5195 = vand.u32 %v186, 4294901760
    %5196 = vmatprep.subr.mxu0 %v5195
    %v5197 = vand.u32 %v185, 4294901760
    %5198 = vmatpush1.msra.mxu0 %v5197
    %v5199 = vand.u32 %v171, 4294901760
    %5200 = vmatprep.subr.mxu0 %v5199
    %v5201 = vand.u32 %v170, 4294901760
    %5202 = vmatpush1.msra.mxu0 %v5201
    %v5203 = vand.u32 %v156, 4294901760
    %5204 = vmatprep.subr.mxu0 %v5203
    %v5205 = vand.u32 %v155, 4294901760
    %5206 = vmatpush1.msra.mxu0 %v5205
    %v5207 = vand.u32 %v141, 4294901760
    %5208 = vmatprep.subr.mxu0 %v5207
    %v5209 = vand.u32 %v140, 4294901760
    %5210 = vmatpush1.msra.mxu0 %v5209
    %v5211 = vand.u32 %v126, 4294901760
    %5212 = vmatprep.subr.mxu0 %v5211
    %v5213 = vand.u32 %v125, 4294901760
    %5214 = vmatpush1.msra.mxu0 %v5213
    %v5215 = vand.u32 %v111, 4294901760
    %5216 = vmatprep.subr.mxu0 %v5215
    %v5217 = vand.u32 %v110, 4294901760
    %5218 = vmatpush1.msra.mxu0 %v5217
    %v5219 = vand.u32 %v96, 4294901760
    %5220 = vmatprep.subr.mxu0 %v5219
    %v5221 = vand.u32 %v95, 4294901760
    %5222 = vmatpush1.msra.mxu0 %v5221
    %v5223 = vand.u32 %v81, 4294901760
    %5224 = vmatprep.subr.mxu0 %v5223
    %v5225 = vand.u32 %v80, 4294901760
    %5226 = vmatpush1.msra.mxu0 %v5225
    %5227 = vmatprep.subr.mxu0 0.0
    %5228 = vmatpush2.msra.mxu0 0.0
    %5229 = vmatprep.subr.mxu0 0.0
    %5230 = vmatpush2.msra.mxu0 0.0
    %5231 = vmatprep.subr.mxu0 0.0
    %5232 = vmatpush2.msra.mxu0 0.0
    %5233 = vmatprep.subr.mxu0 0.0
    %5234 = vmatpush2.msra.mxu0 0.0
    %5235 = vmatprep.subr.mxu0 0.0
    %5236 = vmatpush2.msra.mxu0 0.0
    %5237 = vmatprep.subr.mxu0 0.0
    %5238 = vmatpush2.msra.mxu0 0.0
    %5239 = vmatprep.subr.mxu0 0.0
    %5240 = vmatpush2.msra.mxu0 0.0
    %5241 = vmatprep.subr.mxu0 0.0
    %5242 = vmatpush2.msra.mxu0 0.0
    %5243 = vmatprep.subr.mxu0 0.0
    %5244 = vmatpush2.msra.mxu0 0.0
    %5245 = vmatprep.subr.mxu0 0.0
    %5246 = vmatpush2.msra.mxu0 0.0
    %5247 = vmatprep.subr.mxu0 0.0
    %5248 = vmatpush2.msra.mxu0 0.0
    %5249 = vmatprep.subr.mxu0 0.0
    %5250 = vmatpush2.msra.mxu0 0.0
    %5251 = vmatprep.subr.mxu0 0.0
    %5252 = vmatpush2.msra.mxu0 0.0
    %5253 = vmatprep.subr.mxu0 0.0
    %5254 = vmatpush2.msra.mxu0 0.0
    %5255 = vmatprep.subr.mxu0 0.0
    %5256 = vmatpush2.msra.mxu0 0.0
    %5257 = vmatprep.subr.mxu0 0.0
    %5258 = vmatpush2.msra.mxu0 0.0
    %5259 = vmatprep.mubr.f32.mxu0 0.0
    %v5260 = vand.u32 %v250, 4294901760
    %v5261 = vsub.f32 %v250, %v5260
    %v5262 = vand.u32 %v5261, 4294901760
    %5263 = vmatmul.mubr.f32.gmra.mxu0 %v5262
    %v5264 = vpop.f32.mrf.mxu0
    %v5265 = vadd.f32 %v5167, %v5264
    %v5266 = vpop.f32.mrf.mxu0
    %v5267 = vadd.f32 %v5169, %v5266
    %5268 = vdwg.mxu0
    %5269 = vmatprep.subr.mxu0 0.0
    %5270 = vmatpush1.msra.mxu0 0.0
    %5271 = vmatprep.subr.mxu0 0.0
    %5272 = vmatpush1.msra.mxu0 0.0
    %5273 = vmatprep.subr.mxu0 0.0
    %5274 = vmatpush1.msra.mxu0 0.0
    %5275 = vmatprep.subr.mxu0 0.0
    %5276 = vmatpush1.msra.mxu0 0.0
    %v5277 = vand.u32 %v246, 4294901760
    %v5278 = vsub.f32 %v246, %v5277
    %v5279 = vand.u32 %v5278, 4294901760
    %5280 = vmatprep.subr.mxu0 %v5279
    %v5281 = vand.u32 %v245, 4294901760
    %v5282 = vsub.f32 %v245, %v5281
    %v5283 = vand.u32 %v5282, 4294901760
    %5284 = vmatpush1.msra.mxu0 %v5283
    %v5285 = vand.u32 %v231, 4294901760
    %v5286 = vsub.f32 %v231, %v5285
    %v5287 = vand.u32 %v5286, 4294901760
    %5288 = vmatprep.subr.mxu0 %v5287
    %v5289 = vand.u32 %v230, 4294901760
    %v5290 = vsub.f32 %v230, %v5289
    %v5291 = vand.u32 %v5290, 4294901760
    %5292 = vmatpush1.msra.mxu0 %v5291
    %v5293 = vand.u32 %v216, 4294901760
    %v5294 = vsub.f32 %v216, %v5293
    %v5295 = vand.u32 %v5294, 4294901760
    %5296 = vmatprep.subr.mxu0 %v5295
    %v5297 = vand.u32 %v215, 4294901760
    %v5298 = vsub.f32 %v215, %v5297
    %v5299 = vand.u32 %v5298, 4294901760
    %5300 = vmatpush1.msra.mxu0 %v5299
    %v5301 = vand.u32 %v201, 4294901760
    %v5302 = vsub.f32 %v201, %v5301
    %v5303 = vand.u32 %v5302, 4294901760
    %5304 = vmatprep.subr.mxu0 %v5303
    %v5305 = vand.u32 %v200, 4294901760
    %v5306 = vsub.f32 %v200, %v5305
    %v5307 = vand.u32 %v5306, 4294901760
    %5308 = vmatpush1.msra.mxu0 %v5307
    %v5309 = vand.u32 %v186, 4294901760
    %v5310 = vsub.f32 %v186, %v5309
    %v5311 = vand.u32 %v5310, 4294901760
    %5312 = vmatprep.subr.mxu0 %v5311
    %v5313 = vand.u32 %v185, 4294901760
    %v5314 = vsub.f32 %v185, %v5313
    %v5315 = vand.u32 %v5314, 4294901760
    %5316 = vmatpush1.msra.mxu0 %v5315
    %v5317 = vand.u32 %v171, 4294901760
    %v5318 = vsub.f32 %v171, %v5317
    %v5319 = vand.u32 %v5318, 4294901760
    %5320 = vmatprep.subr.mxu0 %v5319
    %v5321 = vand.u32 %v170, 4294901760
    %v5322 = vsub.f32 %v170, %v5321
    %v5323 = vand.u32 %v5322, 4294901760
    %5324 = vmatpush1.msra.mxu0 %v5323
    %v5325 = vand.u32 %v156, 4294901760
    %v5326 = vsub.f32 %v156, %v5325
    %v5327 = vand.u32 %v5326, 4294901760
    %5328 = vmatprep.subr.mxu0 %v5327
    %v5329 = vand.u32 %v155, 4294901760
    %v5330 = vsub.f32 %v155, %v5329
    %v5331 = vand.u32 %v5330, 4294901760
    %5332 = vmatpush1.msra.mxu0 %v5331
    %v5333 = vand.u32 %v141, 4294901760
    %v5334 = vsub.f32 %v141, %v5333
    %v5335 = vand.u32 %v5334, 4294901760
    %5336 = vmatprep.subr.mxu0 %v5335
    %v5337 = vand.u32 %v140, 4294901760
    %v5338 = vsub.f32 %v140, %v5337
    %v5339 = vand.u32 %v5338, 4294901760
    %5340 = vmatpush1.msra.mxu0 %v5339
    %v5341 = vand.u32 %v126, 4294901760
    %v5342 = vsub.f32 %v126, %v5341
    %v5343 = vand.u32 %v5342, 4294901760
    %5344 = vmatprep.subr.mxu0 %v5343
    %v5345 = vand.u32 %v125, 4294901760
    %v5346 = vsub.f32 %v125, %v5345
    %v5347 = vand.u32 %v5346, 4294901760
    %5348 = vmatpush1.msra.mxu0 %v5347
    %v5349 = vand.u32 %v111, 4294901760
    %v5350 = vsub.f32 %v111, %v5349
    %v5351 = vand.u32 %v5350, 4294901760
    %5352 = vmatprep.subr.mxu0 %v5351
    %v5353 = vand.u32 %v110, 4294901760
    %v5354 = vsub.f32 %v110, %v5353
    %v5355 = vand.u32 %v5354, 4294901760
    %5356 = vmatpush1.msra.mxu0 %v5355
    %v5357 = vand.u32 %v96, 4294901760
    %v5358 = vsub.f32 %v96, %v5357
    %v5359 = vand.u32 %v5358, 4294901760
    %5360 = vmatprep.subr.mxu0 %v5359
    %v5361 = vand.u32 %v95, 4294901760
    %v5362 = vsub.f32 %v95, %v5361
    %v5363 = vand.u32 %v5362, 4294901760
    %5364 = vmatpush1.msra.mxu0 %v5363
    %v5365 = vand.u32 %v81, 4294901760
    %v5366 = vsub.f32 %v81, %v5365
    %v5367 = vand.u32 %v5366, 4294901760
    %5368 = vmatprep.subr.mxu0 %v5367
    %v5369 = vand.u32 %v80, 4294901760
    %v5370 = vsub.f32 %v80, %v5369
    %v5371 = vand.u32 %v5370, 4294901760
    %5372 = vmatpush1.msra.mxu0 %v5371
    %5373 = vmatprep.subr.mxu0 0.0
    %5374 = vmatpush2.msra.mxu0 0.0
    %5375 = vmatprep.subr.mxu0 0.0
    %5376 = vmatpush2.msra.mxu0 0.0
    %5377 = vmatprep.subr.mxu0 0.0
    %5378 = vmatpush2.msra.mxu0 0.0
    %5379 = vmatprep.subr.mxu0 0.0
    %5380 = vmatpush2.msra.mxu0 0.0
    %5381 = vmatprep.subr.mxu0 0.0
    %5382 = vmatpush2.msra.mxu0 0.0
    %5383 = vmatprep.subr.mxu0 0.0
    %5384 = vmatpush2.msra.mxu0 0.0
    %5385 = vmatprep.subr.mxu0 0.0
    %5386 = vmatpush2.msra.mxu0 0.0
    %5387 = vmatprep.subr.mxu0 0.0
    %5388 = vmatpush2.msra.mxu0 0.0
    %5389 = vmatprep.subr.mxu0 0.0
    %5390 = vmatpush2.msra.mxu0 0.0
    %5391 = vmatprep.subr.mxu0 0.0
    %5392 = vmatpush2.msra.mxu0 0.0
    %5393 = vmatprep.subr.mxu0 0.0
    %5394 = vmatpush2.msra.mxu0 0.0
    %5395 = vmatprep.subr.mxu0 0.0
    %5396 = vmatpush2.msra.mxu0 0.0
    %5397 = vmatprep.subr.mxu0 0.0
    %5398 = vmatpush2.msra.mxu0 0.0
    %5399 = vmatprep.subr.mxu0 0.0
    %5400 = vmatpush2.msra.mxu0 0.0
    %5401 = vmatprep.subr.mxu0 0.0
    %5402 = vmatpush2.msra.mxu0 0.0
    %5403 = vmatprep.subr.mxu0 0.0
    %5404 = vmatpush2.msra.mxu0 0.0
    %5405 = vmatprep.mubr.f32.mxu0 0.0
    %v5406 = vand.u32 %v250, 4294901760
    %5407 = vmatmul.mubr.f32.gmra.mxu0 %v5406
    %v5408 = vpop.f32.mrf.mxu0
    %v5409 = vadd.f32 %v5265, %v5408
    %v5410 = vpop.f32.mrf.mxu0
    %v5411 = vadd.f32 %v5267, %v5410
    %5412 = vdwg.mxu0
    %5413 = vmatprep.subr.mxu0 0.0
    %5414 = vmatpush1.msra.mxu0 0.0
    %5415 = vmatprep.subr.mxu0 0.0
    %5416 = vmatpush1.msra.mxu0 0.0
    %5417 = vmatprep.subr.mxu0 0.0
    %5418 = vmatpush1.msra.mxu0 0.0
    %5419 = vmatprep.subr.mxu0 0.0
    %5420 = vmatpush1.msra.mxu0 0.0
    %v5421 = vand.u32 %v246, 4294901760
    %5422 = vmatprep.subr.mxu0 %v5421
    %v5423 = vand.u32 %v245, 4294901760
    %5424 = vmatpush1.msra.mxu0 %v5423
    %v5425 = vand.u32 %v231, 4294901760
    %5426 = vmatprep.subr.mxu0 %v5425
    %v5427 = vand.u32 %v230, 4294901760
    %5428 = vmatpush1.msra.mxu0 %v5427
    %v5429 = vand.u32 %v216, 4294901760
    %5430 = vmatprep.subr.mxu0 %v5429
    %v5431 = vand.u32 %v215, 4294901760
    %5432 = vmatpush1.msra.mxu0 %v5431
    %v5433 = vand.u32 %v201, 4294901760
    %5434 = vmatprep.subr.mxu0 %v5433
    %v5435 = vand.u32 %v200, 4294901760
    %5436 = vmatpush1.msra.mxu0 %v5435
    %v5437 = vand.u32 %v186, 4294901760
    %5438 = vmatprep.subr.mxu0 %v5437
    %v5439 = vand.u32 %v185, 4294901760
    %5440 = vmatpush1.msra.mxu0 %v5439
    %v5441 = vand.u32 %v171, 4294901760
    %5442 = vmatprep.subr.mxu0 %v5441
    %v5443 = vand.u32 %v170, 4294901760
    %5444 = vmatpush1.msra.mxu0 %v5443
    %v5445 = vand.u32 %v156, 4294901760
    %5446 = vmatprep.subr.mxu0 %v5445
    %v5447 = vand.u32 %v155, 4294901760
    %5448 = vmatpush1.msra.mxu0 %v5447
    %v5449 = vand.u32 %v141, 4294901760
    %5450 = vmatprep.subr.mxu0 %v5449
    %v5451 = vand.u32 %v140, 4294901760
    %5452 = vmatpush1.msra.mxu0 %v5451
    %v5453 = vand.u32 %v126, 4294901760
    %5454 = vmatprep.subr.mxu0 %v5453
    %v5455 = vand.u32 %v125, 4294901760
    %5456 = vmatpush1.msra.mxu0 %v5455
    %v5457 = vand.u32 %v111, 4294901760
    %5458 = vmatprep.subr.mxu0 %v5457
    %v5459 = vand.u32 %v110, 4294901760
    %5460 = vmatpush1.msra.mxu0 %v5459
    %v5461 = vand.u32 %v96, 4294901760
    %5462 = vmatprep.subr.mxu0 %v5461
    %v5463 = vand.u32 %v95, 4294901760
    %5464 = vmatpush1.msra.mxu0 %v5463
    %v5465 = vand.u32 %v81, 4294901760
    %5466 = vmatprep.subr.mxu0 %v5465
    %v5467 = vand.u32 %v80, 4294901760
    %5468 = vmatpush1.msra.mxu0 %v5467
    %5469 = vmatprep.subr.mxu0 0.0
    %5470 = vmatpush2.msra.mxu0 0.0
    %5471 = vmatprep.subr.mxu0 0.0
    %5472 = vmatpush2.msra.mxu0 0.0
    %5473 = vmatprep.subr.mxu0 0.0
    %5474 = vmatpush2.msra.mxu0 0.0
    %5475 = vmatprep.subr.mxu0 0.0
    %5476 = vmatpush2.msra.mxu0 0.0
    %5477 = vmatprep.subr.mxu0 0.0
    %5478 = vmatpush2.msra.mxu0 0.0
    %5479 = vmatprep.subr.mxu0 0.0
    %5480 = vmatpush2.msra.mxu0 0.0
    %5481 = vmatprep.subr.mxu0 0.0
    %5482 = vmatpush2.msra.mxu0 0.0
    %5483 = vmatprep.subr.mxu0 0.0
    %5484 = vmatpush2.msra.mxu0 0.0
    %5485 = vmatprep.subr.mxu0 0.0
    %5486 = vmatpush2.msra.mxu0 0.0
    %5487 = vmatprep.subr.mxu0 0.0
    %5488 = vmatpush2.msra.mxu0 0.0
    %5489 = vmatprep.subr.mxu0 0.0
    %5490 = vmatpush2.msra.mxu0 0.0
    %5491 = vmatprep.subr.mxu0 0.0
    %5492 = vmatpush2.msra.mxu0 0.0
    %5493 = vmatprep.subr.mxu0 0.0
    %5494 = vmatpush2.msra.mxu0 0.0
    %5495 = vmatprep.subr.mxu0 0.0
    %5496 = vmatpush2.msra.mxu0 0.0
    %5497 = vmatprep.subr.mxu0 0.0
    %5498 = vmatpush2.msra.mxu0 0.0
    %5499 = vmatprep.subr.mxu0 0.0
    %5500 = vmatpush2.msra.mxu0 0.0
    %5501 = vmatprep.mubr.f32.mxu0 0.0
    %v5502 = vand.u32 %v250, 4294901760
    %5503 = vmatmul.mubr.f32.gmra.mxu0 %v5502
    %v5504 = vpop.f32.mrf.mxu0
    %v5505 = vadd.f32 %v5409, %v5504
    %v5506 = vpop.f32.mrf.mxu0
    %v5507 = vadd.f32 %v5411, %v5506
    %5508 = vdwg.mxu0
    %5509 = vmatprep.subr.mxu0 0.0
    %5510 = vmatpush1.msra.mxu0 0.0
    %5511 = vmatprep.subr.mxu0 0.0
    %5512 = vmatpush1.msra.mxu0 0.0
    %5513 = vmatprep.subr.mxu0 0.0
    %5514 = vmatpush1.msra.mxu0 0.0
    %5515 = vmatprep.subr.mxu0 0.0
    %5516 = vmatpush1.msra.mxu0 0.0
    %5517 = vmatprep.subr.mxu0 0.0
    %v5518 = vand.u32 %v247, 4294901760
    %5519 = vmatpush1.msra.mxu0 %v5518
    %5520 = vmatprep.subr.mxu0 0.0
    %v5521 = vand.u32 %v232, 4294901760
    %5522 = vmatpush1.msra.mxu0 %v5521
    %5523 = vmatprep.subr.mxu0 0.0
    %v5524 = vand.u32 %v217, 4294901760
    %5525 = vmatpush1.msra.mxu0 %v5524
    %5526 = vmatprep.subr.mxu0 0.0
    %v5527 = vand.u32 %v202, 4294901760
    %5528 = vmatpush1.msra.mxu0 %v5527
    %5529 = vmatprep.subr.mxu0 0.0
    %v5530 = vand.u32 %v187, 4294901760
    %5531 = vmatpush1.msra.mxu0 %v5530
    %5532 = vmatprep.subr.mxu0 0.0
    %v5533 = vand.u32 %v172, 4294901760
    %5534 = vmatpush1.msra.mxu0 %v5533
    %5535 = vmatprep.subr.mxu0 0.0
    %v5536 = vand.u32 %v157, 4294901760
    %5537 = vmatpush1.msra.mxu0 %v5536
    %5538 = vmatprep.subr.mxu0 0.0
    %v5539 = vand.u32 %v142, 4294901760
    %5540 = vmatpush1.msra.mxu0 %v5539
    %5541 = vmatprep.subr.mxu0 0.0
    %v5542 = vand.u32 %v127, 4294901760
    %5543 = vmatpush1.msra.mxu0 %v5542
    %5544 = vmatprep.subr.mxu0 0.0
    %v5545 = vand.u32 %v112, 4294901760
    %5546 = vmatpush1.msra.mxu0 %v5545
    %5547 = vmatprep.subr.mxu0 0.0
    %v5548 = vand.u32 %v97, 4294901760
    %5549 = vmatpush1.msra.mxu0 %v5548
    %5550 = vmatprep.subr.mxu0 0.0
    %v5551 = vand.u32 %v82, 4294901760
    %5552 = vmatpush1.msra.mxu0 %v5551
    %5553 = vmatprep.subr.mxu0 0.0
    %5554 = vmatpush2.msra.mxu0 0.0
    %5555 = vmatprep.subr.mxu0 0.0
    %5556 = vmatpush2.msra.mxu0 0.0
    %5557 = vmatprep.subr.mxu0 0.0
    %5558 = vmatpush2.msra.mxu0 0.0
    %5559 = vmatprep.subr.mxu0 0.0
    %5560 = vmatpush2.msra.mxu0 0.0
    %5561 = vmatprep.subr.mxu0 0.0
    %5562 = vmatpush2.msra.mxu0 0.0
    %5563 = vmatprep.subr.mxu0 0.0
    %5564 = vmatpush2.msra.mxu0 0.0
    %5565 = vmatprep.subr.mxu0 0.0
    %5566 = vmatpush2.msra.mxu0 0.0
    %5567 = vmatprep.subr.mxu0 0.0
    %5568 = vmatpush2.msra.mxu0 0.0
    %5569 = vmatprep.subr.mxu0 0.0
    %5570 = vmatpush2.msra.mxu0 0.0
    %5571 = vmatprep.subr.mxu0 0.0
    %5572 = vmatpush2.msra.mxu0 0.0
    %5573 = vmatprep.subr.mxu0 0.0
    %5574 = vmatpush2.msra.mxu0 0.0
    %5575 = vmatprep.subr.mxu0 0.0
    %5576 = vmatpush2.msra.mxu0 0.0
    %5577 = vmatprep.subr.mxu0 0.0
    %5578 = vmatpush2.msra.mxu0 0.0
    %5579 = vmatprep.subr.mxu0 0.0
    %5580 = vmatpush2.msra.mxu0 0.0
    %5581 = vmatprep.subr.mxu0 0.0
    %5582 = vmatpush2.msra.mxu0 0.0
    %5583 = vmatprep.subr.mxu0 0.0
    %5584 = vmatpush2.msra.mxu0 0.0
    %5585 = vmatprep.mubr.f32.mxu0 0.0
    %v5586 = vand.u32 %v250, 4294901760
    %v5587 = vsub.f32 %v250, %v5586
    %v5588 = vand.u32 %v5587, 4294901760
    %v5589 = vsub.f32 %v5587, %v5588
    %v5590 = vand.u32 %v5589, 4294901760
    %5591 = vmatmul.mubr.f32.gmra.mxu0 %v5590
    %v5592 = vpop.f32.mrf.mxu0
    %v5593 = vadd.f32 0.0, %v5592
    %v5594 = vpop.f32.mrf.mxu0
    %5595 = vdwg.mxu0
    %5596 = vmatprep.subr.mxu0 0.0
    %5597 = vmatpush1.msra.mxu0 0.0
    %5598 = vmatprep.subr.mxu0 0.0
    %5599 = vmatpush1.msra.mxu0 0.0
    %5600 = vmatprep.subr.mxu0 0.0
    %5601 = vmatpush1.msra.mxu0 0.0
    %5602 = vmatprep.subr.mxu0 0.0
    %5603 = vmatpush1.msra.mxu0 0.0
    %5604 = vmatprep.subr.mxu0 0.0
    %v5605 = vand.u32 %v247, 4294901760
    %v5606 = vsub.f32 %v247, %v5605
    %v5607 = vand.u32 %v5606, 4294901760
    %v5608 = vsub.f32 %v5606, %v5607
    %v5609 = vand.u32 %v5608, 4294901760
    %5610 = vmatpush1.msra.mxu0 %v5609
    %5611 = vmatprep.subr.mxu0 0.0
    %v5612 = vand.u32 %v232, 4294901760
    %v5613 = vsub.f32 %v232, %v5612
    %v5614 = vand.u32 %v5613, 4294901760
    %v5615 = vsub.f32 %v5613, %v5614
    %v5616 = vand.u32 %v5615, 4294901760
    %5617 = vmatpush1.msra.mxu0 %v5616
    %5618 = vmatprep.subr.mxu0 0.0
    %v5619 = vand.u32 %v217, 4294901760
    %v5620 = vsub.f32 %v217, %v5619
    %v5621 = vand.u32 %v5620, 4294901760
    %v5622 = vsub.f32 %v5620, %v5621
    %v5623 = vand.u32 %v5622, 4294901760
    %5624 = vmatpush1.msra.mxu0 %v5623
    %5625 = vmatprep.subr.mxu0 0.0
    %v5626 = vand.u32 %v202, 4294901760
    %v5627 = vsub.f32 %v202, %v5626
    %v5628 = vand.u32 %v5627, 4294901760
    %v5629 = vsub.f32 %v5627, %v5628
    %v5630 = vand.u32 %v5629, 4294901760
    %5631 = vmatpush1.msra.mxu0 %v5630
    %5632 = vmatprep.subr.mxu0 0.0
    %v5633 = vand.u32 %v187, 4294901760
    %v5634 = vsub.f32 %v187, %v5633
    %v5635 = vand.u32 %v5634, 4294901760
    %v5636 = vsub.f32 %v5634, %v5635
    %v5637 = vand.u32 %v5636, 4294901760
    %5638 = vmatpush1.msra.mxu0 %v5637
    %5639 = vmatprep.subr.mxu0 0.0
    %v5640 = vand.u32 %v172, 4294901760
    %v5641 = vsub.f32 %v172, %v5640
    %v5642 = vand.u32 %v5641, 4294901760
    %v5643 = vsub.f32 %v5641, %v5642
    %v5644 = vand.u32 %v5643, 4294901760
    %5645 = vmatpush1.msra.mxu0 %v5644
    %5646 = vmatprep.subr.mxu0 0.0
    %v5647 = vand.u32 %v157, 4294901760
    %v5648 = vsub.f32 %v157, %v5647
    %v5649 = vand.u32 %v5648, 4294901760
    %v5650 = vsub.f32 %v5648, %v5649
    %v5651 = vand.u32 %v5650, 4294901760
    %5652 = vmatpush1.msra.mxu0 %v5651
    %5653 = vmatprep.subr.mxu0 0.0
    %v5654 = vand.u32 %v142, 4294901760
    %v5655 = vsub.f32 %v142, %v5654
    %v5656 = vand.u32 %v5655, 4294901760
    %v5657 = vsub.f32 %v5655, %v5656
    %v5658 = vand.u32 %v5657, 4294901760
    %5659 = vmatpush1.msra.mxu0 %v5658
    %5660 = vmatprep.subr.mxu0 0.0
    %v5661 = vand.u32 %v127, 4294901760
    %v5662 = vsub.f32 %v127, %v5661
    %v5663 = vand.u32 %v5662, 4294901760
    %v5664 = vsub.f32 %v5662, %v5663
    %v5665 = vand.u32 %v5664, 4294901760
    %5666 = vmatpush1.msra.mxu0 %v5665
    %5667 = vmatprep.subr.mxu0 0.0
    %v5668 = vand.u32 %v112, 4294901760
    %v5669 = vsub.f32 %v112, %v5668
    %v5670 = vand.u32 %v5669, 4294901760
    %v5671 = vsub.f32 %v5669, %v5670
    %v5672 = vand.u32 %v5671, 4294901760
    %5673 = vmatpush1.msra.mxu0 %v5672
    %5674 = vmatprep.subr.mxu0 0.0
    %v5675 = vand.u32 %v97, 4294901760
    %v5676 = vsub.f32 %v97, %v5675
    %v5677 = vand.u32 %v5676, 4294901760
    %v5678 = vsub.f32 %v5676, %v5677
    %v5679 = vand.u32 %v5678, 4294901760
    %5680 = vmatpush1.msra.mxu0 %v5679
    %5681 = vmatprep.subr.mxu0 0.0
    %v5682 = vand.u32 %v82, 4294901760
    %v5683 = vsub.f32 %v82, %v5682
    %v5684 = vand.u32 %v5683, 4294901760
    %v5685 = vsub.f32 %v5683, %v5684
    %v5686 = vand.u32 %v5685, 4294901760
    %5687 = vmatpush1.msra.mxu0 %v5686
    %5688 = vmatprep.subr.mxu0 0.0
    %5689 = vmatpush2.msra.mxu0 0.0
    %5690 = vmatprep.subr.mxu0 0.0
    %5691 = vmatpush2.msra.mxu0 0.0
    %5692 = vmatprep.subr.mxu0 0.0
    %5693 = vmatpush2.msra.mxu0 0.0
    %5694 = vmatprep.subr.mxu0 0.0
    %5695 = vmatpush2.msra.mxu0 0.0
    %5696 = vmatprep.subr.mxu0 0.0
    %5697 = vmatpush2.msra.mxu0 0.0
    %5698 = vmatprep.subr.mxu0 0.0
    %5699 = vmatpush2.msra.mxu0 0.0
    %5700 = vmatprep.subr.mxu0 0.0
    %5701 = vmatpush2.msra.mxu0 0.0
    %5702 = vmatprep.subr.mxu0 0.0
    %5703 = vmatpush2.msra.mxu0 0.0
    %5704 = vmatprep.subr.mxu0 0.0
    %5705 = vmatpush2.msra.mxu0 0.0
    %5706 = vmatprep.subr.mxu0 0.0
    %5707 = vmatpush2.msra.mxu0 0.0
    %5708 = vmatprep.subr.mxu0 0.0
    %5709 = vmatpush2.msra.mxu0 0.0
    %5710 = vmatprep.subr.mxu0 0.0
    %5711 = vmatpush2.msra.mxu0 0.0
    %5712 = vmatprep.subr.mxu0 0.0
    %5713 = vmatpush2.msra.mxu0 0.0
    %5714 = vmatprep.subr.mxu0 0.0
    %5715 = vmatpush2.msra.mxu0 0.0
    %5716 = vmatprep.subr.mxu0 0.0
    %5717 = vmatpush2.msra.mxu0 0.0
    %5718 = vmatprep.subr.mxu0 0.0
    %5719 = vmatpush2.msra.mxu0 0.0
    %5720 = vmatprep.mubr.f32.mxu0 0.0
    %v5721 = vand.u32 %v250, 4294901760
    %5722 = vmatmul.mubr.f32.gmra.mxu0 %v5721
    %v5723 = vpop.f32.mrf.mxu0
    %v5724 = vadd.f32 %v5593, %v5723
    %v5725 = vpop.f32.mrf.mxu0
    %5726 = vdwg.mxu0
    %5727 = vmatprep.subr.mxu0 0.0
    %5728 = vmatpush1.msra.mxu0 0.0
    %5729 = vmatprep.subr.mxu0 0.0
    %5730 = vmatpush1.msra.mxu0 0.0
    %5731 = vmatprep.subr.mxu0 0.0
    %5732 = vmatpush1.msra.mxu0 0.0
    %5733 = vmatprep.subr.mxu0 0.0
    %5734 = vmatpush1.msra.mxu0 0.0
    %5735 = vmatprep.subr.mxu0 0.0
    %v5736 = vand.u32 %v247, 4294901760
    %v5737 = vsub.f32 %v247, %v5736
    %5738 = vmatpush1.msra.mxu0 %v5737
    %5739 = vmatprep.subr.mxu0 0.0
    %v5740 = vand.u32 %v232, 4294901760
    %v5741 = vsub.f32 %v232, %v5740
    %5742 = vmatpush1.msra.mxu0 %v5741
    %5743 = vmatprep.subr.mxu0 0.0
    %v5744 = vand.u32 %v217, 4294901760
    %v5745 = vsub.f32 %v217, %v5744
    %5746 = vmatpush1.msra.mxu0 %v5745
    %5747 = vmatprep.subr.mxu0 0.0
    %v5748 = vand.u32 %v202, 4294901760
    %v5749 = vsub.f32 %v202, %v5748
    %5750 = vmatpush1.msra.mxu0 %v5749
    %5751 = vmatprep.subr.mxu0 0.0
    %v5752 = vand.u32 %v187, 4294901760
    %v5753 = vsub.f32 %v187, %v5752
    %5754 = vmatpush1.msra.mxu0 %v5753
    %5755 = vmatprep.subr.mxu0 0.0
    %v5756 = vand.u32 %v172, 4294901760
    %v5757 = vsub.f32 %v172, %v5756
    %5758 = vmatpush1.msra.mxu0 %v5757
    %5759 = vmatprep.subr.mxu0 0.0
    %v5760 = vand.u32 %v157, 4294901760
    %v5761 = vsub.f32 %v157, %v5760
    %5762 = vmatpush1.msra.mxu0 %v5761
    %5763 = vmatprep.subr.mxu0 0.0
    %v5764 = vand.u32 %v142, 4294901760
    %v5765 = vsub.f32 %v142, %v5764
    %5766 = vmatpush1.msra.mxu0 %v5765
    %5767 = vmatprep.subr.mxu0 0.0
    %v5768 = vand.u32 %v127, 4294901760
    %v5769 = vsub.f32 %v127, %v5768
    %5770 = vmatpush1.msra.mxu0 %v5769
    %5771 = vmatprep.subr.mxu0 0.0
    %v5772 = vand.u32 %v112, 4294901760
    %v5773 = vsub.f32 %v112, %v5772
    %5774 = vmatpush1.msra.mxu0 %v5773
    %5775 = vmatprep.subr.mxu0 0.0
    %v5776 = vand.u32 %v97, 4294901760
    %v5777 = vsub.f32 %v97, %v5776
    %5778 = vmatpush1.msra.mxu0 %v5777
    %5779 = vmatprep.subr.mxu0 0.0
    %v5780 = vand.u32 %v82, 4294901760
    %v5781 = vsub.f32 %v82, %v5780
    %5782 = vmatpush1.msra.mxu0 %v5781
    %5783 = vmatprep.subr.mxu0 0.0
    %5784 = vmatpush2.msra.mxu0 0.0
    %5785 = vmatprep.subr.mxu0 0.0
    %5786 = vmatpush2.msra.mxu0 0.0
    %5787 = vmatprep.subr.mxu0 0.0
    %5788 = vmatpush2.msra.mxu0 0.0
    %5789 = vmatprep.subr.mxu0 0.0
    %5790 = vmatpush2.msra.mxu0 0.0
    %5791 = vmatprep.subr.mxu0 0.0
    %5792 = vmatpush2.msra.mxu0 0.0
    %5793 = vmatprep.subr.mxu0 0.0
    %5794 = vmatpush2.msra.mxu0 0.0
    %5795 = vmatprep.subr.mxu0 0.0
    %5796 = vmatpush2.msra.mxu0 0.0
    %5797 = vmatprep.subr.mxu0 0.0
    %5798 = vmatpush2.msra.mxu0 0.0
    %5799 = vmatprep.subr.mxu0 0.0
    %5800 = vmatpush2.msra.mxu0 0.0
    %5801 = vmatprep.subr.mxu0 0.0
    %5802 = vmatpush2.msra.mxu0 0.0
    %5803 = vmatprep.subr.mxu0 0.0
    %5804 = vmatpush2.msra.mxu0 0.0
    %5805 = vmatprep.subr.mxu0 0.0
    %5806 = vmatpush2.msra.mxu0 0.0
    %5807 = vmatprep.subr.mxu0 0.0
    %5808 = vmatpush2.msra.mxu0 0.0
    %5809 = vmatprep.subr.mxu0 0.0
    %5810 = vmatpush2.msra.mxu0 0.0
    %5811 = vmatprep.subr.mxu0 0.0
    %5812 = vmatpush2.msra.mxu0 0.0
    %5813 = vmatprep.subr.mxu0 0.0
    %5814 = vmatpush2.msra.mxu0 0.0
    %5815 = vmatprep.mubr.f32.mxu0 0.0
    %v5816 = vand.u32 %v250, 4294901760
    %v5817 = vsub.f32 %v250, %v5816
    %5818 = vmatmul.mubr.f32.gmra.mxu0 %v5817
    %v5819 = vpop.f32.mrf.mxu0
    %v5820 = vadd.f32 %v5724, %v5819
    %v5821 = vpop.f32.mrf.mxu0
    %5822 = vdwg.mxu0
    %5823 = vmatprep.subr.mxu0 0.0
    %5824 = vmatpush1.msra.mxu0 0.0
    %5825 = vmatprep.subr.mxu0 0.0
    %5826 = vmatpush1.msra.mxu0 0.0
    %5827 = vmatprep.subr.mxu0 0.0
    %5828 = vmatpush1.msra.mxu0 0.0
    %5829 = vmatprep.subr.mxu0 0.0
    %5830 = vmatpush1.msra.mxu0 0.0
    %5831 = vmatprep.subr.mxu0 0.0
    %v5832 = vand.u32 %v247, 4294901760
    %5833 = vmatpush1.msra.mxu0 %v5832
    %5834 = vmatprep.subr.mxu0 0.0
    %v5835 = vand.u32 %v232, 4294901760
    %5836 = vmatpush1.msra.mxu0 %v5835
    %5837 = vmatprep.subr.mxu0 0.0
    %v5838 = vand.u32 %v217, 4294901760
    %5839 = vmatpush1.msra.mxu0 %v5838
    %5840 = vmatprep.subr.mxu0 0.0
    %v5841 = vand.u32 %v202, 4294901760
    %5842 = vmatpush1.msra.mxu0 %v5841
    %5843 = vmatprep.subr.mxu0 0.0
    %v5844 = vand.u32 %v187, 4294901760
    %5845 = vmatpush1.msra.mxu0 %v5844
    %5846 = vmatprep.subr.mxu0 0.0
    %v5847 = vand.u32 %v172, 4294901760
    %5848 = vmatpush1.msra.mxu0 %v5847
    %5849 = vmatprep.subr.mxu0 0.0
    %v5850 = vand.u32 %v157, 4294901760
    %5851 = vmatpush1.msra.mxu0 %v5850
    %5852 = vmatprep.subr.mxu0 0.0
    %v5853 = vand.u32 %v142, 4294901760
    %5854 = vmatpush1.msra.mxu0 %v5853
    %5855 = vmatprep.subr.mxu0 0.0
    %v5856 = vand.u32 %v127, 4294901760
    %5857 = vmatpush1.msra.mxu0 %v5856
    %5858 = vmatprep.subr.mxu0 0.0
    %v5859 = vand.u32 %v112, 4294901760
    %5860 = vmatpush1.msra.mxu0 %v5859
    %5861 = vmatprep.subr.mxu0 0.0
    %v5862 = vand.u32 %v97, 4294901760
    %5863 = vmatpush1.msra.mxu0 %v5862
    %5864 = vmatprep.subr.mxu0 0.0
    %v5865 = vand.u32 %v82, 4294901760
    %5866 = vmatpush1.msra.mxu0 %v5865
    %5867 = vmatprep.subr.mxu0 0.0
    %5868 = vmatpush2.msra.mxu0 0.0
    %5869 = vmatprep.subr.mxu0 0.0
    %5870 = vmatpush2.msra.mxu0 0.0
    %5871 = vmatprep.subr.mxu0 0.0
    %5872 = vmatpush2.msra.mxu0 0.0
    %5873 = vmatprep.subr.mxu0 0.0
    %5874 = vmatpush2.msra.mxu0 0.0
    %5875 = vmatprep.subr.mxu0 0.0
    %5876 = vmatpush2.msra.mxu0 0.0
    %5877 = vmatprep.subr.mxu0 0.0
    %5878 = vmatpush2.msra.mxu0 0.0
    %5879 = vmatprep.subr.mxu0 0.0
    %5880 = vmatpush2.msra.mxu0 0.0
    %5881 = vmatprep.subr.mxu0 0.0
    %5882 = vmatpush2.msra.mxu0 0.0
    %5883 = vmatprep.subr.mxu0 0.0
    %5884 = vmatpush2.msra.mxu0 0.0
    %5885 = vmatprep.subr.mxu0 0.0
    %5886 = vmatpush2.msra.mxu0 0.0
    %5887 = vmatprep.subr.mxu0 0.0
    %5888 = vmatpush2.msra.mxu0 0.0
    %5889 = vmatprep.subr.mxu0 0.0
    %5890 = vmatpush2.msra.mxu0 0.0
    %5891 = vmatprep.subr.mxu0 0.0
    %5892 = vmatpush2.msra.mxu0 0.0
    %5893 = vmatprep.subr.mxu0 0.0
    %5894 = vmatpush2.msra.mxu0 0.0
    %5895 = vmatprep.subr.mxu0 0.0
    %5896 = vmatpush2.msra.mxu0 0.0
    %5897 = vmatprep.subr.mxu0 0.0
    %5898 = vmatpush2.msra.mxu0 0.0
    %5899 = vmatprep.mubr.f32.mxu0 0.0
    %v5900 = vand.u32 %v250, 4294901760
    %v5901 = vsub.f32 %v250, %v5900
    %v5902 = vand.u32 %v5901, 4294901760
    %5903 = vmatmul.mubr.f32.gmra.mxu0 %v5902
    %v5904 = vpop.f32.mrf.mxu0
    %v5905 = vadd.f32 %v5820, %v5904
    %v5906 = vpop.f32.mrf.mxu0
    %5907 = vdwg.mxu0
    %5908 = vmatprep.subr.mxu0 0.0
    %5909 = vmatpush1.msra.mxu0 0.0
    %5910 = vmatprep.subr.mxu0 0.0
    %5911 = vmatpush1.msra.mxu0 0.0
    %5912 = vmatprep.subr.mxu0 0.0
    %5913 = vmatpush1.msra.mxu0 0.0
    %5914 = vmatprep.subr.mxu0 0.0
    %5915 = vmatpush1.msra.mxu0 0.0
    %5916 = vmatprep.subr.mxu0 0.0
    %v5917 = vand.u32 %v247, 4294901760
    %v5918 = vsub.f32 %v247, %v5917
    %v5919 = vand.u32 %v5918, 4294901760
    %5920 = vmatpush1.msra.mxu0 %v5919
    %5921 = vmatprep.subr.mxu0 0.0
    %v5922 = vand.u32 %v232, 4294901760
    %v5923 = vsub.f32 %v232, %v5922
    %v5924 = vand.u32 %v5923, 4294901760
    %5925 = vmatpush1.msra.mxu0 %v5924
    %5926 = vmatprep.subr.mxu0 0.0
    %v5927 = vand.u32 %v217, 4294901760
    %v5928 = vsub.f32 %v217, %v5927
    %v5929 = vand.u32 %v5928, 4294901760
    %5930 = vmatpush1.msra.mxu0 %v5929
    %5931 = vmatprep.subr.mxu0 0.0
    %v5932 = vand.u32 %v202, 4294901760
    %v5933 = vsub.f32 %v202, %v5932
    %v5934 = vand.u32 %v5933, 4294901760
    %5935 = vmatpush1.msra.mxu0 %v5934
    %5936 = vmatprep.subr.mxu0 0.0
    %v5937 = vand.u32 %v187, 4294901760
    %v5938 = vsub.f32 %v187, %v5937
    %v5939 = vand.u32 %v5938, 4294901760
    %5940 = vmatpush1.msra.mxu0 %v5939
    %5941 = vmatprep.subr.mxu0 0.0
    %v5942 = vand.u32 %v172, 4294901760
    %v5943 = vsub.f32 %v172, %v5942
    %v5944 = vand.u32 %v5943, 4294901760
    %5945 = vmatpush1.msra.mxu0 %v5944
    %5946 = vmatprep.subr.mxu0 0.0
    %v5947 = vand.u32 %v157, 4294901760
    %v5948 = vsub.f32 %v157, %v5947
    %v5949 = vand.u32 %v5948, 4294901760
    %5950 = vmatpush1.msra.mxu0 %v5949
    %5951 = vmatprep.subr.mxu0 0.0
    %v5952 = vand.u32 %v142, 4294901760
    %v5953 = vsub.f32 %v142, %v5952
    %v5954 = vand.u32 %v5953, 4294901760
    %5955 = vmatpush1.msra.mxu0 %v5954
    %5956 = vmatprep.subr.mxu0 0.0
    %v5957 = vand.u32 %v127, 4294901760
    %v5958 = vsub.f32 %v127, %v5957
    %v5959 = vand.u32 %v5958, 4294901760
    %5960 = vmatpush1.msra.mxu0 %v5959
    %5961 = vmatprep.subr.mxu0 0.0
    %v5962 = vand.u32 %v112, 4294901760
    %v5963 = vsub.f32 %v112, %v5962
    %v5964 = vand.u32 %v5963, 4294901760
    %5965 = vmatpush1.msra.mxu0 %v5964
    %5966 = vmatprep.subr.mxu0 0.0
    %v5967 = vand.u32 %v97, 4294901760
    %v5968 = vsub.f32 %v97, %v5967
    %v5969 = vand.u32 %v5968, 4294901760
    %5970 = vmatpush1.msra.mxu0 %v5969
    %5971 = vmatprep.subr.mxu0 0.0
    %v5972 = vand.u32 %v82, 4294901760
    %v5973 = vsub.f32 %v82, %v5972
    %v5974 = vand.u32 %v5973, 4294901760
    %5975 = vmatpush1.msra.mxu0 %v5974
    %5976 = vmatprep.subr.mxu0 0.0
    %5977 = vmatpush2.msra.mxu0 0.0
    %5978 = vmatprep.subr.mxu0 0.0
    %5979 = vmatpush2.msra.mxu0 0.0
    %5980 = vmatprep.subr.mxu0 0.0
    %5981 = vmatpush2.msra.mxu0 0.0
    %5982 = vmatprep.subr.mxu0 0.0
    %5983 = vmatpush2.msra.mxu0 0.0
    %5984 = vmatprep.subr.mxu0 0.0
    %5985 = vmatpush2.msra.mxu0 0.0
    %5986 = vmatprep.subr.mxu0 0.0
    %5987 = vmatpush2.msra.mxu0 0.0
    %5988 = vmatprep.subr.mxu0 0.0
    %5989 = vmatpush2.msra.mxu0 0.0
    %5990 = vmatprep.subr.mxu0 0.0
    %5991 = vmatpush2.msra.mxu0 0.0
    %5992 = vmatprep.subr.mxu0 0.0
    %5993 = vmatpush2.msra.mxu0 0.0
    %5994 = vmatprep.subr.mxu0 0.0
    %5995 = vmatpush2.msra.mxu0 0.0
    %5996 = vmatprep.subr.mxu0 0.0
    %5997 = vmatpush2.msra.mxu0 0.0
    %5998 = vmatprep.subr.mxu0 0.0
    %5999 = vmatpush2.msra.mxu0 0.0
    %6000 = vmatprep.subr.mxu0 0.0
    %6001 = vmatpush2.msra.mxu0 0.0
    %6002 = vmatprep.subr.mxu0 0.0
    %6003 = vmatpush2.msra.mxu0 0.0
    %6004 = vmatprep.subr.mxu0 0.0
    %6005 = vmatpush2.msra.mxu0 0.0
    %6006 = vmatprep.subr.mxu0 0.0
    %6007 = vmatpush2.msra.mxu0 0.0
    %6008 = vmatprep.mubr.f32.mxu0 0.0
    %v6009 = vand.u32 %v250, 4294901760
    %6010 = vmatmul.mubr.f32.gmra.mxu0 %v6009
    %v6011 = vpop.f32.mrf.mxu0
    %v6012 = vadd.f32 %v5905, %v6011
    %v6013 = vpop.f32.mrf.mxu0
    %6014 = vdwg.mxu0
    %6015 = vmatprep.subr.mxu0 0.0
    %6016 = vmatpush1.msra.mxu0 0.0
    %6017 = vmatprep.subr.mxu0 0.0
    %6018 = vmatpush1.msra.mxu0 0.0
    %6019 = vmatprep.subr.mxu0 0.0
    %6020 = vmatpush1.msra.mxu0 0.0
    %6021 = vmatprep.subr.mxu0 0.0
    %6022 = vmatpush1.msra.mxu0 0.0
    %6023 = vmatprep.subr.mxu0 0.0
    %v6024 = vand.u32 %v247, 4294901760
    %6025 = vmatpush1.msra.mxu0 %v6024
    %6026 = vmatprep.subr.mxu0 0.0
    %v6027 = vand.u32 %v232, 4294901760
    %6028 = vmatpush1.msra.mxu0 %v6027
    %6029 = vmatprep.subr.mxu0 0.0
    %v6030 = vand.u32 %v217, 4294901760
    %6031 = vmatpush1.msra.mxu0 %v6030
    %6032 = vmatprep.subr.mxu0 0.0
    %v6033 = vand.u32 %v202, 4294901760
    %6034 = vmatpush1.msra.mxu0 %v6033
    %6035 = vmatprep.subr.mxu0 0.0
    %v6036 = vand.u32 %v187, 4294901760
    %6037 = vmatpush1.msra.mxu0 %v6036
    %6038 = vmatprep.subr.mxu0 0.0
    %v6039 = vand.u32 %v172, 4294901760
    %6040 = vmatpush1.msra.mxu0 %v6039
    %6041 = vmatprep.subr.mxu0 0.0
    %v6042 = vand.u32 %v157, 4294901760
    %6043 = vmatpush1.msra.mxu0 %v6042
    %6044 = vmatprep.subr.mxu0 0.0
    %v6045 = vand.u32 %v142, 4294901760
    %6046 = vmatpush1.msra.mxu0 %v6045
    %6047 = vmatprep.subr.mxu0 0.0
    %v6048 = vand.u32 %v127, 4294901760
    %6049 = vmatpush1.msra.mxu0 %v6048
    %6050 = vmatprep.subr.mxu0 0.0
    %v6051 = vand.u32 %v112, 4294901760
    %6052 = vmatpush1.msra.mxu0 %v6051
    %6053 = vmatprep.subr.mxu0 0.0
    %v6054 = vand.u32 %v97, 4294901760
    %6055 = vmatpush1.msra.mxu0 %v6054
    %6056 = vmatprep.subr.mxu0 0.0
    %v6057 = vand.u32 %v82, 4294901760
    %6058 = vmatpush1.msra.mxu0 %v6057
    %6059 = vmatprep.subr.mxu0 0.0
    %6060 = vmatpush2.msra.mxu0 0.0
    %6061 = vmatprep.subr.mxu0 0.0
    %6062 = vmatpush2.msra.mxu0 0.0
    %6063 = vmatprep.subr.mxu0 0.0
    %6064 = vmatpush2.msra.mxu0 0.0
    %6065 = vmatprep.subr.mxu0 0.0
    %6066 = vmatpush2.msra.mxu0 0.0
    %6067 = vmatprep.subr.mxu0 0.0
    %6068 = vmatpush2.msra.mxu0 0.0
    %6069 = vmatprep.subr.mxu0 0.0
    %6070 = vmatpush2.msra.mxu0 0.0
    %6071 = vmatprep.subr.mxu0 0.0
    %6072 = vmatpush2.msra.mxu0 0.0
    %6073 = vmatprep.subr.mxu0 0.0
    %6074 = vmatpush2.msra.mxu0 0.0
    %6075 = vmatprep.subr.mxu0 0.0
    %6076 = vmatpush2.msra.mxu0 0.0
    %6077 = vmatprep.subr.mxu0 0.0
    %6078 = vmatpush2.msra.mxu0 0.0
    %6079 = vmatprep.subr.mxu0 0.0
    %6080 = vmatpush2.msra.mxu0 0.0
    %6081 = vmatprep.subr.mxu0 0.0
    %6082 = vmatpush2.msra.mxu0 0.0
    %6083 = vmatprep.subr.mxu0 0.0
    %6084 = vmatpush2.msra.mxu0 0.0
    %6085 = vmatprep.subr.mxu0 0.0
    %6086 = vmatpush2.msra.mxu0 0.0
    %6087 = vmatprep.subr.mxu0 0.0
    %6088 = vmatpush2.msra.mxu0 0.0
    %6089 = vmatprep.subr.mxu0 0.0
    %6090 = vmatpush2.msra.mxu0 0.0
    %6091 = vmatprep.mubr.f32.mxu0 0.0
    %v6092 = vand.u32 %v250, 4294901760
    %6093 = vmatmul.mubr.f32.gmra.mxu0 %v6092
    %v6094 = vpop.f32.mrf.mxu0
    %v6095 = vadd.f32 %v6012, %v6094
    %v6096 = vpop.f32.mrf.mxu0
    %6097 = vdwg.mxu0
    %v6098 = vld [vmem:[#allocation7] sm:$0xff]
    %v6099 = vld [vmem:[#allocation7 + $0x8] sm:$0xff]
    %v6102 = vlaneseq
    %v6103 = vshrl.u32 %v6102, 7
    %v6104 = vsub.s32 0, %v6103
    %v6105 = vrot.slane %v6098, %v6104
    %v6106 = vlaneseq
    %v6107 = vshrl.u32 %v6106, 7
    %v6108 = vsub.s32 1, %v6107
    %v6109 = vrot.slane %v6098, %v6108
    %v6110 = vlaneseq
    %v6111 = vshrl.u32 %v6110, 7
    %v6112 = vsub.s32 2, %v6111
    %v6113 = vrot.slane %v6098, %v6112
    %v6114 = vlaneseq
    %v6115 = vshrl.u32 %v6114, 7
    %v6116 = vsub.s32 3, %v6115
    %v6117 = vrot.slane %v6098, %v6116
    %v6118 = vlaneseq
    %v6119 = vshrl.u32 %v6118, 7
    %v6120 = vsub.s32 4, %v6119
    %v6121 = vrot.slane %v6098, %v6120
    %v6122 = vlaneseq
    %v6123 = vshrl.u32 %v6122, 7
    %v6124 = vsub.s32 5, %v6123
    %v6125 = vrot.slane %v6098, %v6124
    %v6126 = vlaneseq
    %v6127 = vshrl.u32 %v6126, 7
    %v6128 = vsub.s32 6, %v6127
    %v6129 = vrot.slane %v6098, %v6128
    %v6130 = vlaneseq
    %v6131 = vshrl.u32 %v6130, 7
    %v6132 = vsub.s32 7, %v6131
    %v6133 = vrot.slane %v6098, %v6132
    %v6134 = vlaneseq
    %v6135 = vshrl.u32 %v6134, 7
    %v6136 = vsub.s32 0, %v6135
    %v6137 = vrot.slane %v6099, %v6136
    %v6138 = vlaneseq
    %v6139 = vshrl.u32 %v6138, 7
    %v6140 = vsub.s32 1, %v6139
    %v6141 = vrot.slane %v6099, %v6140
    %v6142 = vlaneseq
    %v6143 = vshrl.u32 %v6142, 7
    %v6144 = vsub.s32 2, %v6143
    %v6145 = vrot.slane %v6099, %v6144
    %v6146 = vlaneseq
    %v6147 = vshrl.u32 %v6146, 7
    %v6148 = vsub.s32 3, %v6147
    %v6149 = vrot.slane %v6099, %v6148
    %v6150 = vlaneseq
    %v6151 = vshrl.u32 %v6150, 7
    %v6152 = vsub.s32 4, %v6151
    %v6153 = vrot.slane %v6099, %v6152
    %v6154 = vlaneseq
    %v6155 = vshrl.u32 %v6154, 7
    %v6156 = vsub.s32 5, %v6155
    %v6157 = vrot.slane %v6099, %v6156
    %v6158 = vlaneseq
    %v6159 = vshrl.u32 %v6158, 7
    %v6160 = vsub.s32 6, %v6159
    %v6161 = vrot.slane %v6099, %v6160
    %v6177 = vmul.f32 %v999, %v6105
    %v6178 = vmul.f32 %v1001, %v6109
    %v6179 = vmul.f32 %v1750, %v6113
    %v6180 = vmul.f32 %v1752, %v6117
    %v6181 = vmul.f32 %v2501, %v6121
    %v6182 = vmul.f32 %v2503, %v6125
    %v6183 = vmul.f32 %v3252, %v6129
    %v6184 = vmul.f32 %v3254, %v6133
    %v6185 = vmul.f32 %v4003, %v6137
    %v6186 = vmul.f32 %v4005, %v6141
    %v6187 = vmul.f32 %v4754, %v6145
    %v6188 = vmul.f32 %v4756, %v6149
    %v6189 = vmul.f32 %v5505, %v6153
    %v6190 = vmul.f32 %v5507, %v6157
    %v6191 = vmul.f32 %v6095, %v6161
    %v6192 = vand.u32 2147483647, %v6177
    %vm6193 = vcmp.le.f32.partialorder %v6192, 0.7853982
    %vm6194 = vcmp.lt.s32.totalorder %v6177, 0
    %v6195 = vand.u32 %v6177, 2139095040
    %v6196 = vshrl.u32 %v6195, 23
    %v6197 = vsub.s32 %v6196, 127
    %v6198 = vand.u32 2147483647, %v6177
    %v6199 = vand.u32 %v6198, 8388607
    %v6200 = vor.u32 %v6199, 8388608
    %v6201 = vsub.s32 0, %v6200
    %v6202 = vadd.s32 %v6197, 1
    %vm6203 = vcmp.gt.s32.totalorder %v6202, 0
    %v6204 = vsel %vm6203, %v6202, 0
    %v6205 = vshrl.u32 %v6204, 5
    %v6206 = vand.u32 %v6204, 31
    %v6207 = vsub.s32 32, %v6206
    %v6208 = vshrl.u32 683565275, %v6207
    %v6209 = vshll.u32 683565275, %v6206
    %v6210 = vshrl.u32 2475754826, %v6207
    %v6211 = vor.u32 %v6209, %v6210
    %v6212 = vshll.u32 2475754826, %v6206
    %v6213 = vshrl.u32 2131351028, %v6207
    %v6214 = vor.u32 %v6212, %v6213
    %v6215 = vshll.u32 2131351028, %v6206
    %v6216 = vshrl.u32 2102212464, %v6207
    %v6217 = vor.u32 %v6215, %v6216
    %v6218 = vshll.u32 2102212464, %v6206
    %v6219 = vshrl.u32 920167782, %v6207
    %v6220 = vor.u32 %v6218, %v6219
    %v6221 = vshll.u32 920167782, %v6206
    %v6222 = vshrl.u32 1326507024, %v6207
    %v6223 = vor.u32 %v6221, %v6222
    %vm6224 = vcmp.lt.s32.totalorder %v6205, 1
    %vm6225 = vcmp.lt.s32.totalorder %v6205, 2
    %vm6226 = vcmp.lt.s32.totalorder %v6205, 3
    %vm6227 = vcmp.lt.s32.totalorder %v6205, 4
    %v6228 = vsel %vm6224, %v6208, %v6211
    %v6229 = vsel %vm6227, %v6217, 2102212464
    %v6230 = vsel %vm6226, %v6214, %v6229
    %v6231 = vsel %vm6225, %v6228, %v6230
    %v6232 = vsel %vm6224, %v6211, %v6214
    %v6233 = vsel %vm6227, %v6220, 920167782
    %v6234 = vsel %vm6226, %v6217, %v6233
    %v6235 = vsel %vm6225, %v6232, %v6234
    %v6236 = vsel %vm6224, %v6214, %v6217
    %v6237 = vsel %vm6227, %v6223, 1326507024
    %v6238 = vsel %vm6226, %v6220, %v6237
    %v6239 = vsel %vm6225, %v6236, %v6238
    %v6240 = vshll.u32 %v6200, 8
    %v6241 = vmul.u32.u64.compose %v6240, %v6239
    %v6242 = vextract.low.u32 %v6241
    %v6243 = vextract.high.u32 %v6241
    %v6244 = vmul.u32.u64.compose %v6240, %v6235
    %v6245 = vextract.low.u32 %v6244
    %v6246 = vextract.high.u32 %v6244
    %v6247 = vmul.u32 %v6240, %v6231
    %v6248 = vadd.s32 %v6243, %v6245
    %vm6249 = vc.u32 %v6243, %v6245
    %v6250 = vadd.s32 %v6246, 1
    %v6251 = vsel %vm6249, %v6250, %v6246
    %v6252 = vadd.s32 %v6247, %v6251
    %v6253 = vadd.s32 %v6252, 536870912
    %v6254 = vshrl.u32 %v6253, 30
    %v6255 = vshll.u32 %v6254, 30
    %v6256 = vsub.s32 %v6252, %v6255
    %vm6257 = vcmp.lt.s32.totalorder %v6256, 0
    %v6258 = vsub.s32 0, %v6256
    %v6259 = vsel %vm6257, %v6258, %v6256
    %v6260 = vclz %v6259
    %v6261 = vsub.s32 %v6260, 2
    %vm6262 = vcmp.gt.s32.totalorder 0, %v6261
    %v6263 = vsel %vm6262, 0, %v6261
    %v6264 = vsub.s32 32, %v6263
    %v6265 = vshll.u32 %v6256, %v6263
    %v6266 = vshrl.u32 %v6248, %v6264
    %v6267 = vor.u32 %v6265, %v6266
    %v6268 = vsub.s32 4294967266, %v6263
    %v6269 = vadd.s32 %v6268, 127
    %v6270 = vshll.u32 %v6269, 23
    %v6271 = vor.u32 4788187, %v6270
    %v6272 = vand.u32 2147483647, %v6271
    %v6274 = vcvt.s32.f32 %v6267
    %v6275 = vmul.f32 %v6274, %v6272
    %v6276 = vxor.u32 %v6275, 2147483648
    %v6277 = vsel %vm6194, %v6276, %v6275
    %v6278 = vsub.s32 4, %v6254
    %v6279 = vsel %vm6194, %v6278, %v6254
    %v6280 = vsel %vm6193, %v6177, %v6277
    %v6281 = vsel %vm6193, 0, %v6279
    %v6282 = vcosq.f32.pop %v6280
    %v6283 = vsinq.f32.pop %v6280
    %vm6284 = vweird.f32 %v6177
    %v6285 = vadd.s32 %v6281, 3
    %v6286 = vand.u32 %v6285, 3
    %vm6287 = vcmp.lt.s32.totalorder %v6286, 2
    %vm6288 = vcmp.eq.s32.totalorder %v6286, 0
    %v6289 = vxor.u32 %v6283, 2147483648
    %v6290 = vsel %vm6288, %v6282, %v6289
    %vm6291 = vcmp.eq.s32.totalorder %v6286, 2
    %v6292 = vxor.u32 %v6282, 2147483648
    %v6293 = vsel %vm6291, %v6292, %v6283
    %v6294 = vsel %vm6287, %v6290, %v6293
    %v6295 = vsel %vm6284, nan, %v6294
    %v6296 = vand.u32 2147483647, %v6178
    %vm6297 = vcmp.le.f32.partialorder %v6296, 0.7853982
    %vm6298 = vcmp.lt.s32.totalorder %v6178, 0
    %v6299 = vand.u32 %v6178, 2139095040
    %v6300 = vshrl.u32 %v6299, 23
    %v6301 = vsub.s32 %v6300, 127
    %v6302 = vand.u32 2147483647, %v6178
    %v6303 = vand.u32 %v6302, 8388607
    %v6304 = vor.u32 %v6303, 8388608
    %v6305 = vsub.s32 0, %v6304
    %v6306 = vadd.s32 %v6301, 1
    %vm6307 = vcmp.gt.s32.totalorder %v6306, 0
    %v6308 = vsel %vm6307, %v6306, 0
    %v6309 = vshrl.u32 %v6308, 5
    %v6310 = vand.u32 %v6308, 31
    %v6311 = vsub.s32 32, %v6310
    %v6312 = vshrl.u32 683565275, %v6311
    %v6313 = vshll.u32 683565275, %v6310
    %v6314 = vshrl.u32 2475754826, %v6311
    %v6315 = vor.u32 %v6313, %v6314
    %v6316 = vshll.u32 2475754826, %v6310
    %v6317 = vshrl.u32 2131351028, %v6311
    %v6318 = vor.u32 %v6316, %v6317
    %v6319 = vshll.u32 2131351028, %v6310
    %v6320 = vshrl.u32 2102212464, %v6311
    %v6321 = vor.u32 %v6319, %v6320
    %v6322 = vshll.u32 2102212464, %v6310
    %v6323 = vshrl.u32 920167782, %v6311
    %v6324 = vor.u32 %v6322, %v6323
    %v6325 = vshll.u32 920167782, %v6310
    %v6326 = vshrl.u32 1326507024, %v6311
    %v6327 = vor.u32 %v6325, %v6326
    %vm6328 = vcmp.lt.s32.totalorder %v6309, 1
    %vm6329 = vcmp.lt.s32.totalorder %v6309, 2
    %vm6330 = vcmp.lt.s32.totalorder %v6309, 3
    %vm6331 = vcmp.lt.s32.totalorder %v6309, 4
    %v6332 = vsel %vm6328, %v6312, %v6315
    %v6333 = vsel %vm6331, %v6321, 2102212464
    %v6334 = vsel %vm6330, %v6318, %v6333
    %v6335 = vsel %vm6329, %v6332, %v6334
    %v6336 = vsel %vm6328, %v6315, %v6318
    %v6337 = vsel %vm6331, %v6324, 920167782
    %v6338 = vsel %vm6330, %v6321, %v6337
    %v6339 = vsel %vm6329, %v6336, %v6338
    %v6340 = vsel %vm6328, %v6318, %v6321
    %v6341 = vsel %vm6331, %v6327, 1326507024
    %v6342 = vsel %vm6330, %v6324, %v6341
    %v6343 = vsel %vm6329, %v6340, %v6342
    %v6344 = vshll.u32 %v6304, 8
    %v6345 = vmul.u32.u64.compose %v6344, %v6343
    %v6346 = vextract.low.u32 %v6345
    %v6347 = vextract.high.u32 %v6345
    %v6348 = vmul.u32.u64.compose %v6344, %v6339
    %v6349 = vextract.low.u32 %v6348
    %v6350 = vextract.high.u32 %v6348
    %v6351 = vmul.u32 %v6344, %v6335
    %v6352 = vadd.s32 %v6347, %v6349
    %vm6353 = vc.u32 %v6347, %v6349
    %v6354 = vadd.s32 %v6350, 1
    %v6355 = vsel %vm6353, %v6354, %v6350
    %v6356 = vadd.s32 %v6351, %v6355
    %v6357 = vadd.s32 %v6356, 536870912
    %v6358 = vshrl.u32 %v6357, 30
    %v6359 = vshll.u32 %v6358, 30
    %v6360 = vsub.s32 %v6356, %v6359
    %vm6361 = vcmp.lt.s32.totalorder %v6360, 0
    %v6362 = vsub.s32 0, %v6360
    %v6363 = vsel %vm6361, %v6362, %v6360
    %v6364 = vclz %v6363
    %v6365 = vsub.s32 %v6364, 2
    %vm6366 = vcmp.gt.s32.totalorder 0, %v6365
    %v6367 = vsel %vm6366, 0, %v6365
    %v6368 = vsub.s32 32, %v6367
    %v6369 = vshll.u32 %v6360, %v6367
    %v6370 = vshrl.u32 %v6352, %v6368
    %v6371 = vor.u32 %v6369, %v6370
    %v6372 = vsub.s32 4294967266, %v6367
    %v6373 = vadd.s32 %v6372, 127
    %v6374 = vshll.u32 %v6373, 23
    %v6375 = vor.u32 4788187, %v6374
    %v6376 = vand.u32 2147483647, %v6375
    %v6378 = vcvt.s32.f32 %v6371
    %v6379 = vmul.f32 %v6378, %v6376
    %v6380 = vxor.u32 %v6379, 2147483648
    %v6381 = vsel %vm6298, %v6380, %v6379
    %v6382 = vsub.s32 4, %v6358
    %v6383 = vsel %vm6298, %v6382, %v6358
    %v6384 = vsel %vm6297, %v6178, %v6381
    %v6385 = vsel %vm6297, 0, %v6383
    %v6386 = vcosq.f32.pop %v6384
    %v6387 = vsinq.f32.pop %v6384
    %vm6388 = vweird.f32 %v6178
    %v6389 = vadd.s32 %v6385, 3
    %v6390 = vand.u32 %v6389, 3
    %vm6391 = vcmp.lt.s32.totalorder %v6390, 2
    %vm6392 = vcmp.eq.s32.totalorder %v6390, 0
    %v6393 = vxor.u32 %v6387, 2147483648
    %v6394 = vsel %vm6392, %v6386, %v6393
    %vm6395 = vcmp.eq.s32.totalorder %v6390, 2
    %v6396 = vxor.u32 %v6386, 2147483648
    %v6397 = vsel %vm6395, %v6396, %v6387
    %v6398 = vsel %vm6391, %v6394, %v6397
    %v6399 = vsel %vm6388, nan, %v6398
    %v6400 = vand.u32 2147483647, %v6179
    %vm6401 = vcmp.le.f32.partialorder %v6400, 0.7853982
    %vm6402 = vcmp.lt.s32.totalorder %v6179, 0
    %v6403 = vand.u32 %v6179, 2139095040
    %v6404 = vshrl.u32 %v6403, 23
    %v6405 = vsub.s32 %v6404, 127
    %v6406 = vand.u32 2147483647, %v6179
    %v6407 = vand.u32 %v6406, 8388607
    %v6408 = vor.u32 %v6407, 8388608
    %v6409 = vsub.s32 0, %v6408
    %v6410 = vadd.s32 %v6405, 1
    %vm6411 = vcmp.gt.s32.totalorder %v6410, 0
    %v6412 = vsel %vm6411, %v6410, 0
    %v6413 = vshrl.u32 %v6412, 5
    %v6414 = vand.u32 %v6412, 31
    %v6415 = vsub.s32 32, %v6414
    %v6416 = vshrl.u32 683565275, %v6415
    %v6417 = vshll.u32 683565275, %v6414
    %v6418 = vshrl.u32 2475754826, %v6415
    %v6419 = vor.u32 %v6417, %v6418
    %v6420 = vshll.u32 2475754826, %v6414
    %v6421 = vshrl.u32 2131351028, %v6415
    %v6422 = vor.u32 %v6420, %v6421
    %v6423 = vshll.u32 2131351028, %v6414
    %v6424 = vshrl.u32 2102212464, %v6415
    %v6425 = vor.u32 %v6423, %v6424
    %v6426 = vshll.u32 2102212464, %v6414
    %v6427 = vshrl.u32 920167782, %v6415
    %v6428 = vor.u32 %v6426, %v6427
    %v6429 = vshll.u32 920167782, %v6414
    %v6430 = vshrl.u32 1326507024, %v6415
    %v6431 = vor.u32 %v6429, %v6430
    %vm6432 = vcmp.lt.s32.totalorder %v6413, 1
    %vm6433 = vcmp.lt.s32.totalorder %v6413, 2
    %vm6434 = vcmp.lt.s32.totalorder %v6413, 3
    %vm6435 = vcmp.lt.s32.totalorder %v6413, 4
    %v6436 = vsel %vm6432, %v6416, %v6419
    %v6437 = vsel %vm6435, %v6425, 2102212464
    %v6438 = vsel %vm6434, %v6422, %v6437
    %v6439 = vsel %vm6433, %v6436, %v6438
    %v6440 = vsel %vm6432, %v6419, %v6422
    %v6441 = vsel %vm6435, %v6428, 920167782
    %v6442 = vsel %vm6434, %v6425, %v6441
    %v6443 = vsel %vm6433, %v6440, %v6442
    %v6444 = vsel %vm6432, %v6422, %v6425
    %v6445 = vsel %vm6435, %v6431, 1326507024
    %v6446 = vsel %vm6434, %v6428, %v6445
    %v6447 = vsel %vm6433, %v6444, %v6446
    %v6448 = vshll.u32 %v6408, 8
    %v6449 = vmul.u32.u64.compose %v6448, %v6447
    %v6450 = vextract.low.u32 %v6449
    %v6451 = vextract.high.u32 %v6449
    %v6452 = vmul.u32.u64.compose %v6448, %v6443
    %v6453 = vextract.low.u32 %v6452
    %v6454 = vextract.high.u32 %v6452
    %v6455 = vmul.u32 %v6448, %v6439
    %v6456 = vadd.s32 %v6451, %v6453
    %vm6457 = vc.u32 %v6451, %v6453
    %v6458 = vadd.s32 %v6454, 1
    %v6459 = vsel %vm6457, %v6458, %v6454
    %v6460 = vadd.s32 %v6455, %v6459
    %v6461 = vadd.s32 %v6460, 536870912
    %v6462 = vshrl.u32 %v6461, 30
    %v6463 = vshll.u32 %v6462, 30
    %v6464 = vsub.s32 %v6460, %v6463
    %vm6465 = vcmp.lt.s32.totalorder %v6464, 0
    %v6466 = vsub.s32 0, %v6464
    %v6467 = vsel %vm6465, %v6466, %v6464
    %v6468 = vclz %v6467
    %v6469 = vsub.s32 %v6468, 2
    %vm6470 = vcmp.gt.s32.totalorder 0, %v6469
    %v6471 = vsel %vm6470, 0, %v6469
    %v6472 = vsub.s32 32, %v6471
    %v6473 = vshll.u32 %v6464, %v6471
    %v6474 = vshrl.u32 %v6456, %v6472
    %v6475 = vor.u32 %v6473, %v6474
    %v6476 = vsub.s32 4294967266, %v6471
    %v6477 = vadd.s32 %v6476, 127
    %v6478 = vshll.u32 %v6477, 23
    %v6479 = vor.u32 4788187, %v6478
    %v6480 = vand.u32 2147483647, %v6479
    %v6482 = vcvt.s32.f32 %v6475
    %v6483 = vmul.f32 %v6482, %v6480
    %v6484 = vxor.u32 %v6483, 2147483648
    %v6485 = vsel %vm6402, %v6484, %v6483
    %v6486 = vsub.s32 4, %v6462
    %v6487 = vsel %vm6402, %v6486, %v6462
    %v6488 = vsel %vm6401, %v6179, %v6485
    %v6489 = vsel %vm6401, 0, %v6487
    %v6490 = vcosq.f32.pop %v6488
    %v6491 = vsinq.f32.pop %v6488
    %vm6492 = vweird.f32 %v6179
    %v6493 = vadd.s32 %v6489, 3
    %v6494 = vand.u32 %v6493, 3
    %vm6495 = vcmp.lt.s32.totalorder %v6494, 2
    %vm6496 = vcmp.eq.s32.totalorder %v6494, 0
    %v6497 = vxor.u32 %v6491, 2147483648
    %v6498 = vsel %vm6496, %v6490, %v6497
    %vm6499 = vcmp.eq.s32.totalorder %v6494, 2
    %v6500 = vxor.u32 %v6490, 2147483648
    %v6501 = vsel %vm6499, %v6500, %v6491
    %v6502 = vsel %vm6495, %v6498, %v6501
    %v6503 = vsel %vm6492, nan, %v6502
    %v6504 = vand.u32 2147483647, %v6180
    %vm6505 = vcmp.le.f32.partialorder %v6504, 0.7853982
    %vm6506 = vcmp.lt.s32.totalorder %v6180, 0
    %v6507 = vand.u32 %v6180, 2139095040
    %v6508 = vshrl.u32 %v6507, 23
    %v6509 = vsub.s32 %v6508, 127
    %v6510 = vand.u32 2147483647, %v6180
    %v6511 = vand.u32 %v6510, 8388607
    %v6512 = vor.u32 %v6511, 8388608
    %v6513 = vsub.s32 0, %v6512
    %v6514 = vadd.s32 %v6509, 1
    %vm6515 = vcmp.gt.s32.totalorder %v6514, 0
    %v6516 = vsel %vm6515, %v6514, 0
    %v6517 = vshrl.u32 %v6516, 5
    %v6518 = vand.u32 %v6516, 31
    %v6519 = vsub.s32 32, %v6518
    %v6520 = vshrl.u32 683565275, %v6519
    %v6521 = vshll.u32 683565275, %v6518
    %v6522 = vshrl.u32 2475754826, %v6519
    %v6523 = vor.u32 %v6521, %v6522
    %v6524 = vshll.u32 2475754826, %v6518
    %v6525 = vshrl.u32 2131351028, %v6519
    %v6526 = vor.u32 %v6524, %v6525
    %v6527 = vshll.u32 2131351028, %v6518
    %v6528 = vshrl.u32 2102212464, %v6519
    %v6529 = vor.u32 %v6527, %v6528
    %v6530 = vshll.u32 2102212464, %v6518
    %v6531 = vshrl.u32 920167782, %v6519
    %v6532 = vor.u32 %v6530, %v6531
    %v6533 = vshll.u32 920167782, %v6518
    %v6534 = vshrl.u32 1326507024, %v6519
    %v6535 = vor.u32 %v6533, %v6534
    %vm6536 = vcmp.lt.s32.totalorder %v6517, 1
    %vm6537 = vcmp.lt.s32.totalorder %v6517, 2
    %vm6538 = vcmp.lt.s32.totalorder %v6517, 3
    %vm6539 = vcmp.lt.s32.totalorder %v6517, 4
    %v6540 = vsel %vm6536, %v6520, %v6523
    %v6541 = vsel %vm6539, %v6529, 2102212464
    %v6542 = vsel %vm6538, %v6526, %v6541
    %v6543 = vsel %vm6537, %v6540, %v6542
    %v6544 = vsel %vm6536, %v6523, %v6526
    %v6545 = vsel %vm6539, %v6532, 920167782
    %v6546 = vsel %vm6538, %v6529, %v6545
    %v6547 = vsel %vm6537, %v6544, %v6546
    %v6548 = vsel %vm6536, %v6526, %v6529
    %v6549 = vsel %vm6539, %v6535, 1326507024
    %v6550 = vsel %vm6538, %v6532, %v6549
    %v6551 = vsel %vm6537, %v6548, %v6550
    %v6552 = vshll.u32 %v6512, 8
    %v6553 = vmul.u32.u64.compose %v6552, %v6551
    %v6554 = vextract.low.u32 %v6553
    %v6555 = vextract.high.u32 %v6553
    %v6556 = vmul.u32.u64.compose %v6552, %v6547
    %v6557 = vextract.low.u32 %v6556
    %v6558 = vextract.high.u32 %v6556
    %v6559 = vmul.u32 %v6552, %v6543
    %v6560 = vadd.s32 %v6555, %v6557
    %vm6561 = vc.u32 %v6555, %v6557
    %v6562 = vadd.s32 %v6558, 1
    %v6563 = vsel %vm6561, %v6562, %v6558
    %v6564 = vadd.s32 %v6559, %v6563
    %v6565 = vadd.s32 %v6564, 536870912
    %v6566 = vshrl.u32 %v6565, 30
    %v6567 = vshll.u32 %v6566, 30
    %v6568 = vsub.s32 %v6564, %v6567
    %vm6569 = vcmp.lt.s32.totalorder %v6568, 0
    %v6570 = vsub.s32 0, %v6568
    %v6571 = vsel %vm6569, %v6570, %v6568
    %v6572 = vclz %v6571
    %v6573 = vsub.s32 %v6572, 2
    %vm6574 = vcmp.gt.s32.totalorder 0, %v6573
    %v6575 = vsel %vm6574, 0, %v6573
    %v6576 = vsub.s32 32, %v6575
    %v6577 = vshll.u32 %v6568, %v6575
    %v6578 = vshrl.u32 %v6560, %v6576
    %v6579 = vor.u32 %v6577, %v6578
    %v6580 = vsub.s32 4294967266, %v6575
    %v6581 = vadd.s32 %v6580, 127
    %v6582 = vshll.u32 %v6581, 23
    %v6583 = vor.u32 4788187, %v6582
    %v6584 = vand.u32 2147483647, %v6583
    %v6586 = vcvt.s32.f32 %v6579
    %v6587 = vmul.f32 %v6586, %v6584
    %v6588 = vxor.u32 %v6587, 2147483648
    %v6589 = vsel %vm6506, %v6588, %v6587
    %v6590 = vsub.s32 4, %v6566
    %v6591 = vsel %vm6506, %v6590, %v6566
    %v6592 = vsel %vm6505, %v6180, %v6589
    %v6593 = vsel %vm6505, 0, %v6591
    %v6594 = vcosq.f32.pop %v6592
    %v6595 = vsinq.f32.pop %v6592
    %vm6596 = vweird.f32 %v6180
    %v6597 = vadd.s32 %v6593, 3
    %v6598 = vand.u32 %v6597, 3
    %vm6599 = vcmp.lt.s32.totalorder %v6598, 2
    %vm6600 = vcmp.eq.s32.totalorder %v6598, 0
    %v6601 = vxor.u32 %v6595, 2147483648
    %v6602 = vsel %vm6600, %v6594, %v6601
    %vm6603 = vcmp.eq.s32.totalorder %v6598, 2
    %v6604 = vxor.u32 %v6594, 2147483648
    %v6605 = vsel %vm6603, %v6604, %v6595
    %v6606 = vsel %vm6599, %v6602, %v6605
    %v6607 = vsel %vm6596, nan, %v6606
    %v6608 = vand.u32 2147483647, %v6181
    %vm6609 = vcmp.le.f32.partialorder %v6608, 0.7853982
    %vm6610 = vcmp.lt.s32.totalorder %v6181, 0
    %v6611 = vand.u32 %v6181, 2139095040
    %v6612 = vshrl.u32 %v6611, 23
    %v6613 = vsub.s32 %v6612, 127
    %v6614 = vand.u32 2147483647, %v6181
    %v6615 = vand.u32 %v6614, 8388607
    %v6616 = vor.u32 %v6615, 8388608
    %v6617 = vsub.s32 0, %v6616
    %v6618 = vadd.s32 %v6613, 1
    %vm6619 = vcmp.gt.s32.totalorder %v6618, 0
    %v6620 = vsel %vm6619, %v6618, 0
    %v6621 = vshrl.u32 %v6620, 5
    %v6622 = vand.u32 %v6620, 31
    %v6623 = vsub.s32 32, %v6622
    %v6624 = vshrl.u32 683565275, %v6623
    %v6625 = vshll.u32 683565275, %v6622
    %v6626 = vshrl.u32 2475754826, %v6623
    %v6627 = vor.u32 %v6625, %v6626
    %v6628 = vshll.u32 2475754826, %v6622
    %v6629 = vshrl.u32 2131351028, %v6623
    %v6630 = vor.u32 %v6628, %v6629
    %v6631 = vshll.u32 2131351028, %v6622
    %v6632 = vshrl.u32 2102212464, %v6623
    %v6633 = vor.u32 %v6631, %v6632
    %v6634 = vshll.u32 2102212464, %v6622
    %v6635 = vshrl.u32 920167782, %v6623
    %v6636 = vor.u32 %v6634, %v6635
    %v6637 = vshll.u32 920167782, %v6622
    %v6638 = vshrl.u32 1326507024, %v6623
    %v6639 = vor.u32 %v6637, %v6638
    %vm6640 = vcmp.lt.s32.totalorder %v6621, 1
    %vm6641 = vcmp.lt.s32.totalorder %v6621, 2
    %vm6642 = vcmp.lt.s32.totalorder %v6621, 3
    %vm6643 = vcmp.lt.s32.totalorder %v6621, 4
    %v6644 = vsel %vm6640, %v6624, %v6627
    %v6645 = vsel %vm6643, %v6633, 2102212464
    %v6646 = vsel %vm6642, %v6630, %v6645
    %v6647 = vsel %vm6641, %v6644, %v6646
    %v6648 = vsel %vm6640, %v6627, %v6630
    %v6649 = vsel %vm6643, %v6636, 920167782
    %v6650 = vsel %vm6642, %v6633, %v6649
    %v6651 = vsel %vm6641, %v6648, %v6650
    %v6652 = vsel %vm6640, %v6630, %v6633
    %v6653 = vsel %vm6643, %v6639, 1326507024
    %v6654 = vsel %vm6642, %v6636, %v6653
    %v6655 = vsel %vm6641, %v6652, %v6654
    %v6656 = vshll.u32 %v6616, 8
    %v6657 = vmul.u32.u64.compose %v6656, %v6655
    %v6658 = vextract.low.u32 %v6657
    %v6659 = vextract.high.u32 %v6657
    %v6660 = vmul.u32.u64.compose %v6656, %v6651
    %v6661 = vextract.low.u32 %v6660
    %v6662 = vextract.high.u32 %v6660
    %v6663 = vmul.u32 %v6656, %v6647
    %v6664 = vadd.s32 %v6659, %v6661
    %vm6665 = vc.u32 %v6659, %v6661
    %v6666 = vadd.s32 %v6662, 1
    %v6667 = vsel %vm6665, %v6666, %v6662
    %v6668 = vadd.s32 %v6663, %v6667
    %v6669 = vadd.s32 %v6668, 536870912
    %v6670 = vshrl.u32 %v6669, 30
    %v6671 = vshll.u32 %v6670, 30
    %v6672 = vsub.s32 %v6668, %v6671
    %vm6673 = vcmp.lt.s32.totalorder %v6672, 0
    %v6674 = vsub.s32 0, %v6672
    %v6675 = vsel %vm6673, %v6674, %v6672
    %v6676 = vclz %v6675
    %v6677 = vsub.s32 %v6676, 2
    %vm6678 = vcmp.gt.s32.totalorder 0, %v6677
    %v6679 = vsel %vm6678, 0, %v6677
    %v6680 = vsub.s32 32, %v6679
    %v6681 = vshll.u32 %v6672, %v6679
    %v6682 = vshrl.u32 %v6664, %v6680
    %v6683 = vor.u32 %v6681, %v6682
    %v6684 = vsub.s32 4294967266, %v6679
    %v6685 = vadd.s32 %v6684, 127
    %v6686 = vshll.u32 %v6685, 23
    %v6687 = vor.u32 4788187, %v6686
    %v6688 = vand.u32 2147483647, %v6687
    %v6690 = vcvt.s32.f32 %v6683
    %v6691 = vmul.f32 %v6690, %v6688
    %v6692 = vxor.u32 %v6691, 2147483648
    %v6693 = vsel %vm6610, %v6692, %v6691
    %v6694 = vsub.s32 4, %v6670
    %v6695 = vsel %vm6610, %v6694, %v6670
    %v6696 = vsel %vm6609, %v6181, %v6693
    %v6697 = vsel %vm6609, 0, %v6695
    %v6698 = vcosq.f32.pop %v6696
    %v6699 = vsinq.f32.pop %v6696
    %vm6700 = vweird.f32 %v6181
    %v6701 = vadd.s32 %v6697, 3
    %v6702 = vand.u32 %v6701, 3
    %vm6703 = vcmp.lt.s32.totalorder %v6702, 2
    %vm6704 = vcmp.eq.s32.totalorder %v6702, 0
    %v6705 = vxor.u32 %v6699, 2147483648
    %v6706 = vsel %vm6704, %v6698, %v6705
    %vm6707 = vcmp.eq.s32.totalorder %v6702, 2
    %v6708 = vxor.u32 %v6698, 2147483648
    %v6709 = vsel %vm6707, %v6708, %v6699
    %v6710 = vsel %vm6703, %v6706, %v6709
    %v6711 = vsel %vm6700, nan, %v6710
    %v6712 = vand.u32 2147483647, %v6182
    %vm6713 = vcmp.le.f32.partialorder %v6712, 0.7853982
    %vm6714 = vcmp.lt.s32.totalorder %v6182, 0
    %v6715 = vand.u32 %v6182, 2139095040
    %v6716 = vshrl.u32 %v6715, 23
    %v6717 = vsub.s32 %v6716, 127
    %v6718 = vand.u32 2147483647, %v6182
    %v6719 = vand.u32 %v6718, 8388607
    %v6720 = vor.u32 %v6719, 8388608
    %v6721 = vsub.s32 0, %v6720
    %v6722 = vadd.s32 %v6717, 1
    %vm6723 = vcmp.gt.s32.totalorder %v6722, 0
    %v6724 = vsel %vm6723, %v6722, 0
    %v6725 = vshrl.u32 %v6724, 5
    %v6726 = vand.u32 %v6724, 31
    %v6727 = vsub.s32 32, %v6726
    %v6728 = vshrl.u32 683565275, %v6727
    %v6729 = vshll.u32 683565275, %v6726
    %v6730 = vshrl.u32 2475754826, %v6727
    %v6731 = vor.u32 %v6729, %v6730
    %v6732 = vshll.u32 2475754826, %v6726
    %v6733 = vshrl.u32 2131351028, %v6727
    %v6734 = vor.u32 %v6732, %v6733
    %v6735 = vshll.u32 2131351028, %v6726
    %v6736 = vshrl.u32 2102212464, %v6727
    %v6737 = vor.u32 %v6735, %v6736
    %v6738 = vshll.u32 2102212464, %v6726
    %v6739 = vshrl.u32 920167782, %v6727
    %v6740 = vor.u32 %v6738, %v6739
    %v6741 = vshll.u32 920167782, %v6726
    %v6742 = vshrl.u32 1326507024, %v6727
    %v6743 = vor.u32 %v6741, %v6742
    %vm6744 = vcmp.lt.s32.totalorder %v6725, 1
    %vm6745 = vcmp.lt.s32.totalorder %v6725, 2
    %vm6746 = vcmp.lt.s32.totalorder %v6725, 3
    %vm6747 = vcmp.lt.s32.totalorder %v6725, 4
    %v6748 = vsel %vm6744, %v6728, %v6731
    %v6749 = vsel %vm6747, %v6737, 2102212464
    %v6750 = vsel %vm6746, %v6734, %v6749
    %v6751 = vsel %vm6745, %v6748, %v6750
    %v6752 = vsel %vm6744, %v6731, %v6734
    %v6753 = vsel %vm6747, %v6740, 920167782
    %v6754 = vsel %vm6746, %v6737, %v6753
    %v6755 = vsel %vm6745, %v6752, %v6754
    %v6756 = vsel %vm6744, %v6734, %v6737
    %v6757 = vsel %vm6747, %v6743, 1326507024
    %v6758 = vsel %vm6746, %v6740, %v6757
    %v6759 = vsel %vm6745, %v6756, %v6758
    %v6760 = vshll.u32 %v6720, 8
    %v6761 = vmul.u32.u64.compose %v6760, %v6759
    %v6762 = vextract.low.u32 %v6761
    %v6763 = vextract.high.u32 %v6761
    %v6764 = vmul.u32.u64.compose %v6760, %v6755
    %v6765 = vextract.low.u32 %v6764
    %v6766 = vextract.high.u32 %v6764
    %v6767 = vmul.u32 %v6760, %v6751
    %v6768 = vadd.s32 %v6763, %v6765
    %vm6769 = vc.u32 %v6763, %v6765
    %v6770 = vadd.s32 %v6766, 1
    %v6771 = vsel %vm6769, %v6770, %v6766
    %v6772 = vadd.s32 %v6767, %v6771
    %v6773 = vadd.s32 %v6772, 536870912
    %v6774 = vshrl.u32 %v6773, 30
    %v6775 = vshll.u32 %v6774, 30
    %v6776 = vsub.s32 %v6772, %v6775
    %vm6777 = vcmp.lt.s32.totalorder %v6776, 0
    %v6778 = vsub.s32 0, %v6776
    %v6779 = vsel %vm6777, %v6778, %v6776
    %v6780 = vclz %v6779
    %v6781 = vsub.s32 %v6780, 2
    %vm6782 = vcmp.gt.s32.totalorder 0, %v6781
    %v6783 = vsel %vm6782, 0, %v6781
    %v6784 = vsub.s32 32, %v6783
    %v6785 = vshll.u32 %v6776, %v6783
    %v6786 = vshrl.u32 %v6768, %v6784
    %v6787 = vor.u32 %v6785, %v6786
    %v6788 = vsub.s32 4294967266, %v6783
    %v6789 = vadd.s32 %v6788, 127
    %v6790 = vshll.u32 %v6789, 23
    %v6791 = vor.u32 4788187, %v6790
    %v6792 = vand.u32 2147483647, %v6791
    %v6794 = vcvt.s32.f32 %v6787
    %v6795 = vmul.f32 %v6794, %v6792
    %v6796 = vxor.u32 %v6795, 2147483648
    %v6797 = vsel %vm6714, %v6796, %v6795
    %v6798 = vsub.s32 4, %v6774
    %v6799 = vsel %vm6714, %v6798, %v6774
    %v6800 = vsel %vm6713, %v6182, %v6797
    %v6801 = vsel %vm6713, 0, %v6799
    %v6802 = vcosq.f32.pop %v6800
    %v6803 = vsinq.f32.pop %v6800
    %vm6804 = vweird.f32 %v6182
    %v6805 = vadd.s32 %v6801, 3
    %v6806 = vand.u32 %v6805, 3
    %vm6807 = vcmp.lt.s32.totalorder %v6806, 2
    %vm6808 = vcmp.eq.s32.totalorder %v6806, 0
    %v6809 = vxor.u32 %v6803, 2147483648
    %v6810 = vsel %vm6808, %v6802, %v6809
    %vm6811 = vcmp.eq.s32.totalorder %v6806, 2
    %v6812 = vxor.u32 %v6802, 2147483648
    %v6813 = vsel %vm6811, %v6812, %v6803
    %v6814 = vsel %vm6807, %v6810, %v6813
    %v6815 = vsel %vm6804, nan, %v6814
    %v6816 = vand.u32 2147483647, %v6183
    %vm6817 = vcmp.le.f32.partialorder %v6816, 0.7853982
    %vm6818 = vcmp.lt.s32.totalorder %v6183, 0
    %v6819 = vand.u32 %v6183, 2139095040
    %v6820 = vshrl.u32 %v6819, 23
    %v6821 = vsub.s32 %v6820, 127
    %v6822 = vand.u32 2147483647, %v6183
    %v6823 = vand.u32 %v6822, 8388607
    %v6824 = vor.u32 %v6823, 8388608
    %v6825 = vsub.s32 0, %v6824
    %v6826 = vadd.s32 %v6821, 1
    %vm6827 = vcmp.gt.s32.totalorder %v6826, 0
    %v6828 = vsel %vm6827, %v6826, 0
    %v6829 = vshrl.u32 %v6828, 5
    %v6830 = vand.u32 %v6828, 31
    %v6831 = vsub.s32 32, %v6830
    %v6832 = vshrl.u32 683565275, %v6831
    %v6833 = vshll.u32 683565275, %v6830
    %v6834 = vshrl.u32 2475754826, %v6831
    %v6835 = vor.u32 %v6833, %v6834
    %v6836 = vshll.u32 2475754826, %v6830
    %v6837 = vshrl.u32 2131351028, %v6831
    %v6838 = vor.u32 %v6836, %v6837
    %v6839 = vshll.u32 2131351028, %v6830
    %v6840 = vshrl.u32 2102212464, %v6831
    %v6841 = vor.u32 %v6839, %v6840
    %v6842 = vshll.u32 2102212464, %v6830
    %v6843 = vshrl.u32 920167782, %v6831
    %v6844 = vor.u32 %v6842, %v6843
    %v6845 = vshll.u32 920167782, %v6830
    %v6846 = vshrl.u32 1326507024, %v6831
    %v6847 = vor.u32 %v6845, %v6846
    %vm6848 = vcmp.lt.s32.totalorder %v6829, 1
    %vm6849 = vcmp.lt.s32.totalorder %v6829, 2
    %vm6850 = vcmp.lt.s32.totalorder %v6829, 3
    %vm6851 = vcmp.lt.s32.totalorder %v6829, 4
    %v6852 = vsel %vm6848, %v6832, %v6835
    %v6853 = vsel %vm6851, %v6841, 2102212464
    %v6854 = vsel %vm6850, %v6838, %v6853
    %v6855 = vsel %vm6849, %v6852, %v6854
    %v6856 = vsel %vm6848, %v6835, %v6838
    %v6857 = vsel %vm6851, %v6844, 920167782
    %v6858 = vsel %vm6850, %v6841, %v6857
    %v6859 = vsel %vm6849, %v6856, %v6858
    %v6860 = vsel %vm6848, %v6838, %v6841
    %v6861 = vsel %vm6851, %v6847, 1326507024
    %v6862 = vsel %vm6850, %v6844, %v6861
    %v6863 = vsel %vm6849, %v6860, %v6862
    %v6864 = vshll.u32 %v6824, 8
    %v6865 = vmul.u32.u64.compose %v6864, %v6863
    %v6866 = vextract.low.u32 %v6865
    %v6867 = vextract.high.u32 %v6865
    %v6868 = vmul.u32.u64.compose %v6864, %v6859
    %v6869 = vextract.low.u32 %v6868
    %v6870 = vextract.high.u32 %v6868
    %v6871 = vmul.u32 %v6864, %v6855
    %v6872 = vadd.s32 %v6867, %v6869
    %vm6873 = vc.u32 %v6867, %v6869
    %v6874 = vadd.s32 %v6870, 1
    %v6875 = vsel %vm6873, %v6874, %v6870
    %v6876 = vadd.s32 %v6871, %v6875
    %v6877 = vadd.s32 %v6876, 536870912
    %v6878 = vshrl.u32 %v6877, 30
    %v6879 = vshll.u32 %v6878, 30
    %v6880 = vsub.s32 %v6876, %v6879
    %vm6881 = vcmp.lt.s32.totalorder %v6880, 0
    %v6882 = vsub.s32 0, %v6880
    %v6883 = vsel %vm6881, %v6882, %v6880
    %v6884 = vclz %v6883
    %v6885 = vsub.s32 %v6884, 2
    %vm6886 = vcmp.gt.s32.totalorder 0, %v6885
    %v6887 = vsel %vm6886, 0, %v6885
    %v6888 = vsub.s32 32, %v6887
    %v6889 = vshll.u32 %v6880, %v6887
    %v6890 = vshrl.u32 %v6872, %v6888
    %v6891 = vor.u32 %v6889, %v6890
    %v6892 = vsub.s32 4294967266, %v6887
    %v6893 = vadd.s32 %v6892, 127
    %v6894 = vshll.u32 %v6893, 23
    %v6895 = vor.u32 4788187, %v6894
    %v6896 = vand.u32 2147483647, %v6895
    %v6898 = vcvt.s32.f32 %v6891
    %v6899 = vmul.f32 %v6898, %v6896
    %v6900 = vxor.u32 %v6899, 2147483648
    %v6901 = vsel %vm6818, %v6900, %v6899
    %v6902 = vsub.s32 4, %v6878
    %v6903 = vsel %vm6818, %v6902, %v6878
    %v6904 = vsel %vm6817, %v6183, %v6901
    %v6905 = vsel %vm6817, 0, %v6903
    %v6906 = vcosq.f32.pop %v6904
    %v6907 = vsinq.f32.pop %v6904
    %vm6908 = vweird.f32 %v6183
    %v6909 = vadd.s32 %v6905, 3
    %v6910 = vand.u32 %v6909, 3
    %vm6911 = vcmp.lt.s32.totalorder %v6910, 2
    %vm6912 = vcmp.eq.s32.totalorder %v6910, 0
    %v6913 = vxor.u32 %v6907, 2147483648
    %v6914 = vsel %vm6912, %v6906, %v6913
    %vm6915 = vcmp.eq.s32.totalorder %v6910, 2
    %v6916 = vxor.u32 %v6906, 2147483648
    %v6917 = vsel %vm6915, %v6916, %v6907
    %v6918 = vsel %vm6911, %v6914, %v6917
    %v6919 = vsel %vm6908, nan, %v6918
    %v6920 = vand.u32 2147483647, %v6184
    %vm6921 = vcmp.le.f32.partialorder %v6920, 0.7853982
    %vm6922 = vcmp.lt.s32.totalorder %v6184, 0
    %v6923 = vand.u32 %v6184, 2139095040
    %v6924 = vshrl.u32 %v6923, 23
    %v6925 = vsub.s32 %v6924, 127
    %v6926 = vand.u32 2147483647, %v6184
    %v6927 = vand.u32 %v6926, 8388607
    %v6928 = vor.u32 %v6927, 8388608
    %v6929 = vsub.s32 0, %v6928
    %v6930 = vadd.s32 %v6925, 1
    %vm6931 = vcmp.gt.s32.totalorder %v6930, 0
    %v6932 = vsel %vm6931, %v6930, 0
    %v6933 = vshrl.u32 %v6932, 5
    %v6934 = vand.u32 %v6932, 31
    %v6935 = vsub.s32 32, %v6934
    %v6936 = vshrl.u32 683565275, %v6935
    %v6937 = vshll.u32 683565275, %v6934
    %v6938 = vshrl.u32 2475754826, %v6935
    %v6939 = vor.u32 %v6937, %v6938
    %v6940 = vshll.u32 2475754826, %v6934
    %v6941 = vshrl.u32 2131351028, %v6935
    %v6942 = vor.u32 %v6940, %v6941
    %v6943 = vshll.u32 2131351028, %v6934
    %v6944 = vshrl.u32 2102212464, %v6935
    %v6945 = vor.u32 %v6943, %v6944
    %v6946 = vshll.u32 2102212464, %v6934
    %v6947 = vshrl.u32 920167782, %v6935
    %v6948 = vor.u32 %v6946, %v6947
    %v6949 = vshll.u32 920167782, %v6934
    %v6950 = vshrl.u32 1326507024, %v6935
    %v6951 = vor.u32 %v6949, %v6950
    %vm6952 = vcmp.lt.s32.totalorder %v6933, 1
    %vm6953 = vcmp.lt.s32.totalorder %v6933, 2
    %vm6954 = vcmp.lt.s32.totalorder %v6933, 3
    %vm6955 = vcmp.lt.s32.totalorder %v6933, 4
    %v6956 = vsel %vm6952, %v6936, %v6939
    %v6957 = vsel %vm6955, %v6945, 2102212464
    %v6958 = vsel %vm6954, %v6942, %v6957
    %v6959 = vsel %vm6953, %v6956, %v6958
    %v6960 = vsel %vm6952, %v6939, %v6942
    %v6961 = vsel %vm6955, %v6948, 920167782
    %v6962 = vsel %vm6954, %v6945, %v6961
    %v6963 = vsel %vm6953, %v6960, %v6962
    %v6964 = vsel %vm6952, %v6942, %v6945
    %v6965 = vsel %vm6955, %v6951, 1326507024
    %v6966 = vsel %vm6954, %v6948, %v6965
    %v6967 = vsel %vm6953, %v6964, %v6966
    %v6968 = vshll.u32 %v6928, 8
    %v6969 = vmul.u32.u64.compose %v6968, %v6967
    %v6970 = vextract.low.u32 %v6969
    %v6971 = vextract.high.u32 %v6969
    %v6972 = vmul.u32.u64.compose %v6968, %v6963
    %v6973 = vextract.low.u32 %v6972
    %v6974 = vextract.high.u32 %v6972
    %v6975 = vmul.u32 %v6968, %v6959
    %v6976 = vadd.s32 %v6971, %v6973
    %vm6977 = vc.u32 %v6971, %v6973
    %v6978 = vadd.s32 %v6974, 1
    %v6979 = vsel %vm6977, %v6978, %v6974
    %v6980 = vadd.s32 %v6975, %v6979
    %v6981 = vadd.s32 %v6980, 536870912
    %v6982 = vshrl.u32 %v6981, 30
    %v6983 = vshll.u32 %v6982, 30
    %v6984 = vsub.s32 %v6980, %v6983
    %vm6985 = vcmp.lt.s32.totalorder %v6984, 0
    %v6986 = vsub.s32 0, %v6984
    %v6987 = vsel %vm6985, %v6986, %v6984
    %v6988 = vclz %v6987
    %v6989 = vsub.s32 %v6988, 2
    %vm6990 = vcmp.gt.s32.totalorder 0, %v6989
    %v6991 = vsel %vm6990, 0, %v6989
    %v6992 = vsub.s32 32, %v6991
    %v6993 = vshll.u32 %v6984, %v6991
    %v6994 = vshrl.u32 %v6976, %v6992
    %v6995 = vor.u32 %v6993, %v6994
    %v6996 = vsub.s32 4294967266, %v6991
    %v6997 = vadd.s32 %v6996, 127
    %v6998 = vshll.u32 %v6997, 23
    %v6999 = vor.u32 4788187, %v6998
    %v7000 = vand.u32 2147483647, %v6999
    %v7002 = vcvt.s32.f32 %v6995
    %v7003 = vmul.f32 %v7002, %v7000
    %v7004 = vxor.u32 %v7003, 2147483648
    %v7005 = vsel %vm6922, %v7004, %v7003
    %v7006 = vsub.s32 4, %v6982
    %v7007 = vsel %vm6922, %v7006, %v6982
    %v7008 = vsel %vm6921, %v6184, %v7005
    %v7009 = vsel %vm6921, 0, %v7007
    %v7010 = vcosq.f32.pop %v7008
    %v7011 = vsinq.f32.pop %v7008
    %vm7012 = vweird.f32 %v6184
    %v7013 = vadd.s32 %v7009, 3
    %v7014 = vand.u32 %v7013, 3
    %vm7015 = vcmp.lt.s32.totalorder %v7014, 2
    %vm7016 = vcmp.eq.s32.totalorder %v7014, 0
    %v7017 = vxor.u32 %v7011, 2147483648
    %v7018 = vsel %vm7016, %v7010, %v7017
    %vm7019 = vcmp.eq.s32.totalorder %v7014, 2
    %v7020 = vxor.u32 %v7010, 2147483648
    %v7021 = vsel %vm7019, %v7020, %v7011
    %v7022 = vsel %vm7015, %v7018, %v7021
    %v7023 = vsel %vm7012, nan, %v7022
    %v7024 = vand.u32 2147483647, %v6185
    %vm7025 = vcmp.le.f32.partialorder %v7024, 0.7853982
    %vm7026 = vcmp.lt.s32.totalorder %v6185, 0
    %v7027 = vand.u32 %v6185, 2139095040
    %v7028 = vshrl.u32 %v7027, 23
    %v7029 = vsub.s32 %v7028, 127
    %v7030 = vand.u32 2147483647, %v6185
    %v7031 = vand.u32 %v7030, 8388607
    %v7032 = vor.u32 %v7031, 8388608
    %v7033 = vsub.s32 0, %v7032
    %v7034 = vadd.s32 %v7029, 1
    %vm7035 = vcmp.gt.s32.totalorder %v7034, 0
    %v7036 = vsel %vm7035, %v7034, 0
    %v7037 = vshrl.u32 %v7036, 5
    %v7038 = vand.u32 %v7036, 31
    %v7039 = vsub.s32 32, %v7038
    %v7040 = vshrl.u32 683565275, %v7039
    %v7041 = vshll.u32 683565275, %v7038
    %v7042 = vshrl.u32 2475754826, %v7039
    %v7043 = vor.u32 %v7041, %v7042
    %v7044 = vshll.u32 2475754826, %v7038
    %v7045 = vshrl.u32 2131351028, %v7039
    %v7046 = vor.u32 %v7044, %v7045
    %v7047 = vshll.u32 2131351028, %v7038
    %v7048 = vshrl.u32 2102212464, %v7039
    %v7049 = vor.u32 %v7047, %v7048
    %v7050 = vshll.u32 2102212464, %v7038
    %v7051 = vshrl.u32 920167782, %v7039
    %v7052 = vor.u32 %v7050, %v7051
    %v7053 = vshll.u32 920167782, %v7038
    %v7054 = vshrl.u32 1326507024, %v7039
    %v7055 = vor.u32 %v7053, %v7054
    %vm7056 = vcmp.lt.s32.totalorder %v7037, 1
    %vm7057 = vcmp.lt.s32.totalorder %v7037, 2
    %vm7058 = vcmp.lt.s32.totalorder %v7037, 3
    %vm7059 = vcmp.lt.s32.totalorder %v7037, 4
    %v7060 = vsel %vm7056, %v7040, %v7043
    %v7061 = vsel %vm7059, %v7049, 2102212464
    %v7062 = vsel %vm7058, %v7046, %v7061
    %v7063 = vsel %vm7057, %v7060, %v7062
    %v7064 = vsel %vm7056, %v7043, %v7046
    %v7065 = vsel %vm7059, %v7052, 920167782
    %v7066 = vsel %vm7058, %v7049, %v7065
    %v7067 = vsel %vm7057, %v7064, %v7066
    %v7068 = vsel %vm7056, %v7046, %v7049
    %v7069 = vsel %vm7059, %v7055, 1326507024
    %v7070 = vsel %vm7058, %v7052, %v7069
    %v7071 = vsel %vm7057, %v7068, %v7070
    %v7072 = vshll.u32 %v7032, 8
    %v7073 = vmul.u32.u64.compose %v7072, %v7071
    %v7074 = vextract.low.u32 %v7073
    %v7075 = vextract.high.u32 %v7073
    %v7076 = vmul.u32.u64.compose %v7072, %v7067
    %v7077 = vextract.low.u32 %v7076
    %v7078 = vextract.high.u32 %v7076
    %v7079 = vmul.u32 %v7072, %v7063
    %v7080 = vadd.s32 %v7075, %v7077
    %vm7081 = vc.u32 %v7075, %v7077
    %v7082 = vadd.s32 %v7078, 1
    %v7083 = vsel %vm7081, %v7082, %v7078
    %v7084 = vadd.s32 %v7079, %v7083
    %v7085 = vadd.s32 %v7084, 536870912
    %v7086 = vshrl.u32 %v7085, 30
    %v7087 = vshll.u32 %v7086, 30
    %v7088 = vsub.s32 %v7084, %v7087
    %vm7089 = vcmp.lt.s32.totalorder %v7088, 0
    %v7090 = vsub.s32 0, %v7088
    %v7091 = vsel %vm7089, %v7090, %v7088
    %v7092 = vclz %v7091
    %v7093 = vsub.s32 %v7092, 2
    %vm7094 = vcmp.gt.s32.totalorder 0, %v7093
    %v7095 = vsel %vm7094, 0, %v7093
    %v7096 = vsub.s32 32, %v7095
    %v7097 = vshll.u32 %v7088, %v7095
    %v7098 = vshrl.u32 %v7080, %v7096
    %v7099 = vor.u32 %v7097, %v7098
    %v7100 = vsub.s32 4294967266, %v7095
    %v7101 = vadd.s32 %v7100, 127
    %v7102 = vshll.u32 %v7101, 23
    %v7103 = vor.u32 4788187, %v7102
    %v7104 = vand.u32 2147483647, %v7103
    %v7106 = vcvt.s32.f32 %v7099
    %v7107 = vmul.f32 %v7106, %v7104
    %v7108 = vxor.u32 %v7107, 2147483648
    %v7109 = vsel %vm7026, %v7108, %v7107
    %v7110 = vsub.s32 4, %v7086
    %v7111 = vsel %vm7026, %v7110, %v7086
    %v7112 = vsel %vm7025, %v6185, %v7109
    %v7113 = vsel %vm7025, 0, %v7111
    %v7114 = vcosq.f32.pop %v7112
    %v7115 = vsinq.f32.pop %v7112
    %vm7116 = vweird.f32 %v6185
    %v7117 = vadd.s32 %v7113, 3
    %v7118 = vand.u32 %v7117, 3
    %vm7119 = vcmp.lt.s32.totalorder %v7118, 2
    %vm7120 = vcmp.eq.s32.totalorder %v7118, 0
    %v7121 = vxor.u32 %v7115, 2147483648
    %v7122 = vsel %vm7120, %v7114, %v7121
    %vm7123 = vcmp.eq.s32.totalorder %v7118, 2
    %v7124 = vxor.u32 %v7114, 2147483648
    %v7125 = vsel %vm7123, %v7124, %v7115
    %v7126 = vsel %vm7119, %v7122, %v7125
    %v7127 = vsel %vm7116, nan, %v7126
    %v7128 = vand.u32 2147483647, %v6186
    %vm7129 = vcmp.le.f32.partialorder %v7128, 0.7853982
    %vm7130 = vcmp.lt.s32.totalorder %v6186, 0
    %v7131 = vand.u32 %v6186, 2139095040
    %v7132 = vshrl.u32 %v7131, 23
    %v7133 = vsub.s32 %v7132, 127
    %v7134 = vand.u32 2147483647, %v6186
    %v7135 = vand.u32 %v7134, 8388607
    %v7136 = vor.u32 %v7135, 8388608
    %v7137 = vsub.s32 0, %v7136
    %v7138 = vadd.s32 %v7133, 1
    %vm7139 = vcmp.gt.s32.totalorder %v7138, 0
    %v7140 = vsel %vm7139, %v7138, 0
    %v7141 = vshrl.u32 %v7140, 5
    %v7142 = vand.u32 %v7140, 31
    %v7143 = vsub.s32 32, %v7142
    %v7144 = vshrl.u32 683565275, %v7143
    %v7145 = vshll.u32 683565275, %v7142
    %v7146 = vshrl.u32 2475754826, %v7143
    %v7147 = vor.u32 %v7145, %v7146
    %v7148 = vshll.u32 2475754826, %v7142
    %v7149 = vshrl.u32 2131351028, %v7143
    %v7150 = vor.u32 %v7148, %v7149
    %v7151 = vshll.u32 2131351028, %v7142
    %v7152 = vshrl.u32 2102212464, %v7143
    %v7153 = vor.u32 %v7151, %v7152
    %v7154 = vshll.u32 2102212464, %v7142
    %v7155 = vshrl.u32 920167782, %v7143
    %v7156 = vor.u32 %v7154, %v7155
    %v7157 = vshll.u32 920167782, %v7142
    %v7158 = vshrl.u32 1326507024, %v7143
    %v7159 = vor.u32 %v7157, %v7158
    %vm7160 = vcmp.lt.s32.totalorder %v7141, 1
    %vm7161 = vcmp.lt.s32.totalorder %v7141, 2
    %vm7162 = vcmp.lt.s32.totalorder %v7141, 3
    %vm7163 = vcmp.lt.s32.totalorder %v7141, 4
    %v7164 = vsel %vm7160, %v7144, %v7147
    %v7165 = vsel %vm7163, %v7153, 2102212464
    %v7166 = vsel %vm7162, %v7150, %v7165
    %v7167 = vsel %vm7161, %v7164, %v7166
    %v7168 = vsel %vm7160, %v7147, %v7150
    %v7169 = vsel %vm7163, %v7156, 920167782
    %v7170 = vsel %vm7162, %v7153, %v7169
    %v7171 = vsel %vm7161, %v7168, %v7170
    %v7172 = vsel %vm7160, %v7150, %v7153
    %v7173 = vsel %vm7163, %v7159, 1326507024
    %v7174 = vsel %vm7162, %v7156, %v7173
    %v7175 = vsel %vm7161, %v7172, %v7174
    %v7176 = vshll.u32 %v7136, 8
    %v7177 = vmul.u32.u64.compose %v7176, %v7175
    %v7178 = vextract.low.u32 %v7177
    %v7179 = vextract.high.u32 %v7177
    %v7180 = vmul.u32.u64.compose %v7176, %v7171
    %v7181 = vextract.low.u32 %v7180
    %v7182 = vextract.high.u32 %v7180
    %v7183 = vmul.u32 %v7176, %v7167
    %v7184 = vadd.s32 %v7179, %v7181
    %vm7185 = vc.u32 %v7179, %v7181
    %v7186 = vadd.s32 %v7182, 1
    %v7187 = vsel %vm7185, %v7186, %v7182
    %v7188 = vadd.s32 %v7183, %v7187
    %v7189 = vadd.s32 %v7188, 536870912
    %v7190 = vshrl.u32 %v7189, 30
    %v7191 = vshll.u32 %v7190, 30
    %v7192 = vsub.s32 %v7188, %v7191
    %vm7193 = vcmp.lt.s32.totalorder %v7192, 0
    %v7194 = vsub.s32 0, %v7192
    %v7195 = vsel %vm7193, %v7194, %v7192
    %v7196 = vclz %v7195
    %v7197 = vsub.s32 %v7196, 2
    %vm7198 = vcmp.gt.s32.totalorder 0, %v7197
    %v7199 = vsel %vm7198, 0, %v7197
    %v7200 = vsub.s32 32, %v7199
    %v7201 = vshll.u32 %v7192, %v7199
    %v7202 = vshrl.u32 %v7184, %v7200
    %v7203 = vor.u32 %v7201, %v7202
    %v7204 = vsub.s32 4294967266, %v7199
    %v7205 = vadd.s32 %v7204, 127
    %v7206 = vshll.u32 %v7205, 23
    %v7207 = vor.u32 4788187, %v7206
    %v7208 = vand.u32 2147483647, %v7207
    %v7210 = vcvt.s32.f32 %v7203
    %v7211 = vmul.f32 %v7210, %v7208
    %v7212 = vxor.u32 %v7211, 2147483648
    %v7213 = vsel %vm7130, %v7212, %v7211
    %v7214 = vsub.s32 4, %v7190
    %v7215 = vsel %vm7130, %v7214, %v7190
    %v7216 = vsel %vm7129, %v6186, %v7213
    %v7217 = vsel %vm7129, 0, %v7215
    %v7218 = vcosq.f32.pop %v7216
    %v7219 = vsinq.f32.pop %v7216
    %vm7220 = vweird.f32 %v6186
    %v7221 = vadd.s32 %v7217, 3
    %v7222 = vand.u32 %v7221, 3
    %vm7223 = vcmp.lt.s32.totalorder %v7222, 2
    %vm7224 = vcmp.eq.s32.totalorder %v7222, 0
    %v7225 = vxor.u32 %v7219, 2147483648
    %v7226 = vsel %vm7224, %v7218, %v7225
    %vm7227 = vcmp.eq.s32.totalorder %v7222, 2
    %v7228 = vxor.u32 %v7218, 2147483648
    %v7229 = vsel %vm7227, %v7228, %v7219
    %v7230 = vsel %vm7223, %v7226, %v7229
    %v7231 = vsel %vm7220, nan, %v7230
    %v7232 = vand.u32 2147483647, %v6187
    %vm7233 = vcmp.le.f32.partialorder %v7232, 0.7853982
    %vm7234 = vcmp.lt.s32.totalorder %v6187, 0
    %v7235 = vand.u32 %v6187, 2139095040
    %v7236 = vshrl.u32 %v7235, 23
    %v7237 = vsub.s32 %v7236, 127
    %v7238 = vand.u32 2147483647, %v6187
    %v7239 = vand.u32 %v7238, 8388607
    %v7240 = vor.u32 %v7239, 8388608
    %v7241 = vsub.s32 0, %v7240
    %v7242 = vadd.s32 %v7237, 1
    %vm7243 = vcmp.gt.s32.totalorder %v7242, 0
    %v7244 = vsel %vm7243, %v7242, 0
    %v7245 = vshrl.u32 %v7244, 5
    %v7246 = vand.u32 %v7244, 31
    %v7247 = vsub.s32 32, %v7246
    %v7248 = vshrl.u32 683565275, %v7247
    %v7249 = vshll.u32 683565275, %v7246
    %v7250 = vshrl.u32 2475754826, %v7247
    %v7251 = vor.u32 %v7249, %v7250
    %v7252 = vshll.u32 2475754826, %v7246
    %v7253 = vshrl.u32 2131351028, %v7247
    %v7254 = vor.u32 %v7252, %v7253
    %v7255 = vshll.u32 2131351028, %v7246
    %v7256 = vshrl.u32 2102212464, %v7247
    %v7257 = vor.u32 %v7255, %v7256
    %v7258 = vshll.u32 2102212464, %v7246
    %v7259 = vshrl.u32 920167782, %v7247
    %v7260 = vor.u32 %v7258, %v7259
    %v7261 = vshll.u32 920167782, %v7246
    %v7262 = vshrl.u32 1326507024, %v7247
    %v7263 = vor.u32 %v7261, %v7262
    %vm7264 = vcmp.lt.s32.totalorder %v7245, 1
    %vm7265 = vcmp.lt.s32.totalorder %v7245, 2
    %vm7266 = vcmp.lt.s32.totalorder %v7245, 3
    %vm7267 = vcmp.lt.s32.totalorder %v7245, 4
    %v7268 = vsel %vm7264, %v7248, %v7251
    %v7269 = vsel %vm7267, %v7257, 2102212464
    %v7270 = vsel %vm7266, %v7254, %v7269
    %v7271 = vsel %vm7265, %v7268, %v7270
    %v7272 = vsel %vm7264, %v7251, %v7254
    %v7273 = vsel %vm7267, %v7260, 920167782
    %v7274 = vsel %vm7266, %v7257, %v7273
    %v7275 = vsel %vm7265, %v7272, %v7274
    %v7276 = vsel %vm7264, %v7254, %v7257
    %v7277 = vsel %vm7267, %v7263, 1326507024
    %v7278 = vsel %vm7266, %v7260, %v7277
    %v7279 = vsel %vm7265, %v7276, %v7278
    %v7280 = vshll.u32 %v7240, 8
    %v7281 = vmul.u32.u64.compose %v7280, %v7279
    %v7282 = vextract.low.u32 %v7281
    %v7283 = vextract.high.u32 %v7281
    %v7284 = vmul.u32.u64.compose %v7280, %v7275
    %v7285 = vextract.low.u32 %v7284
    %v7286 = vextract.high.u32 %v7284
    %v7287 = vmul.u32 %v7280, %v7271
    %v7288 = vadd.s32 %v7283, %v7285
    %vm7289 = vc.u32 %v7283, %v7285
    %v7290 = vadd.s32 %v7286, 1
    %v7291 = vsel %vm7289, %v7290, %v7286
    %v7292 = vadd.s32 %v7287, %v7291
    %v7293 = vadd.s32 %v7292, 536870912
    %v7294 = vshrl.u32 %v7293, 30
    %v7295 = vshll.u32 %v7294, 30
    %v7296 = vsub.s32 %v7292, %v7295
    %vm7297 = vcmp.lt.s32.totalorder %v7296, 0
    %v7298 = vsub.s32 0, %v7296
    %v7299 = vsel %vm7297, %v7298, %v7296
    %v7300 = vclz %v7299
    %v7301 = vsub.s32 %v7300, 2
    %vm7302 = vcmp.gt.s32.totalorder 0, %v7301
    %v7303 = vsel %vm7302, 0, %v7301
    %v7304 = vsub.s32 32, %v7303
    %v7305 = vshll.u32 %v7296, %v7303
    %v7306 = vshrl.u32 %v7288, %v7304
    %v7307 = vor.u32 %v7305, %v7306
    %v7308 = vsub.s32 4294967266, %v7303
    %v7309 = vadd.s32 %v7308, 127
    %v7310 = vshll.u32 %v7309, 23
    %v7311 = vor.u32 4788187, %v7310
    %v7312 = vand.u32 2147483647, %v7311
    %v7314 = vcvt.s32.f32 %v7307
    %v7315 = vmul.f32 %v7314, %v7312
    %v7316 = vxor.u32 %v7315, 2147483648
    %v7317 = vsel %vm7234, %v7316, %v7315
    %v7318 = vsub.s32 4, %v7294
    %v7319 = vsel %vm7234, %v7318, %v7294
    %v7320 = vsel %vm7233, %v6187, %v7317
    %v7321 = vsel %vm7233, 0, %v7319
    %v7322 = vcosq.f32.pop %v7320
    %v7323 = vsinq.f32.pop %v7320
    %vm7324 = vweird.f32 %v6187
    %v7325 = vadd.s32 %v7321, 3
    %v7326 = vand.u32 %v7325, 3
    %vm7327 = vcmp.lt.s32.totalorder %v7326, 2
    %vm7328 = vcmp.eq.s32.totalorder %v7326, 0
    %v7329 = vxor.u32 %v7323, 2147483648
    %v7330 = vsel %vm7328, %v7322, %v7329
    %vm7331 = vcmp.eq.s32.totalorder %v7326, 2
    %v7332 = vxor.u32 %v7322, 2147483648
    %v7333 = vsel %vm7331, %v7332, %v7323
    %v7334 = vsel %vm7327, %v7330, %v7333
    %v7335 = vsel %vm7324, nan, %v7334
    %v7336 = vand.u32 2147483647, %v6188
    %vm7337 = vcmp.le.f32.partialorder %v7336, 0.7853982
    %vm7338 = vcmp.lt.s32.totalorder %v6188, 0
    %v7339 = vand.u32 %v6188, 2139095040
    %v7340 = vshrl.u32 %v7339, 23
    %v7341 = vsub.s32 %v7340, 127
    %v7342 = vand.u32 2147483647, %v6188
    %v7343 = vand.u32 %v7342, 8388607
    %v7344 = vor.u32 %v7343, 8388608
    %v7345 = vsub.s32 0, %v7344
    %v7346 = vadd.s32 %v7341, 1
    %vm7347 = vcmp.gt.s32.totalorder %v7346, 0
    %v7348 = vsel %vm7347, %v7346, 0
    %v7349 = vshrl.u32 %v7348, 5
    %v7350 = vand.u32 %v7348, 31
    %v7351 = vsub.s32 32, %v7350
    %v7352 = vshrl.u32 683565275, %v7351
    %v7353 = vshll.u32 683565275, %v7350
    %v7354 = vshrl.u32 2475754826, %v7351
    %v7355 = vor.u32 %v7353, %v7354
    %v7356 = vshll.u32 2475754826, %v7350
    %v7357 = vshrl.u32 2131351028, %v7351
    %v7358 = vor.u32 %v7356, %v7357
    %v7359 = vshll.u32 2131351028, %v7350
    %v7360 = vshrl.u32 2102212464, %v7351
    %v7361 = vor.u32 %v7359, %v7360
    %v7362 = vshll.u32 2102212464, %v7350
    %v7363 = vshrl.u32 920167782, %v7351
    %v7364 = vor.u32 %v7362, %v7363
    %v7365 = vshll.u32 920167782, %v7350
    %v7366 = vshrl.u32 1326507024, %v7351
    %v7367 = vor.u32 %v7365, %v7366
    %vm7368 = vcmp.lt.s32.totalorder %v7349, 1
    %vm7369 = vcmp.lt.s32.totalorder %v7349, 2
    %vm7370 = vcmp.lt.s32.totalorder %v7349, 3
    %vm7371 = vcmp.lt.s32.totalorder %v7349, 4
    %v7372 = vsel %vm7368, %v7352, %v7355
    %v7373 = vsel %vm7371, %v7361, 2102212464
    %v7374 = vsel %vm7370, %v7358, %v7373
    %v7375 = vsel %vm7369, %v7372, %v7374
    %v7376 = vsel %vm7368, %v7355, %v7358
    %v7377 = vsel %vm7371, %v7364, 920167782
    %v7378 = vsel %vm7370, %v7361, %v7377
    %v7379 = vsel %vm7369, %v7376, %v7378
    %v7380 = vsel %vm7368, %v7358, %v7361
    %v7381 = vsel %vm7371, %v7367, 1326507024
    %v7382 = vsel %vm7370, %v7364, %v7381
    %v7383 = vsel %vm7369, %v7380, %v7382
    %v7384 = vshll.u32 %v7344, 8
    %v7385 = vmul.u32.u64.compose %v7384, %v7383
    %v7386 = vextract.low.u32 %v7385
    %v7387 = vextract.high.u32 %v7385
    %v7388 = vmul.u32.u64.compose %v7384, %v7379
    %v7389 = vextract.low.u32 %v7388
    %v7390 = vextract.high.u32 %v7388
    %v7391 = vmul.u32 %v7384, %v7375
    %v7392 = vadd.s32 %v7387, %v7389
    %vm7393 = vc.u32 %v7387, %v7389
    %v7394 = vadd.s32 %v7390, 1
    %v7395 = vsel %vm7393, %v7394, %v7390
    %v7396 = vadd.s32 %v7391, %v7395
    %v7397 = vadd.s32 %v7396, 536870912
    %v7398 = vshrl.u32 %v7397, 30
    %v7399 = vshll.u32 %v7398, 30
    %v7400 = vsub.s32 %v7396, %v7399
    %vm7401 = vcmp.lt.s32.totalorder %v7400, 0
    %v7402 = vsub.s32 0, %v7400
    %v7403 = vsel %vm7401, %v7402, %v7400
    %v7404 = vclz %v7403
    %v7405 = vsub.s32 %v7404, 2
    %vm7406 = vcmp.gt.s32.totalorder 0, %v7405
    %v7407 = vsel %vm7406, 0, %v7405
    %v7408 = vsub.s32 32, %v7407
    %v7409 = vshll.u32 %v7400, %v7407
    %v7410 = vshrl.u32 %v7392, %v7408
    %v7411 = vor.u32 %v7409, %v7410
    %v7412 = vsub.s32 4294967266, %v7407
    %v7413 = vadd.s32 %v7412, 127
    %v7414 = vshll.u32 %v7413, 23
    %v7415 = vor.u32 4788187, %v7414
    %v7416 = vand.u32 2147483647, %v7415
    %v7418 = vcvt.s32.f32 %v7411
    %v7419 = vmul.f32 %v7418, %v7416
    %v7420 = vxor.u32 %v7419, 2147483648
    %v7421 = vsel %vm7338, %v7420, %v7419
    %v7422 = vsub.s32 4, %v7398
    %v7423 = vsel %vm7338, %v7422, %v7398
    %v7424 = vsel %vm7337, %v6188, %v7421
    %v7425 = vsel %vm7337, 0, %v7423
    %v7426 = vcosq.f32.pop %v7424
    %v7427 = vsinq.f32.pop %v7424
    %vm7428 = vweird.f32 %v6188
    %v7429 = vadd.s32 %v7425, 3
    %v7430 = vand.u32 %v7429, 3
    %vm7431 = vcmp.lt.s32.totalorder %v7430, 2
    %vm7432 = vcmp.eq.s32.totalorder %v7430, 0
    %v7433 = vxor.u32 %v7427, 2147483648
    %v7434 = vsel %vm7432, %v7426, %v7433
    %vm7435 = vcmp.eq.s32.totalorder %v7430, 2
    %v7436 = vxor.u32 %v7426, 2147483648
    %v7437 = vsel %vm7435, %v7436, %v7427
    %v7438 = vsel %vm7431, %v7434, %v7437
    %v7439 = vsel %vm7428, nan, %v7438
    %v7440 = vand.u32 2147483647, %v6189
    %vm7441 = vcmp.le.f32.partialorder %v7440, 0.7853982
    %vm7442 = vcmp.lt.s32.totalorder %v6189, 0
    %v7443 = vand.u32 %v6189, 2139095040
    %v7444 = vshrl.u32 %v7443, 23
    %v7445 = vsub.s32 %v7444, 127
    %v7446 = vand.u32 2147483647, %v6189
    %v7447 = vand.u32 %v7446, 8388607
    %v7448 = vor.u32 %v7447, 8388608
    %v7449 = vsub.s32 0, %v7448
    %v7450 = vadd.s32 %v7445, 1
    %vm7451 = vcmp.gt.s32.totalorder %v7450, 0
    %v7452 = vsel %vm7451, %v7450, 0
    %v7453 = vshrl.u32 %v7452, 5
    %v7454 = vand.u32 %v7452, 31
    %v7455 = vsub.s32 32, %v7454
    %v7456 = vshrl.u32 683565275, %v7455
    %v7457 = vshll.u32 683565275, %v7454
    %v7458 = vshrl.u32 2475754826, %v7455
    %v7459 = vor.u32 %v7457, %v7458
    %v7460 = vshll.u32 2475754826, %v7454
    %v7461 = vshrl.u32 2131351028, %v7455
    %v7462 = vor.u32 %v7460, %v7461
    %v7463 = vshll.u32 2131351028, %v7454
    %v7464 = vshrl.u32 2102212464, %v7455
    %v7465 = vor.u32 %v7463, %v7464
    %v7466 = vshll.u32 2102212464, %v7454
    %v7467 = vshrl.u32 920167782, %v7455
    %v7468 = vor.u32 %v7466, %v7467
    %v7469 = vshll.u32 920167782, %v7454
    %v7470 = vshrl.u32 1326507024, %v7455
    %v7471 = vor.u32 %v7469, %v7470
    %vm7472 = vcmp.lt.s32.totalorder %v7453, 1
    %vm7473 = vcmp.lt.s32.totalorder %v7453, 2
    %vm7474 = vcmp.lt.s32.totalorder %v7453, 3
    %vm7475 = vcmp.lt.s32.totalorder %v7453, 4
    %v7476 = vsel %vm7472, %v7456, %v7459
    %v7477 = vsel %vm7475, %v7465, 2102212464
    %v7478 = vsel %vm7474, %v7462, %v7477
    %v7479 = vsel %vm7473, %v7476, %v7478
    %v7480 = vsel %vm7472, %v7459, %v7462
    %v7481 = vsel %vm7475, %v7468, 920167782
    %v7482 = vsel %vm7474, %v7465, %v7481
    %v7483 = vsel %vm7473, %v7480, %v7482
    %v7484 = vsel %vm7472, %v7462, %v7465
    %v7485 = vsel %vm7475, %v7471, 1326507024
    %v7486 = vsel %vm7474, %v7468, %v7485
    %v7487 = vsel %vm7473, %v7484, %v7486
    %v7488 = vshll.u32 %v7448, 8
    %v7489 = vmul.u32.u64.compose %v7488, %v7487
    %v7490 = vextract.low.u32 %v7489
    %v7491 = vextract.high.u32 %v7489
    %v7492 = vmul.u32.u64.compose %v7488, %v7483
    %v7493 = vextract.low.u32 %v7492
    %v7494 = vextract.high.u32 %v7492
    %v7495 = vmul.u32 %v7488, %v7479
    %v7496 = vadd.s32 %v7491, %v7493
    %vm7497 = vc.u32 %v7491, %v7493
    %v7498 = vadd.s32 %v7494, 1
    %v7499 = vsel %vm7497, %v7498, %v7494
    %v7500 = vadd.s32 %v7495, %v7499
    %v7501 = vadd.s32 %v7500, 536870912
    %v7502 = vshrl.u32 %v7501, 30
    %v7503 = vshll.u32 %v7502, 30
    %v7504 = vsub.s32 %v7500, %v7503
    %vm7505 = vcmp.lt.s32.totalorder %v7504, 0
    %v7506 = vsub.s32 0, %v7504
    %v7507 = vsel %vm7505, %v7506, %v7504
    %v7508 = vclz %v7507
    %v7509 = vsub.s32 %v7508, 2
    %vm7510 = vcmp.gt.s32.totalorder 0, %v7509
    %v7511 = vsel %vm7510, 0, %v7509
    %v7512 = vsub.s32 32, %v7511
    %v7513 = vshll.u32 %v7504, %v7511
    %v7514 = vshrl.u32 %v7496, %v7512
    %v7515 = vor.u32 %v7513, %v7514
    %v7516 = vsub.s32 4294967266, %v7511
    %v7517 = vadd.s32 %v7516, 127
    %v7518 = vshll.u32 %v7517, 23
    %v7519 = vor.u32 4788187, %v7518
    %v7520 = vand.u32 2147483647, %v7519
    %v7522 = vcvt.s32.f32 %v7515
    %v7523 = vmul.f32 %v7522, %v7520
    %v7524 = vxor.u32 %v7523, 2147483648
    %v7525 = vsel %vm7442, %v7524, %v7523
    %v7526 = vsub.s32 4, %v7502
    %v7527 = vsel %vm7442, %v7526, %v7502
    %v7528 = vsel %vm7441, %v6189, %v7525
    %v7529 = vsel %vm7441, 0, %v7527
    %v7530 = vcosq.f32.pop %v7528
    %v7531 = vsinq.f32.pop %v7528
    %vm7532 = vweird.f32 %v6189
    %v7533 = vadd.s32 %v7529, 3
    %v7534 = vand.u32 %v7533, 3
    %vm7535 = vcmp.lt.s32.totalorder %v7534, 2
    %vm7536 = vcmp.eq.s32.totalorder %v7534, 0
    %v7537 = vxor.u32 %v7531, 2147483648
    %v7538 = vsel %vm7536, %v7530, %v7537
    %vm7539 = vcmp.eq.s32.totalorder %v7534, 2
    %v7540 = vxor.u32 %v7530, 2147483648
    %v7541 = vsel %vm7539, %v7540, %v7531
    %v7542 = vsel %vm7535, %v7538, %v7541
    %v7543 = vsel %vm7532, nan, %v7542
    %v7544 = vand.u32 2147483647, %v6190
    %vm7545 = vcmp.le.f32.partialorder %v7544, 0.7853982
    %vm7546 = vcmp.lt.s32.totalorder %v6190, 0
    %v7547 = vand.u32 %v6190, 2139095040
    %v7548 = vshrl.u32 %v7547, 23
    %v7549 = vsub.s32 %v7548, 127
    %v7550 = vand.u32 2147483647, %v6190
    %v7551 = vand.u32 %v7550, 8388607
    %v7552 = vor.u32 %v7551, 8388608
    %v7553 = vsub.s32 0, %v7552
    %v7554 = vadd.s32 %v7549, 1
    %vm7555 = vcmp.gt.s32.totalorder %v7554, 0
    %v7556 = vsel %vm7555, %v7554, 0
    %v7557 = vshrl.u32 %v7556, 5
    %v7558 = vand.u32 %v7556, 31
    %v7559 = vsub.s32 32, %v7558
    %v7560 = vshrl.u32 683565275, %v7559
    %v7561 = vshll.u32 683565275, %v7558
    %v7562 = vshrl.u32 2475754826, %v7559
    %v7563 = vor.u32 %v7561, %v7562
    %v7564 = vshll.u32 2475754826, %v7558
    %v7565 = vshrl.u32 2131351028, %v7559
    %v7566 = vor.u32 %v7564, %v7565
    %v7567 = vshll.u32 2131351028, %v7558
    %v7568 = vshrl.u32 2102212464, %v7559
    %v7569 = vor.u32 %v7567, %v7568
    %v7570 = vshll.u32 2102212464, %v7558
    %v7571 = vshrl.u32 920167782, %v7559
    %v7572 = vor.u32 %v7570, %v7571
    %v7573 = vshll.u32 920167782, %v7558
    %v7574 = vshrl.u32 1326507024, %v7559
    %v7575 = vor.u32 %v7573, %v7574
    %vm7576 = vcmp.lt.s32.totalorder %v7557, 1
    %vm7577 = vcmp.lt.s32.totalorder %v7557, 2
    %vm7578 = vcmp.lt.s32.totalorder %v7557, 3
    %vm7579 = vcmp.lt.s32.totalorder %v7557, 4
    %v7580 = vsel %vm7576, %v7560, %v7563
    %v7581 = vsel %vm7579, %v7569, 2102212464
    %v7582 = vsel %vm7578, %v7566, %v7581
    %v7583 = vsel %vm7577, %v7580, %v7582
    %v7584 = vsel %vm7576, %v7563, %v7566
    %v7585 = vsel %vm7579, %v7572, 920167782
    %v7586 = vsel %vm7578, %v7569, %v7585
    %v7587 = vsel %vm7577, %v7584, %v7586
    %v7588 = vsel %vm7576, %v7566, %v7569
    %v7589 = vsel %vm7579, %v7575, 1326507024
    %v7590 = vsel %vm7578, %v7572, %v7589
    %v7591 = vsel %vm7577, %v7588, %v7590
    %v7592 = vshll.u32 %v7552, 8
    %v7593 = vmul.u32.u64.compose %v7592, %v7591
    %v7594 = vextract.low.u32 %v7593
    %v7595 = vextract.high.u32 %v7593
    %v7596 = vmul.u32.u64.compose %v7592, %v7587
    %v7597 = vextract.low.u32 %v7596
    %v7598 = vextract.high.u32 %v7596
    %v7599 = vmul.u32 %v7592, %v7583
    %v7600 = vadd.s32 %v7595, %v7597
    %vm7601 = vc.u32 %v7595, %v7597
    %v7602 = vadd.s32 %v7598, 1
    %v7603 = vsel %vm7601, %v7602, %v7598
    %v7604 = vadd.s32 %v7599, %v7603
    %v7605 = vadd.s32 %v7604, 536870912
    %v7606 = vshrl.u32 %v7605, 30
    %v7607 = vshll.u32 %v7606, 30
    %v7608 = vsub.s32 %v7604, %v7607
    %vm7609 = vcmp.lt.s32.totalorder %v7608, 0
    %v7610 = vsub.s32 0, %v7608
    %v7611 = vsel %vm7609, %v7610, %v7608
    %v7612 = vclz %v7611
    %v7613 = vsub.s32 %v7612, 2
    %vm7614 = vcmp.gt.s32.totalorder 0, %v7613
    %v7615 = vsel %vm7614, 0, %v7613
    %v7616 = vsub.s32 32, %v7615
    %v7617 = vshll.u32 %v7608, %v7615
    %v7618 = vshrl.u32 %v7600, %v7616
    %v7619 = vor.u32 %v7617, %v7618
    %v7620 = vsub.s32 4294967266, %v7615
    %v7621 = vadd.s32 %v7620, 127
    %v7622 = vshll.u32 %v7621, 23
    %v7623 = vor.u32 4788187, %v7622
    %v7624 = vand.u32 2147483647, %v7623
    %v7626 = vcvt.s32.f32 %v7619
    %v7627 = vmul.f32 %v7626, %v7624
    %v7628 = vxor.u32 %v7627, 2147483648
    %v7629 = vsel %vm7546, %v7628, %v7627
    %v7630 = vsub.s32 4, %v7606
    %v7631 = vsel %vm7546, %v7630, %v7606
    %v7632 = vsel %vm7545, %v6190, %v7629
    %v7633 = vsel %vm7545, 0, %v7631
    %v7634 = vcosq.f32.pop %v7632
    %v7635 = vsinq.f32.pop %v7632
    %vm7636 = vweird.f32 %v6190
    %v7637 = vadd.s32 %v7633, 3
    %v7638 = vand.u32 %v7637, 3
    %vm7639 = vcmp.lt.s32.totalorder %v7638, 2
    %vm7640 = vcmp.eq.s32.totalorder %v7638, 0
    %v7641 = vxor.u32 %v7635, 2147483648
    %v7642 = vsel %vm7640, %v7634, %v7641
    %vm7643 = vcmp.eq.s32.totalorder %v7638, 2
    %v7644 = vxor.u32 %v7634, 2147483648
    %v7645 = vsel %vm7643, %v7644, %v7635
    %v7646 = vsel %vm7639, %v7642, %v7645
    %v7647 = vsel %vm7636, nan, %v7646
    %v7648 = vand.u32 2147483647, %v6191
    %vm7649 = vcmp.le.f32.partialorder %v7648, 0.7853982
    %vm7650 = vcmp.lt.s32.totalorder %v6191, 0
    %v7651 = vand.u32 %v6191, 2139095040
    %v7652 = vshrl.u32 %v7651, 23
    %v7653 = vsub.s32 %v7652, 127
    %v7654 = vand.u32 2147483647, %v6191
    %v7655 = vand.u32 %v7654, 8388607
    %v7656 = vor.u32 %v7655, 8388608
    %v7657 = vsub.s32 0, %v7656
    %v7658 = vadd.s32 %v7653, 1
    %vm7659 = vcmp.gt.s32.totalorder %v7658, 0
    %v7660 = vsel %vm7659, %v7658, 0
    %v7661 = vshrl.u32 %v7660, 5
    %v7662 = vand.u32 %v7660, 31
    %v7663 = vsub.s32 32, %v7662
    %v7664 = vshrl.u32 683565275, %v7663
    %v7665 = vshll.u32 683565275, %v7662
    %v7666 = vshrl.u32 2475754826, %v7663
    %v7667 = vor.u32 %v7665, %v7666
    %v7668 = vshll.u32 2475754826, %v7662
    %v7669 = vshrl.u32 2131351028, %v7663
    %v7670 = vor.u32 %v7668, %v7669
    %v7671 = vshll.u32 2131351028, %v7662
    %v7672 = vshrl.u32 2102212464, %v7663
    %v7673 = vor.u32 %v7671, %v7672
    %v7674 = vshll.u32 2102212464, %v7662
    %v7675 = vshrl.u32 920167782, %v7663
    %v7676 = vor.u32 %v7674, %v7675
    %v7677 = vshll.u32 920167782, %v7662
    %v7678 = vshrl.u32 1326507024, %v7663
    %v7679 = vor.u32 %v7677, %v7678
    %vm7680 = vcmp.lt.s32.totalorder %v7661, 1
    %vm7681 = vcmp.lt.s32.totalorder %v7661, 2
    %vm7682 = vcmp.lt.s32.totalorder %v7661, 3
    %vm7683 = vcmp.lt.s32.totalorder %v7661, 4
    %v7684 = vsel %vm7680, %v7664, %v7667
    %v7685 = vsel %vm7683, %v7673, 2102212464
    %v7686 = vsel %vm7682, %v7670, %v7685
    %v7687 = vsel %vm7681, %v7684, %v7686
    %v7688 = vsel %vm7680, %v7667, %v7670
    %v7689 = vsel %vm7683, %v7676, 920167782
    %v7690 = vsel %vm7682, %v7673, %v7689
    %v7691 = vsel %vm7681, %v7688, %v7690
    %v7692 = vsel %vm7680, %v7670, %v7673
    %v7693 = vsel %vm7683, %v7679, 1326507024
    %v7694 = vsel %vm7682, %v7676, %v7693
    %v7695 = vsel %vm7681, %v7692, %v7694
    %v7696 = vshll.u32 %v7656, 8
    %v7697 = vmul.u32.u64.compose %v7696, %v7695
    %v7698 = vextract.low.u32 %v7697
    %v7699 = vextract.high.u32 %v7697
    %v7700 = vmul.u32.u64.compose %v7696, %v7691
    %v7701 = vextract.low.u32 %v7700
    %v7702 = vextract.high.u32 %v7700
    %v7703 = vmul.u32 %v7696, %v7687
    %v7704 = vadd.s32 %v7699, %v7701
    %vm7705 = vc.u32 %v7699, %v7701
    %v7706 = vadd.s32 %v7702, 1
    %v7707 = vsel %vm7705, %v7706, %v7702
    %v7708 = vadd.s32 %v7703, %v7707
    %v7709 = vadd.s32 %v7708, 536870912
    %v7710 = vshrl.u32 %v7709, 30
    %v7711 = vshll.u32 %v7710, 30
    %v7712 = vsub.s32 %v7708, %v7711
    %vm7713 = vcmp.lt.s32.totalorder %v7712, 0
    %v7714 = vsub.s32 0, %v7712
    %v7715 = vsel %vm7713, %v7714, %v7712
    %v7716 = vclz %v7715
    %v7717 = vsub.s32 %v7716, 2
    %vm7718 = vcmp.gt.s32.totalorder 0, %v7717
    %v7719 = vsel %vm7718, 0, %v7717
    %v7720 = vsub.s32 32, %v7719
    %v7721 = vshll.u32 %v7712, %v7719
    %v7722 = vshrl.u32 %v7704, %v7720
    %v7723 = vor.u32 %v7721, %v7722
    %v7724 = vsub.s32 4294967266, %v7719
    %v7725 = vadd.s32 %v7724, 127
    %v7726 = vshll.u32 %v7725, 23
    %v7727 = vor.u32 4788187, %v7726
    %v7728 = vand.u32 2147483647, %v7727
    %v7730 = vcvt.s32.f32 %v7723
    %v7731 = vmul.f32 %v7730, %v7728
    %v7732 = vxor.u32 %v7731, 2147483648
    %v7733 = vsel %vm7650, %v7732, %v7731
    %v7734 = vsub.s32 4, %v7710
    %v7735 = vsel %vm7650, %v7734, %v7710
    %v7736 = vsel %vm7649, %v6191, %v7733
    %v7737 = vsel %vm7649, 0, %v7735
    %v7738 = vcosq.f32.pop %v7736
    %v7739 = vsinq.f32.pop %v7736
    %vm7740 = vweird.f32 %v6191
    %v7741 = vadd.s32 %v7737, 3
    %v7742 = vand.u32 %v7741, 3
    %vm7743 = vcmp.lt.s32.totalorder %v7742, 2
    %vm7744 = vcmp.eq.s32.totalorder %v7742, 0
    %v7745 = vxor.u32 %v7739, 2147483648
    %v7746 = vsel %vm7744, %v7738, %v7745
    %vm7747 = vcmp.eq.s32.totalorder %v7742, 2
    %v7748 = vxor.u32 %v7738, 2147483648
    %v7749 = vsel %vm7747, %v7748, %v7739
    %v7750 = vsel %vm7743, %v7746, %v7749
    %v7751 = vsel %vm7740, nan, %v7750
    %v7752 = vand.u32 2147483647, %v6177
    %vm7753 = vcmp.le.f32.partialorder %v7752, 0.7853982
    %vm7754 = vcmp.lt.s32.totalorder %v6177, 0
    %v7755 = vand.u32 %v6177, 2139095040
    %v7756 = vshrl.u32 %v7755, 23
    %v7757 = vsub.s32 %v7756, 127
    %v7758 = vand.u32 2147483647, %v6177
    %v7759 = vand.u32 %v7758, 8388607
    %v7760 = vor.u32 %v7759, 8388608
    %v7761 = vsub.s32 0, %v7760
    %v7762 = vadd.s32 %v7757, 1
    %vm7763 = vcmp.gt.s32.totalorder %v7762, 0
    %v7764 = vsel %vm7763, %v7762, 0
    %v7765 = vshrl.u32 %v7764, 5
    %v7766 = vand.u32 %v7764, 31
    %v7767 = vsub.s32 32, %v7766
    %v7768 = vshrl.u32 683565275, %v7767
    %v7769 = vshll.u32 683565275, %v7766
    %v7770 = vshrl.u32 2475754826, %v7767
    %v7771 = vor.u32 %v7769, %v7770
    %v7772 = vshll.u32 2475754826, %v7766
    %v7773 = vshrl.u32 2131351028, %v7767
    %v7774 = vor.u32 %v7772, %v7773
    %v7775 = vshll.u32 2131351028, %v7766
    %v7776 = vshrl.u32 2102212464, %v7767
    %v7777 = vor.u32 %v7775, %v7776
    %v7778 = vshll.u32 2102212464, %v7766
    %v7779 = vshrl.u32 920167782, %v7767
    %v7780 = vor.u32 %v7778, %v7779
    %v7781 = vshll.u32 920167782, %v7766
    %v7782 = vshrl.u32 1326507024, %v7767
    %v7783 = vor.u32 %v7781, %v7782
    %vm7784 = vcmp.lt.s32.totalorder %v7765, 1
    %vm7785 = vcmp.lt.s32.totalorder %v7765, 2
    %vm7786 = vcmp.lt.s32.totalorder %v7765, 3
    %vm7787 = vcmp.lt.s32.totalorder %v7765, 4
    %v7788 = vsel %vm7784, %v7768, %v7771
    %v7789 = vsel %vm7787, %v7777, 2102212464
    %v7790 = vsel %vm7786, %v7774, %v7789
    %v7791 = vsel %vm7785, %v7788, %v7790
    %v7792 = vsel %vm7784, %v7771, %v7774
    %v7793 = vsel %vm7787, %v7780, 920167782
    %v7794 = vsel %vm7786, %v7777, %v7793
    %v7795 = vsel %vm7785, %v7792, %v7794
    %v7796 = vsel %vm7784, %v7774, %v7777
    %v7797 = vsel %vm7787, %v7783, 1326507024
    %v7798 = vsel %vm7786, %v7780, %v7797
    %v7799 = vsel %vm7785, %v7796, %v7798
    %v7800 = vshll.u32 %v7760, 8
    %v7801 = vmul.u32.u64.compose %v7800, %v7799
    %v7802 = vextract.low.u32 %v7801
    %v7803 = vextract.high.u32 %v7801
    %v7804 = vmul.u32.u64.compose %v7800, %v7795
    %v7805 = vextract.low.u32 %v7804
    %v7806 = vextract.high.u32 %v7804
    %v7807 = vmul.u32 %v7800, %v7791
    %v7808 = vadd.s32 %v7803, %v7805
    %vm7809 = vc.u32 %v7803, %v7805
    %v7810 = vadd.s32 %v7806, 1
    %v7811 = vsel %vm7809, %v7810, %v7806
    %v7812 = vadd.s32 %v7807, %v7811
    %v7813 = vadd.s32 %v7812, 536870912
    %v7814 = vshrl.u32 %v7813, 30
    %v7815 = vshll.u32 %v7814, 30
    %v7816 = vsub.s32 %v7812, %v7815
    %vm7817 = vcmp.lt.s32.totalorder %v7816, 0
    %v7818 = vsub.s32 0, %v7816
    %v7819 = vsel %vm7817, %v7818, %v7816
    %v7820 = vclz %v7819
    %v7821 = vsub.s32 %v7820, 2
    %vm7822 = vcmp.gt.s32.totalorder 0, %v7821
    %v7823 = vsel %vm7822, 0, %v7821
    %v7824 = vsub.s32 32, %v7823
    %v7825 = vshll.u32 %v7816, %v7823
    %v7826 = vshrl.u32 %v7808, %v7824
    %v7827 = vor.u32 %v7825, %v7826
    %v7828 = vsub.s32 4294967266, %v7823
    %v7829 = vadd.s32 %v7828, 127
    %v7830 = vshll.u32 %v7829, 23
    %v7831 = vor.u32 4788187, %v7830
    %v7832 = vand.u32 2147483647, %v7831
    %v7834 = vcvt.s32.f32 %v7827
    %v7835 = vmul.f32 %v7834, %v7832
    %v7836 = vxor.u32 %v7835, 2147483648
    %v7837 = vsel %vm7754, %v7836, %v7835
    %v7838 = vsub.s32 4, %v7814
    %v7839 = vsel %vm7754, %v7838, %v7814
    %v7840 = vsel %vm7753, %v6177, %v7837
    %v7841 = vsel %vm7753, 0, %v7839
    %v7842 = vcosq.f32.pop %v7840
    %v7843 = vsinq.f32.pop %v7840
    %vm7844 = vweird.f32 %v6177
    %v7845 = vand.u32 %v7841, 3
    %vm7846 = vcmp.lt.s32.totalorder %v7845, 2
    %vm7847 = vcmp.eq.s32.totalorder %v7845, 0
    %v7848 = vxor.u32 %v7843, 2147483648
    %v7849 = vsel %vm7847, %v7842, %v7848
    %vm7850 = vcmp.eq.s32.totalorder %v7845, 2
    %v7851 = vxor.u32 %v7842, 2147483648
    %v7852 = vsel %vm7850, %v7851, %v7843
    %v7853 = vsel %vm7846, %v7849, %v7852
    %v7854 = vsel %vm7844, nan, %v7853
    %v7855 = vand.u32 2147483647, %v6178
    %vm7856 = vcmp.le.f32.partialorder %v7855, 0.7853982
    %vm7857 = vcmp.lt.s32.totalorder %v6178, 0
    %v7858 = vand.u32 %v6178, 2139095040
    %v7859 = vshrl.u32 %v7858, 23
    %v7860 = vsub.s32 %v7859, 127
    %v7861 = vand.u32 2147483647, %v6178
    %v7862 = vand.u32 %v7861, 8388607
    %v7863 = vor.u32 %v7862, 8388608
    %v7864 = vsub.s32 0, %v7863
    %v7865 = vadd.s32 %v7860, 1
    %vm7866 = vcmp.gt.s32.totalorder %v7865, 0
    %v7867 = vsel %vm7866, %v7865, 0
    %v7868 = vshrl.u32 %v7867, 5
    %v7869 = vand.u32 %v7867, 31
    %v7870 = vsub.s32 32, %v7869
    %v7871 = vshrl.u32 683565275, %v7870
    %v7872 = vshll.u32 683565275, %v7869
    %v7873 = vshrl.u32 2475754826, %v7870
    %v7874 = vor.u32 %v7872, %v7873
    %v7875 = vshll.u32 2475754826, %v7869
    %v7876 = vshrl.u32 2131351028, %v7870
    %v7877 = vor.u32 %v7875, %v7876
    %v7878 = vshll.u32 2131351028, %v7869
    %v7879 = vshrl.u32 2102212464, %v7870
    %v7880 = vor.u32 %v7878, %v7879
    %v7881 = vshll.u32 2102212464, %v7869
    %v7882 = vshrl.u32 920167782, %v7870
    %v7883 = vor.u32 %v7881, %v7882
    %v7884 = vshll.u32 920167782, %v7869
    %v7885 = vshrl.u32 1326507024, %v7870
    %v7886 = vor.u32 %v7884, %v7885
    %vm7887 = vcmp.lt.s32.totalorder %v7868, 1
    %vm7888 = vcmp.lt.s32.totalorder %v7868, 2
    %vm7889 = vcmp.lt.s32.totalorder %v7868, 3
    %vm7890 = vcmp.lt.s32.totalorder %v7868, 4
    %v7891 = vsel %vm7887, %v7871, %v7874
    %v7892 = vsel %vm7890, %v7880, 2102212464
    %v7893 = vsel %vm7889, %v7877, %v7892
    %v7894 = vsel %vm7888, %v7891, %v7893
    %v7895 = vsel %vm7887, %v7874, %v7877
    %v7896 = vsel %vm7890, %v7883, 920167782
    %v7897 = vsel %vm7889, %v7880, %v7896
    %v7898 = vsel %vm7888, %v7895, %v7897
    %v7899 = vsel %vm7887, %v7877, %v7880
    %v7900 = vsel %vm7890, %v7886, 1326507024
    %v7901 = vsel %vm7889, %v7883, %v7900
    %v7902 = vsel %vm7888, %v7899, %v7901
    %v7903 = vshll.u32 %v7863, 8
    %v7904 = vmul.u32.u64.compose %v7903, %v7902
    %v7905 = vextract.low.u32 %v7904
    %v7906 = vextract.high.u32 %v7904
    %v7907 = vmul.u32.u64.compose %v7903, %v7898
    %v7908 = vextract.low.u32 %v7907
    %v7909 = vextract.high.u32 %v7907
    %v7910 = vmul.u32 %v7903, %v7894
    %v7911 = vadd.s32 %v7906, %v7908
    %vm7912 = vc.u32 %v7906, %v7908
    %v7913 = vadd.s32 %v7909, 1
    %v7914 = vsel %vm7912, %v7913, %v7909
    %v7915 = vadd.s32 %v7910, %v7914
    %v7916 = vadd.s32 %v7915, 536870912
    %v7917 = vshrl.u32 %v7916, 30
    %v7918 = vshll.u32 %v7917, 30
    %v7919 = vsub.s32 %v7915, %v7918
    %vm7920 = vcmp.lt.s32.totalorder %v7919, 0
    %v7921 = vsub.s32 0, %v7919
    %v7922 = vsel %vm7920, %v7921, %v7919
    %v7923 = vclz %v7922
    %v7924 = vsub.s32 %v7923, 2
    %vm7925 = vcmp.gt.s32.totalorder 0, %v7924
    %v7926 = vsel %vm7925, 0, %v7924
    %v7927 = vsub.s32 32, %v7926
    %v7928 = vshll.u32 %v7919, %v7926
    %v7929 = vshrl.u32 %v7911, %v7927
    %v7930 = vor.u32 %v7928, %v7929
    %v7931 = vsub.s32 4294967266, %v7926
    %v7932 = vadd.s32 %v7931, 127
    %v7933 = vshll.u32 %v7932, 23
    %v7934 = vor.u32 4788187, %v7933
    %v7935 = vand.u32 2147483647, %v7934
    %v7937 = vcvt.s32.f32 %v7930
    %v7938 = vmul.f32 %v7937, %v7935
    %v7939 = vxor.u32 %v7938, 2147483648
    %v7940 = vsel %vm7857, %v7939, %v7938
    %v7941 = vsub.s32 4, %v7917
    %v7942 = vsel %vm7857, %v7941, %v7917
    %v7943 = vsel %vm7856, %v6178, %v7940
    %v7944 = vsel %vm7856, 0, %v7942
    %v7945 = vcosq.f32.pop %v7943
    %v7946 = vsinq.f32.pop %v7943
    %vm7947 = vweird.f32 %v6178
    %v7948 = vand.u32 %v7944, 3
    %vm7949 = vcmp.lt.s32.totalorder %v7948, 2
    %vm7950 = vcmp.eq.s32.totalorder %v7948, 0
    %v7951 = vxor.u32 %v7946, 2147483648
    %v7952 = vsel %vm7950, %v7945, %v7951
    %vm7953 = vcmp.eq.s32.totalorder %v7948, 2
    %v7954 = vxor.u32 %v7945, 2147483648
    %v7955 = vsel %vm7953, %v7954, %v7946
    %v7956 = vsel %vm7949, %v7952, %v7955
    %v7957 = vsel %vm7947, nan, %v7956
    %v7958 = vand.u32 2147483647, %v6179
    %vm7959 = vcmp.le.f32.partialorder %v7958, 0.7853982
    %vm7960 = vcmp.lt.s32.totalorder %v6179, 0
    %v7961 = vand.u32 %v6179, 2139095040
    %v7962 = vshrl.u32 %v7961, 23
    %v7963 = vsub.s32 %v7962, 127
    %v7964 = vand.u32 2147483647, %v6179
    %v7965 = vand.u32 %v7964, 8388607
    %v7966 = vor.u32 %v7965, 8388608
    %v7967 = vsub.s32 0, %v7966
    %v7968 = vadd.s32 %v7963, 1
    %vm7969 = vcmp.gt.s32.totalorder %v7968, 0
    %v7970 = vsel %vm7969, %v7968, 0
    %v7971 = vshrl.u32 %v7970, 5
    %v7972 = vand.u32 %v7970, 31
    %v7973 = vsub.s32 32, %v7972
    %v7974 = vshrl.u32 683565275, %v7973
    %v7975 = vshll.u32 683565275, %v7972
    %v7976 = vshrl.u32 2475754826, %v7973
    %v7977 = vor.u32 %v7975, %v7976
    %v7978 = vshll.u32 2475754826, %v7972
    %v7979 = vshrl.u32 2131351028, %v7973
    %v7980 = vor.u32 %v7978, %v7979
    %v7981 = vshll.u32 2131351028, %v7972
    %v7982 = vshrl.u32 2102212464, %v7973
    %v7983 = vor.u32 %v7981, %v7982
    %v7984 = vshll.u32 2102212464, %v7972
    %v7985 = vshrl.u32 920167782, %v7973
    %v7986 = vor.u32 %v7984, %v7985
    %v7987 = vshll.u32 920167782, %v7972
    %v7988 = vshrl.u32 1326507024, %v7973
    %v7989 = vor.u32 %v7987, %v7988
    %vm7990 = vcmp.lt.s32.totalorder %v7971, 1
    %vm7991 = vcmp.lt.s32.totalorder %v7971, 2
    %vm7992 = vcmp.lt.s32.totalorder %v7971, 3
    %vm7993 = vcmp.lt.s32.totalorder %v7971, 4
    %v7994 = vsel %vm7990, %v7974, %v7977
    %v7995 = vsel %vm7993, %v7983, 2102212464
    %v7996 = vsel %vm7992, %v7980, %v7995
    %v7997 = vsel %vm7991, %v7994, %v7996
    %v7998 = vsel %vm7990, %v7977, %v7980
    %v7999 = vsel %vm7993, %v7986, 920167782
    %v8000 = vsel %vm7992, %v7983, %v7999
    %v8001 = vsel %vm7991, %v7998, %v8000
    %v8002 = vsel %vm7990, %v7980, %v7983
    %v8003 = vsel %vm7993, %v7989, 1326507024
    %v8004 = vsel %vm7992, %v7986, %v8003
    %v8005 = vsel %vm7991, %v8002, %v8004
    %v8006 = vshll.u32 %v7966, 8
    %v8007 = vmul.u32.u64.compose %v8006, %v8005
    %v8008 = vextract.low.u32 %v8007
    %v8009 = vextract.high.u32 %v8007
    %v8010 = vmul.u32.u64.compose %v8006, %v8001
    %v8011 = vextract.low.u32 %v8010
    %v8012 = vextract.high.u32 %v8010
    %v8013 = vmul.u32 %v8006, %v7997
    %v8014 = vadd.s32 %v8009, %v8011
    %vm8015 = vc.u32 %v8009, %v8011
    %v8016 = vadd.s32 %v8012, 1
    %v8017 = vsel %vm8015, %v8016, %v8012
    %v8018 = vadd.s32 %v8013, %v8017
    %v8019 = vadd.s32 %v8018, 536870912
    %v8020 = vshrl.u32 %v8019, 30
    %v8021 = vshll.u32 %v8020, 30
    %v8022 = vsub.s32 %v8018, %v8021
    %vm8023 = vcmp.lt.s32.totalorder %v8022, 0
    %v8024 = vsub.s32 0, %v8022
    %v8025 = vsel %vm8023, %v8024, %v8022
    %v8026 = vclz %v8025
    %v8027 = vsub.s32 %v8026, 2
    %vm8028 = vcmp.gt.s32.totalorder 0, %v8027
    %v8029 = vsel %vm8028, 0, %v8027
    %v8030 = vsub.s32 32, %v8029
    %v8031 = vshll.u32 %v8022, %v8029
    %v8032 = vshrl.u32 %v8014, %v8030
    %v8033 = vor.u32 %v8031, %v8032
    %v8034 = vsub.s32 4294967266, %v8029
    %v8035 = vadd.s32 %v8034, 127
    %v8036 = vshll.u32 %v8035, 23
    %v8037 = vor.u32 4788187, %v8036
    %v8038 = vand.u32 2147483647, %v8037
    %v8040 = vcvt.s32.f32 %v8033
    %v8041 = vmul.f32 %v8040, %v8038
    %v8042 = vxor.u32 %v8041, 2147483648
    %v8043 = vsel %vm7960, %v8042, %v8041
    %v8044 = vsub.s32 4, %v8020
    %v8045 = vsel %vm7960, %v8044, %v8020
    %v8046 = vsel %vm7959, %v6179, %v8043
    %v8047 = vsel %vm7959, 0, %v8045
    %v8048 = vcosq.f32.pop %v8046
    %v8049 = vsinq.f32.pop %v8046
    %vm8050 = vweird.f32 %v6179
    %v8051 = vand.u32 %v8047, 3
    %vm8052 = vcmp.lt.s32.totalorder %v8051, 2
    %vm8053 = vcmp.eq.s32.totalorder %v8051, 0
    %v8054 = vxor.u32 %v8049, 2147483648
    %v8055 = vsel %vm8053, %v8048, %v8054
    %vm8056 = vcmp.eq.s32.totalorder %v8051, 2
    %v8057 = vxor.u32 %v8048, 2147483648
    %v8058 = vsel %vm8056, %v8057, %v8049
    %v8059 = vsel %vm8052, %v8055, %v8058
    %v8060 = vsel %vm8050, nan, %v8059
    %v8061 = vand.u32 2147483647, %v6180
    %vm8062 = vcmp.le.f32.partialorder %v8061, 0.7853982
    %vm8063 = vcmp.lt.s32.totalorder %v6180, 0
    %v8064 = vand.u32 %v6180, 2139095040
    %v8065 = vshrl.u32 %v8064, 23
    %v8066 = vsub.s32 %v8065, 127
    %v8067 = vand.u32 2147483647, %v6180
    %v8068 = vand.u32 %v8067, 8388607
    %v8069 = vor.u32 %v8068, 8388608
    %v8070 = vsub.s32 0, %v8069
    %v8071 = vadd.s32 %v8066, 1
    %vm8072 = vcmp.gt.s32.totalorder %v8071, 0
    %v8073 = vsel %vm8072, %v8071, 0
    %v8074 = vshrl.u32 %v8073, 5
    %v8075 = vand.u32 %v8073, 31
    %v8076 = vsub.s32 32, %v8075
    %v8077 = vshrl.u32 683565275, %v8076
    %v8078 = vshll.u32 683565275, %v8075
    %v8079 = vshrl.u32 2475754826, %v8076
    %v8080 = vor.u32 %v8078, %v8079
    %v8081 = vshll.u32 2475754826, %v8075
    %v8082 = vshrl.u32 2131351028, %v8076
    %v8083 = vor.u32 %v8081, %v8082
    %v8084 = vshll.u32 2131351028, %v8075
    %v8085 = vshrl.u32 2102212464, %v8076
    %v8086 = vor.u32 %v8084, %v8085
    %v8087 = vshll.u32 2102212464, %v8075
    %v8088 = vshrl.u32 920167782, %v8076
    %v8089 = vor.u32 %v8087, %v8088
    %v8090 = vshll.u32 920167782, %v8075
    %v8091 = vshrl.u32 1326507024, %v8076
    %v8092 = vor.u32 %v8090, %v8091
    %vm8093 = vcmp.lt.s32.totalorder %v8074, 1
    %vm8094 = vcmp.lt.s32.totalorder %v8074, 2
    %vm8095 = vcmp.lt.s32.totalorder %v8074, 3
    %vm8096 = vcmp.lt.s32.totalorder %v8074, 4
    %v8097 = vsel %vm8093, %v8077, %v8080
    %v8098 = vsel %vm8096, %v8086, 2102212464
    %v8099 = vsel %vm8095, %v8083, %v8098
    %v8100 = vsel %vm8094, %v8097, %v8099
    %v8101 = vsel %vm8093, %v8080, %v8083
    %v8102 = vsel %vm8096, %v8089, 920167782
    %v8103 = vsel %vm8095, %v8086, %v8102
    %v8104 = vsel %vm8094, %v8101, %v8103
    %v8105 = vsel %vm8093, %v8083, %v8086
    %v8106 = vsel %vm8096, %v8092, 1326507024
    %v8107 = vsel %vm8095, %v8089, %v8106
    %v8108 = vsel %vm8094, %v8105, %v8107
    %v8109 = vshll.u32 %v8069, 8
    %v8110 = vmul.u32.u64.compose %v8109, %v8108
    %v8111 = vextract.low.u32 %v8110
    %v8112 = vextract.high.u32 %v8110
    %v8113 = vmul.u32.u64.compose %v8109, %v8104
    %v8114 = vextract.low.u32 %v8113
    %v8115 = vextract.high.u32 %v8113
    %v8116 = vmul.u32 %v8109, %v8100
    %v8117 = vadd.s32 %v8112, %v8114
    %vm8118 = vc.u32 %v8112, %v8114
    %v8119 = vadd.s32 %v8115, 1
    %v8120 = vsel %vm8118, %v8119, %v8115
    %v8121 = vadd.s32 %v8116, %v8120
    %v8122 = vadd.s32 %v8121, 536870912
    %v8123 = vshrl.u32 %v8122, 30
    %v8124 = vshll.u32 %v8123, 30
    %v8125 = vsub.s32 %v8121, %v8124
    %vm8126 = vcmp.lt.s32.totalorder %v8125, 0
    %v8127 = vsub.s32 0, %v8125
    %v8128 = vsel %vm8126, %v8127, %v8125
    %v8129 = vclz %v8128
    %v8130 = vsub.s32 %v8129, 2
    %vm8131 = vcmp.gt.s32.totalorder 0, %v8130
    %v8132 = vsel %vm8131, 0, %v8130
    %v8133 = vsub.s32 32, %v8132
    %v8134 = vshll.u32 %v8125, %v8132
    %v8135 = vshrl.u32 %v8117, %v8133
    %v8136 = vor.u32 %v8134, %v8135
    %v8137 = vsub.s32 4294967266, %v8132
    %v8138 = vadd.s32 %v8137, 127
    %v8139 = vshll.u32 %v8138, 23
    %v8140 = vor.u32 4788187, %v8139
    %v8141 = vand.u32 2147483647, %v8140
    %v8143 = vcvt.s32.f32 %v8136
    %v8144 = vmul.f32 %v8143, %v8141
    %v8145 = vxor.u32 %v8144, 2147483648
    %v8146 = vsel %vm8063, %v8145, %v8144
    %v8147 = vsub.s32 4, %v8123
    %v8148 = vsel %vm8063, %v8147, %v8123
    %v8149 = vsel %vm8062, %v6180, %v8146
    %v8150 = vsel %vm8062, 0, %v8148
    %v8151 = vcosq.f32.pop %v8149
    %v8152 = vsinq.f32.pop %v8149
    %vm8153 = vweird.f32 %v6180
    %v8154 = vand.u32 %v8150, 3
    %vm8155 = vcmp.lt.s32.totalorder %v8154, 2
    %vm8156 = vcmp.eq.s32.totalorder %v8154, 0
    %v8157 = vxor.u32 %v8152, 2147483648
    %v8158 = vsel %vm8156, %v8151, %v8157
    %vm8159 = vcmp.eq.s32.totalorder %v8154, 2
    %v8160 = vxor.u32 %v8151, 2147483648
    %v8161 = vsel %vm8159, %v8160, %v8152
    %v8162 = vsel %vm8155, %v8158, %v8161
    %v8163 = vsel %vm8153, nan, %v8162
    %v8164 = vand.u32 2147483647, %v6181
    %vm8165 = vcmp.le.f32.partialorder %v8164, 0.7853982
    %vm8166 = vcmp.lt.s32.totalorder %v6181, 0
    %v8167 = vand.u32 %v6181, 2139095040
    %v8168 = vshrl.u32 %v8167, 23
    %v8169 = vsub.s32 %v8168, 127
    %v8170 = vand.u32 2147483647, %v6181
    %v8171 = vand.u32 %v8170, 8388607
    %v8172 = vor.u32 %v8171, 8388608
    %v8173 = vsub.s32 0, %v8172
    %v8174 = vadd.s32 %v8169, 1
    %vm8175 = vcmp.gt.s32.totalorder %v8174, 0
    %v8176 = vsel %vm8175, %v8174, 0
    %v8177 = vshrl.u32 %v8176, 5
    %v8178 = vand.u32 %v8176, 31
    %v8179 = vsub.s32 32, %v8178
    %v8180 = vshrl.u32 683565275, %v8179
    %v8181 = vshll.u32 683565275, %v8178
    %v8182 = vshrl.u32 2475754826, %v8179
    %v8183 = vor.u32 %v8181, %v8182
    %v8184 = vshll.u32 2475754826, %v8178
    %v8185 = vshrl.u32 2131351028, %v8179
    %v8186 = vor.u32 %v8184, %v8185
    %v8187 = vshll.u32 2131351028, %v8178
    %v8188 = vshrl.u32 2102212464, %v8179
    %v8189 = vor.u32 %v8187, %v8188
    %v8190 = vshll.u32 2102212464, %v8178
    %v8191 = vshrl.u32 920167782, %v8179
    %v8192 = vor.u32 %v8190, %v8191
    %v8193 = vshll.u32 920167782, %v8178
    %v8194 = vshrl.u32 1326507024, %v8179
    %v8195 = vor.u32 %v8193, %v8194
    %vm8196 = vcmp.lt.s32.totalorder %v8177, 1
    %vm8197 = vcmp.lt.s32.totalorder %v8177, 2
    %vm8198 = vcmp.lt.s32.totalorder %v8177, 3
    %vm8199 = vcmp.lt.s32.totalorder %v8177, 4
    %v8200 = vsel %vm8196, %v8180, %v8183
    %v8201 = vsel %vm8199, %v8189, 2102212464
    %v8202 = vsel %vm8198, %v8186, %v8201
    %v8203 = vsel %vm8197, %v8200, %v8202
    %v8204 = vsel %vm8196, %v8183, %v8186
    %v8205 = vsel %vm8199, %v8192, 920167782
    %v8206 = vsel %vm8198, %v8189, %v8205
    %v8207 = vsel %vm8197, %v8204, %v8206
    %v8208 = vsel %vm8196, %v8186, %v8189
    %v8209 = vsel %vm8199, %v8195, 1326507024
    %v8210 = vsel %vm8198, %v8192, %v8209
    %v8211 = vsel %vm8197, %v8208, %v8210
    %v8212 = vshll.u32 %v8172, 8
    %v8213 = vmul.u32.u64.compose %v8212, %v8211
    %v8214 = vextract.low.u32 %v8213
    %v8215 = vextract.high.u32 %v8213
    %v8216 = vmul.u32.u64.compose %v8212, %v8207
    %v8217 = vextract.low.u32 %v8216
    %v8218 = vextract.high.u32 %v8216
    %v8219 = vmul.u32 %v8212, %v8203
    %v8220 = vadd.s32 %v8215, %v8217
    %vm8221 = vc.u32 %v8215, %v8217
    %v8222 = vadd.s32 %v8218, 1
    %v8223 = vsel %vm8221, %v8222, %v8218
    %v8224 = vadd.s32 %v8219, %v8223
    %v8225 = vadd.s32 %v8224, 536870912
    %v8226 = vshrl.u32 %v8225, 30
    %v8227 = vshll.u32 %v8226, 30
    %v8228 = vsub.s32 %v8224, %v8227
    %vm8229 = vcmp.lt.s32.totalorder %v8228, 0
    %v8230 = vsub.s32 0, %v8228
    %v8231 = vsel %vm8229, %v8230, %v8228
    %v8232 = vclz %v8231
    %v8233 = vsub.s32 %v8232, 2
    %vm8234 = vcmp.gt.s32.totalorder 0, %v8233
    %v8235 = vsel %vm8234, 0, %v8233
    %v8236 = vsub.s32 32, %v8235
    %v8237 = vshll.u32 %v8228, %v8235
    %v8238 = vshrl.u32 %v8220, %v8236
    %v8239 = vor.u32 %v8237, %v8238
    %v8240 = vsub.s32 4294967266, %v8235
    %v8241 = vadd.s32 %v8240, 127
    %v8242 = vshll.u32 %v8241, 23
    %v8243 = vor.u32 4788187, %v8242
    %v8244 = vand.u32 2147483647, %v8243
    %v8246 = vcvt.s32.f32 %v8239
    %v8247 = vmul.f32 %v8246, %v8244
    %v8248 = vxor.u32 %v8247, 2147483648
    %v8249 = vsel %vm8166, %v8248, %v8247
    %v8250 = vsub.s32 4, %v8226
    %v8251 = vsel %vm8166, %v8250, %v8226
    %v8252 = vsel %vm8165, %v6181, %v8249
    %v8253 = vsel %vm8165, 0, %v8251
    %v8254 = vcosq.f32.pop %v8252
    %v8255 = vsinq.f32.pop %v8252
    %vm8256 = vweird.f32 %v6181
    %v8257 = vand.u32 %v8253, 3
    %vm8258 = vcmp.lt.s32.totalorder %v8257, 2
    %vm8259 = vcmp.eq.s32.totalorder %v8257, 0
    %v8260 = vxor.u32 %v8255, 2147483648
    %v8261 = vsel %vm8259, %v8254, %v8260
    %vm8262 = vcmp.eq.s32.totalorder %v8257, 2
    %v8263 = vxor.u32 %v8254, 2147483648
    %v8264 = vsel %vm8262, %v8263, %v8255
    %v8265 = vsel %vm8258, %v8261, %v8264
    %v8266 = vsel %vm8256, nan, %v8265
    %v8267 = vand.u32 2147483647, %v6182
    %vm8268 = vcmp.le.f32.partialorder %v8267, 0.7853982
    %vm8269 = vcmp.lt.s32.totalorder %v6182, 0
    %v8270 = vand.u32 %v6182, 2139095040
    %v8271 = vshrl.u32 %v8270, 23
    %v8272 = vsub.s32 %v8271, 127
    %v8273 = vand.u32 2147483647, %v6182
    %v8274 = vand.u32 %v8273, 8388607
    %v8275 = vor.u32 %v8274, 8388608
    %v8276 = vsub.s32 0, %v8275
    %v8277 = vadd.s32 %v8272, 1
    %vm8278 = vcmp.gt.s32.totalorder %v8277, 0
    %v8279 = vsel %vm8278, %v8277, 0
    %v8280 = vshrl.u32 %v8279, 5
    %v8281 = vand.u32 %v8279, 31
    %v8282 = vsub.s32 32, %v8281
    %v8283 = vshrl.u32 683565275, %v8282
    %v8284 = vshll.u32 683565275, %v8281
    %v8285 = vshrl.u32 2475754826, %v8282
    %v8286 = vor.u32 %v8284, %v8285
    %v8287 = vshll.u32 2475754826, %v8281
    %v8288 = vshrl.u32 2131351028, %v8282
    %v8289 = vor.u32 %v8287, %v8288
    %v8290 = vshll.u32 2131351028, %v8281
    %v8291 = vshrl.u32 2102212464, %v8282
    %v8292 = vor.u32 %v8290, %v8291
    %v8293 = vshll.u32 2102212464, %v8281
    %v8294 = vshrl.u32 920167782, %v8282
    %v8295 = vor.u32 %v8293, %v8294
    %v8296 = vshll.u32 920167782, %v8281
    %v8297 = vshrl.u32 1326507024, %v8282
    %v8298 = vor.u32 %v8296, %v8297
    %vm8299 = vcmp.lt.s32.totalorder %v8280, 1
    %vm8300 = vcmp.lt.s32.totalorder %v8280, 2
    %vm8301 = vcmp.lt.s32.totalorder %v8280, 3
    %vm8302 = vcmp.lt.s32.totalorder %v8280, 4
    %v8303 = vsel %vm8299, %v8283, %v8286
    %v8304 = vsel %vm8302, %v8292, 2102212464
    %v8305 = vsel %vm8301, %v8289, %v8304
    %v8306 = vsel %vm8300, %v8303, %v8305
    %v8307 = vsel %vm8299, %v8286, %v8289
    %v8308 = vsel %vm8302, %v8295, 920167782
    %v8309 = vsel %vm8301, %v8292, %v8308
    %v8310 = vsel %vm8300, %v8307, %v8309
    %v8311 = vsel %vm8299, %v8289, %v8292
    %v8312 = vsel %vm8302, %v8298, 1326507024
    %v8313 = vsel %vm8301, %v8295, %v8312
    %v8314 = vsel %vm8300, %v8311, %v8313
    %v8315 = vshll.u32 %v8275, 8
    %v8316 = vmul.u32.u64.compose %v8315, %v8314
    %v8317 = vextract.low.u32 %v8316
    %v8318 = vextract.high.u32 %v8316
    %v8319 = vmul.u32.u64.compose %v8315, %v8310
    %v8320 = vextract.low.u32 %v8319
    %v8321 = vextract.high.u32 %v8319
    %v8322 = vmul.u32 %v8315, %v8306
    %v8323 = vadd.s32 %v8318, %v8320
    %vm8324 = vc.u32 %v8318, %v8320
    %v8325 = vadd.s32 %v8321, 1
    %v8326 = vsel %vm8324, %v8325, %v8321
    %v8327 = vadd.s32 %v8322, %v8326
    %v8328 = vadd.s32 %v8327, 536870912
    %v8329 = vshrl.u32 %v8328, 30
    %v8330 = vshll.u32 %v8329, 30
    %v8331 = vsub.s32 %v8327, %v8330
    %vm8332 = vcmp.lt.s32.totalorder %v8331, 0
    %v8333 = vsub.s32 0, %v8331
    %v8334 = vsel %vm8332, %v8333, %v8331
    %v8335 = vclz %v8334
    %v8336 = vsub.s32 %v8335, 2
    %vm8337 = vcmp.gt.s32.totalorder 0, %v8336
    %v8338 = vsel %vm8337, 0, %v8336
    %v8339 = vsub.s32 32, %v8338
    %v8340 = vshll.u32 %v8331, %v8338
    %v8341 = vshrl.u32 %v8323, %v8339
    %v8342 = vor.u32 %v8340, %v8341
    %v8343 = vsub.s32 4294967266, %v8338
    %v8344 = vadd.s32 %v8343, 127
    %v8345 = vshll.u32 %v8344, 23
    %v8346 = vor.u32 4788187, %v8345
    %v8347 = vand.u32 2147483647, %v8346
    %v8349 = vcvt.s32.f32 %v8342
    %v8350 = vmul.f32 %v8349, %v8347
    %v8351 = vxor.u32 %v8350, 2147483648
    %v8352 = vsel %vm8269, %v8351, %v8350
    %v8353 = vsub.s32 4, %v8329
    %v8354 = vsel %vm8269, %v8353, %v8329
    %v8355 = vsel %vm8268, %v6182, %v8352
    %v8356 = vsel %vm8268, 0, %v8354
    %v8357 = vcosq.f32.pop %v8355
    %v8358 = vsinq.f32.pop %v8355
    %vm8359 = vweird.f32 %v6182
    %v8360 = vand.u32 %v8356, 3
    %vm8361 = vcmp.lt.s32.totalorder %v8360, 2
    %vm8362 = vcmp.eq.s32.totalorder %v8360, 0
    %v8363 = vxor.u32 %v8358, 2147483648
    %v8364 = vsel %vm8362, %v8357, %v8363
    %vm8365 = vcmp.eq.s32.totalorder %v8360, 2
    %v8366 = vxor.u32 %v8357, 2147483648
    %v8367 = vsel %vm8365, %v8366, %v8358
    %v8368 = vsel %vm8361, %v8364, %v8367
    %v8369 = vsel %vm8359, nan, %v8368
    %v8370 = vand.u32 2147483647, %v6183
    %vm8371 = vcmp.le.f32.partialorder %v8370, 0.7853982
    %vm8372 = vcmp.lt.s32.totalorder %v6183, 0
    %v8373 = vand.u32 %v6183, 2139095040
    %v8374 = vshrl.u32 %v8373, 23
    %v8375 = vsub.s32 %v8374, 127
    %v8376 = vand.u32 2147483647, %v6183
    %v8377 = vand.u32 %v8376, 8388607
    %v8378 = vor.u32 %v8377, 8388608
    %v8379 = vsub.s32 0, %v8378
    %v8380 = vadd.s32 %v8375, 1
    %vm8381 = vcmp.gt.s32.totalorder %v8380, 0
    %v8382 = vsel %vm8381, %v8380, 0
    %v8383 = vshrl.u32 %v8382, 5
    %v8384 = vand.u32 %v8382, 31
    %v8385 = vsub.s32 32, %v8384
    %v8386 = vshrl.u32 683565275, %v8385
    %v8387 = vshll.u32 683565275, %v8384
    %v8388 = vshrl.u32 2475754826, %v8385
    %v8389 = vor.u32 %v8387, %v8388
    %v8390 = vshll.u32 2475754826, %v8384
    %v8391 = vshrl.u32 2131351028, %v8385
    %v8392 = vor.u32 %v8390, %v8391
    %v8393 = vshll.u32 2131351028, %v8384
    %v8394 = vshrl.u32 2102212464, %v8385
    %v8395 = vor.u32 %v8393, %v8394
    %v8396 = vshll.u32 2102212464, %v8384
    %v8397 = vshrl.u32 920167782, %v8385
    %v8398 = vor.u32 %v8396, %v8397
    %v8399 = vshll.u32 920167782, %v8384
    %v8400 = vshrl.u32 1326507024, %v8385
    %v8401 = vor.u32 %v8399, %v8400
    %vm8402 = vcmp.lt.s32.totalorder %v8383, 1
    %vm8403 = vcmp.lt.s32.totalorder %v8383, 2
    %vm8404 = vcmp.lt.s32.totalorder %v8383, 3
    %vm8405 = vcmp.lt.s32.totalorder %v8383, 4
    %v8406 = vsel %vm8402, %v8386, %v8389
    %v8407 = vsel %vm8405, %v8395, 2102212464
    %v8408 = vsel %vm8404, %v8392, %v8407
    %v8409 = vsel %vm8403, %v8406, %v8408
    %v8410 = vsel %vm8402, %v8389, %v8392
    %v8411 = vsel %vm8405, %v8398, 920167782
    %v8412 = vsel %vm8404, %v8395, %v8411
    %v8413 = vsel %vm8403, %v8410, %v8412
    %v8414 = vsel %vm8402, %v8392, %v8395
    %v8415 = vsel %vm8405, %v8401, 1326507024
    %v8416 = vsel %vm8404, %v8398, %v8415
    %v8417 = vsel %vm8403, %v8414, %v8416
    %v8418 = vshll.u32 %v8378, 8
    %v8419 = vmul.u32.u64.compose %v8418, %v8417
    %v8420 = vextract.low.u32 %v8419
    %v8421 = vextract.high.u32 %v8419
    %v8422 = vmul.u32.u64.compose %v8418, %v8413
    %v8423 = vextract.low.u32 %v8422
    %v8424 = vextract.high.u32 %v8422
    %v8425 = vmul.u32 %v8418, %v8409
    %v8426 = vadd.s32 %v8421, %v8423
    %vm8427 = vc.u32 %v8421, %v8423
    %v8428 = vadd.s32 %v8424, 1
    %v8429 = vsel %vm8427, %v8428, %v8424
    %v8430 = vadd.s32 %v8425, %v8429
    %v8431 = vadd.s32 %v8430, 536870912
    %v8432 = vshrl.u32 %v8431, 30
    %v8433 = vshll.u32 %v8432, 30
    %v8434 = vsub.s32 %v8430, %v8433
    %vm8435 = vcmp.lt.s32.totalorder %v8434, 0
    %v8436 = vsub.s32 0, %v8434
    %v8437 = vsel %vm8435, %v8436, %v8434
    %v8438 = vclz %v8437
    %v8439 = vsub.s32 %v8438, 2
    %vm8440 = vcmp.gt.s32.totalorder 0, %v8439
    %v8441 = vsel %vm8440, 0, %v8439
    %v8442 = vsub.s32 32, %v8441
    %v8443 = vshll.u32 %v8434, %v8441
    %v8444 = vshrl.u32 %v8426, %v8442
    %v8445 = vor.u32 %v8443, %v8444
    %v8446 = vsub.s32 4294967266, %v8441
    %v8447 = vadd.s32 %v8446, 127
    %v8448 = vshll.u32 %v8447, 23
    %v8449 = vor.u32 4788187, %v8448
    %v8450 = vand.u32 2147483647, %v8449
    %v8452 = vcvt.s32.f32 %v8445
    %v8453 = vmul.f32 %v8452, %v8450
    %v8454 = vxor.u32 %v8453, 2147483648
    %v8455 = vsel %vm8372, %v8454, %v8453
    %v8456 = vsub.s32 4, %v8432
    %v8457 = vsel %vm8372, %v8456, %v8432
    %v8458 = vsel %vm8371, %v6183, %v8455
    %v8459 = vsel %vm8371, 0, %v8457
    %v8460 = vcosq.f32.pop %v8458
    %v8461 = vsinq.f32.pop %v8458
    %vm8462 = vweird.f32 %v6183
    %v8463 = vand.u32 %v8459, 3
    %vm8464 = vcmp.lt.s32.totalorder %v8463, 2
    %vm8465 = vcmp.eq.s32.totalorder %v8463, 0
    %v8466 = vxor.u32 %v8461, 2147483648
    %v8467 = vsel %vm8465, %v8460, %v8466
    %vm8468 = vcmp.eq.s32.totalorder %v8463, 2
    %v8469 = vxor.u32 %v8460, 2147483648
    %v8470 = vsel %vm8468, %v8469, %v8461
    %v8471 = vsel %vm8464, %v8467, %v8470
    %v8472 = vsel %vm8462, nan, %v8471
    %v8473 = vand.u32 2147483647, %v6184
    %vm8474 = vcmp.le.f32.partialorder %v8473, 0.7853982
    %vm8475 = vcmp.lt.s32.totalorder %v6184, 0
    %v8476 = vand.u32 %v6184, 2139095040
    %v8477 = vshrl.u32 %v8476, 23
    %v8478 = vsub.s32 %v8477, 127
    %v8479 = vand.u32 2147483647, %v6184
    %v8480 = vand.u32 %v8479, 8388607
    %v8481 = vor.u32 %v8480, 8388608
    %v8482 = vsub.s32 0, %v8481
    %v8483 = vadd.s32 %v8478, 1
    %vm8484 = vcmp.gt.s32.totalorder %v8483, 0
    %v8485 = vsel %vm8484, %v8483, 0
    %v8486 = vshrl.u32 %v8485, 5
    %v8487 = vand.u32 %v8485, 31
    %v8488 = vsub.s32 32, %v8487
    %v8489 = vshrl.u32 683565275, %v8488
    %v8490 = vshll.u32 683565275, %v8487
    %v8491 = vshrl.u32 2475754826, %v8488
    %v8492 = vor.u32 %v8490, %v8491
    %v8493 = vshll.u32 2475754826, %v8487
    %v8494 = vshrl.u32 2131351028, %v8488
    %v8495 = vor.u32 %v8493, %v8494
    %v8496 = vshll.u32 2131351028, %v8487
    %v8497 = vshrl.u32 2102212464, %v8488
    %v8498 = vor.u32 %v8496, %v8497
    %v8499 = vshll.u32 2102212464, %v8487
    %v8500 = vshrl.u32 920167782, %v8488
    %v8501 = vor.u32 %v8499, %v8500
    %v8502 = vshll.u32 920167782, %v8487
    %v8503 = vshrl.u32 1326507024, %v8488
    %v8504 = vor.u32 %v8502, %v8503
    %vm8505 = vcmp.lt.s32.totalorder %v8486, 1
    %vm8506 = vcmp.lt.s32.totalorder %v8486, 2
    %vm8507 = vcmp.lt.s32.totalorder %v8486, 3
    %vm8508 = vcmp.lt.s32.totalorder %v8486, 4
    %v8509 = vsel %vm8505, %v8489, %v8492
    %v8510 = vsel %vm8508, %v8498, 2102212464
    %v8511 = vsel %vm8507, %v8495, %v8510
    %v8512 = vsel %vm8506, %v8509, %v8511
    %v8513 = vsel %vm8505, %v8492, %v8495
    %v8514 = vsel %vm8508, %v8501, 920167782
    %v8515 = vsel %vm8507, %v8498, %v8514
    %v8516 = vsel %vm8506, %v8513, %v8515
    %v8517 = vsel %vm8505, %v8495, %v8498
    %v8518 = vsel %vm8508, %v8504, 1326507024
    %v8519 = vsel %vm8507, %v8501, %v8518
    %v8520 = vsel %vm8506, %v8517, %v8519
    %v8521 = vshll.u32 %v8481, 8
    %v8522 = vmul.u32.u64.compose %v8521, %v8520
    %v8523 = vextract.low.u32 %v8522
    %v8524 = vextract.high.u32 %v8522
    %v8525 = vmul.u32.u64.compose %v8521, %v8516
    %v8526 = vextract.low.u32 %v8525
    %v8527 = vextract.high.u32 %v8525
    %v8528 = vmul.u32 %v8521, %v8512
    %v8529 = vadd.s32 %v8524, %v8526
    %vm8530 = vc.u32 %v8524, %v8526
    %v8531 = vadd.s32 %v8527, 1
    %v8532 = vsel %vm8530, %v8531, %v8527
    %v8533 = vadd.s32 %v8528, %v8532
    %v8534 = vadd.s32 %v8533, 536870912
    %v8535 = vshrl.u32 %v8534, 30
    %v8536 = vshll.u32 %v8535, 30
    %v8537 = vsub.s32 %v8533, %v8536
    %vm8538 = vcmp.lt.s32.totalorder %v8537, 0
    %v8539 = vsub.s32 0, %v8537
    %v8540 = vsel %vm8538, %v8539, %v8537
    %v8541 = vclz %v8540
    %v8542 = vsub.s32 %v8541, 2
    %vm8543 = vcmp.gt.s32.totalorder 0, %v8542
    %v8544 = vsel %vm8543, 0, %v8542
    %v8545 = vsub.s32 32, %v8544
    %v8546 = vshll.u32 %v8537, %v8544
    %v8547 = vshrl.u32 %v8529, %v8545
    %v8548 = vor.u32 %v8546, %v8547
    %v8549 = vsub.s32 4294967266, %v8544
    %v8550 = vadd.s32 %v8549, 127
    %v8551 = vshll.u32 %v8550, 23
    %v8552 = vor.u32 4788187, %v8551
    %v8553 = vand.u32 2147483647, %v8552
    %v8555 = vcvt.s32.f32 %v8548
    %v8556 = vmul.f32 %v8555, %v8553
    %v8557 = vxor.u32 %v8556, 2147483648
    %v8558 = vsel %vm8475, %v8557, %v8556
    %v8559 = vsub.s32 4, %v8535
    %v8560 = vsel %vm8475, %v8559, %v8535
    %v8561 = vsel %vm8474, %v6184, %v8558
    %v8562 = vsel %vm8474, 0, %v8560
    %v8563 = vcosq.f32.pop %v8561
    %v8564 = vsinq.f32.pop %v8561
    %vm8565 = vweird.f32 %v6184
    %v8566 = vand.u32 %v8562, 3
    %vm8567 = vcmp.lt.s32.totalorder %v8566, 2
    %vm8568 = vcmp.eq.s32.totalorder %v8566, 0
    %v8569 = vxor.u32 %v8564, 2147483648
    %v8570 = vsel %vm8568, %v8563, %v8569
    %vm8571 = vcmp.eq.s32.totalorder %v8566, 2
    %v8572 = vxor.u32 %v8563, 2147483648
    %v8573 = vsel %vm8571, %v8572, %v8564
    %v8574 = vsel %vm8567, %v8570, %v8573
    %v8575 = vsel %vm8565, nan, %v8574
    %v8576 = vand.u32 2147483647, %v6185
    %vm8577 = vcmp.le.f32.partialorder %v8576, 0.7853982
    %vm8578 = vcmp.lt.s32.totalorder %v6185, 0
    %v8579 = vand.u32 %v6185, 2139095040
    %v8580 = vshrl.u32 %v8579, 23
    %v8581 = vsub.s32 %v8580, 127
    %v8582 = vand.u32 2147483647, %v6185
    %v8583 = vand.u32 %v8582, 8388607
    %v8584 = vor.u32 %v8583, 8388608
    %v8585 = vsub.s32 0, %v8584
    %v8586 = vadd.s32 %v8581, 1
    %vm8587 = vcmp.gt.s32.totalorder %v8586, 0
    %v8588 = vsel %vm8587, %v8586, 0
    %v8589 = vshrl.u32 %v8588, 5
    %v8590 = vand.u32 %v8588, 31
    %v8591 = vsub.s32 32, %v8590
    %v8592 = vshrl.u32 683565275, %v8591
    %v8593 = vshll.u32 683565275, %v8590
    %v8594 = vshrl.u32 2475754826, %v8591
    %v8595 = vor.u32 %v8593, %v8594
    %v8596 = vshll.u32 2475754826, %v8590
    %v8597 = vshrl.u32 2131351028, %v8591
    %v8598 = vor.u32 %v8596, %v8597
    %v8599 = vshll.u32 2131351028, %v8590
    %v8600 = vshrl.u32 2102212464, %v8591
    %v8601 = vor.u32 %v8599, %v8600
    %v8602 = vshll.u32 2102212464, %v8590
    %v8603 = vshrl.u32 920167782, %v8591
    %v8604 = vor.u32 %v8602, %v8603
    %v8605 = vshll.u32 920167782, %v8590
    %v8606 = vshrl.u32 1326507024, %v8591
    %v8607 = vor.u32 %v8605, %v8606
    %vm8608 = vcmp.lt.s32.totalorder %v8589, 1
    %vm8609 = vcmp.lt.s32.totalorder %v8589, 2
    %vm8610 = vcmp.lt.s32.totalorder %v8589, 3
    %vm8611 = vcmp.lt.s32.totalorder %v8589, 4
    %v8612 = vsel %vm8608, %v8592, %v8595
    %v8613 = vsel %vm8611, %v8601, 2102212464
    %v8614 = vsel %vm8610, %v8598, %v8613
    %v8615 = vsel %vm8609, %v8612, %v8614
    %v8616 = vsel %vm8608, %v8595, %v8598
    %v8617 = vsel %vm8611, %v8604, 920167782
    %v8618 = vsel %vm8610, %v8601, %v8617
    %v8619 = vsel %vm8609, %v8616, %v8618
    %v8620 = vsel %vm8608, %v8598, %v8601
    %v8621 = vsel %vm8611, %v8607, 1326507024
    %v8622 = vsel %vm8610, %v8604, %v8621
    %v8623 = vsel %vm8609, %v8620, %v8622
    %v8624 = vshll.u32 %v8584, 8
    %v8625 = vmul.u32.u64.compose %v8624, %v8623
    %v8626 = vextract.low.u32 %v8625
    %v8627 = vextract.high.u32 %v8625
    %v8628 = vmul.u32.u64.compose %v8624, %v8619
    %v8629 = vextract.low.u32 %v8628
    %v8630 = vextract.high.u32 %v8628
    %v8631 = vmul.u32 %v8624, %v8615
    %v8632 = vadd.s32 %v8627, %v8629
    %vm8633 = vc.u32 %v8627, %v8629
    %v8634 = vadd.s32 %v8630, 1
    %v8635 = vsel %vm8633, %v8634, %v8630
    %v8636 = vadd.s32 %v8631, %v8635
    %v8637 = vadd.s32 %v8636, 536870912
    %v8638 = vshrl.u32 %v8637, 30
    %v8639 = vshll.u32 %v8638, 30
    %v8640 = vsub.s32 %v8636, %v8639
    %vm8641 = vcmp.lt.s32.totalorder %v8640, 0
    %v8642 = vsub.s32 0, %v8640
    %v8643 = vsel %vm8641, %v8642, %v8640
    %v8644 = vclz %v8643
    %v8645 = vsub.s32 %v8644, 2
    %vm8646 = vcmp.gt.s32.totalorder 0, %v8645
    %v8647 = vsel %vm8646, 0, %v8645
    %v8648 = vsub.s32 32, %v8647
    %v8649 = vshll.u32 %v8640, %v8647
    %v8650 = vshrl.u32 %v8632, %v8648
    %v8651 = vor.u32 %v8649, %v8650
    %v8652 = vsub.s32 4294967266, %v8647
    %v8653 = vadd.s32 %v8652, 127
    %v8654 = vshll.u32 %v8653, 23
    %v8655 = vor.u32 4788187, %v8654
    %v8656 = vand.u32 2147483647, %v8655
    %v8658 = vcvt.s32.f32 %v8651
    %v8659 = vmul.f32 %v8658, %v8656
    %v8660 = vxor.u32 %v8659, 2147483648
    %v8661 = vsel %vm8578, %v8660, %v8659
    %v8662 = vsub.s32 4, %v8638
    %v8663 = vsel %vm8578, %v8662, %v8638
    %v8664 = vsel %vm8577, %v6185, %v8661
    %v8665 = vsel %vm8577, 0, %v8663
    %v8666 = vcosq.f32.pop %v8664
    %v8667 = vsinq.f32.pop %v8664
    %vm8668 = vweird.f32 %v6185
    %v8669 = vand.u32 %v8665, 3
    %vm8670 = vcmp.lt.s32.totalorder %v8669, 2
    %vm8671 = vcmp.eq.s32.totalorder %v8669, 0
    %v8672 = vxor.u32 %v8667, 2147483648
    %v8673 = vsel %vm8671, %v8666, %v8672
    %vm8674 = vcmp.eq.s32.totalorder %v8669, 2
    %v8675 = vxor.u32 %v8666, 2147483648
    %v8676 = vsel %vm8674, %v8675, %v8667
    %v8677 = vsel %vm8670, %v8673, %v8676
    %v8678 = vsel %vm8668, nan, %v8677
    %v8679 = vand.u32 2147483647, %v6186
    %vm8680 = vcmp.le.f32.partialorder %v8679, 0.7853982
    %vm8681 = vcmp.lt.s32.totalorder %v6186, 0
    %v8682 = vand.u32 %v6186, 2139095040
    %v8683 = vshrl.u32 %v8682, 23
    %v8684 = vsub.s32 %v8683, 127
    %v8685 = vand.u32 2147483647, %v6186
    %v8686 = vand.u32 %v8685, 8388607
    %v8687 = vor.u32 %v8686, 8388608
    %v8688 = vsub.s32 0, %v8687
    %v8689 = vadd.s32 %v8684, 1
    %vm8690 = vcmp.gt.s32.totalorder %v8689, 0
    %v8691 = vsel %vm8690, %v8689, 0
    %v8692 = vshrl.u32 %v8691, 5
    %v8693 = vand.u32 %v8691, 31
    %v8694 = vsub.s32 32, %v8693
    %v8695 = vshrl.u32 683565275, %v8694
    %v8696 = vshll.u32 683565275, %v8693
    %v8697 = vshrl.u32 2475754826, %v8694
    %v8698 = vor.u32 %v8696, %v8697
    %v8699 = vshll.u32 2475754826, %v8693
    %v8700 = vshrl.u32 2131351028, %v8694
    %v8701 = vor.u32 %v8699, %v8700
    %v8702 = vshll.u32 2131351028, %v8693
    %v8703 = vshrl.u32 2102212464, %v8694
    %v8704 = vor.u32 %v8702, %v8703
    %v8705 = vshll.u32 2102212464, %v8693
    %v8706 = vshrl.u32 920167782, %v8694
    %v8707 = vor.u32 %v8705, %v8706
    %v8708 = vshll.u32 920167782, %v8693
    %v8709 = vshrl.u32 1326507024, %v8694
    %v8710 = vor.u32 %v8708, %v8709
    %vm8711 = vcmp.lt.s32.totalorder %v8692, 1
    %vm8712 = vcmp.lt.s32.totalorder %v8692, 2
    %vm8713 = vcmp.lt.s32.totalorder %v8692, 3
    %vm8714 = vcmp.lt.s32.totalorder %v8692, 4
    %v8715 = vsel %vm8711, %v8695, %v8698
    %v8716 = vsel %vm8714, %v8704, 2102212464
    %v8717 = vsel %vm8713, %v8701, %v8716
    %v8718 = vsel %vm8712, %v8715, %v8717
    %v8719 = vsel %vm8711, %v8698, %v8701
    %v8720 = vsel %vm8714, %v8707, 920167782
    %v8721 = vsel %vm8713, %v8704, %v8720
    %v8722 = vsel %vm8712, %v8719, %v8721
    %v8723 = vsel %vm8711, %v8701, %v8704
    %v8724 = vsel %vm8714, %v8710, 1326507024
    %v8725 = vsel %vm8713, %v8707, %v8724
    %v8726 = vsel %vm8712, %v8723, %v8725
    %v8727 = vshll.u32 %v8687, 8
    %v8728 = vmul.u32.u64.compose %v8727, %v8726
    %v8729 = vextract.low.u32 %v8728
    %v8730 = vextract.high.u32 %v8728
    %v8731 = vmul.u32.u64.compose %v8727, %v8722
    %v8732 = vextract.low.u32 %v8731
    %v8733 = vextract.high.u32 %v8731
    %v8734 = vmul.u32 %v8727, %v8718
    %v8735 = vadd.s32 %v8730, %v8732
    %vm8736 = vc.u32 %v8730, %v8732
    %v8737 = vadd.s32 %v8733, 1
    %v8738 = vsel %vm8736, %v8737, %v8733
    %v8739 = vadd.s32 %v8734, %v8738
    %v8740 = vadd.s32 %v8739, 536870912
    %v8741 = vshrl.u32 %v8740, 30
    %v8742 = vshll.u32 %v8741, 30
    %v8743 = vsub.s32 %v8739, %v8742
    %vm8744 = vcmp.lt.s32.totalorder %v8743, 0
    %v8745 = vsub.s32 0, %v8743
    %v8746 = vsel %vm8744, %v8745, %v8743
    %v8747 = vclz %v8746
    %v8748 = vsub.s32 %v8747, 2
    %vm8749 = vcmp.gt.s32.totalorder 0, %v8748
    %v8750 = vsel %vm8749, 0, %v8748
    %v8751 = vsub.s32 32, %v8750
    %v8752 = vshll.u32 %v8743, %v8750
    %v8753 = vshrl.u32 %v8735, %v8751
    %v8754 = vor.u32 %v8752, %v8753
    %v8755 = vsub.s32 4294967266, %v8750
    %v8756 = vadd.s32 %v8755, 127
    %v8757 = vshll.u32 %v8756, 23
    %v8758 = vor.u32 4788187, %v8757
    %v8759 = vand.u32 2147483647, %v8758
    %v8761 = vcvt.s32.f32 %v8754
    %v8762 = vmul.f32 %v8761, %v8759
    %v8763 = vxor.u32 %v8762, 2147483648
    %v8764 = vsel %vm8681, %v8763, %v8762
    %v8765 = vsub.s32 4, %v8741
    %v8766 = vsel %vm8681, %v8765, %v8741
    %v8767 = vsel %vm8680, %v6186, %v8764
    %v8768 = vsel %vm8680, 0, %v8766
    %v8769 = vcosq.f32.pop %v8767
    %v8770 = vsinq.f32.pop %v8767
    %vm8771 = vweird.f32 %v6186
    %v8772 = vand.u32 %v8768, 3
    %vm8773 = vcmp.lt.s32.totalorder %v8772, 2
    %vm8774 = vcmp.eq.s32.totalorder %v8772, 0
    %v8775 = vxor.u32 %v8770, 2147483648
    %v8776 = vsel %vm8774, %v8769, %v8775
    %vm8777 = vcmp.eq.s32.totalorder %v8772, 2
    %v8778 = vxor.u32 %v8769, 2147483648
    %v8779 = vsel %vm8777, %v8778, %v8770
    %v8780 = vsel %vm8773, %v8776, %v8779
    %v8781 = vsel %vm8771, nan, %v8780
    %v8782 = vand.u32 2147483647, %v6187
    %vm8783 = vcmp.le.f32.partialorder %v8782, 0.7853982
    %vm8784 = vcmp.lt.s32.totalorder %v6187, 0
    %v8785 = vand.u32 %v6187, 2139095040
    %v8786 = vshrl.u32 %v8785, 23
    %v8787 = vsub.s32 %v8786, 127
    %v8788 = vand.u32 2147483647, %v6187
    %v8789 = vand.u32 %v8788, 8388607
    %v8790 = vor.u32 %v8789, 8388608
    %v8791 = vsub.s32 0, %v8790
    %v8792 = vadd.s32 %v8787, 1
    %vm8793 = vcmp.gt.s32.totalorder %v8792, 0
    %v8794 = vsel %vm8793, %v8792, 0
    %v8795 = vshrl.u32 %v8794, 5
    %v8796 = vand.u32 %v8794, 31
    %v8797 = vsub.s32 32, %v8796
    %v8798 = vshrl.u32 683565275, %v8797
    %v8799 = vshll.u32 683565275, %v8796
    %v8800 = vshrl.u32 2475754826, %v8797
    %v8801 = vor.u32 %v8799, %v8800
    %v8802 = vshll.u32 2475754826, %v8796
    %v8803 = vshrl.u32 2131351028, %v8797
    %v8804 = vor.u32 %v8802, %v8803
    %v8805 = vshll.u32 2131351028, %v8796
    %v8806 = vshrl.u32 2102212464, %v8797
    %v8807 = vor.u32 %v8805, %v8806
    %v8808 = vshll.u32 2102212464, %v8796
    %v8809 = vshrl.u32 920167782, %v8797
    %v8810 = vor.u32 %v8808, %v8809
    %v8811 = vshll.u32 920167782, %v8796
    %v8812 = vshrl.u32 1326507024, %v8797
    %v8813 = vor.u32 %v8811, %v8812
    %vm8814 = vcmp.lt.s32.totalorder %v8795, 1
    %vm8815 = vcmp.lt.s32.totalorder %v8795, 2
    %vm8816 = vcmp.lt.s32.totalorder %v8795, 3
    %vm8817 = vcmp.lt.s32.totalorder %v8795, 4
    %v8818 = vsel %vm8814, %v8798, %v8801
    %v8819 = vsel %vm8817, %v8807, 2102212464
    %v8820 = vsel %vm8816, %v8804, %v8819
    %v8821 = vsel %vm8815, %v8818, %v8820
    %v8822 = vsel %vm8814, %v8801, %v8804
    %v8823 = vsel %vm8817, %v8810, 920167782
    %v8824 = vsel %vm8816, %v8807, %v8823
    %v8825 = vsel %vm8815, %v8822, %v8824
    %v8826 = vsel %vm8814, %v8804, %v8807
    %v8827 = vsel %vm8817, %v8813, 1326507024
    %v8828 = vsel %vm8816, %v8810, %v8827
    %v8829 = vsel %vm8815, %v8826, %v8828
    %v8830 = vshll.u32 %v8790, 8
    %v8831 = vmul.u32.u64.compose %v8830, %v8829
    %v8832 = vextract.low.u32 %v8831
    %v8833 = vextract.high.u32 %v8831
    %v8834 = vmul.u32.u64.compose %v8830, %v8825
    %v8835 = vextract.low.u32 %v8834
    %v8836 = vextract.high.u32 %v8834
    %v8837 = vmul.u32 %v8830, %v8821
    %v8838 = vadd.s32 %v8833, %v8835
    %vm8839 = vc.u32 %v8833, %v8835
    %v8840 = vadd.s32 %v8836, 1
    %v8841 = vsel %vm8839, %v8840, %v8836
    %v8842 = vadd.s32 %v8837, %v8841
    %v8843 = vadd.s32 %v8842, 536870912
    %v8844 = vshrl.u32 %v8843, 30
    %v8845 = vshll.u32 %v8844, 30
    %v8846 = vsub.s32 %v8842, %v8845
    %vm8847 = vcmp.lt.s32.totalorder %v8846, 0
    %v8848 = vsub.s32 0, %v8846
    %v8849 = vsel %vm8847, %v8848, %v8846
    %v8850 = vclz %v8849
    %v8851 = vsub.s32 %v8850, 2
    %vm8852 = vcmp.gt.s32.totalorder 0, %v8851
    %v8853 = vsel %vm8852, 0, %v8851
    %v8854 = vsub.s32 32, %v8853
    %v8855 = vshll.u32 %v8846, %v8853
    %v8856 = vshrl.u32 %v8838, %v8854
    %v8857 = vor.u32 %v8855, %v8856
    %v8858 = vsub.s32 4294967266, %v8853
    %v8859 = vadd.s32 %v8858, 127
    %v8860 = vshll.u32 %v8859, 23
    %v8861 = vor.u32 4788187, %v8860
    %v8862 = vand.u32 2147483647, %v8861
    %v8864 = vcvt.s32.f32 %v8857
    %v8865 = vmul.f32 %v8864, %v8862
    %v8866 = vxor.u32 %v8865, 2147483648
    %v8867 = vsel %vm8784, %v8866, %v8865
    %v8868 = vsub.s32 4, %v8844
    %v8869 = vsel %vm8784, %v8868, %v8844
    %v8870 = vsel %vm8783, %v6187, %v8867
    %v8871 = vsel %vm8783, 0, %v8869
    %v8872 = vcosq.f32.pop %v8870
    %v8873 = vsinq.f32.pop %v8870
    %vm8874 = vweird.f32 %v6187
    %v8875 = vand.u32 %v8871, 3
    %vm8876 = vcmp.lt.s32.totalorder %v8875, 2
    %vm8877 = vcmp.eq.s32.totalorder %v8875, 0
    %v8878 = vxor.u32 %v8873, 2147483648
    %v8879 = vsel %vm8877, %v8872, %v8878
    %vm8880 = vcmp.eq.s32.totalorder %v8875, 2
    %v8881 = vxor.u32 %v8872, 2147483648
    %v8882 = vsel %vm8880, %v8881, %v8873
    %v8883 = vsel %vm8876, %v8879, %v8882
    %v8884 = vsel %vm8874, nan, %v8883
    %v8885 = vand.u32 2147483647, %v6188
    %vm8886 = vcmp.le.f32.partialorder %v8885, 0.7853982
    %vm8887 = vcmp.lt.s32.totalorder %v6188, 0
    %v8888 = vand.u32 %v6188, 2139095040
    %v8889 = vshrl.u32 %v8888, 23
    %v8890 = vsub.s32 %v8889, 127
    %v8891 = vand.u32 2147483647, %v6188
    %v8892 = vand.u32 %v8891, 8388607
    %v8893 = vor.u32 %v8892, 8388608
    %v8894 = vsub.s32 0, %v8893
    %v8895 = vadd.s32 %v8890, 1
    %vm8896 = vcmp.gt.s32.totalorder %v8895, 0
    %v8897 = vsel %vm8896, %v8895, 0
    %v8898 = vshrl.u32 %v8897, 5
    %v8899 = vand.u32 %v8897, 31
    %v8900 = vsub.s32 32, %v8899
    %v8901 = vshrl.u32 683565275, %v8900
    %v8902 = vshll.u32 683565275, %v8899
    %v8903 = vshrl.u32 2475754826, %v8900
    %v8904 = vor.u32 %v8902, %v8903
    %v8905 = vshll.u32 2475754826, %v8899
    %v8906 = vshrl.u32 2131351028, %v8900
    %v8907 = vor.u32 %v8905, %v8906
    %v8908 = vshll.u32 2131351028, %v8899
    %v8909 = vshrl.u32 2102212464, %v8900
    %v8910 = vor.u32 %v8908, %v8909
    %v8911 = vshll.u32 2102212464, %v8899
    %v8912 = vshrl.u32 920167782, %v8900
    %v8913 = vor.u32 %v8911, %v8912
    %v8914 = vshll.u32 920167782, %v8899
    %v8915 = vshrl.u32 1326507024, %v8900
    %v8916 = vor.u32 %v8914, %v8915
    %vm8917 = vcmp.lt.s32.totalorder %v8898, 1
    %vm8918 = vcmp.lt.s32.totalorder %v8898, 2
    %vm8919 = vcmp.lt.s32.totalorder %v8898, 3
    %vm8920 = vcmp.lt.s32.totalorder %v8898, 4
    %v8921 = vsel %vm8917, %v8901, %v8904
    %v8922 = vsel %vm8920, %v8910, 2102212464
    %v8923 = vsel %vm8919, %v8907, %v8922
    %v8924 = vsel %vm8918, %v8921, %v8923
    %v8925 = vsel %vm8917, %v8904, %v8907
    %v8926 = vsel %vm8920, %v8913, 920167782
    %v8927 = vsel %vm8919, %v8910, %v8926
    %v8928 = vsel %vm8918, %v8925, %v8927
    %v8929 = vsel %vm8917, %v8907, %v8910
    %v8930 = vsel %vm8920, %v8916, 1326507024
    %v8931 = vsel %vm8919, %v8913, %v8930
    %v8932 = vsel %vm8918, %v8929, %v8931
    %v8933 = vshll.u32 %v8893, 8
    %v8934 = vmul.u32.u64.compose %v8933, %v8932
    %v8935 = vextract.low.u32 %v8934
    %v8936 = vextract.high.u32 %v8934
    %v8937 = vmul.u32.u64.compose %v8933, %v8928
    %v8938 = vextract.low.u32 %v8937
    %v8939 = vextract.high.u32 %v8937
    %v8940 = vmul.u32 %v8933, %v8924
    %v8941 = vadd.s32 %v8936, %v8938
    %vm8942 = vc.u32 %v8936, %v8938
    %v8943 = vadd.s32 %v8939, 1
    %v8944 = vsel %vm8942, %v8943, %v8939
    %v8945 = vadd.s32 %v8940, %v8944
    %v8946 = vadd.s32 %v8945, 536870912
    %v8947 = vshrl.u32 %v8946, 30
    %v8948 = vshll.u32 %v8947, 30
    %v8949 = vsub.s32 %v8945, %v8948
    %vm8950 = vcmp.lt.s32.totalorder %v8949, 0
    %v8951 = vsub.s32 0, %v8949
    %v8952 = vsel %vm8950, %v8951, %v8949
    %v8953 = vclz %v8952
    %v8954 = vsub.s32 %v8953, 2
    %vm8955 = vcmp.gt.s32.totalorder 0, %v8954
    %v8956 = vsel %vm8955, 0, %v8954
    %v8957 = vsub.s32 32, %v8956
    %v8958 = vshll.u32 %v8949, %v8956
    %v8959 = vshrl.u32 %v8941, %v8957
    %v8960 = vor.u32 %v8958, %v8959
    %v8961 = vsub.s32 4294967266, %v8956
    %v8962 = vadd.s32 %v8961, 127
    %v8963 = vshll.u32 %v8962, 23
    %v8964 = vor.u32 4788187, %v8963
    %v8965 = vand.u32 2147483647, %v8964
    %v8967 = vcvt.s32.f32 %v8960
    %v8968 = vmul.f32 %v8967, %v8965
    %v8969 = vxor.u32 %v8968, 2147483648
    %v8970 = vsel %vm8887, %v8969, %v8968
    %v8971 = vsub.s32 4, %v8947
    %v8972 = vsel %vm8887, %v8971, %v8947
    %v8973 = vsel %vm8886, %v6188, %v8970
    %v8974 = vsel %vm8886, 0, %v8972
    %v8975 = vcosq.f32.pop %v8973
    %v8976 = vsinq.f32.pop %v8973
    %vm8977 = vweird.f32 %v6188
    %v8978 = vand.u32 %v8974, 3
    %vm8979 = vcmp.lt.s32.totalorder %v8978, 2
    %vm8980 = vcmp.eq.s32.totalorder %v8978, 0
    %v8981 = vxor.u32 %v8976, 2147483648
    %v8982 = vsel %vm8980, %v8975, %v8981
    %vm8983 = vcmp.eq.s32.totalorder %v8978, 2
    %v8984 = vxor.u32 %v8975, 2147483648
    %v8985 = vsel %vm8983, %v8984, %v8976
    %v8986 = vsel %vm8979, %v8982, %v8985
    %v8987 = vsel %vm8977, nan, %v8986
    %v8988 = vand.u32 2147483647, %v6189
    %vm8989 = vcmp.le.f32.partialorder %v8988, 0.7853982
    %vm8990 = vcmp.lt.s32.totalorder %v6189, 0
    %v8991 = vand.u32 %v6189, 2139095040
    %v8992 = vshrl.u32 %v8991, 23
    %v8993 = vsub.s32 %v8992, 127
    %v8994 = vand.u32 2147483647, %v6189
    %v8995 = vand.u32 %v8994, 8388607
    %v8996 = vor.u32 %v8995, 8388608
    %v8997 = vsub.s32 0, %v8996
    %v8998 = vadd.s32 %v8993, 1
    %vm8999 = vcmp.gt.s32.totalorder %v8998, 0
    %v9000 = vsel %vm8999, %v8998, 0
    %v9001 = vshrl.u32 %v9000, 5
    %v9002 = vand.u32 %v9000, 31
    %v9003 = vsub.s32 32, %v9002
    %v9004 = vshrl.u32 683565275, %v9003
    %v9005 = vshll.u32 683565275, %v9002
    %v9006 = vshrl.u32 2475754826, %v9003
    %v9007 = vor.u32 %v9005, %v9006
    %v9008 = vshll.u32 2475754826, %v9002
    %v9009 = vshrl.u32 2131351028, %v9003
    %v9010 = vor.u32 %v9008, %v9009
    %v9011 = vshll.u32 2131351028, %v9002
    %v9012 = vshrl.u32 2102212464, %v9003
    %v9013 = vor.u32 %v9011, %v9012
    %v9014 = vshll.u32 2102212464, %v9002
    %v9015 = vshrl.u32 920167782, %v9003
    %v9016 = vor.u32 %v9014, %v9015
    %v9017 = vshll.u32 920167782, %v9002
    %v9018 = vshrl.u32 1326507024, %v9003
    %v9019 = vor.u32 %v9017, %v9018
    %vm9020 = vcmp.lt.s32.totalorder %v9001, 1
    %vm9021 = vcmp.lt.s32.totalorder %v9001, 2
    %vm9022 = vcmp.lt.s32.totalorder %v9001, 3
    %vm9023 = vcmp.lt.s32.totalorder %v9001, 4
    %v9024 = vsel %vm9020, %v9004, %v9007
    %v9025 = vsel %vm9023, %v9013, 2102212464
    %v9026 = vsel %vm9022, %v9010, %v9025
    %v9027 = vsel %vm9021, %v9024, %v9026
    %v9028 = vsel %vm9020, %v9007, %v9010
    %v9029 = vsel %vm9023, %v9016, 920167782
    %v9030 = vsel %vm9022, %v9013, %v9029
    %v9031 = vsel %vm9021, %v9028, %v9030
    %v9032 = vsel %vm9020, %v9010, %v9013
    %v9033 = vsel %vm9023, %v9019, 1326507024
    %v9034 = vsel %vm9022, %v9016, %v9033
    %v9035 = vsel %vm9021, %v9032, %v9034
    %v9036 = vshll.u32 %v8996, 8
    %v9037 = vmul.u32.u64.compose %v9036, %v9035
    %v9038 = vextract.low.u32 %v9037
    %v9039 = vextract.high.u32 %v9037
    %v9040 = vmul.u32.u64.compose %v9036, %v9031
    %v9041 = vextract.low.u32 %v9040
    %v9042 = vextract.high.u32 %v9040
    %v9043 = vmul.u32 %v9036, %v9027
    %v9044 = vadd.s32 %v9039, %v9041
    %vm9045 = vc.u32 %v9039, %v9041
    %v9046 = vadd.s32 %v9042, 1
    %v9047 = vsel %vm9045, %v9046, %v9042
    %v9048 = vadd.s32 %v9043, %v9047
    %v9049 = vadd.s32 %v9048, 536870912
    %v9050 = vshrl.u32 %v9049, 30
    %v9051 = vshll.u32 %v9050, 30
    %v9052 = vsub.s32 %v9048, %v9051
    %vm9053 = vcmp.lt.s32.totalorder %v9052, 0
    %v9054 = vsub.s32 0, %v9052
    %v9055 = vsel %vm9053, %v9054, %v9052
    %v9056 = vclz %v9055
    %v9057 = vsub.s32 %v9056, 2
    %vm9058 = vcmp.gt.s32.totalorder 0, %v9057
    %v9059 = vsel %vm9058, 0, %v9057
    %v9060 = vsub.s32 32, %v9059
    %v9061 = vshll.u32 %v9052, %v9059
    %v9062 = vshrl.u32 %v9044, %v9060
    %v9063 = vor.u32 %v9061, %v9062
    %v9064 = vsub.s32 4294967266, %v9059
    %v9065 = vadd.s32 %v9064, 127
    %v9066 = vshll.u32 %v9065, 23
    %v9067 = vor.u32 4788187, %v9066
    %v9068 = vand.u32 2147483647, %v9067
    %v9070 = vcvt.s32.f32 %v9063
    %v9071 = vmul.f32 %v9070, %v9068
    %v9072 = vxor.u32 %v9071, 2147483648
    %v9073 = vsel %vm8990, %v9072, %v9071
    %v9074 = vsub.s32 4, %v9050
    %v9075 = vsel %vm8990, %v9074, %v9050
    %v9076 = vsel %vm8989, %v6189, %v9073
    %v9077 = vsel %vm8989, 0, %v9075
    %v9078 = vcosq.f32.pop %v9076
    %v9079 = vsinq.f32.pop %v9076
    %vm9080 = vweird.f32 %v6189
    %v9081 = vand.u32 %v9077, 3
    %vm9082 = vcmp.lt.s32.totalorder %v9081, 2
    %vm9083 = vcmp.eq.s32.totalorder %v9081, 0
    %v9084 = vxor.u32 %v9079, 2147483648
    %v9085 = vsel %vm9083, %v9078, %v9084
    %vm9086 = vcmp.eq.s32.totalorder %v9081, 2
    %v9087 = vxor.u32 %v9078, 2147483648
    %v9088 = vsel %vm9086, %v9087, %v9079
    %v9089 = vsel %vm9082, %v9085, %v9088
    %v9090 = vsel %vm9080, nan, %v9089
    %v9091 = vand.u32 2147483647, %v6190
    %vm9092 = vcmp.le.f32.partialorder %v9091, 0.7853982
    %vm9093 = vcmp.lt.s32.totalorder %v6190, 0
    %v9094 = vand.u32 %v6190, 2139095040
    %v9095 = vshrl.u32 %v9094, 23
    %v9096 = vsub.s32 %v9095, 127
    %v9097 = vand.u32 2147483647, %v6190
    %v9098 = vand.u32 %v9097, 8388607
    %v9099 = vor.u32 %v9098, 8388608
    %v9100 = vsub.s32 0, %v9099
    %v9101 = vadd.s32 %v9096, 1
    %vm9102 = vcmp.gt.s32.totalorder %v9101, 0
    %v9103 = vsel %vm9102, %v9101, 0
    %v9104 = vshrl.u32 %v9103, 5
    %v9105 = vand.u32 %v9103, 31
    %v9106 = vsub.s32 32, %v9105
    %v9107 = vshrl.u32 683565275, %v9106
    %v9108 = vshll.u32 683565275, %v9105
    %v9109 = vshrl.u32 2475754826, %v9106
    %v9110 = vor.u32 %v9108, %v9109
    %v9111 = vshll.u32 2475754826, %v9105
    %v9112 = vshrl.u32 2131351028, %v9106
    %v9113 = vor.u32 %v9111, %v9112
    %v9114 = vshll.u32 2131351028, %v9105
    %v9115 = vshrl.u32 2102212464, %v9106
    %v9116 = vor.u32 %v9114, %v9115
    %v9117 = vshll.u32 2102212464, %v9105
    %v9118 = vshrl.u32 920167782, %v9106
    %v9119 = vor.u32 %v9117, %v9118
    %v9120 = vshll.u32 920167782, %v9105
    %v9121 = vshrl.u32 1326507024, %v9106
    %v9122 = vor.u32 %v9120, %v9121
    %vm9123 = vcmp.lt.s32.totalorder %v9104, 1
    %vm9124 = vcmp.lt.s32.totalorder %v9104, 2
    %vm9125 = vcmp.lt.s32.totalorder %v9104, 3
    %vm9126 = vcmp.lt.s32.totalorder %v9104, 4
    %v9127 = vsel %vm9123, %v9107, %v9110
    %v9128 = vsel %vm9126, %v9116, 2102212464
    %v9129 = vsel %vm9125, %v9113, %v9128
    %v9130 = vsel %vm9124, %v9127, %v9129
    %v9131 = vsel %vm9123, %v9110, %v9113
    %v9132 = vsel %vm9126, %v9119, 920167782
    %v9133 = vsel %vm9125, %v9116, %v9132
    %v9134 = vsel %vm9124, %v9131, %v9133
    %v9135 = vsel %vm9123, %v9113, %v9116
    %v9136 = vsel %vm9126, %v9122, 1326507024
    %v9137 = vsel %vm9125, %v9119, %v9136
    %v9138 = vsel %vm9124, %v9135, %v9137
    %v9139 = vshll.u32 %v9099, 8
    %v9140 = vmul.u32.u64.compose %v9139, %v9138
    %v9141 = vextract.low.u32 %v9140
    %v9142 = vextract.high.u32 %v9140
    %v9143 = vmul.u32.u64.compose %v9139, %v9134
    %v9144 = vextract.low.u32 %v9143
    %v9145 = vextract.high.u32 %v9143
    %v9146 = vmul.u32 %v9139, %v9130
    %v9147 = vadd.s32 %v9142, %v9144
    %vm9148 = vc.u32 %v9142, %v9144
    %v9149 = vadd.s32 %v9145, 1
    %v9150 = vsel %vm9148, %v9149, %v9145
    %v9151 = vadd.s32 %v9146, %v9150
    %v9152 = vadd.s32 %v9151, 536870912
    %v9153 = vshrl.u32 %v9152, 30
    %v9154 = vshll.u32 %v9153, 30
    %v9155 = vsub.s32 %v9151, %v9154
    %vm9156 = vcmp.lt.s32.totalorder %v9155, 0
    %v9157 = vsub.s32 0, %v9155
    %v9158 = vsel %vm9156, %v9157, %v9155
    %v9159 = vclz %v9158
    %v9160 = vsub.s32 %v9159, 2
    %vm9161 = vcmp.gt.s32.totalorder 0, %v9160
    %v9162 = vsel %vm9161, 0, %v9160
    %v9163 = vsub.s32 32, %v9162
    %v9164 = vshll.u32 %v9155, %v9162
    %v9165 = vshrl.u32 %v9147, %v9163
    %v9166 = vor.u32 %v9164, %v9165
    %v9167 = vsub.s32 4294967266, %v9162
    %v9168 = vadd.s32 %v9167, 127
    %v9169 = vshll.u32 %v9168, 23
    %v9170 = vor.u32 4788187, %v9169
    %v9171 = vand.u32 2147483647, %v9170
    %v9173 = vcvt.s32.f32 %v9166
    %v9174 = vmul.f32 %v9173, %v9171
    %v9175 = vxor.u32 %v9174, 2147483648
    %v9176 = vsel %vm9093, %v9175, %v9174
    %v9177 = vsub.s32 4, %v9153
    %v9178 = vsel %vm9093, %v9177, %v9153
    %v9179 = vsel %vm9092, %v6190, %v9176
    %v9180 = vsel %vm9092, 0, %v9178
    %v9181 = vcosq.f32.pop %v9179
    %v9182 = vsinq.f32.pop %v9179
    %vm9183 = vweird.f32 %v6190
    %v9184 = vand.u32 %v9180, 3
    %vm9185 = vcmp.lt.s32.totalorder %v9184, 2
    %vm9186 = vcmp.eq.s32.totalorder %v9184, 0
    %v9187 = vxor.u32 %v9182, 2147483648
    %v9188 = vsel %vm9186, %v9181, %v9187
    %vm9189 = vcmp.eq.s32.totalorder %v9184, 2
    %v9190 = vxor.u32 %v9181, 2147483648
    %v9191 = vsel %vm9189, %v9190, %v9182
    %v9192 = vsel %vm9185, %v9188, %v9191
    %v9193 = vsel %vm9183, nan, %v9192
    %v9194 = vand.u32 2147483647, %v6191
    %vm9195 = vcmp.le.f32.partialorder %v9194, 0.7853982
    %vm9196 = vcmp.lt.s32.totalorder %v6191, 0
    %v9197 = vand.u32 %v6191, 2139095040
    %v9198 = vshrl.u32 %v9197, 23
    %v9199 = vsub.s32 %v9198, 127
    %v9200 = vand.u32 2147483647, %v6191
    %v9201 = vand.u32 %v9200, 8388607
    %v9202 = vor.u32 %v9201, 8388608
    %v9203 = vsub.s32 0, %v9202
    %v9204 = vadd.s32 %v9199, 1
    %vm9205 = vcmp.gt.s32.totalorder %v9204, 0
    %v9206 = vsel %vm9205, %v9204, 0
    %v9207 = vshrl.u32 %v9206, 5
    %v9208 = vand.u32 %v9206, 31
    %v9209 = vsub.s32 32, %v9208
    %v9210 = vshrl.u32 683565275, %v9209
    %v9211 = vshll.u32 683565275, %v9208
    %v9212 = vshrl.u32 2475754826, %v9209
    %v9213 = vor.u32 %v9211, %v9212
    %v9214 = vshll.u32 2475754826, %v9208
    %v9215 = vshrl.u32 2131351028, %v9209
    %v9216 = vor.u32 %v9214, %v9215
    %v9217 = vshll.u32 2131351028, %v9208
    %v9218 = vshrl.u32 2102212464, %v9209
    %v9219 = vor.u32 %v9217, %v9218
    %v9220 = vshll.u32 2102212464, %v9208
    %v9221 = vshrl.u32 920167782, %v9209
    %v9222 = vor.u32 %v9220, %v9221
    %v9223 = vshll.u32 920167782, %v9208
    %v9224 = vshrl.u32 1326507024, %v9209
    %v9225 = vor.u32 %v9223, %v9224
    %vm9226 = vcmp.lt.s32.totalorder %v9207, 1
    %vm9227 = vcmp.lt.s32.totalorder %v9207, 2
    %vm9228 = vcmp.lt.s32.totalorder %v9207, 3
    %vm9229 = vcmp.lt.s32.totalorder %v9207, 4
    %v9230 = vsel %vm9226, %v9210, %v9213
    %v9231 = vsel %vm9229, %v9219, 2102212464
    %v9232 = vsel %vm9228, %v9216, %v9231
    %v9233 = vsel %vm9227, %v9230, %v9232
    %v9234 = vsel %vm9226, %v9213, %v9216
    %v9235 = vsel %vm9229, %v9222, 920167782
    %v9236 = vsel %vm9228, %v9219, %v9235
    %v9237 = vsel %vm9227, %v9234, %v9236
    %v9238 = vsel %vm9226, %v9216, %v9219
    %v9239 = vsel %vm9229, %v9225, 1326507024
    %v9240 = vsel %vm9228, %v9222, %v9239
    %v9241 = vsel %vm9227, %v9238, %v9240
    %v9242 = vshll.u32 %v9202, 8
    %v9243 = vmul.u32.u64.compose %v9242, %v9241
    %v9244 = vextract.low.u32 %v9243
    %v9245 = vextract.high.u32 %v9243
    %v9246 = vmul.u32.u64.compose %v9242, %v9237
    %v9247 = vextract.low.u32 %v9246
    %v9248 = vextract.high.u32 %v9246
    %v9249 = vmul.u32 %v9242, %v9233
    %v9250 = vadd.s32 %v9245, %v9247
    %vm9251 = vc.u32 %v9245, %v9247
    %v9252 = vadd.s32 %v9248, 1
    %v9253 = vsel %vm9251, %v9252, %v9248
    %v9254 = vadd.s32 %v9249, %v9253
    %v9255 = vadd.s32 %v9254, 536870912
    %v9256 = vshrl.u32 %v9255, 30
    %v9257 = vshll.u32 %v9256, 30
    %v9258 = vsub.s32 %v9254, %v9257
    %vm9259 = vcmp.lt.s32.totalorder %v9258, 0
    %v9260 = vsub.s32 0, %v9258
    %v9261 = vsel %vm9259, %v9260, %v9258
    %v9262 = vclz %v9261
    %v9263 = vsub.s32 %v9262, 2
    %vm9264 = vcmp.gt.s32.totalorder 0, %v9263
    %v9265 = vsel %vm9264, 0, %v9263
    %v9266 = vsub.s32 32, %v9265
    %v9267 = vshll.u32 %v9258, %v9265
    %v9268 = vshrl.u32 %v9250, %v9266
    %v9269 = vor.u32 %v9267, %v9268
    %v9270 = vsub.s32 4294967266, %v9265
    %v9271 = vadd.s32 %v9270, 127
    %v9272 = vshll.u32 %v9271, 23
    %v9273 = vor.u32 4788187, %v9272
    %v9274 = vand.u32 2147483647, %v9273
    %v9276 = vcvt.s32.f32 %v9269
    %v9277 = vmul.f32 %v9276, %v9274
    %v9278 = vxor.u32 %v9277, 2147483648
    %v9279 = vsel %vm9196, %v9278, %v9277
    %v9280 = vsub.s32 4, %v9256
    %v9281 = vsel %vm9196, %v9280, %v9256
    %v9282 = vsel %vm9195, %v6191, %v9279
    %v9283 = vsel %vm9195, 0, %v9281
    %v9284 = vcosq.f32.pop %v9282
    %v9285 = vsinq.f32.pop %v9282
    %vm9286 = vweird.f32 %v6191
    %v9287 = vand.u32 %v9283, 3
    %vm9288 = vcmp.lt.s32.totalorder %v9287, 2
    %vm9289 = vcmp.eq.s32.totalorder %v9287, 0
    %v9290 = vxor.u32 %v9285, 2147483648
    %v9291 = vsel %vm9289, %v9284, %v9290
    %vm9292 = vcmp.eq.s32.totalorder %v9287, 2
    %v9293 = vxor.u32 %v9284, 2147483648
    %v9294 = vsel %vm9292, %v9293, %v9285
    %v9295 = vsel %vm9288, %v9291, %v9294
    %v9296 = vsel %vm9286, nan, %v9295
    %v9297 = vld [vmem:[#allocation8] sm:$0xff]
    %v9298 = vld [vmem:[#allocation8 + $0x8] sm:$0xff]
    %vm9299 = vcmp.ne.s32.totalorder %v9297, 0
    %vm9300 = vcmp.ne.s32.totalorder %v9298, 0
    %v9316 = vcombine.low %v7854, %v7957
    %v9317 = vcombine.low %v8060, %v8163
    %v9318 = vcombine.low %v8266, %v8369
    %v9319 = vcombine.low %v8472, %v8575
    %v9321 = vunpack.c.l.s4 1966171168
    %v9322 = vunpack.c.0.s8 %v9321
    %v9323 = vlaneseq
    %v9324 = vshrl.u32 %v9323, 7
    %v9325 = vsub.s32 %v9322, %v9324
    %v9326 = vrot.slane %v9316, %v9325
    %v9328 = vunpack.c.l.s4 1966171168
    %v9329 = vunpack.c.0.s8 %v9328
    %v9330 = vlaneseq
    %v9331 = vshrl.u32 %v9330, 7
    %v9332 = vsub.s32 %v9329, %v9331
    %v9333 = vrot.slane %v9317, %v9332
    %v9335 = vunpack.c.l.s4 1966171168
    %v9336 = vunpack.c.0.s8 %v9335
    %v9337 = vlaneseq
    %v9338 = vshrl.u32 %v9337, 7
    %v9339 = vsub.s32 %v9336, %v9338
    %v9340 = vrot.slane %v9318, %v9339
    %v9342 = vunpack.c.l.s4 1966171168
    %v9343 = vunpack.c.0.s8 %v9342
    %v9344 = vlaneseq
    %v9345 = vshrl.u32 %v9344, 7
    %v9346 = vsub.s32 %v9343, %v9345
    %v9347 = vrot.slane %v9319, %v9346
    %v9348 = vcombine.low %v9326, %v9333
    %v9349 = vcombine.low %v9340, %v9347
    %v9351 = vunpack.c.l.s4 1966171168
    %v9352 = vunpack.c.0.s8 %v9351
    %v9353 = vlaneseq
    %v9354 = vshrl.u32 %v9353, 7
    %v9355 = vsub.s32 %v9352, %v9354
    %v9356 = vrot.slane %v9348, %v9355
    %v9358 = vunpack.c.l.s4 1966171168
    %v9359 = vunpack.c.0.s8 %v9358
    %v9360 = vlaneseq
    %v9361 = vshrl.u32 %v9360, 7
    %v9362 = vsub.s32 %v9359, %v9361
    %v9363 = vrot.slane %v9349, %v9362
    %v9364 = vcombine.low %v9356, %v9363
    %v9365 = vcombine.low %v8678, %v8781
    %v9366 = vcombine.low %v8884, %v8987
    %v9367 = vcombine.low %v9090, %v9193
    %v9369 = vunpack.c.l.s4 1966171168
    %v9370 = vunpack.c.0.s8 %v9369
    %v9371 = vlaneseq
    %v9372 = vshrl.u32 %v9371, 7
    %v9373 = vsub.s32 %v9370, %v9372
    %v9374 = vrot.slane %v9365, %v9373
    %v9376 = vunpack.c.l.s4 1966171168
    %v9377 = vunpack.c.0.s8 %v9376
    %v9378 = vlaneseq
    %v9379 = vshrl.u32 %v9378, 7
    %v9380 = vsub.s32 %v9377, %v9379
    %v9381 = vrot.slane %v9366, %v9380
    %v9383 = vunpack.c.l.s4 1966171168
    %v9384 = vunpack.c.0.s8 %v9383
    %v9385 = vlaneseq
    %v9386 = vshrl.u32 %v9385, 7
    %v9387 = vsub.s32 %v9384, %v9386
    %v9388 = vrot.slane %v9367, %v9387
    %v9390 = vunpack.c.l.s4 1966171168
    %v9391 = vunpack.c.0.s8 %v9390
    %v9392 = vlaneseq
    %v9393 = vshrl.u32 %v9392, 7
    %v9394 = vsub.s32 %v9391, %v9393
    %v9395 = vrot.slane %v9296, %v9394
    %v9396 = vcombine.low %v9374, %v9381
    %v9397 = vcombine.low %v9388, %v9395
    %v9399 = vunpack.c.l.s4 1966171168
    %v9400 = vunpack.c.0.s8 %v9399
    %v9401 = vlaneseq
    %v9402 = vshrl.u32 %v9401, 7
    %v9403 = vsub.s32 %v9400, %v9402
    %v9404 = vrot.slane %v9396, %v9403
    %v9406 = vunpack.c.l.s4 1966171168
    %v9407 = vunpack.c.0.s8 %v9406
    %v9408 = vlaneseq
    %v9409 = vshrl.u32 %v9408, 7
    %v9410 = vsub.s32 %v9407, %v9409
    %v9411 = vrot.slane %v9397, %v9410
    %v9412 = vcombine.low %v9404, %v9411
    %v9430 = vcombine.low %v6295, %v6399
    %v9431 = vcombine.low %v6503, %v6607
    %v9432 = vcombine.low %v6711, %v6815
    %v9433 = vcombine.low %v6919, %v7023
    %v9435 = vunpack.c.l.s4 1966171168
    %v9436 = vunpack.c.0.s8 %v9435
    %v9437 = vlaneseq
    %v9438 = vshrl.u32 %v9437, 7
    %v9439 = vsub.s32 %v9436, %v9438
    %v9440 = vrot.slane %v9430, %v9439
    %v9442 = vunpack.c.l.s4 1966171168
    %v9443 = vunpack.c.0.s8 %v9442
    %v9444 = vlaneseq
    %v9445 = vshrl.u32 %v9444, 7
    %v9446 = vsub.s32 %v9443, %v9445
    %v9447 = vrot.slane %v9431, %v9446
    %v9449 = vunpack.c.l.s4 1966171168
    %v9450 = vunpack.c.0.s8 %v9449
    %v9451 = vlaneseq
    %v9452 = vshrl.u32 %v9451, 7
    %v9453 = vsub.s32 %v9450, %v9452
    %v9454 = vrot.slane %v9432, %v9453
    %v9456 = vunpack.c.l.s4 1966171168
    %v9457 = vunpack.c.0.s8 %v9456
    %v9458 = vlaneseq
    %v9459 = vshrl.u32 %v9458, 7
    %v9460 = vsub.s32 %v9457, %v9459
    %v9461 = vrot.slane %v9433, %v9460
    %v9462 = vcombine.low %v9440, %v9447
    %v9463 = vcombine.low %v9454, %v9461
    %v9465 = vunpack.c.l.s4 1966171168
    %v9466 = vunpack.c.0.s8 %v9465
    %v9467 = vlaneseq
    %v9468 = vshrl.u32 %v9467, 7
    %v9469 = vsub.s32 %v9466, %v9468
    %v9470 = vrot.slane %v9462, %v9469
    %v9472 = vunpack.c.l.s4 1966171168
    %v9473 = vunpack.c.0.s8 %v9472
    %v9474 = vlaneseq
    %v9475 = vshrl.u32 %v9474, 7
    %v9476 = vsub.s32 %v9473, %v9475
    %v9477 = vrot.slane %v9463, %v9476
    %v9478 = vcombine.low %v9470, %v9477
    %v9479 = vcombine.low %v7127, %v7231
    %v9480 = vcombine.low %v7335, %v7439
    %v9481 = vcombine.low %v7543, %v7647
    %v9483 = vunpack.c.l.s4 1966171168
    %v9484 = vunpack.c.0.s8 %v9483
    %v9485 = vlaneseq
    %v9486 = vshrl.u32 %v9485, 7
    %v9487 = vsub.s32 %v9484, %v9486
    %v9488 = vrot.slane %v9479, %v9487
    %v9490 = vunpack.c.l.s4 1966171168
    %v9491 = vunpack.c.0.s8 %v9490
    %v9492 = vlaneseq
    %v9493 = vshrl.u32 %v9492, 7
    %v9494 = vsub.s32 %v9491, %v9493
    %v9495 = vrot.slane %v9480, %v9494
    %v9497 = vunpack.c.l.s4 1966171168
    %v9498 = vunpack.c.0.s8 %v9497
    %v9499 = vlaneseq
    %v9500 = vshrl.u32 %v9499, 7
    %v9501 = vsub.s32 %v9498, %v9500
    %v9502 = vrot.slane %v9481, %v9501
    %v9504 = vunpack.c.l.s4 1966171168
    %v9505 = vunpack.c.0.s8 %v9504
    %v9506 = vlaneseq
    %v9507 = vshrl.u32 %v9506, 7
    %v9508 = vsub.s32 %v9505, %v9507
    %v9509 = vrot.slane %v7751, %v9508
    %v9510 = vcombine.low %v9488, %v9495
    %v9511 = vcombine.low %v9502, %v9509
    %v9513 = vunpack.c.l.s4 1966171168
    %v9514 = vunpack.c.0.s8 %v9513
    %v9515 = vlaneseq
    %v9516 = vshrl.u32 %v9515, 7
    %v9517 = vsub.s32 %v9514, %v9516
    %v9518 = vrot.slane %v9510, %v9517
    %v9520 = vunpack.c.l.s4 1966171168
    %v9521 = vunpack.c.0.s8 %v9520
    %v9522 = vlaneseq
    %v9523 = vshrl.u32 %v9522, 7
    %v9524 = vsub.s32 %v9521, %v9523
    %v9525 = vrot.slane %v9511, %v9524
    %v9526 = vcombine.low %v9518, %v9525
    %v9529 = vsel %vm9299, %v9364, %v9478
    %v9530 = vsel %vm9300, %v9412, %v9526
    %9531 = vst [vmem:[#allocation10] sm:$0xff] %v9529
    %v9532 = vlaneseq
    %vm9533 = vcmp.ge.s32.totalorder %v9532, 0
    %vm9534 = vcmp.lt.s32.totalorder %v9532, 896
    %vm9535 = vmand %vm9533, %vm9534
    %9536 = vst.msk [vmem:[#allocation10 + $0x8] sm:$0x7f] %vm9535, %v9530
    // Predicated region
    $region34: #{tpu_custom_call.1} parent=1 // pred_check
      _
    $region35: #{tpu_custom_call.1} parent=1 // pred_check_branch
      %9538 = sbr.rel (0) target = $region37
    $region36: #{tpu_custom_call.1} parent=1 // pred_region
      %s9540 = ssub.s32 240, 240
      %9541 = vsyncadd [#allocation4], %s9540
      %s9543 = sshll.u32 [#allocation10], 4
      %s9544 = int_to_ptr.vmem [resolvable:$true] %s9543
      %9546 = dma.vmem_to_hbm [thread:$0]  %s9544, 240, %s4, [#allocation4]
    $region37: #{tpu_custom_call.1} parent=1 // pred_fallthru
      _
    // Predicated region
    $region38: #{tpu_custom_call.1} parent=1 // pred_check
      _
    $region39: #{tpu_custom_call.1} parent=1 // pred_check_branch
      %9548 = sbr.rel (0) target = $region41
    $region40: #{tpu_custom_call.1} parent=1 // pred_region
      %9549 = dma.done [#allocation4], 240
    $region41: #{tpu_custom_call.1} parent=1 // pred_fallthru
      _
    %9550 = vsyncpa [#allocation3], 1
    %9551 = vsyncpa [#allocation6], 1
    %9552 = vsyncpa [#allocation9], 1
    %9553 = vsyncpa [#allocation4], 1

</llo_original>
